<compile_context>
chip_gen: v7x
topology: tpu7x:2x2x1
jax: 0.10.0
libtpu: 0.0.40
codegen_flags: <defaults>
</compile_context>

<pallas_src>
import functools

import jax
import jax.numpy as jnp
import numpy as np
from jax.experimental import pallas as pl
from jax.experimental.pallas import tpu as pltpu

STACK_SIZE = 4
ACTION_SPACE = [0, 1, 2, 3]          # len == 4 -> fc2 output dim


def _round_up(x, m):
    return ((x + m - 1) // m) * m


@functools.lru_cache(maxsize=1)
def _fc_parallel_default():
    """True on chips with 2 TensorCores sharing the grid (v7x)."""
    try:
        kind = jax.devices()[0].device_kind.lower()
    except Exception:
        return False
    return ("v7" in kind) or ("7x" in kind)


# ----------------------------------------------------------------------------
# Conv GEMM kernels (single full-size block, no K loop, no scratch).
# ----------------------------------------------------------------------------
def _mm_bias_relu_wx_kernel(w_ref, x_ref, b_ref, o_ref):
    # out(Cout, N) = relu(W(Cout, Kp) @ colT(Kp, N) + b(Cout, 1))
    acc = jnp.dot(w_ref[...], x_ref[...], preferred_element_type=jnp.float32)
    o_ref[...] = jnp.maximum(acc + b_ref[...], 0.0).astype(o_ref.dtype)


def _mm_bias_relu_xw_kernel(x_ref, w_ref, b_ref, o_ref):
    # out(N, Cout) = relu(col(N, Kp) @ W^T(Kp, Cout) + b(1, Cout))
    acc = jnp.dot(x_ref[...], w_ref[...], preferred_element_type=jnp.float32)
    o_ref[...] = jnp.maximum(acc + b_ref[...], 0.0).astype(o_ref.dtype)


def _im2col_T_nchw(x, kh, kw, stride, k_pad, n_pad):
    """x: (B, C, H, W) -> colT (k_pad, n_pad) bf16; rows (C, kh, kw), cols (B, Ho, Wo)."""
    x = x.astype(jnp.bfloat16)
    B, C, H, W = x.shape
    Ho = (H - kh) // stride + 1
    Wo = (W - kw) // stride + 1
    cols = []
    for i in range(kh):
        for j in range(kw):
            cols.append(x[:, :, i:i + stride * Ho:stride, j:j + stride * Wo:stride])
    col = jnp.stack(cols, axis=0).reshape(kh, kw, B, C, Ho, Wo)
    col = col.transpose(3, 0, 1, 2, 4, 5)                    # (C, kh, kw, B, Ho, Wo)
    col = col.reshape(C * kh * kw, B * Ho * Wo)
    col = jnp.pad(col, ((0, k_pad - C * kh * kw), (0, n_pad - B * Ho * Wo)))
    return col, Ho, Wo


def _im2col_rows_cmajor(y, kh, kw, stride, k_pad):
    """y: (C, B, H, W) bf16 -> col (B*Ho*Wo, k_pad); cols ordered (C, kh, kw)."""
    C, B, H, W = y.shape
    Ho = (H - kh) // stride + 1
    Wo = (W - kw) // stride + 1
    cols = []
    for i in range(kh):
        for j in range(kw):
            cols.append(y[:, :, i:i + stride * Ho:stride, j:j + stride * Wo:stride])
    col = jnp.stack(cols, axis=0).reshape(kh, kw, C, B, Ho, Wo)
    col = col.transpose(3, 4, 5, 2, 0, 1)                    # (B, Ho, Wo, C, kh, kw)
    col = col.reshape(B * Ho * Wo, C * kh * kw)
    col = jnp.pad(col, ((0, 0), (0, k_pad - C * kh * kw)))
    return col, Ho, Wo


def conv1_fwd(x, w_mat, b_col, kh, kw, stride):
    """x: NCHW f32; w_mat: (Cout, Kp) bf16; b_col: (Cout, 1) f32.
    Returns channel-major (Cout, B, Ho, Wo) bf16 (no NCHW transpose)."""
    Cout, Kp = w_mat.shape
    B = x.shape[0]
    Ho = (x.shape[2] - kh) // stride + 1
    Wo = (x.shape[3] - kw) // stride + 1
    N = B * Ho * Wo
    Np = _round_up(N, 128)                                    # lane-dense output
    colT, _, _ = _im2col_T_nchw(x, kh, kw, stride, Kp, Np)
    out = pl.pallas_call(
        _mm_bias_relu_wx_kernel,
        out_shape=jax.ShapeDtypeStruct((Cout, Np), jnp.bfloat16),
        grid=(1,),
        in_specs=[
            pl.BlockSpec((Cout, Kp), lambda i: (0, 0)),
            pl.BlockSpec((Kp, Np), lambda i: (0, 0)),
            pl.BlockSpec((Cout, 1), lambda i: (0, 0)),
        ],
        out_specs=pl.BlockSpec((Cout, Np), lambda i: (0, 0)),
    )(w_mat, colT, b_col)
    return out[:, :N].reshape(Cout, B, Ho, Wo)


def conv2_fwd(y_cmajor, w_t, b_row, kh, kw, stride):
    """y_cmajor: (C, B, H, W) bf16; w_t: (Kp, Cout) bf16; b_row: (1, Cout) f32.
    Returns (B*Ho*Wo, Cout) bf16 with rows ordered (b, ho, wo)."""
    Kp, Cout = w_t.shape
    col, Ho, Wo = _im2col_rows_cmajor(y_cmajor, kh, kw, stride, Kp)
    N = col.shape[0]
    out = pl.pallas_call(
        _mm_bias_relu_xw_kernel,
        out_shape=jax.ShapeDtypeStruct((N, Cout), jnp.bfloat16),
        grid=(1,),
        in_specs=[
            pl.BlockSpec((N, Kp), lambda i: (0, 0)),
            pl.BlockSpec((Kp, Cout), lambda i: (0, 0)),
            pl.BlockSpec((1, Cout), lambda i: (0, 0)),
        ],
        out_specs=pl.BlockSpec((N, Cout), lambda i: (0, 0)),
    )(col, w_t, b_row)
    return out, Ho, Wo


# ----------------------------------------------------------------------------
# Fused fc1(+ReLU)+fc2.  Grid = (nj,) over fc1's 512 outputs, tn=128 per block.
#   per step: h = relu(x @ w1_blk + b1_blk);  partial = h @ w2_blk
# v5e/v6e: "arbitrary" grid, fc2 output accumulated in-kernel (b2 on step 0).
# v7x:     "parallel" grid, per-block partials summed outside (both TCs used).
# ----------------------------------------------------------------------------
def _fc_partial_kernel(x_ref, w1_ref, b1_ref, w2_ref, o_ref):
    h = jnp.dot(x_ref[...], w1_ref[...], preferred_element_type=jnp.float32)
    h = jnp.maximum(h + b1_ref[...], 0.0)
    o_ref[...] = jnp.dot(h, w2_ref[...], preferred_element_type=jnp.float32)


def _fc_accum_kernel(x_ref, w1_ref, b1_ref, w2_ref, b2_ref, o_ref):
    h = jnp.dot(x_ref[...], w1_ref[...], preferred_element_type=jnp.float32)
    h = jnp.maximum(h + b1_ref[...], 0.0)
    p = jnp.dot(h, w2_ref[...], preferred_element_type=jnp.float32)
    j = pl.program_id(0)

    @pl.when(j == 0)
    def _():
        o_ref[...] = p + b2_ref[...]

    @pl.when(j > 0)
    def _():
        o_ref[...] = o_ref[...] + p


def fc1_fc2_fused(x, w1b, b1, w2, b2, *, parallel_partials=None):
    """x: (M, Kp) bf16; w1b: (nj, Kp, tn) bf16 block-contiguous; b1: (1, 512) f32;
    w2: (512, 4) f32; b2: (1, 4) f32."""
    if parallel_partials is None:
        parallel_partials = _fc_parallel_default()
    nj, Kp, tn = w1b.shape
    M, Kx = x.shape
    N1 = b1.shape[1]
    N2 = w2.shape[1]
    assert Kx == Kp and Kp % 128 == 0, (Kx, Kp)
    assert N1 == nj * tn and w2.shape[0] == N1, (N1, nj, tn, w2.shape)

    x_spec = pl.BlockSpec((M, Kp), lambda j: (0, 0))
    w1_spec = pl.BlockSpec((None, Kp, tn), lambda j: (j, 0, 0))   # contiguous block j
    b1_spec = pl.BlockSpec((1, tn), lambda j: (0, j))
    w2_spec = pl.BlockSpec((tn, N2), lambda j: (j, 0))

    if parallel_partials:
        # v7x: shard the ~11 MB weight stream across both TensorCores.
        partials = pl.pallas_call(
            _fc_partial_kernel,
            out_shape=jax.ShapeDtypeStruct((nj, M, N2), jnp.float32),
            grid=(nj,),
            in_specs=[x_spec, w1_spec, b1_spec, w2_spec],
            out_specs=pl.BlockSpec((None, M, N2), lambda j: (j, 0, 0)),
            compiler_params=pltpu.CompilerParams(
                dimension_semantics=("parallel",)),
        )(x, w1b, b1, w2)
        return partials.sum(axis=0) + b2

    # v5e / v6e: single TensorCore -> accumulate in-kernel, no extra dispatch.
    return pl.pallas_call(
        _fc_accum_kernel,
        out_shape=jax.ShapeDtypeStruct((M, N2), jnp.float32),
        grid=(nj,),
        in_specs=[x_spec, w1_spec, b1_spec, w2_spec,
                  pl.BlockSpec((1, N2), lambda j: (0, 0))],
        out_specs=pl.BlockSpec((M, N2), lambda j: (0, 0)),
        compiler_params=pltpu.CompilerParams(
            dimension_semantics=("arbitrary",)),
    )(x, w1b, b1, w2, b2)


# ----------------------------------------------------------------------------
# One-time parameter preparation (cached): reshape / permute / pad / cast.
# ----------------------------------------------------------------------------
def prepare_params(p, tn=128):
    # conv1: (Cout, Cin*kh*kw) padded to 128, bf16.
    c1o, c1i, kh1, kw1 = p["w1"].shape
    k1 = c1i * kh1 * kw1
    k1p = _round_up(k1, 128)
    w1m = jnp.pad(p["w1"].reshape(c1o, k1),
                  ((0, 0), (0, k1p - k1))).astype(jnp.bfloat16)

    # conv2: transposed to (Kp, Cout) for the col(N,K) @ W^T orientation, bf16.
    c2o, c2i, kh2, kw2 = p["w2"].shape
    k2 = c2i * kh2 * kw2
    k2p = _round_up(k2, 128)
    w2t = jnp.pad(p["w2"].reshape(c2o, k2),
                  ((0, 0), (0, k2p - k2))).astype(jnp.bfloat16).T

    # fc1: permute K axis from torch's (c, ho, wo) flatten order to (ho, wo, c)
    # so the conv2 GEMM output flattens with a pure reshape; transpose, pad K to
    # a 128 multiple, cast bf16, and store block-contiguous as (nj, Kp, tn).
    n1, kf = p["fc1_w"].shape
    hw = kf // c2o
    s = int(round(hw ** 0.5))
    assert s * s == hw and c2o * s * s == kf, (kf, c2o)
    assert n1 % tn == 0, (n1, tn)
    nj = n1 // tn
    kfp = _round_up(kf, 128)
    w_perm = p["fc1_w"].reshape(n1, c2o, s, s).transpose(0, 2, 3, 1).reshape(n1, kf)
    w1t = jnp.pad(w_perm.T, ((0, kfp - kf), (0, 0))).astype(jnp.bfloat16)  # (Kp, 512)
    fc1_wb = w1t.reshape(kfp, nj, tn).transpose(1, 0, 2)                   # (nj, Kp, tn)

    return {
        "w1m": w1m,
        "b1c": p["b1"].reshape(-1, 1),                 # (32, 1) f32
        "w2T": w2t,                                    # (k2p, 64) bf16
        "b2r": p["b2"].reshape(1, -1),                 # (1, 64) f32
        "fc1_wB": fc1_wb,                              # (nj, Kp, tn) bf16
        "fc1_b": p["fc1_b"].reshape(1, -1),            # (1, 512) f32
        "fc2_wT": p["fc2_w"].T,                        # (512, 4) f32
        "fc2_b": p["fc2_b"].reshape(1, -1),            # (1, 4) f32
    }


# ----------------------------------------------------------------------------
# Full DQN forward
# ----------------------------------------------------------------------------
@jax.jit
def dqn_forward(x, pp):
    B = x.shape[0]
    y1 = conv1_fwd(x, pp["w1m"], pp["b1c"], 5, 5, 2)            # (32, B, 29, 29) bf16
    o2, ho, wo = conv2_fwd(y1, pp["w2T"], pp["b2r"], 5, 5, 2)   # (B*169, 64) bf16
    cout2 = o2.shape[1]
    x_flat = o2.reshape(B, ho * wo * cout2)                     # pure reshape flatten
    kp = pp["fc1_wB"].shape[1]
    x_flat = jnp.pad(x_flat, ((0, 0), (0, kp - x_flat.shape[1])))  # tiny zero pad
    return fc1_fc2_fused(x_flat, pp["fc1_wB"], pp["fc1_b"],
                         pp["fc2_wT"], pp["fc2_b"])


# Pure-JAX f32 reference for validation.
def dqn_forward_ref(x, p):
    dn = ("NCHW", "OIHW", "NCHW")
    y = jax.lax.conv_general_dilated(x, p["w1"], (2, 2), "VALID",
                                     dimension_numbers=dn)
    y = jnp.maximum(y + p["b1"][None, :, None, None], 0.0)
    y = jax.lax.conv_general_dilated(y, p["w2"], (2, 2), "VALID",
                                     dimension_numbers=dn)
    y = jnp.maximum(y + p["b2"][None, :, None, None], 0.0)
    y = y.reshape(y.shape[0], -1)
    y = jnp.maximum(y @ p["fc1_w"].T + p["fc1_b"], 0.0)
    return y @ p["fc2_w"].T + p["fc2_b"]


def init_params(key):
    ks = jax.random.split(key, 8)
    f32 = jnp.float32
    return {
        "w1": 0.05 * jax.random.normal(ks[0], (32, STACK_SIZE, 5, 5), f32),
        "b1": 0.05 * jax.random.normal(ks[1], (32,), f32),
        "w2": 0.05 * jax.random.normal(ks[2], (64, 32, 5, 5), f32),
        "b2": 0.05 * jax.random.normal(ks[3], (64,), f32),
        "fc1_w": 0.01 * jax.random.normal(ks[4], (512, 10816), f32),
        "fc1_b": 0.01 * jax.random.normal(ks[5], (512,), f32),
        "fc2_w": 0.05 * jax.random.normal(ks[6], (len(ACTION_SPACE), 512), f32),
        "fc2_b": 0.05 * jax.random.normal(ks[7], (len(ACTION_SPACE),), f32),
    }


if __name__ == "__main__":
    key = jax.random.PRNGKey(0)
    kx, kp = jax.random.split(key)

    # Input spatial size 61 is implied by fc1's 10816 = 64 * 13 * 13:
    #   61 -conv(5,s2)-> 29 -conv(5,s2)-> 13.
    x = jax.random.normal(kx, (2, STACK_SIZE, 61, 61), jnp.float32)
    params = init_params(kp)
    prepared = prepare_params(params)          # cached, one-time layout work

    out = jax.block_until_ready(dqn_forward(x, prepared))
    assert out.shape == (2, len(ACTION_SPACE)), out.shape

    ref = jax.block_until_ready(dqn_forward_ref(x, params))
    np.testing.assert_allclose(np.asarray(out), np.asarray(ref),
                               rtol=2e-2, atol=2e-2)

    print("KERNEL_OK")
</pallas_src>

<mosaic_0001>
module attributes {stable_mosaic.version = 11 : i64} {
  func.func @_mm_bias_relu_wx_kernel(%arg0: i32, %arg1: memref<32x128xbf16, #tpu.memory_space<vmem>>, %arg2: memref<128x1792xbf16, #tpu.memory_space<vmem>>, %arg3: memref<32x1xf32, #tpu.memory_space<vmem>>, %arg4: memref<32x1792xbf16, #tpu.memory_space<vmem>>) attributes {dimension_semantics = [#tpu.dimension_semantics<arbitrary>], iteration_bounds = array<i64: 1>, scalar_prefetch = 0 : i64, scratch_operands = 0 : i64, tpu.core_type = #tpu.core_type<tc>, window_params = [{pipeline_mode = #tpu.pipeline_mode<synchronous>, transform_indices = @transform_0, window_bounds = array<i64: 32, 128>}, {pipeline_mode = #tpu.pipeline_mode<synchronous>, transform_indices = @transform_1, window_bounds = array<i64: 128, 1792>}, {pipeline_mode = #tpu.pipeline_mode<synchronous>, transform_indices = @transform_2, window_bounds = array<i64: 32, 1>}, {pipeline_mode = #tpu.pipeline_mode<synchronous>, transform_indices = @transform_3, window_bounds = array<i64: 32, 1792>}]} {
    %c0 = arith.constant 0 : index
    %c0_0 = arith.constant 0 : index
    %0 = vector.load %arg1[%c0, %c0_0] : memref<32x128xbf16, #tpu.memory_space<vmem>>, vector<32x128xbf16>
    %c0_1 = arith.constant 0 : index
    %c0_2 = arith.constant 0 : index
    %1 = vector.load %arg2[%c0_1, %c0_2] : memref<128x1792xbf16, #tpu.memory_space<vmem>>, vector<128x1792xbf16>
    %cst = arith.constant dense<0.000000e+00> : vector<32x1792xf32>
    %2 = tpu.matmul %0, %1, %cst {dimension_numbers = #tpu.dot_dimension_numbers<[1], [0], [0], [1], [0, 0, 1, 1], [], []>} : vector<32x128xbf16>, vector<128x1792xbf16>, vector<32x1792xf32> -> vector<32x1792xf32>
    %c0_3 = arith.constant 0 : index
    %c0_4 = arith.constant 0 : index
    %3 = vector.load %arg3[%c0_3, %c0_4] : memref<32x1xf32, #tpu.memory_space<vmem>>, vector<32x1xf32>
    %4 = vector.broadcast %3 : vector<32x1xf32> to vector<32x1792xf32>
    %5 = arith.addf %2, %4 : vector<32x1792xf32>
    %cst_5 = arith.constant 0.000000e+00 : f32
    %6 = vector.broadcast %cst_5 : f32 to vector<32x1792xf32>
    %7 = arith.maximumf %5, %6 : vector<32x1792xf32>
    %8 = arith.truncf %7 : vector<32x1792xf32> to vector<32x1792xbf16>
    %c0_6 = arith.constant 0 : index
    %c0_7 = arith.constant 0 : index
    %9 = vector.load %arg4[%c0_6, %c0_7] : memref<32x1792xbf16, #tpu.memory_space<vmem>>, vector<32x1792xbf16>
    tpu.vector_store %arg4[%c0_6, %c0_7], %8 {strides = array<i32>} : memref<32x1792xbf16, #tpu.memory_space<vmem>>, vector<32x1792xbf16>,
    return
  }
  func.func @transform_0(%arg0: i32) -> (i32, i32) {
    %c0_i32 = arith.constant 0 : i32
    %c0_i32_0 = arith.constant 0 : i32
    %c0_i32_1 = arith.constant 0 : i32
    return %c0_i32, %c0_i32_0 : i32, i32
  }
  func.func @transform_1(%arg0: i32) -> (i32, i32) {
    %c0_i32 = arith.constant 0 : i32
    %c0_i32_0 = arith.constant 0 : i32
    %c0_i32_1 = arith.constant 0 : i32
    return %c0_i32, %c0_i32_0 : i32, i32
  }
  func.func @transform_2(%arg0: i32) -> (i32, i32) {
    %c0_i32 = arith.constant 0 : i32
    %c0_i32_0 = arith.constant 0 : i32
    %c0_i32_1 = arith.constant 0 : i32
    return %c0_i32, %c0_i32_0 : i32, i32
  }
  func.func @transform_3(%arg0: i32) -> (i32, i32) {
    %c0_i32 = arith.constant 0 : i32
    %c0_i32_0 = arith.constant 0 : i32
    %c0_i32_1 = arith.constant 0 : i32
    return %c0_i32, %c0_i32_0 : i32, i32
  }
}

module attributes {stable_mosaic.version = 11 : i64} {
  func.func @_mm_bias_relu_xw_kernel(%arg0: i32, %arg1: memref<338x896xbf16, #tpu.memory_space<vmem>>, %arg2: memref<896x64xbf16, #tpu.memory_space<vmem>>, %arg3: memref<1x64xf32, #tpu.memory_space<vmem>>, %arg4: memref<338x64xbf16, #tpu.memory_space<vmem>>) attributes {dimension_semantics = [#tpu.dimension_semantics<arbitrary>], iteration_bounds = array<i64: 1>, scalar_prefetch = 0 : i64, scratch_operands = 0 : i64, tpu.core_type = #tpu.core_type<tc>, window_params = [{pipeline_mode = #tpu.pipeline_mode<synchronous>, transform_indices = @transform_0, window_bounds = array<i64: 338, 896>}, {pipeline_mode = #tpu.pipeline_mode<synchronous>, transform_indices = @transform_1, window_bounds = array<i64: 896, 64>}, {pipeline_mode = #tpu.pipeline_mode<synchronous>, transform_indices = @transform_2, window_bounds = array<i64: 1, 64>}, {pipeline_mode = #tpu.pipeline_mode<synchronous>, transform_indices = @transform_3, window_bounds = array<i64: 338, 64>}]} {
    %c0 = arith.constant 0 : index
    %c0_0 = arith.constant 0 : index
    %0 = vector.load %arg1[%c0, %c0_0] : memref<338x896xbf16, #tpu.memory_space<vmem>>, vector<338x896xbf16>
    %c0_1 = arith.constant 0 : index
    %c0_2 = arith.constant 0 : index
    %1 = vector.load %arg2[%c0_1, %c0_2] : memref<896x64xbf16, #tpu.memory_space<vmem>>, vector<896x64xbf16>
    %cst = arith.constant dense<0.000000e+00> : vector<338x64xf32>
    %2 = tpu.matmul %0, %1, %cst {dimension_numbers = #tpu.dot_dimension_numbers<[1], [0], [0], [1], [0, 0, 1, 1], [], []>} : vector<338x896xbf16>, vector<896x64xbf16>, vector<338x64xf32> -> vector<338x64xf32>
    %c0_3 = arith.constant 0 : index
    %c0_4 = arith.constant 0 : index
    %3 = vector.load %arg3[%c0_3, %c0_4] : memref<1x64xf32, #tpu.memory_space<vmem>>, vector<1x64xf32>
    %4 = vector.broadcast %3 : vector<1x64xf32> to vector<338x64xf32>
    %5 = arith.addf %2, %4 : vector<338x64xf32>
    %cst_5 = arith.constant 0.000000e+00 : f32
    %6 = vector.broadcast %cst_5 : f32 to vector<338x64xf32>
    %7 = arith.maximumf %5, %6 : vector<338x64xf32>
    %8 = arith.truncf %7 : vector<338x64xf32> to vector<338x64xbf16>
    %c0_6 = arith.constant 0 : index
    %c0_7 = arith.constant 0 : index
    %9 = vector.load %arg4[%c0_6, %c0_7] : memref<338x64xbf16, #tpu.memory_space<vmem>>, vector<338x64xbf16>
    tpu.vector_store %arg4[%c0_6, %c0_7], %8 {strides = array<i32>} : memref<338x64xbf16, #tpu.memory_space<vmem>>, vector<338x64xbf16>,
    return
  }
  func.func @transform_0(%arg0: i32) -> (i32, i32) {
    %c0_i32 = arith.constant 0 : i32
    %c0_i32_0 = arith.constant 0 : i32
    %c0_i32_1 = arith.constant 0 : i32
    return %c0_i32, %c0_i32_0 : i32, i32
  }
  func.func @transform_1(%arg0: i32) -> (i32, i32) {
    %c0_i32 = arith.constant 0 : i32
    %c0_i32_0 = arith.constant 0 : i32
    %c0_i32_1 = arith.constant 0 : i32
    return %c0_i32, %c0_i32_0 : i32, i32
  }
  func.func @transform_2(%arg0: i32) -> (i32, i32) {
    %c0_i32 = arith.constant 0 : i32
    %c0_i32_0 = arith.constant 0 : i32
    %c0_i32_1 = arith.constant 0 : i32
    return %c0_i32, %c0_i32_0 : i32, i32
  }
  func.func @transform_3(%arg0: i32) -> (i32, i32) {
    %c0_i32 = arith.constant 0 : i32
    %c0_i32_0 = arith.constant 0 : i32
    %c0_i32_1 = arith.constant 0 : i32
    return %c0_i32, %c0_i32_0 : i32, i32
  }
}

module attributes {stable_mosaic.version = 11 : i64} {
  func.func @_fc_accum_kernel(%arg0: i32, %arg1: memref<2x10880xbf16, #tpu.memory_space<vmem>>, %arg2: memref<1x10880x128xbf16, #tpu.memory_space<vmem>>, %arg3: memref<1x128xf32, #tpu.memory_space<vmem>>, %arg4: memref<128x4xf32, #tpu.memory_space<vmem>>, %arg5: memref<1x4xf32, #tpu.memory_space<vmem>>, %arg6: memref<2x4xf32, #tpu.memory_space<vmem>>) attributes {dimension_semantics = [#tpu.dimension_semantics<arbitrary>], iteration_bounds = array<i64: 4>, scalar_prefetch = 0 : i64, scratch_operands = 0 : i64, tpu.core_type = #tpu.core_type<tc>, window_params = [{pipeline_mode = #tpu.pipeline_mode<synchronous>, transform_indices = @transform_0, window_bounds = array<i64: 2, 10880>}, {transform_indices = @transform_1, window_bounds = array<i64: 1, 10880, 128>}, {transform_indices = @transform_2, window_bounds = array<i64: 1, 128>}, {transform_indices = @transform_3, window_bounds = array<i64: 128, 4>}, {pipeline_mode = #tpu.pipeline_mode<synchronous>, transform_indices = @transform_4, window_bounds = array<i64: 1, 4>}, {pipeline_mode = #tpu.pipeline_mode<synchronous>, transform_indices = @transform_5, window_bounds = array<i64: 2, 4>}]} {
    %c0 = arith.constant 0 : index
    %c0_0 = arith.constant 0 : index
    %0 = vector.load %arg1[%c0, %c0_0] : memref<2x10880xbf16, #tpu.memory_space<vmem>>, vector<2x10880xbf16>
    %c0_1 = arith.constant 0 : index
    %c0_2 = arith.constant 0 : index
    %c0_3 = arith.constant 0 : index
    %1 = vector.load %arg2[%c0_1, %c0_2, %c0_3] : memref<1x10880x128xbf16, #tpu.memory_space<vmem>>, vector<1x10880x128xbf16>
    %2 = vector.shape_cast %1 : vector<1x10880x128xbf16> to vector<10880x128xbf16>
    %cst = arith.constant dense<0.000000e+00> : vector<2x128xf32>
    %3 = tpu.matmul %0, %2, %cst {dimension_numbers = #tpu.dot_dimension_numbers<[1], [0], [0], [1], [0, 0, 1, 1], [], []>} : vector<2x10880xbf16>, vector<10880x128xbf16>, vector<2x128xf32> -> vector<2x128xf32>
    %c0_4 = arith.constant 0 : index
    %c0_5 = arith.constant 0 : index
    %4 = vector.load %arg3[%c0_4, %c0_5] : memref<1x128xf32, #tpu.memory_space<vmem>>, vector<1x128xf32>
    %5 = vector.broadcast %4 : vector<1x128xf32> to vector<2x128xf32>
    %6 = arith.addf %3, %5 : vector<2x128xf32>
    %cst_6 = arith.constant 0.000000e+00 : f32
    %7 = vector.broadcast %cst_6 : f32 to vector<2x128xf32>
    %8 = arith.maximumf %6, %7 : vector<2x128xf32>
    %c0_7 = arith.constant 0 : index
    %c0_8 = arith.constant 0 : index
    %9 = vector.load %arg4[%c0_7, %c0_8] : memref<128x4xf32, #tpu.memory_space<vmem>>, vector<128x4xf32>
    %cst_9 = arith.constant dense<0.000000e+00> : vector<2x4xf32>
    %10 = tpu.matmul %8, %9, %cst_9 {dimension_numbers = #tpu.dot_dimension_numbers<[1], [0], [0], [1], [0, 0, 1, 1], [], []>} : vector<2x128xf32>, vector<128x4xf32>, vector<2x4xf32> -> vector<2x4xf32>
    %c0_i32 = arith.constant 0 : i32
    %11 = arith.cmpi eq, %arg0, %c0_i32 : i32
    %12 = arith.extui %11 : i1 to i32
    %c0_i32_10 = arith.constant 0 : i32
    %13 = arith.cmpi ne, %12, %c0_i32_10 : i32
    scf.if %13 {
      %c0_13 = arith.constant 0 : index
      %c0_14 = arith.constant 0 : index
      %17 = vector.load %arg5[%c0_13, %c0_14] : memref<1x4xf32, #tpu.memory_space<vmem>>, vector<1x4xf32>
      %18 = vector.broadcast %17 : vector<1x4xf32> to vector<2x4xf32>
      %19 = arith.addf %10, %18 : vector<2x4xf32>
      %c0_15 = arith.constant 0 : index
      %c0_16 = arith.constant 0 : index
      %20 = vector.load %arg6[%c0_15, %c0_16] : memref<2x4xf32, #tpu.memory_space<vmem>>, vector<2x4xf32>
      tpu.vector_store %arg6[%c0_15, %c0_16], %19 {strides = array<i32>} : memref<2x4xf32, #tpu.memory_space<vmem>>, vector<2x4xf32>,
    } else {
    }
    %c0_i32_11 = arith.constant 0 : i32
    %14 = arith.cmpi sgt, %arg0, %c0_i32_11 : i32
    %15 = arith.extui %14 : i1 to i32
    %c0_i32_12 = arith.constant 0 : i32
    %16 = arith.cmpi ne, %15, %c0_i32_12 : i32
    scf.if %16 {
      %c0_13 = arith.constant 0 : index
      %c0_14 = arith.constant 0 : index
      %17 = vector.load %arg6[%c0_13, %c0_14] : memref<2x4xf32, #tpu.memory_space<vmem>>, vector<2x4xf32>
      %18 = arith.addf %17, %10 : vector<2x4xf32>
      %c0_15 = arith.constant 0 : index
      %c0_16 = arith.constant 0 : index
      %19 = vector.load %arg6[%c0_15, %c0_16] : memref<2x4xf32, #tpu.memory_space<vmem>>, vector<2x4xf32>
      tpu.vector_store %arg6[%c0_15, %c0_16], %18 {strides = array<i32>} : memref<2x4xf32, #tpu.memory_space<vmem>>, vector<2x4xf32>,
    } else {
    }
    return
  }
  func.func @transform_0(%arg0: i32) -> (i32, i32) {
    %c0_i32 = arith.constant 0 : i32
    %c0_i32_0 = arith.constant 0 : i32
    %c0_i32_1 = arith.constant 0 : i32
    return %c0_i32, %c0_i32_0 : i32, i32
  }
  func.func @transform_1(%arg0: i32) -> (i32, i32, i32) {
    %c0_i32 = arith.constant 0 : i32
    %c0_i32_0 = arith.constant 0 : i32
    %c0_i32_1 = arith.constant 0 : i32
    return %arg0, %c0_i32, %c0_i32_0 : i32, i32, i32
  }
  func.func @transform_2(%arg0: i32) -> (i32, i32) {
    %c0_i32 = arith.constant 0 : i32
    %c0_i32_0 = arith.constant 0 : i32
    return %c0_i32, %arg0 : i32, i32
  }
  func.func @transform_3(%arg0: i32) -> (i32, i32) {
    %c0_i32 = arith.constant 0 : i32
    %c0_i32_0 = arith.constant 0 : i32
    return %arg0, %c0_i32 : i32, i32
  }
  func.func @transform_4(%arg0: i32) -> (i32, i32) {
    %c0_i32 = arith.constant 0 : i32
    %c0_i32_0 = arith.constant 0 : i32
    %c0_i32_1 = arith.constant 0 : i32
    return %c0_i32, %c0_i32_0 : i32, i32
  }
  func.func @transform_5(%arg0: i32) -> (i32, i32) {
    %c0_i32 = arith.constant 0 : i32
    %c0_i32_0 = arith.constant 0 : i32
    %c0_i32_1 = arith.constant 0 : i32
    return %c0_i32, %c0_i32_0 : i32, i32
  }
}

</mosaic_0001>

<llo_original>
// kernel: dqn_forward.3
$region0: #{dqn_forward.3}
  #allocation0 [shape = 'u32[]', space=smem, size = 0x4, offset = 0x4, fixed_abs, tag = 'smem constant byte address 0x4 - core index']
  #allocation1 [shape = 'u32[144,128]{1,0:T(1,128)}', space=vmem, size = 0x12000, scoped, tag = 'internal scratch']
  %s0 = inlined_call_operand.vmem [shape: bf16[32,128], index: 0, kind: input, shape index: {}]
  %s1 = inlined_call_operand.vmem [shape: bf16[128,1792], index: 1, kind: input, shape index: {}]
  %s2 = inlined_call_operand.vmem [shape: f32[32,1], index: 2, kind: input, shape index: {}]
  %s3 = inlined_call_operand.vmem [shape: bf16[32,1792], index: 3, kind: output, shape index: {}]
  %s4 = sld [smem:[#allocation0]]
  $region22: #{dqn_forward.3} parent=0
    _
  %s6 = ssub.s32 1, %s4
  %s7 = scalar_select 0, %s6, %s4
  // Predicated region
  $region2: #{dqn_forward.3} parent=0 // pred_check
    _
  $region3: #{dqn_forward.3} parent=0 // pred_check_branch
    %9 = sbr.rel (0) target = $region5
  $region4: #{dqn_forward.3} parent=0 // pred_region
    _
  $region5: #{dqn_forward.3} parent=0 // pred_fallthru
    _
  // Predicated region
  $region6: #{dqn_forward.3} parent=0 // pred_check
    _
  $region7: #{dqn_forward.3} parent=0 // pred_check_branch
    %11 = sbr.rel (0) target = $region9
  $region8: #{dqn_forward.3} parent=0 // pred_region
    _
  $region9: #{dqn_forward.3} parent=0 // pred_fallthru
    _
  // Predicated region
  $region10: #{dqn_forward.3} parent=0 // pred_check
    _
  $region11: #{dqn_forward.3} parent=0 // pred_check_branch
    %13 = sbr.rel (0) target = $region13
  $region12: #{dqn_forward.3} parent=0 // pred_region
    _
  $region13: #{dqn_forward.3} parent=0 // pred_fallthru
    _
  %v15 = vld [vmem:[%s0] sm:$0xf]
  %v16 = vld [vmem:[%s0 + $0x4] sm:$0xf]
  %v17 = vld [vmem:[%s0 + $0x8] sm:$0xf]
  %v18 = vld [vmem:[%s0 + $0xc] sm:$0xf]
  %v19 = vld [vmem:[%s1] sm:$0xff]
  %v20 = vld [vmem:[%s1 + $0x8] sm:$0xff]
  %v21 = vld [vmem:[%s1 + $0x10] sm:$0xff]
  %v22 = vld [vmem:[%s1 + $0x18] sm:$0xff]
  %v23 = vld [vmem:[%s1 + $0x20] sm:$0xff]
  %v24 = vld [vmem:[%s1 + $0x28] sm:$0xff]
  %v25 = vld [vmem:[%s1 + $0x30] sm:$0xff]
  %v26 = vld [vmem:[%s1 + $0x38] sm:$0xff]
  %v27 = vld [vmem:[%s1 + $0x40] sm:$0xff]
  %v28 = vld [vmem:[%s1 + $0x48] sm:$0xff]
  %v29 = vld [vmem:[%s1 + $0x50] sm:$0xff]
  %v30 = vld [vmem:[%s1 + $0x58] sm:$0xff]
  %v31 = vld [vmem:[%s1 + $0x60] sm:$0xff]
  %v32 = vld [vmem:[%s1 + $0x68] sm:$0xff]
  %v33 = vld [vmem:[%s1 + $0x70] sm:$0xff]
  %v34 = vld [vmem:[%s1 + $0x78] sm:$0xff]
  %v35 = vld [vmem:[%s1 + $0x80] sm:$0xff]
  %v36 = vld [vmem:[%s1 + $0x88] sm:$0xff]
  %v37 = vld [vmem:[%s1 + $0x90] sm:$0xff]
  %v38 = vld [vmem:[%s1 + $0x98] sm:$0xff]
  %v39 = vld [vmem:[%s1 + $0xa0] sm:$0xff]
  %v40 = vld [vmem:[%s1 + $0xa8] sm:$0xff]
  %v41 = vld [vmem:[%s1 + $0xb0] sm:$0xff]
  %v42 = vld [vmem:[%s1 + $0xb8] sm:$0xff]
  %v43 = vld [vmem:[%s1 + $0xc0] sm:$0xff]
  %v44 = vld [vmem:[%s1 + $0xc8] sm:$0xff]
  %v45 = vld [vmem:[%s1 + $0xd0] sm:$0xff]
  %v46 = vld [vmem:[%s1 + $0xd8] sm:$0xff]
  %v47 = vld [vmem:[%s1 + $0xe0] sm:$0xff]
  %v48 = vld [vmem:[%s1 + $0xe8] sm:$0xff]
  %v49 = vld [vmem:[%s1 + $0xf0] sm:$0xff]
  %v50 = vld [vmem:[%s1 + $0xf8] sm:$0xff]
  %v51 = vld [vmem:[%s1 + $0x100] sm:$0xff]
  %v52 = vld [vmem:[%s1 + $0x108] sm:$0xff]
  %v53 = vld [vmem:[%s1 + $0x110] sm:$0xff]
  %v54 = vld [vmem:[%s1 + $0x118] sm:$0xff]
  %v55 = vld [vmem:[%s1 + $0x120] sm:$0xff]
  %v56 = vld [vmem:[%s1 + $0x128] sm:$0xff]
  %v57 = vld [vmem:[%s1 + $0x130] sm:$0xff]
  %v58 = vld [vmem:[%s1 + $0x138] sm:$0xff]
  %v59 = vld [vmem:[%s1 + $0x140] sm:$0xff]
  %v60 = vld [vmem:[%s1 + $0x148] sm:$0xff]
  %v61 = vld [vmem:[%s1 + $0x150] sm:$0xff]
  %v62 = vld [vmem:[%s1 + $0x158] sm:$0xff]
  %v63 = vld [vmem:[%s1 + $0x160] sm:$0xff]
  %v64 = vld [vmem:[%s1 + $0x168] sm:$0xff]
  %v65 = vld [vmem:[%s1 + $0x170] sm:$0xff]
  %v66 = vld [vmem:[%s1 + $0x178] sm:$0xff]
  %v67 = vld [vmem:[%s1 + $0x180] sm:$0xff]
  %v68 = vld [vmem:[%s1 + $0x188] sm:$0xff]
  %v69 = vld [vmem:[%s1 + $0x190] sm:$0xff]
  %v70 = vld [vmem:[%s1 + $0x198] sm:$0xff]
  %v71 = vld [vmem:[%s1 + $0x1a0] sm:$0xff]
  %v72 = vld [vmem:[%s1 + $0x1a8] sm:$0xff]
  %v73 = vld [vmem:[%s1 + $0x1b0] sm:$0xff]
  %v74 = vld [vmem:[%s1 + $0x1b8] sm:$0xff]
  %v75 = vld [vmem:[%s1 + $0x1c0] sm:$0xff]
  %v76 = vld [vmem:[%s1 + $0x1c8] sm:$0xff]
  %v77 = vld [vmem:[%s1 + $0x1d0] sm:$0xff]
  %v78 = vld [vmem:[%s1 + $0x1d8] sm:$0xff]
  %v79 = vld [vmem:[%s1 + $0x1e0] sm:$0xff]
  %v80 = vld [vmem:[%s1 + $0x1e8] sm:$0xff]
  %v81 = vld [vmem:[%s1 + $0x1f0] sm:$0xff]
  %v82 = vld [vmem:[%s1 + $0x1f8] sm:$0xff]
  %v83 = vld [vmem:[%s1 + $0x200] sm:$0xff]
  %v84 = vld [vmem:[%s1 + $0x208] sm:$0xff]
  %v85 = vld [vmem:[%s1 + $0x210] sm:$0xff]
  %v86 = vld [vmem:[%s1 + $0x218] sm:$0xff]
  %v87 = vld [vmem:[%s1 + $0x220] sm:$0xff]
  %v88 = vld [vmem:[%s1 + $0x228] sm:$0xff]
  %v89 = vld [vmem:[%s1 + $0x230] sm:$0xff]
  %v90 = vld [vmem:[%s1 + $0x238] sm:$0xff]
  %v91 = vld [vmem:[%s1 + $0x240] sm:$0xff]
  %v92 = vld [vmem:[%s1 + $0x248] sm:$0xff]
  %v93 = vld [vmem:[%s1 + $0x250] sm:$0xff]
  %v94 = vld [vmem:[%s1 + $0x258] sm:$0xff]
  %v95 = vld [vmem:[%s1 + $0x260] sm:$0xff]
  %v96 = vld [vmem:[%s1 + $0x268] sm:$0xff]
  %v97 = vld [vmem:[%s1 + $0x270] sm:$0xff]
  %v98 = vld [vmem:[%s1 + $0x278] sm:$0xff]
  %v99 = vld [vmem:[%s1 + $0x280] sm:$0xff]
  %v100 = vld [vmem:[%s1 + $0x288] sm:$0xff]
  %v101 = vld [vmem:[%s1 + $0x290] sm:$0xff]
  %v102 = vld [vmem:[%s1 + $0x298] sm:$0xff]
  %v103 = vld [vmem:[%s1 + $0x2a0] sm:$0xff]
  %v104 = vld [vmem:[%s1 + $0x2a8] sm:$0xff]
  %v105 = vld [vmem:[%s1 + $0x2b0] sm:$0xff]
  %v106 = vld [vmem:[%s1 + $0x2b8] sm:$0xff]
  %v107 = vld [vmem:[%s1 + $0x2c0] sm:$0xff]
  %v108 = vld [vmem:[%s1 + $0x2c8] sm:$0xff]
  %v109 = vld [vmem:[%s1 + $0x2d0] sm:$0xff]
  %v110 = vld [vmem:[%s1 + $0x2d8] sm:$0xff]
  %v111 = vld [vmem:[%s1 + $0x2e0] sm:$0xff]
  %v112 = vld [vmem:[%s1 + $0x2e8] sm:$0xff]
  %v113 = vld [vmem:[%s1 + $0x2f0] sm:$0xff]
  %v114 = vld [vmem:[%s1 + $0x2f8] sm:$0xff]
  %v115 = vld [vmem:[%s1 + $0x300] sm:$0xff]
  %v116 = vld [vmem:[%s1 + $0x308] sm:$0xff]
  %v117 = vld [vmem:[%s1 + $0x310] sm:$0xff]
  %v118 = vld [vmem:[%s1 + $0x318] sm:$0xff]
  %v119 = vld [vmem:[%s1 + $0x320] sm:$0xff]
  %v120 = vld [vmem:[%s1 + $0x328] sm:$0xff]
  %v121 = vld [vmem:[%s1 + $0x330] sm:$0xff]
  %v122 = vld [vmem:[%s1 + $0x338] sm:$0xff]
  %v123 = vld [vmem:[%s1 + $0x340] sm:$0xff]
  %v124 = vld [vmem:[%s1 + $0x348] sm:$0xff]
  %v125 = vld [vmem:[%s1 + $0x350] sm:$0xff]
  %v126 = vld [vmem:[%s1 + $0x358] sm:$0xff]
  %v127 = vld [vmem:[%s1 + $0x360] sm:$0xff]
  %v128 = vld [vmem:[%s1 + $0x368] sm:$0xff]
  %v129 = vld [vmem:[%s1 + $0x370] sm:$0xff]
  %v130 = vld [vmem:[%s1 + $0x378] sm:$0xff]
  %v131 = vld [vmem:[%s2] sm:$0xff]
  %v132 = vld [vmem:[%s2 + $0x8] sm:$0xff]
  %v133 = vld [vmem:[%s2 + $0x10] sm:$0xff]
  %v134 = vld [vmem:[%s2 + $0x18] sm:$0xff]
  %136 = vset.pattern.permute.xlu0 0
  %137 = vperm.xlu0 %136, %v131
  %v138 = vpop.permute.xlu0 %137
  %141 = vset.pattern.permute.xlu0 0
  %142 = vperm.xlu0 %141, %v132
  %v143 = vpop.permute.xlu0 %142
  %146 = vset.pattern.permute.xlu0 0
  %147 = vperm.xlu0 %146, %v133
  %v148 = vpop.permute.xlu0 %147
  %151 = vset.pattern.permute.xlu0 0
  %152 = vperm.xlu0 %151, %v134
  %v153 = vpop.permute.xlu0 %152
  %v159 = vunpack.c.l.b16 %v15
  %v160 = vunpack.c.l.b16 %v16
  %v161 = vunpack.c.l.b16 %v17
  %v162 = vunpack.c.l.b16 %v18
  %v163 = vpack.c.b16 %v160, %v159
  %v164 = vpack.c.b16 %v162, %v161
  %v279 = vunpack.c.l.b16 %v19
  %v280 = vunpack.c.h.b16 %v19
  %v281 = vunpack.c.l.b16 %v20
  %v282 = vunpack.c.h.b16 %v20
  %v283 = vunpack.c.l.b16 %v21
  %v284 = vunpack.c.h.b16 %v21
  %v285 = vunpack.c.l.b16 %v22
  %v286 = vunpack.c.h.b16 %v22
  %v287 = vunpack.c.l.b16 %v23
  %v288 = vunpack.c.h.b16 %v23
  %v289 = vunpack.c.l.b16 %v24
  %v290 = vunpack.c.h.b16 %v24
  %v291 = vunpack.c.l.b16 %v25
  %v292 = vunpack.c.h.b16 %v25
  %v293 = vunpack.c.l.b16 %v26
  %v294 = vunpack.c.h.b16 %v26
  %v295 = vunpack.c.l.b16 %v27
  %v296 = vunpack.c.h.b16 %v27
  %v297 = vunpack.c.l.b16 %v28
  %v298 = vunpack.c.h.b16 %v28
  %v299 = vunpack.c.l.b16 %v29
  %v300 = vunpack.c.h.b16 %v29
  %v301 = vunpack.c.l.b16 %v30
  %v302 = vunpack.c.h.b16 %v30
  %v303 = vunpack.c.l.b16 %v31
  %v304 = vunpack.c.h.b16 %v31
  %v305 = vunpack.c.l.b16 %v32
  %v306 = vunpack.c.h.b16 %v32
  %v307 = vunpack.c.l.b16 %v33
  %v308 = vunpack.c.h.b16 %v33
  %v309 = vunpack.c.l.b16 %v34
  %v310 = vunpack.c.h.b16 %v34
  %v311 = vunpack.c.l.b16 %v35
  %v312 = vunpack.c.h.b16 %v35
  %v313 = vunpack.c.l.b16 %v36
  %v314 = vunpack.c.h.b16 %v36
  %v315 = vunpack.c.l.b16 %v37
  %v316 = vunpack.c.h.b16 %v37
  %v317 = vunpack.c.l.b16 %v38
  %v318 = vunpack.c.h.b16 %v38
  %v319 = vunpack.c.l.b16 %v39
  %v320 = vunpack.c.h.b16 %v39
  %v321 = vunpack.c.l.b16 %v40
  %v322 = vunpack.c.h.b16 %v40
  %v323 = vunpack.c.l.b16 %v41
  %v324 = vunpack.c.h.b16 %v41
  %v325 = vunpack.c.l.b16 %v42
  %v326 = vunpack.c.h.b16 %v42
  %v327 = vunpack.c.l.b16 %v43
  %v328 = vunpack.c.h.b16 %v43
  %v329 = vunpack.c.l.b16 %v44
  %v330 = vunpack.c.h.b16 %v44
  %v331 = vunpack.c.l.b16 %v45
  %v332 = vunpack.c.h.b16 %v45
  %v333 = vunpack.c.l.b16 %v46
  %v334 = vunpack.c.h.b16 %v46
  %v335 = vunpack.c.l.b16 %v47
  %v336 = vunpack.c.h.b16 %v47
  %v337 = vunpack.c.l.b16 %v48
  %v338 = vunpack.c.h.b16 %v48
  %v339 = vunpack.c.l.b16 %v49
  %v340 = vunpack.c.h.b16 %v49
  %v341 = vunpack.c.l.b16 %v50
  %v342 = vunpack.c.h.b16 %v50
  %v343 = vunpack.c.l.b16 %v51
  %v344 = vunpack.c.h.b16 %v51
  %v345 = vunpack.c.l.b16 %v52
  %v346 = vunpack.c.h.b16 %v52
  %v347 = vunpack.c.l.b16 %v53
  %v348 = vunpack.c.h.b16 %v53
  %v349 = vunpack.c.l.b16 %v54
  %v350 = vunpack.c.h.b16 %v54
  %v351 = vunpack.c.l.b16 %v55
  %v352 = vunpack.c.h.b16 %v55
  %v353 = vunpack.c.l.b16 %v56
  %v354 = vunpack.c.h.b16 %v56
  %v355 = vunpack.c.l.b16 %v57
  %v356 = vunpack.c.h.b16 %v57
  %v357 = vunpack.c.l.b16 %v58
  %v358 = vunpack.c.h.b16 %v58
  %v359 = vunpack.c.l.b16 %v59
  %v360 = vunpack.c.h.b16 %v59
  %v361 = vunpack.c.l.b16 %v60
  %v362 = vunpack.c.h.b16 %v60
  %v363 = vunpack.c.l.b16 %v61
  %v364 = vunpack.c.h.b16 %v61
  %v365 = vunpack.c.l.b16 %v62
  %v366 = vunpack.c.h.b16 %v62
  %v367 = vunpack.c.l.b16 %v63
  %v368 = vunpack.c.h.b16 %v63
  %v369 = vunpack.c.l.b16 %v64
  %v370 = vunpack.c.h.b16 %v64
  %v371 = vunpack.c.l.b16 %v65
  %v372 = vunpack.c.h.b16 %v65
  %v373 = vunpack.c.l.b16 %v66
  %v374 = vunpack.c.h.b16 %v66
  %v375 = vunpack.c.l.b16 %v67
  %v376 = vunpack.c.h.b16 %v67
  %v377 = vunpack.c.l.b16 %v68
  %v378 = vunpack.c.h.b16 %v68
  %v379 = vunpack.c.l.b16 %v69
  %v380 = vunpack.c.h.b16 %v69
  %v381 = vunpack.c.l.b16 %v70
  %v382 = vunpack.c.h.b16 %v70
  %v383 = vunpack.c.l.b16 %v71
  %v384 = vunpack.c.h.b16 %v71
  %v385 = vunpack.c.l.b16 %v72
  %v386 = vunpack.c.h.b16 %v72
  %v387 = vunpack.c.l.b16 %v73
  %v388 = vunpack.c.h.b16 %v73
  %v389 = vunpack.c.l.b16 %v74
  %v390 = vunpack.c.h.b16 %v74
  %v391 = vunpack.c.l.b16 %v75
  %v392 = vunpack.c.h.b16 %v75
  %v393 = vunpack.c.l.b16 %v76
  %v394 = vunpack.c.h.b16 %v76
  %v395 = vunpack.c.l.b16 %v77
  %v396 = vunpack.c.h.b16 %v77
  %v397 = vunpack.c.l.b16 %v78
  %v398 = vunpack.c.h.b16 %v78
  %v399 = vunpack.c.l.b16 %v79
  %v400 = vunpack.c.h.b16 %v79
  %v401 = vunpack.c.l.b16 %v80
  %v402 = vunpack.c.h.b16 %v80
  %v403 = vunpack.c.l.b16 %v81
  %v404 = vunpack.c.h.b16 %v81
  %v405 = vunpack.c.l.b16 %v82
  %v406 = vunpack.c.h.b16 %v82
  %v407 = vunpack.c.l.b16 %v83
  %v408 = vunpack.c.h.b16 %v83
  %v409 = vunpack.c.l.b16 %v84
  %v410 = vunpack.c.h.b16 %v84
  %v411 = vunpack.c.l.b16 %v85
  %v412 = vunpack.c.h.b16 %v85
  %v413 = vunpack.c.l.b16 %v86
  %v414 = vunpack.c.h.b16 %v86
  %v415 = vunpack.c.l.b16 %v87
  %v416 = vunpack.c.h.b16 %v87
  %v417 = vunpack.c.l.b16 %v88
  %v418 = vunpack.c.h.b16 %v88
  %v419 = vunpack.c.l.b16 %v89
  %v420 = vunpack.c.h.b16 %v89
  %v421 = vunpack.c.l.b16 %v90
  %v422 = vunpack.c.h.b16 %v90
  %v423 = vunpack.c.l.b16 %v91
  %v424 = vunpack.c.h.b16 %v91
  %v425 = vunpack.c.l.b16 %v92
  %v426 = vunpack.c.h.b16 %v92
  %v427 = vunpack.c.l.b16 %v93
  %v428 = vunpack.c.h.b16 %v93
  %v429 = vunpack.c.l.b16 %v94
  %v430 = vunpack.c.h.b16 %v94
  %v431 = vunpack.c.l.b16 %v95
  %v432 = vunpack.c.h.b16 %v95
  %v433 = vunpack.c.l.b16 %v96
  %v434 = vunpack.c.h.b16 %v96
  %v435 = vunpack.c.l.b16 %v97
  %v436 = vunpack.c.h.b16 %v97
  %v437 = vunpack.c.l.b16 %v98
  %v438 = vunpack.c.h.b16 %v98
  %v439 = vunpack.c.l.b16 %v99
  %v440 = vunpack.c.h.b16 %v99
  %v441 = vunpack.c.l.b16 %v100
  %v442 = vunpack.c.h.b16 %v100
  %v443 = vunpack.c.l.b16 %v101
  %v444 = vunpack.c.h.b16 %v101
  %v445 = vunpack.c.l.b16 %v102
  %v446 = vunpack.c.h.b16 %v102
  %v447 = vunpack.c.l.b16 %v103
  %v448 = vunpack.c.h.b16 %v103
  %v449 = vunpack.c.l.b16 %v104
  %v450 = vunpack.c.h.b16 %v104
  %v451 = vunpack.c.l.b16 %v105
  %v452 = vunpack.c.h.b16 %v105
  %v453 = vunpack.c.l.b16 %v106
  %v454 = vunpack.c.h.b16 %v106
  %v455 = vunpack.c.l.b16 %v107
  %v456 = vunpack.c.h.b16 %v107
  %v457 = vunpack.c.l.b16 %v108
  %v458 = vunpack.c.h.b16 %v108
  %v459 = vunpack.c.l.b16 %v109
  %v460 = vunpack.c.h.b16 %v109
  %v461 = vunpack.c.l.b16 %v110
  %v462 = vunpack.c.h.b16 %v110
  %v463 = vunpack.c.l.b16 %v111
  %v464 = vunpack.c.h.b16 %v111
  %v465 = vunpack.c.l.b16 %v112
  %v466 = vunpack.c.h.b16 %v112
  %v467 = vunpack.c.l.b16 %v113
  %v468 = vunpack.c.h.b16 %v113
  %v469 = vunpack.c.l.b16 %v114
  %v470 = vunpack.c.h.b16 %v114
  %v471 = vunpack.c.l.b16 %v115
  %v472 = vunpack.c.h.b16 %v115
  %v473 = vunpack.c.l.b16 %v116
  %v474 = vunpack.c.h.b16 %v116
  %v475 = vunpack.c.l.b16 %v117
  %v476 = vunpack.c.h.b16 %v117
  %v477 = vunpack.c.l.b16 %v118
  %v478 = vunpack.c.h.b16 %v118
  %v479 = vunpack.c.l.b16 %v119
  %v480 = vunpack.c.h.b16 %v119
  %v481 = vunpack.c.l.b16 %v120
  %v482 = vunpack.c.h.b16 %v120
  %v483 = vunpack.c.l.b16 %v121
  %v484 = vunpack.c.h.b16 %v121
  %v485 = vunpack.c.l.b16 %v122
  %v486 = vunpack.c.h.b16 %v122
  %v487 = vunpack.c.l.b16 %v123
  %v488 = vunpack.c.h.b16 %v123
  %v489 = vunpack.c.l.b16 %v124
  %v490 = vunpack.c.h.b16 %v124
  %v491 = vunpack.c.l.b16 %v125
  %v492 = vunpack.c.h.b16 %v125
  %v493 = vunpack.c.l.b16 %v126
  %v494 = vunpack.c.h.b16 %v126
  %v495 = vunpack.c.l.b16 %v127
  %v496 = vunpack.c.h.b16 %v127
  %v497 = vunpack.c.l.b16 %v128
  %v498 = vunpack.c.h.b16 %v128
  %v499 = vunpack.c.l.b16 %v129
  %v500 = vunpack.c.h.b16 %v129
  %v501 = vunpack.c.l.b16 %v130
  %v502 = vunpack.c.h.b16 %v130
  %v503 = vpack.c.b16 %v293, %v279
  %v504 = vpack.c.b16 %v294, %v280
  %v505 = vpack.c.b16 %v295, %v281
  %v506 = vpack.c.b16 %v296, %v282
  %v507 = vpack.c.b16 %v297, %v283
  %v508 = vpack.c.b16 %v298, %v284
  %v509 = vpack.c.b16 %v299, %v285
  %v510 = vpack.c.b16 %v300, %v286
  %v511 = vpack.c.b16 %v301, %v287
  %v512 = vpack.c.b16 %v302, %v288
  %v513 = vpack.c.b16 %v303, %v289
  %v514 = vpack.c.b16 %v304, %v290
  %v515 = vpack.c.b16 %v305, %v291
  %v516 = vpack.c.b16 %v306, %v292
  %v517 = vpack.c.b16 %v321, %v307
  %v518 = vpack.c.b16 %v322, %v308
  %v519 = vpack.c.b16 %v323, %v309
  %v520 = vpack.c.b16 %v324, %v310
  %v521 = vpack.c.b16 %v325, %v311
  %v522 = vpack.c.b16 %v326, %v312
  %v523 = vpack.c.b16 %v327, %v313
  %v524 = vpack.c.b16 %v328, %v314
  %v525 = vpack.c.b16 %v329, %v315
  %v526 = vpack.c.b16 %v330, %v316
  %v527 = vpack.c.b16 %v331, %v317
  %v528 = vpack.c.b16 %v332, %v318
  %v529 = vpack.c.b16 %v333, %v319
  %v530 = vpack.c.b16 %v334, %v320
  %v531 = vpack.c.b16 %v349, %v335
  %v532 = vpack.c.b16 %v350, %v336
  %v533 = vpack.c.b16 %v351, %v337
  %v534 = vpack.c.b16 %v352, %v338
  %v535 = vpack.c.b16 %v353, %v339
  %v536 = vpack.c.b16 %v354, %v340
  %v537 = vpack.c.b16 %v355, %v341
  %v538 = vpack.c.b16 %v356, %v342
  %v539 = vpack.c.b16 %v357, %v343
  %v540 = vpack.c.b16 %v358, %v344
  %v541 = vpack.c.b16 %v359, %v345
  %v542 = vpack.c.b16 %v360, %v346
  %v543 = vpack.c.b16 %v361, %v347
  %v544 = vpack.c.b16 %v362, %v348
  %v545 = vpack.c.b16 %v377, %v363
  %v546 = vpack.c.b16 %v378, %v364
  %v547 = vpack.c.b16 %v379, %v365
  %v548 = vpack.c.b16 %v380, %v366
  %v549 = vpack.c.b16 %v381, %v367
  %v550 = vpack.c.b16 %v382, %v368
  %v551 = vpack.c.b16 %v383, %v369
  %v552 = vpack.c.b16 %v384, %v370
  %v553 = vpack.c.b16 %v385, %v371
  %v554 = vpack.c.b16 %v386, %v372
  %v555 = vpack.c.b16 %v387, %v373
  %v556 = vpack.c.b16 %v388, %v374
  %v557 = vpack.c.b16 %v389, %v375
  %v558 = vpack.c.b16 %v390, %v376
  %v559 = vpack.c.b16 %v405, %v391
  %v560 = vpack.c.b16 %v406, %v392
  %v561 = vpack.c.b16 %v407, %v393
  %v562 = vpack.c.b16 %v408, %v394
  %v563 = vpack.c.b16 %v409, %v395
  %v564 = vpack.c.b16 %v410, %v396
  %v565 = vpack.c.b16 %v411, %v397
  %v566 = vpack.c.b16 %v412, %v398
  %v567 = vpack.c.b16 %v413, %v399
  %v568 = vpack.c.b16 %v414, %v400
  %v569 = vpack.c.b16 %v415, %v401
  %v570 = vpack.c.b16 %v416, %v402
  %v571 = vpack.c.b16 %v417, %v403
  %v572 = vpack.c.b16 %v418, %v404
  %v573 = vpack.c.b16 %v433, %v419
  %v574 = vpack.c.b16 %v434, %v420
  %v575 = vpack.c.b16 %v435, %v421
  %v576 = vpack.c.b16 %v436, %v422
  %v577 = vpack.c.b16 %v437, %v423
  %v578 = vpack.c.b16 %v438, %v424
  %v579 = vpack.c.b16 %v439, %v425
  %v580 = vpack.c.b16 %v440, %v426
  %v581 = vpack.c.b16 %v441, %v427
  %v582 = vpack.c.b16 %v442, %v428
  %v583 = vpack.c.b16 %v443, %v429
  %v584 = vpack.c.b16 %v444, %v430
  %v585 = vpack.c.b16 %v445, %v431
  %v586 = vpack.c.b16 %v446, %v432
  %v587 = vpack.c.b16 %v461, %v447
  %v588 = vpack.c.b16 %v462, %v448
  %v589 = vpack.c.b16 %v463, %v449
  %v590 = vpack.c.b16 %v464, %v450
  %v591 = vpack.c.b16 %v465, %v451
  %v592 = vpack.c.b16 %v466, %v452
  %v593 = vpack.c.b16 %v467, %v453
  %v594 = vpack.c.b16 %v468, %v454
  %v595 = vpack.c.b16 %v469, %v455
  %v596 = vpack.c.b16 %v470, %v456
  %v597 = vpack.c.b16 %v471, %v457
  %v598 = vpack.c.b16 %v472, %v458
  %v599 = vpack.c.b16 %v473, %v459
  %v600 = vpack.c.b16 %v474, %v460
  %v601 = vpack.c.b16 %v489, %v475
  %v602 = vpack.c.b16 %v490, %v476
  %v603 = vpack.c.b16 %v491, %v477
  %v604 = vpack.c.b16 %v492, %v478
  %v605 = vpack.c.b16 %v493, %v479
  %v606 = vpack.c.b16 %v494, %v480
  %v607 = vpack.c.b16 %v495, %v481
  %v608 = vpack.c.b16 %v496, %v482
  %v609 = vpack.c.b16 %v497, %v483
  %v610 = vpack.c.b16 %v498, %v484
  %v611 = vpack.c.b16 %v499, %v485
  %v612 = vpack.c.b16 %v500, %v486
  %v613 = vpack.c.b16 %v501, %v487
  %v614 = vpack.c.b16 %v502, %v488
  %727 = vmatprep.subr.bf16.mxu0 %v504
  %728 = vmatpush1.bf16.msra.mxu0 %v503
  %729 = vmatprep.subr.bf16.mxu0 %v518
  %730 = vmatpush1.bf16.msra.mxu0 %v517
  %731 = vmatprep.subr.bf16.mxu0 %v532
  %732 = vmatpush1.bf16.msra.mxu0 %v531
  %733 = vmatprep.subr.bf16.mxu0 %v546
  %734 = vmatpush1.bf16.msra.mxu0 %v545
  %735 = vmatprep.subr.bf16.mxu0 %v560
  %736 = vmatpush1.bf16.msra.mxu0 %v559
  %737 = vmatprep.subr.bf16.mxu0 %v574
  %738 = vmatpush1.bf16.msra.mxu0 %v573
  %739 = vmatprep.subr.bf16.mxu0 %v588
  %740 = vmatpush1.bf16.msra.mxu0 %v587
  %741 = vmatprep.subr.bf16.mxu0 %v602
  %742 = vmatpush1.bf16.msra.mxu0 %v601
  %743 = vmatprep.subr.bf16.mxu0 0
  %744 = vmatpush1.bf16.msra.mxu0 0
  %745 = vmatprep.subr.bf16.mxu0 0
  %746 = vmatpush1.bf16.msra.mxu0 0
  %747 = vmatprep.subr.bf16.mxu0 0
  %748 = vmatpush1.bf16.msra.mxu0 0
  %749 = vmatprep.subr.bf16.mxu0 0
  %750 = vmatpush1.bf16.msra.mxu0 0
  %751 = vmatprep.subr.bf16.mxu0 0
  %752 = vmatpush1.bf16.msra.mxu0 0
  %753 = vmatprep.subr.bf16.mxu0 0
  %754 = vmatpush1.bf16.msra.mxu0 0
  %755 = vmatprep.subr.bf16.mxu0 0
  %756 = vmatpush1.bf16.msra.mxu0 0
  %757 = vmatprep.subr.bf16.mxu0 0
  %758 = vmatpush1.bf16.msra.mxu0 0
  %759 = vmatprep.mubr.bf16.mxu0 0
  %760 = vmatmul.mubr.bf16.gmra.mrb[0].mxu0 %v163
  %v761 = vpop.f32.mrb[0].mxu0
  %v762 = vadd.f32 %v138, %v761
  %v763 = vpop.f32.mrb[0].mxu0
  %v764 = vadd.f32 %v138, %v763
  %v765 = vpop.f32.mrb[0].mxu0
  %v766 = vadd.f32 %v143, %v765
  %v767 = vpop.f32.mrb[0].mxu0
  %v768 = vadd.f32 %v143, %v767
  %769 = vmatprep.mubr.bf16.mxu0 0
  %770 = vmatmul.mubr.bf16.gmra.mrb[0].mxu0 %v164
  %v771 = vpop.f32.mrb[0].mxu0
  %v772 = vadd.f32 %v148, %v771
  %v773 = vpop.f32.mrb[0].mxu0
  %v774 = vadd.f32 %v148, %v773
  %v775 = vpop.f32.mrb[0].mxu0
  %v776 = vadd.f32 %v153, %v775
  %v777 = vpop.f32.mrb[0].mxu0
  %v778 = vadd.f32 %v153, %v777
  %779 = vdwg.mxu0
  %780 = vmatprep.subr.bf16.mxu0 %v506
  %781 = vmatpush1.bf16.msra.mxu0 %v505
  %782 = vmatprep.subr.bf16.mxu0 %v520
  %783 = vmatpush1.bf16.msra.mxu0 %v519
  %784 = vmatprep.subr.bf16.mxu0 %v534
  %785 = vmatpush1.bf16.msra.mxu0 %v533
  %786 = vmatprep.subr.bf16.mxu0 %v548
  %787 = vmatpush1.bf16.msra.mxu0 %v547
  %788 = vmatprep.subr.bf16.mxu0 %v562
  %789 = vmatpush1.bf16.msra.mxu0 %v561
  %790 = vmatprep.subr.bf16.mxu0 %v576
  %791 = vmatpush1.bf16.msra.mxu0 %v575
  %792 = vmatprep.subr.bf16.mxu0 %v590
  %793 = vmatpush1.bf16.msra.mxu0 %v589
  %794 = vmatprep.subr.bf16.mxu0 %v604
  %795 = vmatpush1.bf16.msra.mxu0 %v603
  %796 = vmatprep.subr.bf16.mxu0 0
  %797 = vmatpush1.bf16.msra.mxu0 0
  %798 = vmatprep.subr.bf16.mxu0 0
  %799 = vmatpush1.bf16.msra.mxu0 0
  %800 = vmatprep.subr.bf16.mxu0 0
  %801 = vmatpush1.bf16.msra.mxu0 0
  %802 = vmatprep.subr.bf16.mxu0 0
  %803 = vmatpush1.bf16.msra.mxu0 0
  %804 = vmatprep.subr.bf16.mxu0 0
  %805 = vmatpush1.bf16.msra.mxu0 0
  %806 = vmatprep.subr.bf16.mxu0 0
  %807 = vmatpush1.bf16.msra.mxu0 0
  %808 = vmatprep.subr.bf16.mxu0 0
  %809 = vmatpush1.bf16.msra.mxu0 0
  %810 = vmatprep.subr.bf16.mxu0 0
  %811 = vmatpush1.bf16.msra.mxu0 0
  %812 = vmatprep.mubr.bf16.mxu0 0
  %813 = vmatmul.mubr.bf16.gmra.mrb[0].mxu0 %v163
  %v814 = vpop.f32.mrb[0].mxu0
  %v815 = vadd.f32 %v138, %v814
  %v816 = vpop.f32.mrb[0].mxu0
  %v817 = vadd.f32 %v138, %v816
  %v818 = vpop.f32.mrb[0].mxu0
  %v819 = vadd.f32 %v143, %v818
  %v820 = vpop.f32.mrb[0].mxu0
  %v821 = vadd.f32 %v143, %v820
  %822 = vmatprep.mubr.bf16.mxu0 0
  %823 = vmatmul.mubr.bf16.gmra.mrb[0].mxu0 %v164
  %v824 = vpop.f32.mrb[0].mxu0
  %v825 = vadd.f32 %v148, %v824
  %v826 = vpop.f32.mrb[0].mxu0
  %v827 = vadd.f32 %v148, %v826
  %v828 = vpop.f32.mrb[0].mxu0
  %v829 = vadd.f32 %v153, %v828
  %v830 = vpop.f32.mrb[0].mxu0
  %v831 = vadd.f32 %v153, %v830
  %832 = vdwg.mxu0
  %833 = vmatprep.subr.bf16.mxu0 %v508
  %834 = vmatpush1.bf16.msra.mxu0 %v507
  %835 = vmatprep.subr.bf16.mxu0 %v522
  %836 = vmatpush1.bf16.msra.mxu0 %v521
  %837 = vmatprep.subr.bf16.mxu0 %v536
  %838 = vmatpush1.bf16.msra.mxu0 %v535
  %839 = vmatprep.subr.bf16.mxu0 %v550
  %840 = vmatpush1.bf16.msra.mxu0 %v549
  %841 = vmatprep.subr.bf16.mxu0 %v564
  %842 = vmatpush1.bf16.msra.mxu0 %v563
  %843 = vmatprep.subr.bf16.mxu0 %v578
  %844 = vmatpush1.bf16.msra.mxu0 %v577
  %845 = vmatprep.subr.bf16.mxu0 %v592
  %846 = vmatpush1.bf16.msra.mxu0 %v591
  %847 = vmatprep.subr.bf16.mxu0 %v606
  %848 = vmatpush1.bf16.msra.mxu0 %v605
  %849 = vmatprep.subr.bf16.mxu0 0
  %850 = vmatpush1.bf16.msra.mxu0 0
  %851 = vmatprep.subr.bf16.mxu0 0
  %852 = vmatpush1.bf16.msra.mxu0 0
  %853 = vmatprep.subr.bf16.mxu0 0
  %854 = vmatpush1.bf16.msra.mxu0 0
  %855 = vmatprep.subr.bf16.mxu0 0
  %856 = vmatpush1.bf16.msra.mxu0 0
  %857 = vmatprep.subr.bf16.mxu0 0
  %858 = vmatpush1.bf16.msra.mxu0 0
  %859 = vmatprep.subr.bf16.mxu0 0
  %860 = vmatpush1.bf16.msra.mxu0 0
  %861 = vmatprep.subr.bf16.mxu0 0
  %862 = vmatpush1.bf16.msra.mxu0 0
  %863 = vmatprep.subr.bf16.mxu0 0
  %864 = vmatpush1.bf16.msra.mxu0 0
  %865 = vmatprep.mubr.bf16.mxu0 0
  %866 = vmatmul.mubr.bf16.gmra.mrb[0].mxu0 %v163
  %v867 = vpop.f32.mrb[0].mxu0
  %v868 = vadd.f32 %v138, %v867
  %v869 = vpop.f32.mrb[0].mxu0
  %v870 = vadd.f32 %v138, %v869
  %v871 = vpop.f32.mrb[0].mxu0
  %v872 = vadd.f32 %v143, %v871
  %v873 = vpop.f32.mrb[0].mxu0
  %v874 = vadd.f32 %v143, %v873
  %875 = vmatprep.mubr.bf16.mxu0 0
  %876 = vmatmul.mubr.bf16.gmra.mrb[0].mxu0 %v164
  %v877 = vpop.f32.mrb[0].mxu0
  %v878 = vadd.f32 %v148, %v877
  %v879 = vpop.f32.mrb[0].mxu0
  %v880 = vadd.f32 %v148, %v879
  %v881 = vpop.f32.mrb[0].mxu0
  %v882 = vadd.f32 %v153, %v881
  %v883 = vpop.f32.mrb[0].mxu0
  %v884 = vadd.f32 %v153, %v883
  %885 = vdwg.mxu0
  %886 = vmatprep.subr.bf16.mxu0 %v510
  %887 = vmatpush1.bf16.msra.mxu0 %v509
  %888 = vmatprep.subr.bf16.mxu0 %v524
  %889 = vmatpush1.bf16.msra.mxu0 %v523
  %890 = vmatprep.subr.bf16.mxu0 %v538
  %891 = vmatpush1.bf16.msra.mxu0 %v537
  %892 = vmatprep.subr.bf16.mxu0 %v552
  %893 = vmatpush1.bf16.msra.mxu0 %v551
  %894 = vmatprep.subr.bf16.mxu0 %v566
  %895 = vmatpush1.bf16.msra.mxu0 %v565
  %896 = vmatprep.subr.bf16.mxu0 %v580
  %897 = vmatpush1.bf16.msra.mxu0 %v579
  %898 = vmatprep.subr.bf16.mxu0 %v594
  %899 = vmatpush1.bf16.msra.mxu0 %v593
  %900 = vmatprep.subr.bf16.mxu0 %v608
  %901 = vmatpush1.bf16.msra.mxu0 %v607
  %902 = vmatprep.subr.bf16.mxu0 0
  %903 = vmatpush1.bf16.msra.mxu0 0
  %904 = vmatprep.subr.bf16.mxu0 0
  %905 = vmatpush1.bf16.msra.mxu0 0
  %906 = vmatprep.subr.bf16.mxu0 0
  %907 = vmatpush1.bf16.msra.mxu0 0
  %908 = vmatprep.subr.bf16.mxu0 0
  %909 = vmatpush1.bf16.msra.mxu0 0
  %910 = vmatprep.subr.bf16.mxu0 0
  %911 = vmatpush1.bf16.msra.mxu0 0
  %912 = vmatprep.subr.bf16.mxu0 0
  %913 = vmatpush1.bf16.msra.mxu0 0
  %914 = vmatprep.subr.bf16.mxu0 0
  %915 = vmatpush1.bf16.msra.mxu0 0
  %916 = vmatprep.subr.bf16.mxu0 0
  %917 = vmatpush1.bf16.msra.mxu0 0
  %918 = vmatprep.mubr.bf16.mxu0 0
  %919 = vmatmul.mubr.bf16.gmra.mrb[0].mxu0 %v163
  %v920 = vpop.f32.mrb[0].mxu0
  %v921 = vadd.f32 %v138, %v920
  %v922 = vpop.f32.mrb[0].mxu0
  %v923 = vadd.f32 %v138, %v922
  %v924 = vpop.f32.mrb[0].mxu0
  %v925 = vadd.f32 %v143, %v924
  %v926 = vpop.f32.mrb[0].mxu0
  %v927 = vadd.f32 %v143, %v926
  %928 = vmatprep.mubr.bf16.mxu0 0
  %929 = vmatmul.mubr.bf16.gmra.mrb[0].mxu0 %v164
  %v930 = vpop.f32.mrb[0].mxu0
  %v931 = vadd.f32 %v148, %v930
  %v932 = vpop.f32.mrb[0].mxu0
  %v933 = vadd.f32 %v148, %v932
  %v934 = vpop.f32.mrb[0].mxu0
  %v935 = vadd.f32 %v153, %v934
  %v936 = vpop.f32.mrb[0].mxu0
  %v937 = vadd.f32 %v153, %v936
  %938 = vdwg.mxu0
  %939 = vmatprep.subr.bf16.mxu0 %v512
  %940 = vmatpush1.bf16.msra.mxu0 %v511
  %941 = vmatprep.subr.bf16.mxu0 %v526
  %942 = vmatpush1.bf16.msra.mxu0 %v525
  %943 = vmatprep.subr.bf16.mxu0 %v540
  %944 = vmatpush1.bf16.msra.mxu0 %v539
  %945 = vmatprep.subr.bf16.mxu0 %v554
  %946 = vmatpush1.bf16.msra.mxu0 %v553
  %947 = vmatprep.subr.bf16.mxu0 %v568
  %948 = vmatpush1.bf16.msra.mxu0 %v567
  %949 = vmatprep.subr.bf16.mxu0 %v582
  %950 = vmatpush1.bf16.msra.mxu0 %v581
  %951 = vmatprep.subr.bf16.mxu0 %v596
  %952 = vmatpush1.bf16.msra.mxu0 %v595
  %953 = vmatprep.subr.bf16.mxu0 %v610
  %954 = vmatpush1.bf16.msra.mxu0 %v609
  %955 = vmatprep.subr.bf16.mxu0 0
  %956 = vmatpush1.bf16.msra.mxu0 0
  %957 = vmatprep.subr.bf16.mxu0 0
  %958 = vmatpush1.bf16.msra.mxu0 0
  %959 = vmatprep.subr.bf16.mxu0 0
  %960 = vmatpush1.bf16.msra.mxu0 0
  %961 = vmatprep.subr.bf16.mxu0 0
  %962 = vmatpush1.bf16.msra.mxu0 0
  %963 = vmatprep.subr.bf16.mxu0 0
  %964 = vmatpush1.bf16.msra.mxu0 0
  %965 = vmatprep.subr.bf16.mxu0 0
  %966 = vmatpush1.bf16.msra.mxu0 0
  %967 = vmatprep.subr.bf16.mxu0 0
  %968 = vmatpush1.bf16.msra.mxu0 0
  %969 = vmatprep.subr.bf16.mxu0 0
  %970 = vmatpush1.bf16.msra.mxu0 0
  %971 = vmatprep.mubr.bf16.mxu0 0
  %972 = vmatmul.mubr.bf16.gmra.mrb[0].mxu0 %v163
  %v973 = vpop.f32.mrb[0].mxu0
  %v974 = vadd.f32 %v138, %v973
  %v975 = vpop.f32.mrb[0].mxu0
  %v976 = vadd.f32 %v138, %v975
  %v977 = vpop.f32.mrb[0].mxu0
  %v978 = vadd.f32 %v143, %v977
  %v979 = vpop.f32.mrb[0].mxu0
  %v980 = vadd.f32 %v143, %v979
  %981 = vmatprep.mubr.bf16.mxu0 0
  %982 = vmatmul.mubr.bf16.gmra.mrb[0].mxu0 %v164
  %v983 = vpop.f32.mrb[0].mxu0
  %v984 = vadd.f32 %v148, %v983
  %v985 = vpop.f32.mrb[0].mxu0
  %v986 = vadd.f32 %v148, %v985
  %v987 = vpop.f32.mrb[0].mxu0
  %v988 = vadd.f32 %v153, %v987
  %v989 = vpop.f32.mrb[0].mxu0
  %v990 = vadd.f32 %v153, %v989
  %991 = vdwg.mxu0
  %992 = vmatprep.subr.bf16.mxu0 %v514
  %993 = vmatpush1.bf16.msra.mxu0 %v513
  %994 = vmatprep.subr.bf16.mxu0 %v528
  %995 = vmatpush1.bf16.msra.mxu0 %v527
  %996 = vmatprep.subr.bf16.mxu0 %v542
  %997 = vmatpush1.bf16.msra.mxu0 %v541
  %998 = vmatprep.subr.bf16.mxu0 %v556
  %999 = vmatpush1.bf16.msra.mxu0 %v555
  %1000 = vmatprep.subr.bf16.mxu0 %v570
  %1001 = vmatpush1.bf16.msra.mxu0 %v569
  %1002 = vmatprep.subr.bf16.mxu0 %v584
  %1003 = vmatpush1.bf16.msra.mxu0 %v583
  %1004 = vmatprep.subr.bf16.mxu0 %v598
  %1005 = vmatpush1.bf16.msra.mxu0 %v597
  %1006 = vmatprep.subr.bf16.mxu0 %v612
  %1007 = vmatpush1.bf16.msra.mxu0 %v611
  %1008 = vmatprep.subr.bf16.mxu0 0
  %1009 = vmatpush1.bf16.msra.mxu0 0
  %1010 = vmatprep.subr.bf16.mxu0 0
  %1011 = vmatpush1.bf16.msra.mxu0 0
  %1012 = vmatprep.subr.bf16.mxu0 0
  %1013 = vmatpush1.bf16.msra.mxu0 0
  %1014 = vmatprep.subr.bf16.mxu0 0
  %1015 = vmatpush1.bf16.msra.mxu0 0
  %1016 = vmatprep.subr.bf16.mxu0 0
  %1017 = vmatpush1.bf16.msra.mxu0 0
  %1018 = vmatprep.subr.bf16.mxu0 0
  %1019 = vmatpush1.bf16.msra.mxu0 0
  %1020 = vmatprep.subr.bf16.mxu0 0
  %1021 = vmatpush1.bf16.msra.mxu0 0
  %1022 = vmatprep.subr.bf16.mxu0 0
  %1023 = vmatpush1.bf16.msra.mxu0 0
  %1024 = vmatprep.mubr.bf16.mxu0 0
  %1025 = vmatmul.mubr.bf16.gmra.mrb[0].mxu0 %v163
  %v1026 = vpop.f32.mrb[0].mxu0
  %v1027 = vadd.f32 %v138, %v1026
  %v1028 = vpop.f32.mrb[0].mxu0
  %v1029 = vadd.f32 %v138, %v1028
  %v1030 = vpop.f32.mrb[0].mxu0
  %v1031 = vadd.f32 %v143, %v1030
  %v1032 = vpop.f32.mrb[0].mxu0
  %v1033 = vadd.f32 %v143, %v1032
  %1034 = vmatprep.mubr.bf16.mxu0 0
  %1035 = vmatmul.mubr.bf16.gmra.mrb[0].mxu0 %v164
  %v1036 = vpop.f32.mrb[0].mxu0
  %v1037 = vadd.f32 %v148, %v1036
  %v1038 = vpop.f32.mrb[0].mxu0
  %v1039 = vadd.f32 %v148, %v1038
  %v1040 = vpop.f32.mrb[0].mxu0
  %v1041 = vadd.f32 %v153, %v1040
  %v1042 = vpop.f32.mrb[0].mxu0
  %v1043 = vadd.f32 %v153, %v1042
  %1044 = vdwg.mxu0
  %1045 = vmatprep.subr.bf16.mxu0 %v516
  %1046 = vmatpush1.bf16.msra.mxu0 %v515
  %1047 = vmatprep.subr.bf16.mxu0 %v530
  %1048 = vmatpush1.bf16.msra.mxu0 %v529
  %1049 = vmatprep.subr.bf16.mxu0 %v544
  %1050 = vmatpush1.bf16.msra.mxu0 %v543
  %1051 = vmatprep.subr.bf16.mxu0 %v558
  %1052 = vmatpush1.bf16.msra.mxu0 %v557
  %1053 = vmatprep.subr.bf16.mxu0 %v572
  %1054 = vmatpush1.bf16.msra.mxu0 %v571
  %1055 = vmatprep.subr.bf16.mxu0 %v586
  %1056 = vmatpush1.bf16.msra.mxu0 %v585
  %1057 = vmatprep.subr.bf16.mxu0 %v600
  %1058 = vmatpush1.bf16.msra.mxu0 %v599
  %1059 = vmatprep.subr.bf16.mxu0 %v614
  %1060 = vmatpush1.bf16.msra.mxu0 %v613
  %1061 = vmatprep.subr.bf16.mxu0 0
  %1062 = vmatpush1.bf16.msra.mxu0 0
  %1063 = vmatprep.subr.bf16.mxu0 0
  %1064 = vmatpush1.bf16.msra.mxu0 0
  %1065 = vmatprep.subr.bf16.mxu0 0
  %1066 = vmatpush1.bf16.msra.mxu0 0
  %1067 = vmatprep.subr.bf16.mxu0 0
  %1068 = vmatpush1.bf16.msra.mxu0 0
  %1069 = vmatprep.subr.bf16.mxu0 0
  %1070 = vmatpush1.bf16.msra.mxu0 0
  %1071 = vmatprep.subr.bf16.mxu0 0
  %1072 = vmatpush1.bf16.msra.mxu0 0
  %1073 = vmatprep.subr.bf16.mxu0 0
  %1074 = vmatpush1.bf16.msra.mxu0 0
  %1075 = vmatprep.subr.bf16.mxu0 0
  %1076 = vmatpush1.bf16.msra.mxu0 0
  %1077 = vmatprep.mubr.bf16.mxu0 0
  %1078 = vmatmul.mubr.bf16.gmra.mrb[0].mxu0 %v163
  %v1079 = vpop.f32.mrb[0].mxu0
  %v1080 = vadd.f32 %v138, %v1079
  %v1081 = vpop.f32.mrb[0].mxu0
  %v1082 = vadd.f32 %v138, %v1081
  %v1083 = vpop.f32.mrb[0].mxu0
  %v1084 = vadd.f32 %v143, %v1083
  %v1085 = vpop.f32.mrb[0].mxu0
  %v1086 = vadd.f32 %v143, %v1085
  %1087 = vmatprep.mubr.bf16.mxu0 0
  %1088 = vmatmul.mubr.bf16.gmra.mrb[0].mxu0 %v164
  %v1089 = vpop.f32.mrb[0].mxu0
  %v1090 = vadd.f32 %v148, %v1089
  %v1091 = vpop.f32.mrb[0].mxu0
  %v1092 = vadd.f32 %v148, %v1091
  %v1093 = vpop.f32.mrb[0].mxu0
  %v1094 = vadd.f32 %v153, %v1093
  %v1095 = vpop.f32.mrb[0].mxu0
  %v1096 = vadd.f32 %v153, %v1095
  %1097 = vdwg.mxu0
  %v1098 = vmax.f32 %v762, 0.0
  %v1099 = vmax.f32 %v764, 0.0
  %v1100 = vmax.f32 %v815, 0.0
  %v1101 = vmax.f32 %v817, 0.0
  %v1102 = vmax.f32 %v868, 0.0
  %v1103 = vmax.f32 %v870, 0.0
  %v1104 = vmax.f32 %v921, 0.0
  %v1105 = vmax.f32 %v923, 0.0
  %v1106 = vmax.f32 %v974, 0.0
  %v1107 = vmax.f32 %v976, 0.0
  %v1108 = vmax.f32 %v1027, 0.0
  %v1109 = vmax.f32 %v1029, 0.0
  %v1110 = vmax.f32 %v1080, 0.0
  %v1111 = vmax.f32 %v1082, 0.0
  %v1112 = vmax.f32 %v766, 0.0
  %v1113 = vmax.f32 %v768, 0.0
  %v1114 = vmax.f32 %v819, 0.0
  %v1115 = vmax.f32 %v821, 0.0
  %v1116 = vmax.f32 %v872, 0.0
  %v1117 = vmax.f32 %v874, 0.0
  %v1118 = vmax.f32 %v925, 0.0
  %v1119 = vmax.f32 %v927, 0.0
  %v1120 = vmax.f32 %v978, 0.0
  %v1121 = vmax.f32 %v980, 0.0
  %v1122 = vmax.f32 %v1031, 0.0
  %v1123 = vmax.f32 %v1033, 0.0
  %v1124 = vmax.f32 %v1084, 0.0
  %v1125 = vmax.f32 %v1086, 0.0
  %v1126 = vmax.f32 %v772, 0.0
  %v1127 = vmax.f32 %v774, 0.0
  %v1128 = vmax.f32 %v825, 0.0
  %v1129 = vmax.f32 %v827, 0.0
  %v1130 = vmax.f32 %v878, 0.0
  %v1131 = vmax.f32 %v880, 0.0
  %v1132 = vmax.f32 %v931, 0.0
  %v1133 = vmax.f32 %v933, 0.0
  %v1134 = vmax.f32 %v984, 0.0
  %v1135 = vmax.f32 %v986, 0.0
  %v1136 = vmax.f32 %v1037, 0.0
  %v1137 = vmax.f32 %v1039, 0.0
  %v1138 = vmax.f32 %v1090, 0.0
  %v1139 = vmax.f32 %v1092, 0.0
  %v1140 = vmax.f32 %v776, 0.0
  %v1141 = vmax.f32 %v778, 0.0
  %v1142 = vmax.f32 %v829, 0.0
  %v1143 = vmax.f32 %v831, 0.0
  %v1144 = vmax.f32 %v882, 0.0
  %v1145 = vmax.f32 %v884, 0.0
  %v1146 = vmax.f32 %v935, 0.0
  %v1147 = vmax.f32 %v937, 0.0
  %v1148 = vmax.f32 %v988, 0.0
  %v1149 = vmax.f32 %v990, 0.0
  %v1150 = vmax.f32 %v1041, 0.0
  %v1151 = vmax.f32 %v1043, 0.0
  %v1152 = vmax.f32 %v1094, 0.0
  %v1153 = vmax.f32 %v1096, 0.0
  %v1154 = vpack.c.bf16 %v1112, %v1098
  %v1155 = vpack.c.bf16 %v1113, %v1099
  %v1156 = vpack.c.bf16 %v1114, %v1100
  %v1157 = vpack.c.bf16 %v1115, %v1101
  %v1158 = vpack.c.bf16 %v1116, %v1102
  %v1159 = vpack.c.bf16 %v1117, %v1103
  %v1160 = vpack.c.bf16 %v1118, %v1104
  %v1161 = vpack.c.bf16 %v1119, %v1105
  %v1162 = vpack.c.bf16 %v1120, %v1106
  %v1163 = vpack.c.bf16 %v1121, %v1107
  %v1164 = vpack.c.bf16 %v1122, %v1108
  %v1165 = vpack.c.bf16 %v1123, %v1109
  %v1166 = vpack.c.bf16 %v1124, %v1110
  %v1167 = vpack.c.bf16 %v1125, %v1111
  %v1168 = vpack.c.bf16 %v1140, %v1126
  %v1169 = vpack.c.bf16 %v1141, %v1127
  %v1170 = vpack.c.bf16 %v1142, %v1128
  %v1171 = vpack.c.bf16 %v1143, %v1129
  %v1172 = vpack.c.bf16 %v1144, %v1130
  %v1173 = vpack.c.bf16 %v1145, %v1131
  %v1174 = vpack.c.bf16 %v1146, %v1132
  %v1175 = vpack.c.bf16 %v1147, %v1133
  %v1176 = vpack.c.bf16 %v1148, %v1134
  %v1177 = vpack.c.bf16 %v1149, %v1135
  %v1178 = vpack.c.bf16 %v1150, %v1136
  %v1179 = vpack.c.bf16 %v1151, %v1137
  %v1180 = vpack.c.bf16 %v1152, %v1138
  %v1181 = vpack.c.bf16 %v1153, %v1139
  %v1210 = vunpack.c.l.b16 %v1154
  %v1211 = vunpack.c.l.b16 %v1155
  %v1212 = vunpack.c.l.b16 %v1156
  %v1213 = vunpack.c.l.b16 %v1157
  %v1214 = vunpack.c.l.b16 %v1158
  %v1215 = vunpack.c.l.b16 %v1159
  %v1216 = vunpack.c.l.b16 %v1160
  %v1217 = vunpack.c.l.b16 %v1161
  %v1218 = vunpack.c.l.b16 %v1162
  %v1219 = vunpack.c.l.b16 %v1163
  %v1220 = vunpack.c.l.b16 %v1164
  %v1221 = vunpack.c.l.b16 %v1165
  %v1222 = vunpack.c.l.b16 %v1166
  %v1223 = vunpack.c.l.b16 %v1167
  %v1224 = vunpack.c.h.b16 %v1154
  %v1225 = vunpack.c.h.b16 %v1155
  %v1226 = vunpack.c.h.b16 %v1156
  %v1227 = vunpack.c.h.b16 %v1157
  %v1228 = vunpack.c.h.b16 %v1158
  %v1229 = vunpack.c.h.b16 %v1159
  %v1230 = vunpack.c.h.b16 %v1160
  %v1231 = vunpack.c.h.b16 %v1161
  %v1232 = vunpack.c.h.b16 %v1162
  %v1233 = vunpack.c.h.b16 %v1163
  %v1234 = vunpack.c.h.b16 %v1164
  %v1235 = vunpack.c.h.b16 %v1165
  %v1236 = vunpack.c.h.b16 %v1166
  %v1237 = vunpack.c.h.b16 %v1167
  %v1238 = vunpack.c.l.b16 %v1168
  %v1239 = vunpack.c.l.b16 %v1169
  %v1240 = vunpack.c.l.b16 %v1170
  %v1241 = vunpack.c.l.b16 %v1171
  %v1242 = vunpack.c.l.b16 %v1172
  %v1243 = vunpack.c.l.b16 %v1173
  %v1244 = vunpack.c.l.b16 %v1174
  %v1245 = vunpack.c.l.b16 %v1175
  %v1246 = vunpack.c.l.b16 %v1176
  %v1247 = vunpack.c.l.b16 %v1177
  %v1248 = vunpack.c.l.b16 %v1178
  %v1249 = vunpack.c.l.b16 %v1179
  %v1250 = vunpack.c.l.b16 %v1180
  %v1251 = vunpack.c.l.b16 %v1181
  %v1252 = vunpack.c.h.b16 %v1168
  %v1253 = vunpack.c.h.b16 %v1169
  %v1254 = vunpack.c.h.b16 %v1170
  %v1255 = vunpack.c.h.b16 %v1171
  %v1256 = vunpack.c.h.b16 %v1172
  %v1257 = vunpack.c.h.b16 %v1173
  %v1258 = vunpack.c.h.b16 %v1174
  %v1259 = vunpack.c.h.b16 %v1175
  %v1260 = vunpack.c.h.b16 %v1176
  %v1261 = vunpack.c.h.b16 %v1177
  %v1262 = vunpack.c.h.b16 %v1178
  %v1263 = vunpack.c.h.b16 %v1179
  %v1264 = vunpack.c.h.b16 %v1180
  %v1265 = vunpack.c.h.b16 %v1181
  %v1266 = vpack.c.b16 %v1211, %v1210
  %v1267 = vpack.c.b16 %v1213, %v1212
  %v1268 = vpack.c.b16 %v1215, %v1214
  %v1269 = vpack.c.b16 %v1217, %v1216
  %v1270 = vpack.c.b16 %v1219, %v1218
  %v1271 = vpack.c.b16 %v1221, %v1220
  %v1272 = vpack.c.b16 %v1223, %v1222
  %v1273 = vpack.c.b16 %v1225, %v1224
  %v1274 = vpack.c.b16 %v1227, %v1226
  %v1275 = vpack.c.b16 %v1229, %v1228
  %v1276 = vpack.c.b16 %v1231, %v1230
  %v1277 = vpack.c.b16 %v1233, %v1232
  %v1278 = vpack.c.b16 %v1235, %v1234
  %v1279 = vpack.c.b16 %v1237, %v1236
  %v1280 = vpack.c.b16 %v1239, %v1238
  %v1281 = vpack.c.b16 %v1241, %v1240
  %v1282 = vpack.c.b16 %v1243, %v1242
  %v1283 = vpack.c.b16 %v1245, %v1244
  %v1284 = vpack.c.b16 %v1247, %v1246
  %v1285 = vpack.c.b16 %v1249, %v1248
  %v1286 = vpack.c.b16 %v1251, %v1250
  %v1287 = vpack.c.b16 %v1253, %v1252
  %v1288 = vpack.c.b16 %v1255, %v1254
  %v1289 = vpack.c.b16 %v1257, %v1256
  %v1290 = vpack.c.b16 %v1259, %v1258
  %v1291 = vpack.c.b16 %v1261, %v1260
  %v1292 = vpack.c.b16 %v1263, %v1262
  %v1293 = vpack.c.b16 %v1265, %v1264
  %1322 = vst [vmem:[%s3] sm:$0xff] %v1266
  %1323 = vst [vmem:[%s3 + $0x8] sm:$0xff] %v1267
  %1324 = vst [vmem:[%s3 + $0x10] sm:$0xff] %v1268
  %1325 = vst [vmem:[%s3 + $0x18] sm:$0xff] %v1269
  %1326 = vst [vmem:[%s3 + $0x20] sm:$0xff] %v1270
  %1327 = vst [vmem:[%s3 + $0x28] sm:$0xff] %v1271
  %1328 = vst [vmem:[%s3 + $0x30] sm:$0xff] %v1272
  %1329 = vst [vmem:[%s3 + $0x38] sm:$0xff] %v1273
  %1330 = vst [vmem:[%s3 + $0x40] sm:$0xff] %v1274
  %1331 = vst [vmem:[%s3 + $0x48] sm:$0xff] %v1275
  %1332 = vst [vmem:[%s3 + $0x50] sm:$0xff] %v1276
  %1333 = vst [vmem:[%s3 + $0x58] sm:$0xff] %v1277
  %1334 = vst [vmem:[%s3 + $0x60] sm:$0xff] %v1278
  %1335 = vst [vmem:[%s3 + $0x68] sm:$0xff] %v1279
  %1336 = vst [vmem:[%s3 + $0x70] sm:$0xff] %v1280
  %1337 = vst [vmem:[%s3 + $0x78] sm:$0xff] %v1281
  %1338 = vst [vmem:[%s3 + $0x80] sm:$0xff] %v1282
  %1339 = vst [vmem:[%s3 + $0x88] sm:$0xff] %v1283
  %1340 = vst [vmem:[%s3 + $0x90] sm:$0xff] %v1284
  %1341 = vst [vmem:[%s3 + $0x98] sm:$0xff] %v1285
  %1342 = vst [vmem:[%s3 + $0xa0] sm:$0xff] %v1286
  %1343 = vst [vmem:[%s3 + $0xa8] sm:$0xff] %v1287
  %1344 = vst [vmem:[%s3 + $0xb0] sm:$0xff] %v1288
  %1345 = vst [vmem:[%s3 + $0xb8] sm:$0xff] %v1289
  %1346 = vst [vmem:[%s3 + $0xc0] sm:$0xff] %v1290
  %1347 = vst [vmem:[%s3 + $0xc8] sm:$0xff] %v1291
  %1348 = vst [vmem:[%s3 + $0xd0] sm:$0xff] %v1292
  %1349 = vst [vmem:[%s3 + $0xd8] sm:$0xff] %v1293
  // Predicated region
  $region14: #{dqn_forward.3} parent=0 // pred_check
    _
  $region15: #{dqn_forward.3} parent=0 // pred_check_branch
    %1351 = sbr.rel (0) target = $region17
  $region16: #{dqn_forward.3} parent=0 // pred_region
    _
  $region17: #{dqn_forward.3} parent=0 // pred_fallthru
    _
  // Predicated region
  $region18: #{dqn_forward.3} parent=0 // pred_check
    _
  $region19: #{dqn_forward.3} parent=0 // pred_check_branch
    %1353 = sbr.rel (0) target = $region21
  $region20: #{dqn_forward.3} parent=0 // pred_region
    _
  $region21: #{dqn_forward.3} parent=0 // pred_fallthru
    _

// kernel: dqn_forward.4
$region0: #{dqn_forward.4}
  #allocation0 [shape = 'u32[]', space=smem, size = 0x4, offset = 0x4, fixed_abs, tag = 'smem constant byte address 0x4 - core index']
  #allocation1 [shape = 'u32[144,128]{1,0:T(1,128)}', space=vmem, size = 0x12000, scoped, tag = 'internal scratch']
  %s0 = inlined_call_operand.vmem [shape: bf16[338,896], index: 0, kind: input, shape index: {}]
  %s1 = inlined_call_operand.vmem [shape: bf16[896,64], index: 1, kind: input, shape index: {}]
  %s2 = inlined_call_operand.vmem [shape: f32[1,64], index: 2, kind: input, shape index: {}]
  %s3 = inlined_call_operand.vmem [shape: bf16[338,64], index: 3, kind: output, shape index: {}]
  %s4 = sld [smem:[#allocation0]]
  $region22: #{dqn_forward.4} parent=0
    _
  %s6 = ssub.s32 1, %s4
  %s7 = scalar_select 0, %s6, %s4
  // Predicated region
  $region2: #{dqn_forward.4} parent=0 // pred_check
    _
  $region3: #{dqn_forward.4} parent=0 // pred_check_branch
    %9 = sbr.rel (0) target = $region5
  $region4: #{dqn_forward.4} parent=0 // pred_region
    _
  $region5: #{dqn_forward.4} parent=0 // pred_fallthru
    _
  // Predicated region
  $region6: #{dqn_forward.4} parent=0 // pred_check
    _
  $region7: #{dqn_forward.4} parent=0 // pred_check_branch
    %11 = sbr.rel (0) target = $region9
  $region8: #{dqn_forward.4} parent=0 // pred_region
    _
  $region9: #{dqn_forward.4} parent=0 // pred_fallthru
    _
  // Predicated region
  $region10: #{dqn_forward.4} parent=0 // pred_check
    _
  $region11: #{dqn_forward.4} parent=0 // pred_check_branch
    %13 = sbr.rel (0) target = $region13
  $region12: #{dqn_forward.4} parent=0 // pred_region
    _
  $region13: #{dqn_forward.4} parent=0 // pred_fallthru
    _
  %v15 = vld [vmem:[%s0] sm:$0xff]
  %v16 = vld [vmem:[%s0 + $0x8] sm:$0xff]
  %v17 = vld [vmem:[%s0 + $0x10] sm:$0xff]
  %v18 = vld [vmem:[%s0 + $0x18] sm:$0xf]
  %v19 = vld [vmem:[%s0 + $0x1c] sm:$0xff]
  %v20 = vld [vmem:[%s0 + $0x24] sm:$0xff]
  %v21 = vld [vmem:[%s0 + $0x2c] sm:$0xff]
  %v22 = vld [vmem:[%s0 + $0x34] sm:$0xf]
  %v23 = vld [vmem:[%s0 + $0x38] sm:$0xff]
  %v24 = vld [vmem:[%s0 + $0x40] sm:$0xff]
  %v25 = vld [vmem:[%s0 + $0x48] sm:$0xff]
  %v26 = vld [vmem:[%s0 + $0x50] sm:$0xf]
  %v27 = vld [vmem:[%s0 + $0x54] sm:$0xff]
  %v28 = vld [vmem:[%s0 + $0x5c] sm:$0xff]
  %v29 = vld [vmem:[%s0 + $0x64] sm:$0xff]
  %v30 = vld [vmem:[%s0 + $0x6c] sm:$0xf]
  %v31 = vld [vmem:[%s0 + $0x70] sm:$0xff]
  %v32 = vld [vmem:[%s0 + $0x78] sm:$0xff]
  %v33 = vld [vmem:[%s0 + $0x80] sm:$0xff]
  %v34 = vld [vmem:[%s0 + $0x88] sm:$0xf]
  %v35 = vld [vmem:[%s0 + $0x8c] sm:$0xff]
  %v36 = vld [vmem:[%s0 + $0x94] sm:$0xff]
  %v37 = vld [vmem:[%s0 + $0x9c] sm:$0xff]
  %v38 = vld [vmem:[%s0 + $0xa4] sm:$0xf]
  %v39 = vld [vmem:[%s0 + $0xa8] sm:$0xff]
  %v40 = vld [vmem:[%s0 + $0xb0] sm:$0xff]
  %v41 = vld [vmem:[%s0 + $0xb8] sm:$0xff]
  %v42 = vld [vmem:[%s0 + $0xc0] sm:$0xf]
  %v43 = vld [vmem:[%s0 + $0xc4] sm:$0xff]
  %v44 = vld [vmem:[%s0 + $0xcc] sm:$0xff]
  %v45 = vld [vmem:[%s0 + $0xd4] sm:$0xff]
  %v46 = vld [vmem:[%s0 + $0xdc] sm:$0xf]
  %v47 = vld [vmem:[%s0 + $0xe0] sm:$0xff]
  %v48 = vld [vmem:[%s0 + $0xe8] sm:$0xff]
  %v49 = vld [vmem:[%s0 + $0xf0] sm:$0xff]
  %v50 = vld [vmem:[%s0 + $0xf8] sm:$0xf]
  %v51 = vld [vmem:[%s0 + $0xfc] sm:$0xff]
  %v52 = vld [vmem:[%s0 + $0x104] sm:$0xff]
  %v53 = vld [vmem:[%s0 + $0x10c] sm:$0xff]
  %v54 = vld [vmem:[%s0 + $0x114] sm:$0xf]
  %v55 = vld [vmem:[%s0 + $0x118] sm:$0xff]
  %v56 = vld [vmem:[%s0 + $0x120] sm:$0xff]
  %v57 = vld [vmem:[%s0 + $0x128] sm:$0xff]
  %v58 = vld [vmem:[%s0 + $0x130] sm:$0xf]
  %v59 = vld [vmem:[%s0 + $0x134] sm:$0xff]
  %v60 = vld [vmem:[%s0 + $0x13c] sm:$0xff]
  %v61 = vld [vmem:[%s0 + $0x144] sm:$0xff]
  %v62 = vld [vmem:[%s0 + $0x14c] sm:$0xf]
  %v63 = vld [vmem:[%s0 + $0x150] sm:$0xff]
  %v64 = vld [vmem:[%s0 + $0x158] sm:$0xff]
  %v65 = vld [vmem:[%s0 + $0x160] sm:$0xff]
  %v66 = vld [vmem:[%s0 + $0x168] sm:$0xf]
  %v67 = vld [vmem:[%s0 + $0x16c] sm:$0xff]
  %v68 = vld [vmem:[%s0 + $0x174] sm:$0xff]
  %v69 = vld [vmem:[%s0 + $0x17c] sm:$0xff]
  %v70 = vld [vmem:[%s0 + $0x184] sm:$0xf]
  %v71 = vld [vmem:[%s0 + $0x188] sm:$0xff]
  %v72 = vld [vmem:[%s0 + $0x190] sm:$0xff]
  %v73 = vld [vmem:[%s0 + $0x198] sm:$0xff]
  %v74 = vld [vmem:[%s0 + $0x1a0] sm:$0xf]
  %v75 = vld [vmem:[%s0 + $0x1a4] sm:$0xff]
  %v76 = vld [vmem:[%s0 + $0x1ac] sm:$0xff]
  %v77 = vld [vmem:[%s0 + $0x1b4] sm:$0xff]
  %v78 = vld [vmem:[%s0 + $0x1bc] sm:$0xf]
  %v79 = vld [vmem:[%s0 + $0x1c0] sm:$0xff]
  %v80 = vld [vmem:[%s0 + $0x1c8] sm:$0xff]
  %v81 = vld [vmem:[%s0 + $0x1d0] sm:$0xff]
  %v82 = vld [vmem:[%s0 + $0x1d8] sm:$0xf]
  %v83 = vld [vmem:[%s0 + $0x1dc] sm:$0xff]
  %v84 = vld [vmem:[%s0 + $0x1e4] sm:$0xff]
  %v85 = vld [vmem:[%s0 + $0x1ec] sm:$0xff]
  %v86 = vld [vmem:[%s0 + $0x1f4] sm:$0xf]
  %v87 = vld [vmem:[%s0 + $0x1f8] sm:$0xff]
  %v88 = vld [vmem:[%s0 + $0x200] sm:$0xff]
  %v89 = vld [vmem:[%s0 + $0x208] sm:$0xff]
  %v90 = vld [vmem:[%s0 + $0x210] sm:$0xf]
  %v91 = vld [vmem:[%s0 + $0x214] sm:$0xff]
  %v92 = vld [vmem:[%s0 + $0x21c] sm:$0xff]
  %v93 = vld [vmem:[%s0 + $0x224] sm:$0xff]
  %v94 = vld [vmem:[%s0 + $0x22c] sm:$0xf]
  %v95 = vld [vmem:[%s0 + $0x230] sm:$0xff]
  %v96 = vld [vmem:[%s0 + $0x238] sm:$0xff]
  %v97 = vld [vmem:[%s0 + $0x240] sm:$0xff]
  %v98 = vld [vmem:[%s0 + $0x248] sm:$0xf]
  %v99 = vld [vmem:[%s0 + $0x24c] sm:$0xff]
  %v100 = vld [vmem:[%s0 + $0x254] sm:$0xff]
  %v101 = vld [vmem:[%s0 + $0x25c] sm:$0xff]
  %v102 = vld [vmem:[%s0 + $0x264] sm:$0xf]
  %v103 = vld [vmem:[%s0 + $0x268] sm:$0xff]
  %v104 = vld [vmem:[%s0 + $0x270] sm:$0xff]
  %v105 = vld [vmem:[%s0 + $0x278] sm:$0xff]
  %v106 = vld [vmem:[%s0 + $0x280] sm:$0xf]
  %v107 = vld [vmem:[%s0 + $0x284] sm:$0xff]
  %v108 = vld [vmem:[%s0 + $0x28c] sm:$0xff]
  %v109 = vld [vmem:[%s0 + $0x294] sm:$0xff]
  %v110 = vld [vmem:[%s0 + $0x29c] sm:$0xf]
  %v111 = vld [vmem:[%s0 + $0x2a0] sm:$0xff]
  %v112 = vld [vmem:[%s0 + $0x2a8] sm:$0xff]
  %v113 = vld [vmem:[%s0 + $0x2b0] sm:$0xff]
  %v114 = vld [vmem:[%s0 + $0x2b8] sm:$0xf]
  %v115 = vld [vmem:[%s0 + $0x2bc] sm:$0xff]
  %v116 = vld [vmem:[%s0 + $0x2c4] sm:$0xff]
  %v117 = vld [vmem:[%s0 + $0x2cc] sm:$0xff]
  %v118 = vld [vmem:[%s0 + $0x2d4] sm:$0xf]
  %v119 = vld [vmem:[%s0 + $0x2d8] sm:$0xff]
  %v120 = vld [vmem:[%s0 + $0x2e0] sm:$0xff]
  %v121 = vld [vmem:[%s0 + $0x2e8] sm:$0xff]
  %v122 = vld [vmem:[%s0 + $0x2f0] sm:$0xf]
  %v123 = vld [vmem:[%s0 + $0x2f4] sm:$0xff]
  %v124 = vld [vmem:[%s0 + $0x2fc] sm:$0xff]
  %v125 = vld [vmem:[%s0 + $0x304] sm:$0xff]
  %v126 = vld [vmem:[%s0 + $0x30c] sm:$0xf]
  %v127 = vld [vmem:[%s0 + $0x310] sm:$0xff]
  %v128 = vld [vmem:[%s0 + $0x318] sm:$0xff]
  %v129 = vld [vmem:[%s0 + $0x320] sm:$0xff]
  %v130 = vld [vmem:[%s0 + $0x328] sm:$0xf]
  %v131 = vld [vmem:[%s0 + $0x32c] sm:$0xff]
  %v132 = vld [vmem:[%s0 + $0x334] sm:$0xff]
  %v133 = vld [vmem:[%s0 + $0x33c] sm:$0xff]
  %v134 = vld [vmem:[%s0 + $0x344] sm:$0xf]
  %v135 = vld [vmem:[%s0 + $0x348] sm:$0xff]
  %v136 = vld [vmem:[%s0 + $0x350] sm:$0xff]
  %v137 = vld [vmem:[%s0 + $0x358] sm:$0xff]
  %v138 = vld [vmem:[%s0 + $0x360] sm:$0xf]
  %v139 = vld [vmem:[%s0 + $0x364] sm:$0xff]
  %v140 = vld [vmem:[%s0 + $0x36c] sm:$0xff]
  %v141 = vld [vmem:[%s0 + $0x374] sm:$0xff]
  %v142 = vld [vmem:[%s0 + $0x37c] sm:$0xf]
  %v143 = vld [vmem:[%s0 + $0x380] sm:$0xff]
  %v144 = vld [vmem:[%s0 + $0x388] sm:$0xff]
  %v145 = vld [vmem:[%s0 + $0x390] sm:$0xff]
  %v146 = vld [vmem:[%s0 + $0x398] sm:$0xf]
  %v147 = vld [vmem:[%s0 + $0x39c] sm:$0xff]
  %v148 = vld [vmem:[%s0 + $0x3a4] sm:$0xff]
  %v149 = vld [vmem:[%s0 + $0x3ac] sm:$0xff]
  %v150 = vld [vmem:[%s0 + $0x3b4] sm:$0xf]
  %v151 = vld [vmem:[%s0 + $0x3b8] sm:$0xff]
  %v152 = vld [vmem:[%s0 + $0x3c0] sm:$0xff]
  %v153 = vld [vmem:[%s0 + $0x3c8] sm:$0xff]
  %v154 = vld [vmem:[%s0 + $0x3d0] sm:$0xf]
  %v155 = vld [vmem:[%s0 + $0x3d4] sm:$0xff]
  %v156 = vld [vmem:[%s0 + $0x3dc] sm:$0xff]
  %v157 = vld [vmem:[%s0 + $0x3e4] sm:$0xff]
  %v158 = vld [vmem:[%s0 + $0x3ec] sm:$0xf]
  %v159 = vld [vmem:[%s0 + $0x3f0] sm:$0xff]
  %v160 = vld [vmem:[%s0 + $0x3f8] sm:$0xff]
  %v161 = vld [vmem:[%s0 + $0x400] sm:$0xff]
  %v162 = vld [vmem:[%s0 + $0x408] sm:$0xf]
  %v163 = vld [vmem:[%s0 + $0x40c] sm:$0xff]
  %v164 = vld [vmem:[%s0 + $0x414] sm:$0xff]
  %v165 = vld [vmem:[%s0 + $0x41c] sm:$0xff]
  %v166 = vld [vmem:[%s0 + $0x424] sm:$0xf]
  %v167 = vld [vmem:[%s0 + $0x428] sm:$0xff]
  %v168 = vld [vmem:[%s0 + $0x430] sm:$0xff]
  %v169 = vld [vmem:[%s0 + $0x438] sm:$0xff]
  %v170 = vld [vmem:[%s0 + $0x440] sm:$0xf]
  %v171 = vld [vmem:[%s0 + $0x444] sm:$0xff]
  %v172 = vld [vmem:[%s0 + $0x44c] sm:$0xff]
  %v173 = vld [vmem:[%s0 + $0x454] sm:$0xff]
  %v174 = vld [vmem:[%s0 + $0x45c] sm:$0xf]
  %v175 = vld [vmem:[%s0 + $0x460] sm:$0xff]
  %v176 = vld [vmem:[%s0 + $0x468] sm:$0xff]
  %v177 = vld [vmem:[%s0 + $0x470] sm:$0xff]
  %v178 = vld [vmem:[%s0 + $0x478] sm:$0xf]
  %v179 = vld [vmem:[%s0 + $0x47c] sm:$0xff]
  %v180 = vld [vmem:[%s0 + $0x484] sm:$0xff]
  %v181 = vld [vmem:[%s0 + $0x48c] sm:$0xff]
  %v182 = vld [vmem:[%s0 + $0x494] sm:$0xf]
  %v183 = vld [vmem:[%s0 + $0x498] sm:$0x11]
  %v184 = vld [vmem:[%s0 + $0x4a0] sm:$0x11]
  %v185 = vld [vmem:[%s0 + $0x4a8] sm:$0x11]
  %v186 = vld [vmem:[%s0 + $0x4b0] sm:$0x1]
  %v187 = vld [vmem:[%s1] sm:$0xf]
  %v188 = vld [vmem:[%s1 + $0x4] sm:$0xf]
  %v189 = vld [vmem:[%s1 + $0x8] sm:$0xf]
  %v190 = vld [vmem:[%s1 + $0xc] sm:$0xf]
  %v191 = vld [vmem:[%s1 + $0x10] sm:$0xf]
  %v192 = vld [vmem:[%s1 + $0x14] sm:$0xf]
  %v193 = vld [vmem:[%s1 + $0x18] sm:$0xf]
  %v194 = vld [vmem:[%s1 + $0x1c] sm:$0xf]
  %v195 = vld [vmem:[%s1 + $0x20] sm:$0xf]
  %v196 = vld [vmem:[%s1 + $0x24] sm:$0xf]
  %v197 = vld [vmem:[%s1 + $0x28] sm:$0xf]
  %v198 = vld [vmem:[%s1 + $0x2c] sm:$0xf]
  %v199 = vld [vmem:[%s1 + $0x30] sm:$0xf]
  %v200 = vld [vmem:[%s1 + $0x34] sm:$0xf]
  %v201 = vld [vmem:[%s1 + $0x38] sm:$0xf]
  %v202 = vld [vmem:[%s1 + $0x3c] sm:$0xf]
  %v203 = vld [vmem:[%s1 + $0x40] sm:$0xf]
  %v204 = vld [vmem:[%s1 + $0x44] sm:$0xf]
  %v205 = vld [vmem:[%s1 + $0x48] sm:$0xf]
  %v206 = vld [vmem:[%s1 + $0x4c] sm:$0xf]
  %v207 = vld [vmem:[%s1 + $0x50] sm:$0xf]
  %v208 = vld [vmem:[%s1 + $0x54] sm:$0xf]
  %v209 = vld [vmem:[%s1 + $0x58] sm:$0xf]
  %v210 = vld [vmem:[%s1 + $0x5c] sm:$0xf]
  %v211 = vld [vmem:[%s1 + $0x60] sm:$0xf]
  %v212 = vld [vmem:[%s1 + $0x64] sm:$0xf]
  %v213 = vld [vmem:[%s1 + $0x68] sm:$0xf]
  %v214 = vld [vmem:[%s1 + $0x6c] sm:$0xf]
  %v215 = vld [vmem:[%s1 + $0x70] sm:$0xf]
  %v216 = vld [vmem:[%s1 + $0x74] sm:$0xf]
  %v217 = vld [vmem:[%s1 + $0x78] sm:$0xf]
  %v218 = vld [vmem:[%s1 + $0x7c] sm:$0xf]
  %v219 = vld [vmem:[%s1 + $0x80] sm:$0xf]
  %v220 = vld [vmem:[%s1 + $0x84] sm:$0xf]
  %v221 = vld [vmem:[%s1 + $0x88] sm:$0xf]
  %v222 = vld [vmem:[%s1 + $0x8c] sm:$0xf]
  %v223 = vld [vmem:[%s1 + $0x90] sm:$0xf]
  %v224 = vld [vmem:[%s1 + $0x94] sm:$0xf]
  %v225 = vld [vmem:[%s1 + $0x98] sm:$0xf]
  %v226 = vld [vmem:[%s1 + $0x9c] sm:$0xf]
  %v227 = vld [vmem:[%s1 + $0xa0] sm:$0xf]
  %v228 = vld [vmem:[%s1 + $0xa4] sm:$0xf]
  %v229 = vld [vmem:[%s1 + $0xa8] sm:$0xf]
  %v230 = vld [vmem:[%s1 + $0xac] sm:$0xf]
  %v231 = vld [vmem:[%s1 + $0xb0] sm:$0xf]
  %v232 = vld [vmem:[%s1 + $0xb4] sm:$0xf]
  %v233 = vld [vmem:[%s1 + $0xb8] sm:$0xf]
  %v234 = vld [vmem:[%s1 + $0xbc] sm:$0xf]
  %v235 = vld [vmem:[%s1 + $0xc0] sm:$0xf]
  %v236 = vld [vmem:[%s1 + $0xc4] sm:$0xf]
  %v237 = vld [vmem:[%s1 + $0xc8] sm:$0xf]
  %v238 = vld [vmem:[%s1 + $0xcc] sm:$0xf]
  %v239 = vld [vmem:[%s1 + $0xd0] sm:$0xf]
  %v240 = vld [vmem:[%s1 + $0xd4] sm:$0xf]
  %v241 = vld [vmem:[%s1 + $0xd8] sm:$0xf]
  %v242 = vld [vmem:[%s1 + $0xdc] sm:$0xf]
  %v243 = vld [vmem:[%s1 + $0xe0] sm:$0xf]
  %v244 = vld [vmem:[%s1 + $0xe4] sm:$0xf]
  %v245 = vld [vmem:[%s1 + $0xe8] sm:$0xf]
  %v246 = vld [vmem:[%s1 + $0xec] sm:$0xf]
  %v247 = vld [vmem:[%s1 + $0xf0] sm:$0xf]
  %v248 = vld [vmem:[%s1 + $0xf4] sm:$0xf]
  %v249 = vld [vmem:[%s1 + $0xf8] sm:$0xf]
  %v250 = vld [vmem:[%s1 + $0xfc] sm:$0xf]
  %v251 = vld [vmem:[%s1 + $0x100] sm:$0xf]
  %v252 = vld [vmem:[%s1 + $0x104] sm:$0xf]
  %v253 = vld [vmem:[%s1 + $0x108] sm:$0xf]
  %v254 = vld [vmem:[%s1 + $0x10c] sm:$0xf]
  %v255 = vld [vmem:[%s1 + $0x110] sm:$0xf]
  %v256 = vld [vmem:[%s1 + $0x114] sm:$0xf]
  %v257 = vld [vmem:[%s1 + $0x118] sm:$0xf]
  %v258 = vld [vmem:[%s1 + $0x11c] sm:$0xf]
  %v259 = vld [vmem:[%s1 + $0x120] sm:$0xf]
  %v260 = vld [vmem:[%s1 + $0x124] sm:$0xf]
  %v261 = vld [vmem:[%s1 + $0x128] sm:$0xf]
  %v262 = vld [vmem:[%s1 + $0x12c] sm:$0xf]
  %v263 = vld [vmem:[%s1 + $0x130] sm:$0xf]
  %v264 = vld [vmem:[%s1 + $0x134] sm:$0xf]
  %v265 = vld [vmem:[%s1 + $0x138] sm:$0xf]
  %v266 = vld [vmem:[%s1 + $0x13c] sm:$0xf]
  %v267 = vld [vmem:[%s1 + $0x140] sm:$0xf]
  %v268 = vld [vmem:[%s1 + $0x144] sm:$0xf]
  %v269 = vld [vmem:[%s1 + $0x148] sm:$0xf]
  %v270 = vld [vmem:[%s1 + $0x14c] sm:$0xf]
  %v271 = vld [vmem:[%s1 + $0x150] sm:$0xf]
  %v272 = vld [vmem:[%s1 + $0x154] sm:$0xf]
  %v273 = vld [vmem:[%s1 + $0x158] sm:$0xf]
  %v274 = vld [vmem:[%s1 + $0x15c] sm:$0xf]
  %v275 = vld [vmem:[%s1 + $0x160] sm:$0xf]
  %v276 = vld [vmem:[%s1 + $0x164] sm:$0xf]
  %v277 = vld [vmem:[%s1 + $0x168] sm:$0xf]
  %v278 = vld [vmem:[%s1 + $0x16c] sm:$0xf]
  %v279 = vld [vmem:[%s1 + $0x170] sm:$0xf]
  %v280 = vld [vmem:[%s1 + $0x174] sm:$0xf]
  %v281 = vld [vmem:[%s1 + $0x178] sm:$0xf]
  %v282 = vld [vmem:[%s1 + $0x17c] sm:$0xf]
  %v283 = vld [vmem:[%s1 + $0x180] sm:$0xf]
  %v284 = vld [vmem:[%s1 + $0x184] sm:$0xf]
  %v285 = vld [vmem:[%s1 + $0x188] sm:$0xf]
  %v286 = vld [vmem:[%s1 + $0x18c] sm:$0xf]
  %v287 = vld [vmem:[%s1 + $0x190] sm:$0xf]
  %v288 = vld [vmem:[%s1 + $0x194] sm:$0xf]
  %v289 = vld [vmem:[%s1 + $0x198] sm:$0xf]
  %v290 = vld [vmem:[%s1 + $0x19c] sm:$0xf]
  %v291 = vld [vmem:[%s1 + $0x1a0] sm:$0xf]
  %v292 = vld [vmem:[%s1 + $0x1a4] sm:$0xf]
  %v293 = vld [vmem:[%s1 + $0x1a8] sm:$0xf]
  %v294 = vld [vmem:[%s1 + $0x1ac] sm:$0xf]
  %v295 = vld [vmem:[%s1 + $0x1b0] sm:$0xf]
  %v296 = vld [vmem:[%s1 + $0x1b4] sm:$0xf]
  %v297 = vld [vmem:[%s1 + $0x1b8] sm:$0xf]
  %v298 = vld [vmem:[%s1 + $0x1bc] sm:$0xf]
  %v299 = vld [vmem:[%s2] sm:$0x1]
  %v301 = vlaneseq
  %v302 = vshrl.u32 %v301, 7
  %v303 = vsub.s32 0, %v302
  %v304 = vrot.slane %v299, %v303
  %v478 = vunpack.c.l.b16 %v15
  %v479 = vunpack.c.h.b16 %v15
  %v480 = vunpack.c.l.b16 %v16
  %v481 = vunpack.c.h.b16 %v16
  %v482 = vunpack.c.l.b16 %v17
  %v483 = vunpack.c.h.b16 %v17
  %v484 = vunpack.c.l.b16 %v18
  %v485 = vunpack.c.l.b16 %v19
  %v486 = vunpack.c.h.b16 %v19
  %v487 = vunpack.c.l.b16 %v20
  %v488 = vunpack.c.h.b16 %v20
  %v489 = vunpack.c.l.b16 %v21
  %v490 = vunpack.c.h.b16 %v21
  %v491 = vunpack.c.l.b16 %v22
  %v492 = vunpack.c.l.b16 %v23
  %v493 = vunpack.c.h.b16 %v23
  %v494 = vunpack.c.l.b16 %v24
  %v495 = vunpack.c.h.b16 %v24
  %v496 = vunpack.c.l.b16 %v25
  %v497 = vunpack.c.h.b16 %v25
  %v498 = vunpack.c.l.b16 %v26
  %v499 = vunpack.c.l.b16 %v27
  %v500 = vunpack.c.h.b16 %v27
  %v501 = vunpack.c.l.b16 %v28
  %v502 = vunpack.c.h.b16 %v28
  %v503 = vunpack.c.l.b16 %v29
  %v504 = vunpack.c.h.b16 %v29
  %v505 = vunpack.c.l.b16 %v30
  %v506 = vunpack.c.l.b16 %v31
  %v507 = vunpack.c.h.b16 %v31
  %v508 = vunpack.c.l.b16 %v32
  %v509 = vunpack.c.h.b16 %v32
  %v510 = vunpack.c.l.b16 %v33
  %v511 = vunpack.c.h.b16 %v33
  %v512 = vunpack.c.l.b16 %v34
  %v513 = vunpack.c.l.b16 %v35
  %v514 = vunpack.c.h.b16 %v35
  %v515 = vunpack.c.l.b16 %v36
  %v516 = vunpack.c.h.b16 %v36
  %v517 = vunpack.c.l.b16 %v37
  %v518 = vunpack.c.h.b16 %v37
  %v519 = vunpack.c.l.b16 %v38
  %v520 = vunpack.c.l.b16 %v39
  %v521 = vunpack.c.h.b16 %v39
  %v522 = vunpack.c.l.b16 %v40
  %v523 = vunpack.c.h.b16 %v40
  %v524 = vunpack.c.l.b16 %v41
  %v525 = vunpack.c.h.b16 %v41
  %v526 = vunpack.c.l.b16 %v42
  %v527 = vunpack.c.l.b16 %v43
  %v528 = vunpack.c.h.b16 %v43
  %v529 = vunpack.c.l.b16 %v44
  %v530 = vunpack.c.h.b16 %v44
  %v531 = vunpack.c.l.b16 %v45
  %v532 = vunpack.c.h.b16 %v45
  %v533 = vunpack.c.l.b16 %v46
  %v534 = vunpack.c.l.b16 %v47
  %v535 = vunpack.c.h.b16 %v47
  %v536 = vunpack.c.l.b16 %v48
  %v537 = vunpack.c.h.b16 %v48
  %v538 = vunpack.c.l.b16 %v49
  %v539 = vunpack.c.h.b16 %v49
  %v540 = vunpack.c.l.b16 %v50
  %v541 = vunpack.c.l.b16 %v51
  %v542 = vunpack.c.h.b16 %v51
  %v543 = vunpack.c.l.b16 %v52
  %v544 = vunpack.c.h.b16 %v52
  %v545 = vunpack.c.l.b16 %v53
  %v546 = vunpack.c.h.b16 %v53
  %v547 = vunpack.c.l.b16 %v54
  %v548 = vunpack.c.l.b16 %v55
  %v549 = vunpack.c.h.b16 %v55
  %v550 = vunpack.c.l.b16 %v56
  %v551 = vunpack.c.h.b16 %v56
  %v552 = vunpack.c.l.b16 %v57
  %v553 = vunpack.c.h.b16 %v57
  %v554 = vunpack.c.l.b16 %v58
  %v555 = vunpack.c.l.b16 %v59
  %v556 = vunpack.c.h.b16 %v59
  %v557 = vunpack.c.l.b16 %v60
  %v558 = vunpack.c.h.b16 %v60
  %v559 = vunpack.c.l.b16 %v61
  %v560 = vunpack.c.h.b16 %v61
  %v561 = vunpack.c.l.b16 %v62
  %v562 = vunpack.c.l.b16 %v63
  %v563 = vunpack.c.h.b16 %v63
  %v564 = vunpack.c.l.b16 %v64
  %v565 = vunpack.c.h.b16 %v64
  %v566 = vunpack.c.l.b16 %v65
  %v567 = vunpack.c.h.b16 %v65
  %v568 = vunpack.c.l.b16 %v66
  %v569 = vunpack.c.l.b16 %v67
  %v570 = vunpack.c.h.b16 %v67
  %v571 = vunpack.c.l.b16 %v68
  %v572 = vunpack.c.h.b16 %v68
  %v573 = vunpack.c.l.b16 %v69
  %v574 = vunpack.c.h.b16 %v69
  %v575 = vunpack.c.l.b16 %v70
  %v576 = vunpack.c.l.b16 %v71
  %v577 = vunpack.c.h.b16 %v71
  %v578 = vunpack.c.l.b16 %v72
  %v579 = vunpack.c.h.b16 %v72
  %v580 = vunpack.c.l.b16 %v73
  %v581 = vunpack.c.h.b16 %v73
  %v582 = vunpack.c.l.b16 %v74
  %v583 = vunpack.c.l.b16 %v75
  %v584 = vunpack.c.h.b16 %v75
  %v585 = vunpack.c.l.b16 %v76
  %v586 = vunpack.c.h.b16 %v76
  %v587 = vunpack.c.l.b16 %v77
  %v588 = vunpack.c.h.b16 %v77
  %v589 = vunpack.c.l.b16 %v78
  %v590 = vunpack.c.l.b16 %v79
  %v591 = vunpack.c.h.b16 %v79
  %v592 = vunpack.c.l.b16 %v80
  %v593 = vunpack.c.h.b16 %v80
  %v594 = vunpack.c.l.b16 %v81
  %v595 = vunpack.c.h.b16 %v81
  %v596 = vunpack.c.l.b16 %v82
  %v597 = vunpack.c.l.b16 %v83
  %v598 = vunpack.c.h.b16 %v83
  %v599 = vunpack.c.l.b16 %v84
  %v600 = vunpack.c.h.b16 %v84
  %v601 = vunpack.c.l.b16 %v85
  %v602 = vunpack.c.h.b16 %v85
  %v603 = vunpack.c.l.b16 %v86
  %v604 = vunpack.c.l.b16 %v87
  %v605 = vunpack.c.h.b16 %v87
  %v606 = vunpack.c.l.b16 %v88
  %v607 = vunpack.c.h.b16 %v88
  %v608 = vunpack.c.l.b16 %v89
  %v609 = vunpack.c.h.b16 %v89
  %v610 = vunpack.c.l.b16 %v90
  %v611 = vunpack.c.l.b16 %v91
  %v612 = vunpack.c.h.b16 %v91
  %v613 = vunpack.c.l.b16 %v92
  %v614 = vunpack.c.h.b16 %v92
  %v615 = vunpack.c.l.b16 %v93
  %v616 = vunpack.c.h.b16 %v93
  %v617 = vunpack.c.l.b16 %v94
  %v618 = vunpack.c.l.b16 %v95
  %v619 = vunpack.c.h.b16 %v95
  %v620 = vunpack.c.l.b16 %v96
  %v621 = vunpack.c.h.b16 %v96
  %v622 = vunpack.c.l.b16 %v97
  %v623 = vunpack.c.h.b16 %v97
  %v624 = vunpack.c.l.b16 %v98
  %v625 = vunpack.c.l.b16 %v99
  %v626 = vunpack.c.h.b16 %v99
  %v627 = vunpack.c.l.b16 %v100
  %v628 = vunpack.c.h.b16 %v100
  %v629 = vunpack.c.l.b16 %v101
  %v630 = vunpack.c.h.b16 %v101
  %v631 = vunpack.c.l.b16 %v102
  %v632 = vunpack.c.l.b16 %v103
  %v633 = vunpack.c.h.b16 %v103
  %v634 = vunpack.c.l.b16 %v104
  %v635 = vunpack.c.h.b16 %v104
  %v636 = vunpack.c.l.b16 %v105
  %v637 = vunpack.c.h.b16 %v105
  %v638 = vunpack.c.l.b16 %v106
  %v639 = vunpack.c.l.b16 %v107
  %v640 = vunpack.c.h.b16 %v107
  %v641 = vunpack.c.l.b16 %v108
  %v642 = vunpack.c.h.b16 %v108
  %v643 = vunpack.c.l.b16 %v109
  %v644 = vunpack.c.h.b16 %v109
  %v645 = vunpack.c.l.b16 %v110
  %v646 = vunpack.c.l.b16 %v111
  %v647 = vunpack.c.h.b16 %v111
  %v648 = vunpack.c.l.b16 %v112
  %v649 = vunpack.c.h.b16 %v112
  %v650 = vunpack.c.l.b16 %v113
  %v651 = vunpack.c.h.b16 %v113
  %v652 = vunpack.c.l.b16 %v114
  %v653 = vunpack.c.l.b16 %v115
  %v654 = vunpack.c.h.b16 %v115
  %v655 = vunpack.c.l.b16 %v116
  %v656 = vunpack.c.h.b16 %v116
  %v657 = vunpack.c.l.b16 %v117
  %v658 = vunpack.c.h.b16 %v117
  %v659 = vunpack.c.l.b16 %v118
  %v660 = vunpack.c.l.b16 %v119
  %v661 = vunpack.c.h.b16 %v119
  %v662 = vunpack.c.l.b16 %v120
  %v663 = vunpack.c.h.b16 %v120
  %v664 = vunpack.c.l.b16 %v121
  %v665 = vunpack.c.h.b16 %v121
  %v666 = vunpack.c.l.b16 %v122
  %v667 = vunpack.c.l.b16 %v123
  %v668 = vunpack.c.h.b16 %v123
  %v669 = vunpack.c.l.b16 %v124
  %v670 = vunpack.c.h.b16 %v124
  %v671 = vunpack.c.l.b16 %v125
  %v672 = vunpack.c.h.b16 %v125
  %v673 = vunpack.c.l.b16 %v126
  %v674 = vunpack.c.l.b16 %v127
  %v675 = vunpack.c.h.b16 %v127
  %v676 = vunpack.c.l.b16 %v128
  %v677 = vunpack.c.h.b16 %v128
  %v678 = vunpack.c.l.b16 %v129
  %v679 = vunpack.c.h.b16 %v129
  %v680 = vunpack.c.l.b16 %v130
  %v681 = vunpack.c.l.b16 %v131
  %v682 = vunpack.c.h.b16 %v131
  %v683 = vunpack.c.l.b16 %v132
  %v684 = vunpack.c.h.b16 %v132
  %v685 = vunpack.c.l.b16 %v133
  %v686 = vunpack.c.h.b16 %v133
  %v687 = vunpack.c.l.b16 %v134
  %v688 = vunpack.c.l.b16 %v135
  %v689 = vunpack.c.h.b16 %v135
  %v690 = vunpack.c.l.b16 %v136
  %v691 = vunpack.c.h.b16 %v136
  %v692 = vunpack.c.l.b16 %v137
  %v693 = vunpack.c.h.b16 %v137
  %v694 = vunpack.c.l.b16 %v138
  %v695 = vunpack.c.l.b16 %v139
  %v696 = vunpack.c.h.b16 %v139
  %v697 = vunpack.c.l.b16 %v140
  %v698 = vunpack.c.h.b16 %v140
  %v699 = vunpack.c.l.b16 %v141
  %v700 = vunpack.c.h.b16 %v141
  %v701 = vunpack.c.l.b16 %v142
  %v702 = vunpack.c.l.b16 %v143
  %v703 = vunpack.c.h.b16 %v143
  %v704 = vunpack.c.l.b16 %v144
  %v705 = vunpack.c.h.b16 %v144
  %v706 = vunpack.c.l.b16 %v145
  %v707 = vunpack.c.h.b16 %v145
  %v708 = vunpack.c.l.b16 %v146
  %v709 = vunpack.c.l.b16 %v147
  %v710 = vunpack.c.h.b16 %v147
  %v711 = vunpack.c.l.b16 %v148
  %v712 = vunpack.c.h.b16 %v148
  %v713 = vunpack.c.l.b16 %v149
  %v714 = vunpack.c.h.b16 %v149
  %v715 = vunpack.c.l.b16 %v150
  %v716 = vunpack.c.l.b16 %v151
  %v717 = vunpack.c.h.b16 %v151
  %v718 = vunpack.c.l.b16 %v152
  %v719 = vunpack.c.h.b16 %v152
  %v720 = vunpack.c.l.b16 %v153
  %v721 = vunpack.c.h.b16 %v153
  %v722 = vunpack.c.l.b16 %v154
  %v723 = vunpack.c.l.b16 %v155
  %v724 = vunpack.c.h.b16 %v155
  %v725 = vunpack.c.l.b16 %v156
  %v726 = vunpack.c.h.b16 %v156
  %v727 = vunpack.c.l.b16 %v157
  %v728 = vunpack.c.h.b16 %v157
  %v729 = vunpack.c.l.b16 %v158
  %v730 = vunpack.c.l.b16 %v159
  %v731 = vunpack.c.h.b16 %v159
  %v732 = vunpack.c.l.b16 %v160
  %v733 = vunpack.c.h.b16 %v160
  %v734 = vunpack.c.l.b16 %v161
  %v735 = vunpack.c.h.b16 %v161
  %v736 = vunpack.c.l.b16 %v162
  %v737 = vunpack.c.l.b16 %v163
  %v738 = vunpack.c.h.b16 %v163
  %v739 = vunpack.c.l.b16 %v164
  %v740 = vunpack.c.h.b16 %v164
  %v741 = vunpack.c.l.b16 %v165
  %v742 = vunpack.c.h.b16 %v165
  %v743 = vunpack.c.l.b16 %v166
  %v744 = vunpack.c.l.b16 %v167
  %v745 = vunpack.c.h.b16 %v167
  %v746 = vunpack.c.l.b16 %v168
  %v747 = vunpack.c.h.b16 %v168
  %v748 = vunpack.c.l.b16 %v169
  %v749 = vunpack.c.h.b16 %v169
  %v750 = vunpack.c.l.b16 %v170
  %v751 = vunpack.c.l.b16 %v171
  %v752 = vunpack.c.h.b16 %v171
  %v753 = vunpack.c.l.b16 %v172
  %v754 = vunpack.c.h.b16 %v172
  %v755 = vunpack.c.l.b16 %v173
  %v756 = vunpack.c.h.b16 %v173
  %v757 = vunpack.c.l.b16 %v174
  %v758 = vunpack.c.l.b16 %v175
  %v759 = vunpack.c.h.b16 %v175
  %v760 = vunpack.c.l.b16 %v176
  %v761 = vunpack.c.h.b16 %v176
  %v762 = vunpack.c.l.b16 %v177
  %v763 = vunpack.c.h.b16 %v177
  %v764 = vunpack.c.l.b16 %v178
  %v765 = vunpack.c.l.b16 %v179
  %v766 = vunpack.c.h.b16 %v179
  %v767 = vunpack.c.l.b16 %v180
  %v768 = vunpack.c.h.b16 %v180
  %v769 = vunpack.c.l.b16 %v181
  %v770 = vunpack.c.h.b16 %v181
  %v771 = vunpack.c.l.b16 %v182
  %v772 = vunpack.c.l.b16 %v183
  %v773 = vunpack.c.h.b16 %v183
  %v774 = vunpack.c.l.b16 %v184
  %v775 = vunpack.c.h.b16 %v184
  %v776 = vunpack.c.l.b16 %v185
  %v777 = vunpack.c.h.b16 %v185
  %v778 = vunpack.c.l.b16 %v186
  %v779 = vpack.c.b16 %v485, %v478
  %v780 = vpack.c.b16 %v486, %v479
  %v781 = vpack.c.b16 %v487, %v480
  %v782 = vpack.c.b16 %v488, %v481
  %v783 = vpack.c.b16 %v489, %v482
  %v784 = vpack.c.b16 %v490, %v483
  %v785 = vpack.c.b16 %v491, %v484
  %v786 = vpack.c.b16 %v499, %v492
  %v787 = vpack.c.b16 %v500, %v493
  %v788 = vpack.c.b16 %v501, %v494
  %v789 = vpack.c.b16 %v502, %v495
  %v790 = vpack.c.b16 %v503, %v496
  %v791 = vpack.c.b16 %v504, %v497
  %v792 = vpack.c.b16 %v505, %v498
  %v793 = vpack.c.b16 %v513, %v506
  %v794 = vpack.c.b16 %v514, %v507
  %v795 = vpack.c.b16 %v515, %v508
  %v796 = vpack.c.b16 %v516, %v509
  %v797 = vpack.c.b16 %v517, %v510
  %v798 = vpack.c.b16 %v518, %v511
  %v799 = vpack.c.b16 %v519, %v512
  %v800 = vpack.c.b16 %v527, %v520
  %v801 = vpack.c.b16 %v528, %v521
  %v802 = vpack.c.b16 %v529, %v522
  %v803 = vpack.c.b16 %v530, %v523
  %v804 = vpack.c.b16 %v531, %v524
  %v805 = vpack.c.b16 %v532, %v525
  %v806 = vpack.c.b16 %v533, %v526
  %v807 = vpack.c.b16 %v541, %v534
  %v808 = vpack.c.b16 %v542, %v535
  %v809 = vpack.c.b16 %v543, %v536
  %v810 = vpack.c.b16 %v544, %v537
  %v811 = vpack.c.b16 %v545, %v538
  %v812 = vpack.c.b16 %v546, %v539
  %v813 = vpack.c.b16 %v547, %v540
  %v814 = vpack.c.b16 %v555, %v548
  %v815 = vpack.c.b16 %v556, %v549
  %v816 = vpack.c.b16 %v557, %v550
  %v817 = vpack.c.b16 %v558, %v551
  %v818 = vpack.c.b16 %v559, %v552
  %v819 = vpack.c.b16 %v560, %v553
  %v820 = vpack.c.b16 %v561, %v554
  %v821 = vpack.c.b16 %v569, %v562
  %v822 = vpack.c.b16 %v570, %v563
  %v823 = vpack.c.b16 %v571, %v564
  %v824 = vpack.c.b16 %v572, %v565
  %v825 = vpack.c.b16 %v573, %v566
  %v826 = vpack.c.b16 %v574, %v567
  %v827 = vpack.c.b16 %v575, %v568
  %v828 = vpack.c.b16 %v583, %v576
  %v829 = vpack.c.b16 %v584, %v577
  %v830 = vpack.c.b16 %v585, %v578
  %v831 = vpack.c.b16 %v586, %v579
  %v832 = vpack.c.b16 %v587, %v580
  %v833 = vpack.c.b16 %v588, %v581
  %v834 = vpack.c.b16 %v589, %v582
  %v835 = vpack.c.b16 %v597, %v590
  %v836 = vpack.c.b16 %v598, %v591
  %v837 = vpack.c.b16 %v599, %v592
  %v838 = vpack.c.b16 %v600, %v593
  %v839 = vpack.c.b16 %v601, %v594
  %v840 = vpack.c.b16 %v602, %v595
  %v841 = vpack.c.b16 %v603, %v596
  %v842 = vpack.c.b16 %v611, %v604
  %v843 = vpack.c.b16 %v612, %v605
  %v844 = vpack.c.b16 %v613, %v606
  %v845 = vpack.c.b16 %v614, %v607
  %v846 = vpack.c.b16 %v615, %v608
  %v847 = vpack.c.b16 %v616, %v609
  %v848 = vpack.c.b16 %v617, %v610
  %v849 = vpack.c.b16 %v625, %v618
  %v850 = vpack.c.b16 %v626, %v619
  %v851 = vpack.c.b16 %v627, %v620
  %v852 = vpack.c.b16 %v628, %v621
  %v853 = vpack.c.b16 %v629, %v622
  %v854 = vpack.c.b16 %v630, %v623
  %v855 = vpack.c.b16 %v631, %v624
  %v856 = vpack.c.b16 %v639, %v632
  %v857 = vpack.c.b16 %v640, %v633
  %v858 = vpack.c.b16 %v641, %v634
  %v859 = vpack.c.b16 %v642, %v635
  %v860 = vpack.c.b16 %v643, %v636
  %v861 = vpack.c.b16 %v644, %v637
  %v862 = vpack.c.b16 %v645, %v638
  %v863 = vpack.c.b16 %v653, %v646
  %v864 = vpack.c.b16 %v654, %v647
  %v865 = vpack.c.b16 %v655, %v648
  %v866 = vpack.c.b16 %v656, %v649
  %v867 = vpack.c.b16 %v657, %v650
  %v868 = vpack.c.b16 %v658, %v651
  %v869 = vpack.c.b16 %v659, %v652
  %v870 = vpack.c.b16 %v667, %v660
  %v871 = vpack.c.b16 %v668, %v661
  %v872 = vpack.c.b16 %v669, %v662
  %v873 = vpack.c.b16 %v670, %v663
  %v874 = vpack.c.b16 %v671, %v664
  %v875 = vpack.c.b16 %v672, %v665
  %v876 = vpack.c.b16 %v673, %v666
  %v877 = vpack.c.b16 %v681, %v674
  %v878 = vpack.c.b16 %v682, %v675
  %v879 = vpack.c.b16 %v683, %v676
  %v880 = vpack.c.b16 %v684, %v677
  %v881 = vpack.c.b16 %v685, %v678
  %v882 = vpack.c.b16 %v686, %v679
  %v883 = vpack.c.b16 %v687, %v680
  %v884 = vpack.c.b16 %v695, %v688
  %v885 = vpack.c.b16 %v696, %v689
  %v886 = vpack.c.b16 %v697, %v690
  %v887 = vpack.c.b16 %v698, %v691
  %v888 = vpack.c.b16 %v699, %v692
  %v889 = vpack.c.b16 %v700, %v693
  %v890 = vpack.c.b16 %v701, %v694
  %v891 = vpack.c.b16 %v709, %v702
  %v892 = vpack.c.b16 %v710, %v703
  %v893 = vpack.c.b16 %v711, %v704
  %v894 = vpack.c.b16 %v712, %v705
  %v895 = vpack.c.b16 %v713, %v706
  %v896 = vpack.c.b16 %v714, %v707
  %v897 = vpack.c.b16 %v715, %v708
  %v898 = vpack.c.b16 %v723, %v716
  %v899 = vpack.c.b16 %v724, %v717
  %v900 = vpack.c.b16 %v725, %v718
  %v901 = vpack.c.b16 %v726, %v719
  %v902 = vpack.c.b16 %v727, %v720
  %v903 = vpack.c.b16 %v728, %v721
  %v904 = vpack.c.b16 %v729, %v722
  %v905 = vpack.c.b16 %v737, %v730
  %v906 = vpack.c.b16 %v738, %v731
  %v907 = vpack.c.b16 %v739, %v732
  %v908 = vpack.c.b16 %v740, %v733
  %v909 = vpack.c.b16 %v741, %v734
  %v910 = vpack.c.b16 %v742, %v735
  %v911 = vpack.c.b16 %v743, %v736
  %v912 = vpack.c.b16 %v751, %v744
  %v913 = vpack.c.b16 %v752, %v745
  %v914 = vpack.c.b16 %v753, %v746
  %v915 = vpack.c.b16 %v754, %v747
  %v916 = vpack.c.b16 %v755, %v748
  %v917 = vpack.c.b16 %v756, %v749
  %v918 = vpack.c.b16 %v757, %v750
  %v919 = vpack.c.b16 %v765, %v758
  %v920 = vpack.c.b16 %v766, %v759
  %v921 = vpack.c.b16 %v767, %v760
  %v922 = vpack.c.b16 %v768, %v761
  %v923 = vpack.c.b16 %v769, %v762
  %v924 = vpack.c.b16 %v770, %v763
  %v925 = vpack.c.b16 %v771, %v764
  %v926 = vpack.c.b16 %v772, %v772
  %v927 = vpack.c.b16 %v773, %v773
  %v928 = vpack.c.b16 %v774, %v774
  %v929 = vpack.c.b16 %v775, %v775
  %v930 = vpack.c.b16 %v776, %v776
  %v931 = vpack.c.b16 %v777, %v777
  %v932 = vpack.c.b16 %v778, %v778
  %v1199 = vunpack.c.l.b16 %v187
  %v1200 = vunpack.c.l.b16 %v188
  %v1201 = vunpack.c.l.b16 %v189
  %v1202 = vunpack.c.l.b16 %v190
  %v1203 = vunpack.c.l.b16 %v191
  %v1204 = vunpack.c.l.b16 %v192
  %v1205 = vunpack.c.l.b16 %v193
  %v1206 = vunpack.c.l.b16 %v194
  %v1207 = vunpack.c.l.b16 %v195
  %v1208 = vunpack.c.l.b16 %v196
  %v1209 = vunpack.c.l.b16 %v197
  %v1210 = vunpack.c.l.b16 %v198
  %v1211 = vunpack.c.l.b16 %v199
  %v1212 = vunpack.c.l.b16 %v200
  %v1213 = vunpack.c.l.b16 %v201
  %v1214 = vunpack.c.l.b16 %v202
  %v1215 = vunpack.c.l.b16 %v203
  %v1216 = vunpack.c.l.b16 %v204
  %v1217 = vunpack.c.l.b16 %v205
  %v1218 = vunpack.c.l.b16 %v206
  %v1219 = vunpack.c.l.b16 %v207
  %v1220 = vunpack.c.l.b16 %v208
  %v1221 = vunpack.c.l.b16 %v209
  %v1222 = vunpack.c.l.b16 %v210
  %v1223 = vunpack.c.l.b16 %v211
  %v1224 = vunpack.c.l.b16 %v212
  %v1225 = vunpack.c.l.b16 %v213
  %v1226 = vunpack.c.l.b16 %v214
  %v1227 = vunpack.c.l.b16 %v215
  %v1228 = vunpack.c.l.b16 %v216
  %v1229 = vunpack.c.l.b16 %v217
  %v1230 = vunpack.c.l.b16 %v218
  %v1231 = vunpack.c.l.b16 %v219
  %v1232 = vunpack.c.l.b16 %v220
  %v1233 = vunpack.c.l.b16 %v221
  %v1234 = vunpack.c.l.b16 %v222
  %v1235 = vunpack.c.l.b16 %v223
  %v1236 = vunpack.c.l.b16 %v224
  %v1237 = vunpack.c.l.b16 %v225
  %v1238 = vunpack.c.l.b16 %v226
  %v1239 = vunpack.c.l.b16 %v227
  %v1240 = vunpack.c.l.b16 %v228
  %v1241 = vunpack.c.l.b16 %v229
  %v1242 = vunpack.c.l.b16 %v230
  %v1243 = vunpack.c.l.b16 %v231
  %v1244 = vunpack.c.l.b16 %v232
  %v1245 = vunpack.c.l.b16 %v233
  %v1246 = vunpack.c.l.b16 %v234
  %v1247 = vunpack.c.l.b16 %v235
  %v1248 = vunpack.c.l.b16 %v236
  %v1249 = vunpack.c.l.b16 %v237
  %v1250 = vunpack.c.l.b16 %v238
  %v1251 = vunpack.c.l.b16 %v239
  %v1252 = vunpack.c.l.b16 %v240
  %v1253 = vunpack.c.l.b16 %v241
  %v1254 = vunpack.c.l.b16 %v242
  %v1255 = vunpack.c.l.b16 %v243
  %v1256 = vunpack.c.l.b16 %v244
  %v1257 = vunpack.c.l.b16 %v245
  %v1258 = vunpack.c.l.b16 %v246
  %v1259 = vunpack.c.l.b16 %v247
  %v1260 = vunpack.c.l.b16 %v248
  %v1261 = vunpack.c.l.b16 %v249
  %v1262 = vunpack.c.l.b16 %v250
  %v1263 = vunpack.c.l.b16 %v251
  %v1264 = vunpack.c.l.b16 %v252
  %v1265 = vunpack.c.l.b16 %v253
  %v1266 = vunpack.c.l.b16 %v254
  %v1267 = vunpack.c.l.b16 %v255
  %v1268 = vunpack.c.l.b16 %v256
  %v1269 = vunpack.c.l.b16 %v257
  %v1270 = vunpack.c.l.b16 %v258
  %v1271 = vunpack.c.l.b16 %v259
  %v1272 = vunpack.c.l.b16 %v260
  %v1273 = vunpack.c.l.b16 %v261
  %v1274 = vunpack.c.l.b16 %v262
  %v1275 = vunpack.c.l.b16 %v263
  %v1276 = vunpack.c.l.b16 %v264
  %v1277 = vunpack.c.l.b16 %v265
  %v1278 = vunpack.c.l.b16 %v266
  %v1279 = vunpack.c.l.b16 %v267
  %v1280 = vunpack.c.l.b16 %v268
  %v1281 = vunpack.c.l.b16 %v269
  %v1282 = vunpack.c.l.b16 %v270
  %v1283 = vunpack.c.l.b16 %v271
  %v1284 = vunpack.c.l.b16 %v272
  %v1285 = vunpack.c.l.b16 %v273
  %v1286 = vunpack.c.l.b16 %v274
  %v1287 = vunpack.c.l.b16 %v275
  %v1288 = vunpack.c.l.b16 %v276
  %v1289 = vunpack.c.l.b16 %v277
  %v1290 = vunpack.c.l.b16 %v278
  %v1291 = vunpack.c.l.b16 %v279
  %v1292 = vunpack.c.l.b16 %v280
  %v1293 = vunpack.c.l.b16 %v281
  %v1294 = vunpack.c.l.b16 %v282
  %v1295 = vunpack.c.l.b16 %v283
  %v1296 = vunpack.c.l.b16 %v284
  %v1297 = vunpack.c.l.b16 %v285
  %v1298 = vunpack.c.l.b16 %v286
  %v1299 = vunpack.c.l.b16 %v287
  %v1300 = vunpack.c.l.b16 %v288
  %v1301 = vunpack.c.l.b16 %v289
  %v1302 = vunpack.c.l.b16 %v290
  %v1303 = vunpack.c.l.b16 %v291
  %v1304 = vunpack.c.l.b16 %v292
  %v1305 = vunpack.c.l.b16 %v293
  %v1306 = vunpack.c.l.b16 %v294
  %v1307 = vunpack.c.l.b16 %v295
  %v1308 = vunpack.c.l.b16 %v296
  %v1309 = vunpack.c.l.b16 %v297
  %v1310 = vunpack.c.l.b16 %v298
  %v1311 = vpack.c.b16 %v1200, %v1199
  %v1312 = vpack.c.b16 %v1202, %v1201
  %v1313 = vpack.c.b16 %v1204, %v1203
  %v1314 = vpack.c.b16 %v1206, %v1205
  %v1315 = vpack.c.b16 %v1208, %v1207
  %v1316 = vpack.c.b16 %v1210, %v1209
  %v1317 = vpack.c.b16 %v1212, %v1211
  %v1318 = vpack.c.b16 %v1214, %v1213
  %v1319 = vpack.c.b16 %v1216, %v1215
  %v1320 = vpack.c.b16 %v1218, %v1217
  %v1321 = vpack.c.b16 %v1220, %v1219
  %v1322 = vpack.c.b16 %v1222, %v1221
  %v1323 = vpack.c.b16 %v1224, %v1223
  %v1324 = vpack.c.b16 %v1226, %v1225
  %v1325 = vpack.c.b16 %v1228, %v1227
  %v1326 = vpack.c.b16 %v1230, %v1229
  %v1327 = vpack.c.b16 %v1232, %v1231
  %v1328 = vpack.c.b16 %v1234, %v1233
  %v1329 = vpack.c.b16 %v1236, %v1235
  %v1330 = vpack.c.b16 %v1238, %v1237
  %v1331 = vpack.c.b16 %v1240, %v1239
  %v1332 = vpack.c.b16 %v1242, %v1241
  %v1333 = vpack.c.b16 %v1244, %v1243
  %v1334 = vpack.c.b16 %v1246, %v1245
  %v1335 = vpack.c.b16 %v1248, %v1247
  %v1336 = vpack.c.b16 %v1250, %v1249
  %v1337 = vpack.c.b16 %v1252, %v1251
  %v1338 = vpack.c.b16 %v1254, %v1253
  %v1339 = vpack.c.b16 %v1256, %v1255
  %v1340 = vpack.c.b16 %v1258, %v1257
  %v1341 = vpack.c.b16 %v1260, %v1259
  %v1342 = vpack.c.b16 %v1262, %v1261
  %v1343 = vpack.c.b16 %v1264, %v1263
  %v1344 = vpack.c.b16 %v1266, %v1265
  %v1345 = vpack.c.b16 %v1268, %v1267
  %v1346 = vpack.c.b16 %v1270, %v1269
  %v1347 = vpack.c.b16 %v1272, %v1271
  %v1348 = vpack.c.b16 %v1274, %v1273
  %v1349 = vpack.c.b16 %v1276, %v1275
  %v1350 = vpack.c.b16 %v1278, %v1277
  %v1351 = vpack.c.b16 %v1280, %v1279
  %v1352 = vpack.c.b16 %v1282, %v1281
  %v1353 = vpack.c.b16 %v1284, %v1283
  %v1354 = vpack.c.b16 %v1286, %v1285
  %v1355 = vpack.c.b16 %v1288, %v1287
  %v1356 = vpack.c.b16 %v1290, %v1289
  %v1357 = vpack.c.b16 %v1292, %v1291
  %v1358 = vpack.c.b16 %v1294, %v1293
  %v1359 = vpack.c.b16 %v1296, %v1295
  %v1360 = vpack.c.b16 %v1298, %v1297
  %v1361 = vpack.c.b16 %v1300, %v1299
  %v1362 = vpack.c.b16 %v1302, %v1301
  %v1363 = vpack.c.b16 %v1304, %v1303
  %v1364 = vpack.c.b16 %v1306, %v1305
  %v1365 = vpack.c.b16 %v1308, %v1307
  %v1366 = vpack.c.b16 %v1310, %v1309
  %1423 = vmatprep.subr.bf16.mxu0 0
  %1424 = vmatpush1.bf16.msra.mxu0 %v1311
  %1425 = vmatprep.subr.bf16.mxu0 0
  %1426 = vmatpush1.bf16.msra.mxu0 %v1312
  %1427 = vmatprep.subr.bf16.mxu0 0
  %1428 = vmatpush1.bf16.msra.mxu0 %v1313
  %1429 = vmatprep.subr.bf16.mxu0 0
  %1430 = vmatpush1.bf16.msra.mxu0 %v1314
  %1431 = vmatprep.subr.bf16.mxu0 0
  %1432 = vmatpush1.bf16.msra.mxu0 %v1315
  %1433 = vmatprep.subr.bf16.mxu0 0
  %1434 = vmatpush1.bf16.msra.mxu0 %v1316
  %1435 = vmatprep.subr.bf16.mxu0 0
  %1436 = vmatpush1.bf16.msra.mxu0 %v1317
  %1437 = vmatprep.subr.bf16.mxu0 0
  %1438 = vmatpush1.bf16.msra.mxu0 %v1318
  %1439 = vmatprep.subr.bf16.mxu0 0
  %1440 = vmatpush1.bf16.msra.mxu0 %v1319
  %1441 = vmatprep.subr.bf16.mxu0 0
  %1442 = vmatpush1.bf16.msra.mxu0 %v1320
  %1443 = vmatprep.subr.bf16.mxu0 0
  %1444 = vmatpush1.bf16.msra.mxu0 %v1321
  %1445 = vmatprep.subr.bf16.mxu0 0
  %1446 = vmatpush1.bf16.msra.mxu0 %v1322
  %1447 = vmatprep.subr.bf16.mxu0 0
  %1448 = vmatpush1.bf16.msra.mxu0 %v1323
  %1449 = vmatprep.subr.bf16.mxu0 0
  %1450 = vmatpush1.bf16.msra.mxu0 %v1324
  %1451 = vmatprep.subr.bf16.mxu0 0
  %1452 = vmatpush1.bf16.msra.mxu0 %v1325
  %1453 = vmatprep.subr.bf16.mxu0 0
  %1454 = vmatpush1.bf16.msra.mxu0 %v1326
  %1455 = vmatprep.mubr.bf16.mxu0 %v780
  %1456 = vmatmul.mubr.bf16.gmra.mrb[0].mxu0 %v779
  %v1457 = vpop.f32.mrb[0].mxu0
  %v1458 = vadd.f32 %v304, %v1457
  %v1459 = vpop.f32.mrb[0].mxu0
  %v1460 = vpop.f32.mrb[0].mxu0
  %v1461 = vadd.f32 %v304, %v1460
  %v1462 = vpop.f32.mrb[0].mxu0
  %1463 = vmatprep.mubr.bf16.mxu0 %v787
  %1464 = vmatmul.mubr.bf16.gmra.mrb[0].mxu0 %v786
  %v1465 = vpop.f32.mrb[0].mxu0
  %v1466 = vadd.f32 %v304, %v1465
  %v1467 = vpop.f32.mrb[0].mxu0
  %v1468 = vpop.f32.mrb[0].mxu0
  %v1469 = vadd.f32 %v304, %v1468
  %v1470 = vpop.f32.mrb[0].mxu0
  %1471 = vmatprep.mubr.bf16.mxu0 %v794
  %1472 = vmatmul.mubr.bf16.gmra.mrb[0].mxu0 %v793
  %v1473 = vpop.f32.mrb[0].mxu0
  %v1474 = vadd.f32 %v304, %v1473
  %v1475 = vpop.f32.mrb[0].mxu0
  %v1476 = vpop.f32.mrb[0].mxu0
  %v1477 = vadd.f32 %v304, %v1476
  %v1478 = vpop.f32.mrb[0].mxu0
  %1479 = vmatprep.mubr.bf16.mxu0 %v801
  %1480 = vmatmul.mubr.bf16.gmra.mrb[0].mxu0 %v800
  %v1481 = vpop.f32.mrb[0].mxu0
  %v1482 = vadd.f32 %v304, %v1481
  %v1483 = vpop.f32.mrb[0].mxu0
  %v1484 = vpop.f32.mrb[0].mxu0
  %v1485 = vadd.f32 %v304, %v1484
  %v1486 = vpop.f32.mrb[0].mxu0
  %1487 = vmatprep.mubr.bf16.mxu0 %v808
  %1488 = vmatmul.mubr.bf16.gmra.mrb[0].mxu0 %v807
  %v1489 = vpop.f32.mrb[0].mxu0
  %v1490 = vadd.f32 %v304, %v1489
  %v1491 = vpop.f32.mrb[0].mxu0
  %v1492 = vpop.f32.mrb[0].mxu0
  %v1493 = vadd.f32 %v304, %v1492
  %v1494 = vpop.f32.mrb[0].mxu0
  %1495 = vmatprep.mubr.bf16.mxu0 %v815
  %1496 = vmatmul.mubr.bf16.gmra.mrb[0].mxu0 %v814
  %v1497 = vpop.f32.mrb[0].mxu0
  %v1498 = vadd.f32 %v304, %v1497
  %v1499 = vpop.f32.mrb[0].mxu0
  %v1500 = vpop.f32.mrb[0].mxu0
  %v1501 = vadd.f32 %v304, %v1500
  %v1502 = vpop.f32.mrb[0].mxu0
  %1503 = vmatprep.mubr.bf16.mxu0 %v822
  %1504 = vmatmul.mubr.bf16.gmra.mrb[0].mxu0 %v821
  %v1505 = vpop.f32.mrb[0].mxu0
  %v1506 = vadd.f32 %v304, %v1505
  %v1507 = vpop.f32.mrb[0].mxu0
  %v1508 = vpop.f32.mrb[0].mxu0
  %v1509 = vadd.f32 %v304, %v1508
  %v1510 = vpop.f32.mrb[0].mxu0
  %1511 = vmatprep.mubr.bf16.mxu0 %v829
  %1512 = vmatmul.mubr.bf16.gmra.mrb[0].mxu0 %v828
  %v1513 = vpop.f32.mrb[0].mxu0
  %v1514 = vadd.f32 %v304, %v1513
  %v1515 = vpop.f32.mrb[0].mxu0
  %v1516 = vpop.f32.mrb[0].mxu0
  %v1517 = vadd.f32 %v304, %v1516
  %v1518 = vpop.f32.mrb[0].mxu0
  %1519 = vmatprep.mubr.bf16.mxu0 %v836
  %1520 = vmatmul.mubr.bf16.gmra.mrb[0].mxu0 %v835
  %v1521 = vpop.f32.mrb[0].mxu0
  %v1522 = vadd.f32 %v304, %v1521
  %v1523 = vpop.f32.mrb[0].mxu0
  %v1524 = vpop.f32.mrb[0].mxu0
  %v1525 = vadd.f32 %v304, %v1524
  %v1526 = vpop.f32.mrb[0].mxu0
  %1527 = vmatprep.mubr.bf16.mxu0 %v843
  %1528 = vmatmul.mubr.bf16.gmra.mrb[0].mxu0 %v842
  %v1529 = vpop.f32.mrb[0].mxu0
  %v1530 = vadd.f32 %v304, %v1529
  %v1531 = vpop.f32.mrb[0].mxu0
  %v1532 = vpop.f32.mrb[0].mxu0
  %v1533 = vadd.f32 %v304, %v1532
  %v1534 = vpop.f32.mrb[0].mxu0
  %1535 = vmatprep.mubr.bf16.mxu0 %v850
  %1536 = vmatmul.mubr.bf16.gmra.mrb[0].mxu0 %v849
  %v1537 = vpop.f32.mrb[0].mxu0
  %v1538 = vadd.f32 %v304, %v1537
  %v1539 = vpop.f32.mrb[0].mxu0
  %v1540 = vpop.f32.mrb[0].mxu0
  %v1541 = vadd.f32 %v304, %v1540
  %v1542 = vpop.f32.mrb[0].mxu0
  %1543 = vmatprep.mubr.bf16.mxu0 %v857
  %1544 = vmatmul.mubr.bf16.gmra.mrb[0].mxu0 %v856
  %v1545 = vpop.f32.mrb[0].mxu0
  %v1546 = vadd.f32 %v304, %v1545
  %v1547 = vpop.f32.mrb[0].mxu0
  %v1548 = vpop.f32.mrb[0].mxu0
  %v1549 = vadd.f32 %v304, %v1548
  %v1550 = vpop.f32.mrb[0].mxu0
  %1551 = vmatprep.mubr.bf16.mxu0 %v864
  %1552 = vmatmul.mubr.bf16.gmra.mrb[0].mxu0 %v863
  %v1553 = vpop.f32.mrb[0].mxu0
  %v1554 = vadd.f32 %v304, %v1553
  %v1555 = vpop.f32.mrb[0].mxu0
  %v1556 = vpop.f32.mrb[0].mxu0
  %v1557 = vadd.f32 %v304, %v1556
  %v1558 = vpop.f32.mrb[0].mxu0
  %1559 = vmatprep.mubr.bf16.mxu0 %v871
  %1560 = vmatmul.mubr.bf16.gmra.mrb[0].mxu0 %v870
  %v1561 = vpop.f32.mrb[0].mxu0
  %v1562 = vadd.f32 %v304, %v1561
  %v1563 = vpop.f32.mrb[0].mxu0
  %v1564 = vpop.f32.mrb[0].mxu0
  %v1565 = vadd.f32 %v304, %v1564
  %v1566 = vpop.f32.mrb[0].mxu0
  %1567 = vmatprep.mubr.bf16.mxu0 %v878
  %1568 = vmatmul.mubr.bf16.gmra.mrb[0].mxu0 %v877
  %v1569 = vpop.f32.mrb[0].mxu0
  %v1570 = vadd.f32 %v304, %v1569
  %v1571 = vpop.f32.mrb[0].mxu0
  %v1572 = vpop.f32.mrb[0].mxu0
  %v1573 = vadd.f32 %v304, %v1572
  %v1574 = vpop.f32.mrb[0].mxu0
  %1575 = vmatprep.mubr.bf16.mxu0 %v885
  %1576 = vmatmul.mubr.bf16.gmra.mrb[0].mxu0 %v884
  %v1577 = vpop.f32.mrb[0].mxu0
  %v1578 = vadd.f32 %v304, %v1577
  %v1579 = vpop.f32.mrb[0].mxu0
  %v1580 = vpop.f32.mrb[0].mxu0
  %v1581 = vadd.f32 %v304, %v1580
  %v1582 = vpop.f32.mrb[0].mxu0
  %1583 = vmatprep.mubr.bf16.mxu0 %v892
  %1584 = vmatmul.mubr.bf16.gmra.mrb[0].mxu0 %v891
  %v1585 = vpop.f32.mrb[0].mxu0
  %v1586 = vadd.f32 %v304, %v1585
  %v1587 = vpop.f32.mrb[0].mxu0
  %v1588 = vpop.f32.mrb[0].mxu0
  %v1589 = vadd.f32 %v304, %v1588
  %v1590 = vpop.f32.mrb[0].mxu0
  %1591 = vmatprep.mubr.bf16.mxu0 %v899
  %1592 = vmatmul.mubr.bf16.gmra.mrb[0].mxu0 %v898
  %v1593 = vpop.f32.mrb[0].mxu0
  %v1594 = vadd.f32 %v304, %v1593
  %v1595 = vpop.f32.mrb[0].mxu0
  %v1596 = vpop.f32.mrb[0].mxu0
  %v1597 = vadd.f32 %v304, %v1596
  %v1598 = vpop.f32.mrb[0].mxu0
  %1599 = vmatprep.mubr.bf16.mxu0 %v906
  %1600 = vmatmul.mubr.bf16.gmra.mrb[0].mxu0 %v905
  %v1601 = vpop.f32.mrb[0].mxu0
  %v1602 = vadd.f32 %v304, %v1601
  %v1603 = vpop.f32.mrb[0].mxu0
  %v1604 = vpop.f32.mrb[0].mxu0
  %v1605 = vadd.f32 %v304, %v1604
  %v1606 = vpop.f32.mrb[0].mxu0
  %1607 = vmatprep.mubr.bf16.mxu0 %v913
  %1608 = vmatmul.mubr.bf16.gmra.mrb[0].mxu0 %v912
  %v1609 = vpop.f32.mrb[0].mxu0
  %v1610 = vadd.f32 %v304, %v1609
  %v1611 = vpop.f32.mrb[0].mxu0
  %v1612 = vpop.f32.mrb[0].mxu0
  %v1613 = vadd.f32 %v304, %v1612
  %v1614 = vpop.f32.mrb[0].mxu0
  %1615 = vmatprep.mubr.bf16.mxu0 %v920
  %1616 = vmatmul.mubr.bf16.gmra.mrb[0].mxu0 %v919
  %v1617 = vpop.f32.mrb[0].mxu0
  %v1618 = vadd.f32 %v304, %v1617
  %v1619 = vpop.f32.mrb[0].mxu0
  %v1620 = vpop.f32.mrb[0].mxu0
  %v1621 = vadd.f32 %v304, %v1620
  %v1622 = vpop.f32.mrb[0].mxu0
  %1623 = vmatprep.mubr.bf16.mxu0 %v927
  %1624 = vmatmul.mubr.bf16.gmra.mrb[0].mxu0 %v926
  %v1625 = vpop.f32.mrb[0].mxu0
  %v1626 = vadd.f32 %v304, %v1625
  %v1627 = vpop.f32.mrb[0].mxu0
  %v1628 = vpop.f32.mrb[0].mxu0
  %v1629 = vpop.f32.mrb[0].mxu0
  %1630 = vdwg.mxu0
  %1631 = vmatprep.subr.bf16.mxu0 0
  %1632 = vmatpush1.bf16.msra.mxu0 %v1327
  %1633 = vmatprep.subr.bf16.mxu0 0
  %1634 = vmatpush1.bf16.msra.mxu0 %v1328
  %1635 = vmatprep.subr.bf16.mxu0 0
  %1636 = vmatpush1.bf16.msra.mxu0 %v1329
  %1637 = vmatprep.subr.bf16.mxu0 0
  %1638 = vmatpush1.bf16.msra.mxu0 %v1330
  %1639 = vmatprep.subr.bf16.mxu0 0
  %1640 = vmatpush1.bf16.msra.mxu0 %v1331
  %1641 = vmatprep.subr.bf16.mxu0 0
  %1642 = vmatpush1.bf16.msra.mxu0 %v1332
  %1643 = vmatprep.subr.bf16.mxu0 0
  %1644 = vmatpush1.bf16.msra.mxu0 %v1333
  %1645 = vmatprep.subr.bf16.mxu0 0
  %1646 = vmatpush1.bf16.msra.mxu0 %v1334
  %1647 = vmatprep.subr.bf16.mxu0 0
  %1648 = vmatpush1.bf16.msra.mxu0 %v1335
  %1649 = vmatprep.subr.bf16.mxu0 0
  %1650 = vmatpush1.bf16.msra.mxu0 %v1336
  %1651 = vmatprep.subr.bf16.mxu0 0
  %1652 = vmatpush1.bf16.msra.mxu0 %v1337
  %1653 = vmatprep.subr.bf16.mxu0 0
  %1654 = vmatpush1.bf16.msra.mxu0 %v1338
  %1655 = vmatprep.subr.bf16.mxu0 0
  %1656 = vmatpush1.bf16.msra.mxu0 %v1339
  %1657 = vmatprep.subr.bf16.mxu0 0
  %1658 = vmatpush1.bf16.msra.mxu0 %v1340
  %1659 = vmatprep.subr.bf16.mxu0 0
  %1660 = vmatpush1.bf16.msra.mxu0 %v1341
  %1661 = vmatprep.subr.bf16.mxu0 0
  %1662 = vmatpush1.bf16.msra.mxu0 %v1342
  %1663 = vmatprep.mubr.bf16.mxu0 %v782
  %1664 = vmatmul.mubr.bf16.gmra.mrb[0].mxu0 %v781
  %v1665 = vpop.f32.mrb[0].mxu0
  %v1666 = vadd.f32 %v1458, %v1665
  %v1667 = vpop.f32.mrb[0].mxu0
  %v1668 = vpop.f32.mrb[0].mxu0
  %v1669 = vadd.f32 %v1461, %v1668
  %v1670 = vpop.f32.mrb[0].mxu0
  %1671 = vmatprep.mubr.bf16.mxu0 %v789
  %1672 = vmatmul.mubr.bf16.gmra.mrb[0].mxu0 %v788
  %v1673 = vpop.f32.mrb[0].mxu0
  %v1674 = vadd.f32 %v1466, %v1673
  %v1675 = vpop.f32.mrb[0].mxu0
  %v1676 = vpop.f32.mrb[0].mxu0
  %v1677 = vadd.f32 %v1469, %v1676
  %v1678 = vpop.f32.mrb[0].mxu0
  %1679 = vmatprep.mubr.bf16.mxu0 %v796
  %1680 = vmatmul.mubr.bf16.gmra.mrb[0].mxu0 %v795
  %v1681 = vpop.f32.mrb[0].mxu0
  %v1682 = vadd.f32 %v1474, %v1681
  %v1683 = vpop.f32.mrb[0].mxu0
  %v1684 = vpop.f32.mrb[0].mxu0
  %v1685 = vadd.f32 %v1477, %v1684
  %v1686 = vpop.f32.mrb[0].mxu0
  %1687 = vmatprep.mubr.bf16.mxu0 %v803
  %1688 = vmatmul.mubr.bf16.gmra.mrb[0].mxu0 %v802
  %v1689 = vpop.f32.mrb[0].mxu0
  %v1690 = vadd.f32 %v1482, %v1689
  %v1691 = vpop.f32.mrb[0].mxu0
  %v1692 = vpop.f32.mrb[0].mxu0
  %v1693 = vadd.f32 %v1485, %v1692
  %v1694 = vpop.f32.mrb[0].mxu0
  %1695 = vmatprep.mubr.bf16.mxu0 %v810
  %1696 = vmatmul.mubr.bf16.gmra.mrb[0].mxu0 %v809
  %v1697 = vpop.f32.mrb[0].mxu0
  %v1698 = vadd.f32 %v1490, %v1697
  %v1699 = vpop.f32.mrb[0].mxu0
  %v1700 = vpop.f32.mrb[0].mxu0
  %v1701 = vadd.f32 %v1493, %v1700
  %v1702 = vpop.f32.mrb[0].mxu0
  %1703 = vmatprep.mubr.bf16.mxu0 %v817
  %1704 = vmatmul.mubr.bf16.gmra.mrb[0].mxu0 %v816
  %v1705 = vpop.f32.mrb[0].mxu0
  %v1706 = vadd.f32 %v1498, %v1705
  %v1707 = vpop.f32.mrb[0].mxu0
  %v1708 = vpop.f32.mrb[0].mxu0
  %v1709 = vadd.f32 %v1501, %v1708
  %v1710 = vpop.f32.mrb[0].mxu0
  %1711 = vmatprep.mubr.bf16.mxu0 %v824
  %1712 = vmatmul.mubr.bf16.gmra.mrb[0].mxu0 %v823
  %v1713 = vpop.f32.mrb[0].mxu0
  %v1714 = vadd.f32 %v1506, %v1713
  %v1715 = vpop.f32.mrb[0].mxu0
  %v1716 = vpop.f32.mrb[0].mxu0
  %v1717 = vadd.f32 %v1509, %v1716
  %v1718 = vpop.f32.mrb[0].mxu0
  %1719 = vmatprep.mubr.bf16.mxu0 %v831
  %1720 = vmatmul.mubr.bf16.gmra.mrb[0].mxu0 %v830
  %v1721 = vpop.f32.mrb[0].mxu0
  %v1722 = vadd.f32 %v1514, %v1721
  %v1723 = vpop.f32.mrb[0].mxu0
  %v1724 = vpop.f32.mrb[0].mxu0
  %v1725 = vadd.f32 %v1517, %v1724
  %v1726 = vpop.f32.mrb[0].mxu0
  %1727 = vmatprep.mubr.bf16.mxu0 %v838
  %1728 = vmatmul.mubr.bf16.gmra.mrb[0].mxu0 %v837
  %v1729 = vpop.f32.mrb[0].mxu0
  %v1730 = vadd.f32 %v1522, %v1729
  %v1731 = vpop.f32.mrb[0].mxu0
  %v1732 = vpop.f32.mrb[0].mxu0
  %v1733 = vadd.f32 %v1525, %v1732
  %v1734 = vpop.f32.mrb[0].mxu0
  %1735 = vmatprep.mubr.bf16.mxu0 %v845
  %1736 = vmatmul.mubr.bf16.gmra.mrb[0].mxu0 %v844
  %v1737 = vpop.f32.mrb[0].mxu0
  %v1738 = vadd.f32 %v1530, %v1737
  %v1739 = vpop.f32.mrb[0].mxu0
  %v1740 = vpop.f32.mrb[0].mxu0
  %v1741 = vadd.f32 %v1533, %v1740
  %v1742 = vpop.f32.mrb[0].mxu0
  %1743 = vmatprep.mubr.bf16.mxu0 %v852
  %1744 = vmatmul.mubr.bf16.gmra.mrb[0].mxu0 %v851
  %v1745 = vpop.f32.mrb[0].mxu0
  %v1746 = vadd.f32 %v1538, %v1745
  %v1747 = vpop.f32.mrb[0].mxu0
  %v1748 = vpop.f32.mrb[0].mxu0
  %v1749 = vadd.f32 %v1541, %v1748
  %v1750 = vpop.f32.mrb[0].mxu0
  %1751 = vmatprep.mubr.bf16.mxu0 %v859
  %1752 = vmatmul.mubr.bf16.gmra.mrb[0].mxu0 %v858
  %v1753 = vpop.f32.mrb[0].mxu0
  %v1754 = vadd.f32 %v1546, %v1753
  %v1755 = vpop.f32.mrb[0].mxu0
  %v1756 = vpop.f32.mrb[0].mxu0
  %v1757 = vadd.f32 %v1549, %v1756
  %v1758 = vpop.f32.mrb[0].mxu0
  %1759 = vmatprep.mubr.bf16.mxu0 %v866
  %1760 = vmatmul.mubr.bf16.gmra.mrb[0].mxu0 %v865
  %v1761 = vpop.f32.mrb[0].mxu0
  %v1762 = vadd.f32 %v1554, %v1761
  %v1763 = vpop.f32.mrb[0].mxu0
  %v1764 = vpop.f32.mrb[0].mxu0
  %v1765 = vadd.f32 %v1557, %v1764
  %v1766 = vpop.f32.mrb[0].mxu0
  %1767 = vmatprep.mubr.bf16.mxu0 %v873
  %1768 = vmatmul.mubr.bf16.gmra.mrb[0].mxu0 %v872
  %v1769 = vpop.f32.mrb[0].mxu0
  %v1770 = vadd.f32 %v1562, %v1769
  %v1771 = vpop.f32.mrb[0].mxu0
  %v1772 = vpop.f32.mrb[0].mxu0
  %v1773 = vadd.f32 %v1565, %v1772
  %v1774 = vpop.f32.mrb[0].mxu0
  %1775 = vmatprep.mubr.bf16.mxu0 %v880
  %1776 = vmatmul.mubr.bf16.gmra.mrb[0].mxu0 %v879
  %v1777 = vpop.f32.mrb[0].mxu0
  %v1778 = vadd.f32 %v1570, %v1777
  %v1779 = vpop.f32.mrb[0].mxu0
  %v1780 = vpop.f32.mrb[0].mxu0
  %v1781 = vadd.f32 %v1573, %v1780
  %v1782 = vpop.f32.mrb[0].mxu0
  %1783 = vmatprep.mubr.bf16.mxu0 %v887
  %1784 = vmatmul.mubr.bf16.gmra.mrb[0].mxu0 %v886
  %v1785 = vpop.f32.mrb[0].mxu0
  %v1786 = vadd.f32 %v1578, %v1785
  %v1787 = vpop.f32.mrb[0].mxu0
  %v1788 = vpop.f32.mrb[0].mxu0
  %v1789 = vadd.f32 %v1581, %v1788
  %v1790 = vpop.f32.mrb[0].mxu0
  %1791 = vmatprep.mubr.bf16.mxu0 %v894
  %1792 = vmatmul.mubr.bf16.gmra.mrb[0].mxu0 %v893
  %v1793 = vpop.f32.mrb[0].mxu0
  %v1794 = vadd.f32 %v1586, %v1793
  %v1795 = vpop.f32.mrb[0].mxu0
  %v1796 = vpop.f32.mrb[0].mxu0
  %v1797 = vadd.f32 %v1589, %v1796
  %v1798 = vpop.f32.mrb[0].mxu0
  %1799 = vmatprep.mubr.bf16.mxu0 %v901
  %1800 = vmatmul.mubr.bf16.gmra.mrb[0].mxu0 %v900
  %v1801 = vpop.f32.mrb[0].mxu0
  %v1802 = vadd.f32 %v1594, %v1801
  %v1803 = vpop.f32.mrb[0].mxu0
  %v1804 = vpop.f32.mrb[0].mxu0
  %v1805 = vadd.f32 %v1597, %v1804
  %v1806 = vpop.f32.mrb[0].mxu0
  %1807 = vmatprep.mubr.bf16.mxu0 %v908
  %1808 = vmatmul.mubr.bf16.gmra.mrb[0].mxu0 %v907
  %v1809 = vpop.f32.mrb[0].mxu0
  %v1810 = vadd.f32 %v1602, %v1809
  %v1811 = vpop.f32.mrb[0].mxu0
  %v1812 = vpop.f32.mrb[0].mxu0
  %v1813 = vadd.f32 %v1605, %v1812
  %v1814 = vpop.f32.mrb[0].mxu0
  %1815 = vmatprep.mubr.bf16.mxu0 %v915
  %1816 = vmatmul.mubr.bf16.gmra.mrb[0].mxu0 %v914
  %v1817 = vpop.f32.mrb[0].mxu0
  %v1818 = vadd.f32 %v1610, %v1817
  %v1819 = vpop.f32.mrb[0].mxu0
  %v1820 = vpop.f32.mrb[0].mxu0
  %v1821 = vadd.f32 %v1613, %v1820
  %v1822 = vpop.f32.mrb[0].mxu0
  %1823 = vmatprep.mubr.bf16.mxu0 %v922
  %1824 = vmatmul.mubr.bf16.gmra.mrb[0].mxu0 %v921
  %v1825 = vpop.f32.mrb[0].mxu0
  %v1826 = vadd.f32 %v1618, %v1825
  %v1827 = vpop.f32.mrb[0].mxu0
  %v1828 = vpop.f32.mrb[0].mxu0
  %v1829 = vadd.f32 %v1621, %v1828
  %v1830 = vpop.f32.mrb[0].mxu0
  %1831 = vmatprep.mubr.bf16.mxu0 %v929
  %1832 = vmatmul.mubr.bf16.gmra.mrb[0].mxu0 %v928
  %v1833 = vpop.f32.mrb[0].mxu0
  %v1834 = vadd.f32 %v1626, %v1833
  %v1835 = vpop.f32.mrb[0].mxu0
  %v1836 = vpop.f32.mrb[0].mxu0
  %v1837 = vpop.f32.mrb[0].mxu0
  %1838 = vdwg.mxu0
  %1839 = vmatprep.subr.bf16.mxu0 0
  %1840 = vmatpush1.bf16.msra.mxu0 %v1343
  %1841 = vmatprep.subr.bf16.mxu0 0
  %1842 = vmatpush1.bf16.msra.mxu0 %v1344
  %1843 = vmatprep.subr.bf16.mxu0 0
  %1844 = vmatpush1.bf16.msra.mxu0 %v1345
  %1845 = vmatprep.subr.bf16.mxu0 0
  %1846 = vmatpush1.bf16.msra.mxu0 %v1346
  %1847 = vmatprep.subr.bf16.mxu0 0
  %1848 = vmatpush1.bf16.msra.mxu0 %v1347
  %1849 = vmatprep.subr.bf16.mxu0 0
  %1850 = vmatpush1.bf16.msra.mxu0 %v1348
  %1851 = vmatprep.subr.bf16.mxu0 0
  %1852 = vmatpush1.bf16.msra.mxu0 %v1349
  %1853 = vmatprep.subr.bf16.mxu0 0
  %1854 = vmatpush1.bf16.msra.mxu0 %v1350
  %1855 = vmatprep.subr.bf16.mxu0 0
  %1856 = vmatpush1.bf16.msra.mxu0 %v1351
  %1857 = vmatprep.subr.bf16.mxu0 0
  %1858 = vmatpush1.bf16.msra.mxu0 %v1352
  %1859 = vmatprep.subr.bf16.mxu0 0
  %1860 = vmatpush1.bf16.msra.mxu0 %v1353
  %1861 = vmatprep.subr.bf16.mxu0 0
  %1862 = vmatpush1.bf16.msra.mxu0 %v1354
  %1863 = vmatprep.subr.bf16.mxu0 0
  %1864 = vmatpush1.bf16.msra.mxu0 %v1355
  %1865 = vmatprep.subr.bf16.mxu0 0
  %1866 = vmatpush1.bf16.msra.mxu0 %v1356
  %1867 = vmatprep.subr.bf16.mxu0 0
  %1868 = vmatpush1.bf16.msra.mxu0 %v1357
  %1869 = vmatprep.subr.bf16.mxu0 0
  %1870 = vmatpush1.bf16.msra.mxu0 %v1358
  %1871 = vmatprep.mubr.bf16.mxu0 %v784
  %1872 = vmatmul.mubr.bf16.gmra.mrb[0].mxu0 %v783
  %v1873 = vpop.f32.mrb[0].mxu0
  %v1874 = vadd.f32 %v1666, %v1873
  %v1875 = vpop.f32.mrb[0].mxu0
  %v1876 = vpop.f32.mrb[0].mxu0
  %v1877 = vadd.f32 %v1669, %v1876
  %v1878 = vpop.f32.mrb[0].mxu0
  %1879 = vmatprep.mubr.bf16.mxu0 %v791
  %1880 = vmatmul.mubr.bf16.gmra.mrb[0].mxu0 %v790
  %v1881 = vpop.f32.mrb[0].mxu0
  %v1882 = vadd.f32 %v1674, %v1881
  %v1883 = vpop.f32.mrb[0].mxu0
  %v1884 = vpop.f32.mrb[0].mxu0
  %v1885 = vadd.f32 %v1677, %v1884
  %v1886 = vpop.f32.mrb[0].mxu0
  %1887 = vmatprep.mubr.bf16.mxu0 %v798
  %1888 = vmatmul.mubr.bf16.gmra.mrb[0].mxu0 %v797
  %v1889 = vpop.f32.mrb[0].mxu0
  %v1890 = vadd.f32 %v1682, %v1889
  %v1891 = vpop.f32.mrb[0].mxu0
  %v1892 = vpop.f32.mrb[0].mxu0
  %v1893 = vadd.f32 %v1685, %v1892
  %v1894 = vpop.f32.mrb[0].mxu0
  %1895 = vmatprep.mubr.bf16.mxu0 %v805
  %1896 = vmatmul.mubr.bf16.gmra.mrb[0].mxu0 %v804
  %v1897 = vpop.f32.mrb[0].mxu0
  %v1898 = vadd.f32 %v1690, %v1897
  %v1899 = vpop.f32.mrb[0].mxu0
  %v1900 = vpop.f32.mrb[0].mxu0
  %v1901 = vadd.f32 %v1693, %v1900
  %v1902 = vpop.f32.mrb[0].mxu0
  %1903 = vmatprep.mubr.bf16.mxu0 %v812
  %1904 = vmatmul.mubr.bf16.gmra.mrb[0].mxu0 %v811
  %v1905 = vpop.f32.mrb[0].mxu0
  %v1906 = vadd.f32 %v1698, %v1905
  %v1907 = vpop.f32.mrb[0].mxu0
  %v1908 = vpop.f32.mrb[0].mxu0
  %v1909 = vadd.f32 %v1701, %v1908
  %v1910 = vpop.f32.mrb[0].mxu0
  %1911 = vmatprep.mubr.bf16.mxu0 %v819
  %1912 = vmatmul.mubr.bf16.gmra.mrb[0].mxu0 %v818
  %v1913 = vpop.f32.mrb[0].mxu0
  %v1914 = vadd.f32 %v1706, %v1913
  %v1915 = vpop.f32.mrb[0].mxu0
  %v1916 = vpop.f32.mrb[0].mxu0
  %v1917 = vadd.f32 %v1709, %v1916
  %v1918 = vpop.f32.mrb[0].mxu0
  %1919 = vmatprep.mubr.bf16.mxu0 %v826
  %1920 = vmatmul.mubr.bf16.gmra.mrb[0].mxu0 %v825
  %v1921 = vpop.f32.mrb[0].mxu0
  %v1922 = vadd.f32 %v1714, %v1921
  %v1923 = vpop.f32.mrb[0].mxu0
  %v1924 = vpop.f32.mrb[0].mxu0
  %v1925 = vadd.f32 %v1717, %v1924
  %v1926 = vpop.f32.mrb[0].mxu0
  %1927 = vmatprep.mubr.bf16.mxu0 %v833
  %1928 = vmatmul.mubr.bf16.gmra.mrb[0].mxu0 %v832
  %v1929 = vpop.f32.mrb[0].mxu0
  %v1930 = vadd.f32 %v1722, %v1929
  %v1931 = vpop.f32.mrb[0].mxu0
  %v1932 = vpop.f32.mrb[0].mxu0
  %v1933 = vadd.f32 %v1725, %v1932
  %v1934 = vpop.f32.mrb[0].mxu0
  %1935 = vmatprep.mubr.bf16.mxu0 %v840
  %1936 = vmatmul.mubr.bf16.gmra.mrb[0].mxu0 %v839
  %v1937 = vpop.f32.mrb[0].mxu0
  %v1938 = vadd.f32 %v1730, %v1937
  %v1939 = vpop.f32.mrb[0].mxu0
  %v1940 = vpop.f32.mrb[0].mxu0
  %v1941 = vadd.f32 %v1733, %v1940
  %v1942 = vpop.f32.mrb[0].mxu0
  %1943 = vmatprep.mubr.bf16.mxu0 %v847
  %1944 = vmatmul.mubr.bf16.gmra.mrb[0].mxu0 %v846
  %v1945 = vpop.f32.mrb[0].mxu0
  %v1946 = vadd.f32 %v1738, %v1945
  %v1947 = vpop.f32.mrb[0].mxu0
  %v1948 = vpop.f32.mrb[0].mxu0
  %v1949 = vadd.f32 %v1741, %v1948
  %v1950 = vpop.f32.mrb[0].mxu0
  %1951 = vmatprep.mubr.bf16.mxu0 %v854
  %1952 = vmatmul.mubr.bf16.gmra.mrb[0].mxu0 %v853
  %v1953 = vpop.f32.mrb[0].mxu0
  %v1954 = vadd.f32 %v1746, %v1953
  %v1955 = vpop.f32.mrb[0].mxu0
  %v1956 = vpop.f32.mrb[0].mxu0
  %v1957 = vadd.f32 %v1749, %v1956
  %v1958 = vpop.f32.mrb[0].mxu0
  %1959 = vmatprep.mubr.bf16.mxu0 %v861
  %1960 = vmatmul.mubr.bf16.gmra.mrb[0].mxu0 %v860
  %v1961 = vpop.f32.mrb[0].mxu0
  %v1962 = vadd.f32 %v1754, %v1961
  %v1963 = vpop.f32.mrb[0].mxu0
  %v1964 = vpop.f32.mrb[0].mxu0
  %v1965 = vadd.f32 %v1757, %v1964
  %v1966 = vpop.f32.mrb[0].mxu0
  %1967 = vmatprep.mubr.bf16.mxu0 %v868
  %1968 = vmatmul.mubr.bf16.gmra.mrb[0].mxu0 %v867
  %v1969 = vpop.f32.mrb[0].mxu0
  %v1970 = vadd.f32 %v1762, %v1969
  %v1971 = vpop.f32.mrb[0].mxu0
  %v1972 = vpop.f32.mrb[0].mxu0
  %v1973 = vadd.f32 %v1765, %v1972
  %v1974 = vpop.f32.mrb[0].mxu0
  %1975 = vmatprep.mubr.bf16.mxu0 %v875
  %1976 = vmatmul.mubr.bf16.gmra.mrb[0].mxu0 %v874
  %v1977 = vpop.f32.mrb[0].mxu0
  %v1978 = vadd.f32 %v1770, %v1977
  %v1979 = vpop.f32.mrb[0].mxu0
  %v1980 = vpop.f32.mrb[0].mxu0
  %v1981 = vadd.f32 %v1773, %v1980
  %v1982 = vpop.f32.mrb[0].mxu0
  %1983 = vmatprep.mubr.bf16.mxu0 %v882
  %1984 = vmatmul.mubr.bf16.gmra.mrb[0].mxu0 %v881
  %v1985 = vpop.f32.mrb[0].mxu0
  %v1986 = vadd.f32 %v1778, %v1985
  %v1987 = vpop.f32.mrb[0].mxu0
  %v1988 = vpop.f32.mrb[0].mxu0
  %v1989 = vadd.f32 %v1781, %v1988
  %v1990 = vpop.f32.mrb[0].mxu0
  %1991 = vmatprep.mubr.bf16.mxu0 %v889
  %1992 = vmatmul.mubr.bf16.gmra.mrb[0].mxu0 %v888
  %v1993 = vpop.f32.mrb[0].mxu0
  %v1994 = vadd.f32 %v1786, %v1993
  %v1995 = vpop.f32.mrb[0].mxu0
  %v1996 = vpop.f32.mrb[0].mxu0
  %v1997 = vadd.f32 %v1789, %v1996
  %v1998 = vpop.f32.mrb[0].mxu0
  %1999 = vmatprep.mubr.bf16.mxu0 %v896
  %2000 = vmatmul.mubr.bf16.gmra.mrb[0].mxu0 %v895
  %v2001 = vpop.f32.mrb[0].mxu0
  %v2002 = vadd.f32 %v1794, %v2001
  %v2003 = vpop.f32.mrb[0].mxu0
  %v2004 = vpop.f32.mrb[0].mxu0
  %v2005 = vadd.f32 %v1797, %v2004
  %v2006 = vpop.f32.mrb[0].mxu0
  %2007 = vmatprep.mubr.bf16.mxu0 %v903
  %2008 = vmatmul.mubr.bf16.gmra.mrb[0].mxu0 %v902
  %v2009 = vpop.f32.mrb[0].mxu0
  %v2010 = vadd.f32 %v1802, %v2009
  %v2011 = vpop.f32.mrb[0].mxu0
  %v2012 = vpop.f32.mrb[0].mxu0
  %v2013 = vadd.f32 %v1805, %v2012
  %v2014 = vpop.f32.mrb[0].mxu0
  %2015 = vmatprep.mubr.bf16.mxu0 %v910
  %2016 = vmatmul.mubr.bf16.gmra.mrb[0].mxu0 %v909
  %v2017 = vpop.f32.mrb[0].mxu0
  %v2018 = vadd.f32 %v1810, %v2017
  %v2019 = vpop.f32.mrb[0].mxu0
  %v2020 = vpop.f32.mrb[0].mxu0
  %v2021 = vadd.f32 %v1813, %v2020
  %v2022 = vpop.f32.mrb[0].mxu0
  %2023 = vmatprep.mubr.bf16.mxu0 %v917
  %2024 = vmatmul.mubr.bf16.gmra.mrb[0].mxu0 %v916
  %v2025 = vpop.f32.mrb[0].mxu0
  %v2026 = vadd.f32 %v1818, %v2025
  %v2027 = vpop.f32.mrb[0].mxu0
  %v2028 = vpop.f32.mrb[0].mxu0
  %v2029 = vadd.f32 %v1821, %v2028
  %v2030 = vpop.f32.mrb[0].mxu0
  %2031 = vmatprep.mubr.bf16.mxu0 %v924
  %2032 = vmatmul.mubr.bf16.gmra.mrb[0].mxu0 %v923
  %v2033 = vpop.f32.mrb[0].mxu0
  %v2034 = vadd.f32 %v1826, %v2033
  %v2035 = vpop.f32.mrb[0].mxu0
  %v2036 = vpop.f32.mrb[0].mxu0
  %v2037 = vadd.f32 %v1829, %v2036
  %v2038 = vpop.f32.mrb[0].mxu0
  %2039 = vmatprep.mubr.bf16.mxu0 %v931
  %2040 = vmatmul.mubr.bf16.gmra.mrb[0].mxu0 %v930
  %v2041 = vpop.f32.mrb[0].mxu0
  %v2042 = vadd.f32 %v1834, %v2041
  %v2043 = vpop.f32.mrb[0].mxu0
  %v2044 = vpop.f32.mrb[0].mxu0
  %v2045 = vpop.f32.mrb[0].mxu0
  %2046 = vdwg.mxu0
  %2047 = vmatprep.subr.bf16.mxu0 0
  %2048 = vmatpush1.bf16.msra.mxu0 %v1359
  %2049 = vmatprep.subr.bf16.mxu0 0
  %2050 = vmatpush1.bf16.msra.mxu0 %v1360
  %2051 = vmatprep.subr.bf16.mxu0 0
  %2052 = vmatpush1.bf16.msra.mxu0 %v1361
  %2053 = vmatprep.subr.bf16.mxu0 0
  %2054 = vmatpush1.bf16.msra.mxu0 %v1362
  %2055 = vmatprep.subr.bf16.mxu0 0
  %2056 = vmatpush1.bf16.msra.mxu0 %v1363
  %2057 = vmatprep.subr.bf16.mxu0 0
  %2058 = vmatpush1.bf16.msra.mxu0 %v1364
  %2059 = vmatprep.subr.bf16.mxu0 0
  %2060 = vmatpush1.bf16.msra.mxu0 %v1365
  %2061 = vmatprep.subr.bf16.mxu0 0
  %2062 = vmatpush1.bf16.msra.mxu0 %v1366
  %2063 = vmatprep.subr.bf16.mxu0 0
  %2064 = vmatpush1.bf16.msra.mxu0 0
  %2065 = vmatprep.subr.bf16.mxu0 0
  %2066 = vmatpush1.bf16.msra.mxu0 0
  %2067 = vmatprep.subr.bf16.mxu0 0
  %2068 = vmatpush1.bf16.msra.mxu0 0
  %2069 = vmatprep.subr.bf16.mxu0 0
  %2070 = vmatpush1.bf16.msra.mxu0 0
  %2071 = vmatprep.subr.bf16.mxu0 0
  %2072 = vmatpush1.bf16.msra.mxu0 0
  %2073 = vmatprep.subr.bf16.mxu0 0
  %2074 = vmatpush1.bf16.msra.mxu0 0
  %2075 = vmatprep.subr.bf16.mxu0 0
  %2076 = vmatpush1.bf16.msra.mxu0 0
  %2077 = vmatprep.subr.bf16.mxu0 0
  %2078 = vmatpush1.bf16.msra.mxu0 0
  %2079 = vmatprep.mubr.bf16.mxu0 0
  %2080 = vmatmul.mubr.bf16.gmra.mrb[0].mxu0 %v785
  %v2081 = vpop.f32.mrb[0].mxu0
  %v2082 = vadd.f32 %v1874, %v2081
  %v2083 = vpop.f32.mrb[0].mxu0
  %v2084 = vpop.f32.mrb[0].mxu0
  %v2085 = vadd.f32 %v1877, %v2084
  %v2086 = vpop.f32.mrb[0].mxu0
  %2087 = vmatprep.mubr.bf16.mxu0 0
  %2088 = vmatmul.mubr.bf16.gmra.mrb[0].mxu0 %v792
  %v2089 = vpop.f32.mrb[0].mxu0
  %v2090 = vadd.f32 %v1882, %v2089
  %v2091 = vpop.f32.mrb[0].mxu0
  %v2092 = vpop.f32.mrb[0].mxu0
  %v2093 = vadd.f32 %v1885, %v2092
  %v2094 = vpop.f32.mrb[0].mxu0
  %2095 = vmatprep.mubr.bf16.mxu0 0
  %2096 = vmatmul.mubr.bf16.gmra.mrb[0].mxu0 %v799
  %v2097 = vpop.f32.mrb[0].mxu0
  %v2098 = vadd.f32 %v1890, %v2097
  %v2099 = vpop.f32.mrb[0].mxu0
  %v2100 = vpop.f32.mrb[0].mxu0
  %v2101 = vadd.f32 %v1893, %v2100
  %v2102 = vpop.f32.mrb[0].mxu0
  %2103 = vmatprep.mubr.bf16.mxu0 0
  %2104 = vmatmul.mubr.bf16.gmra.mrb[0].mxu0 %v806
  %v2105 = vpop.f32.mrb[0].mxu0
  %v2106 = vadd.f32 %v1898, %v2105
  %v2107 = vpop.f32.mrb[0].mxu0
  %v2108 = vpop.f32.mrb[0].mxu0
  %v2109 = vadd.f32 %v1901, %v2108
  %v2110 = vpop.f32.mrb[0].mxu0
  %2111 = vmatprep.mubr.bf16.mxu0 0
  %2112 = vmatmul.mubr.bf16.gmra.mrb[0].mxu0 %v813
  %v2113 = vpop.f32.mrb[0].mxu0
  %v2114 = vadd.f32 %v1906, %v2113
  %v2115 = vpop.f32.mrb[0].mxu0
  %v2116 = vpop.f32.mrb[0].mxu0
  %v2117 = vadd.f32 %v1909, %v2116
  %v2118 = vpop.f32.mrb[0].mxu0
  %2119 = vmatprep.mubr.bf16.mxu0 0
  %2120 = vmatmul.mubr.bf16.gmra.mrb[0].mxu0 %v820
  %v2121 = vpop.f32.mrb[0].mxu0
  %v2122 = vadd.f32 %v1914, %v2121
  %v2123 = vpop.f32.mrb[0].mxu0
  %v2124 = vpop.f32.mrb[0].mxu0
  %v2125 = vadd.f32 %v1917, %v2124
  %v2126 = vpop.f32.mrb[0].mxu0
  %2127 = vmatprep.mubr.bf16.mxu0 0
  %2128 = vmatmul.mubr.bf16.gmra.mrb[0].mxu0 %v827
  %v2129 = vpop.f32.mrb[0].mxu0
  %v2130 = vadd.f32 %v1922, %v2129
  %v2131 = vpop.f32.mrb[0].mxu0
  %v2132 = vpop.f32.mrb[0].mxu0
  %v2133 = vadd.f32 %v1925, %v2132
  %v2134 = vpop.f32.mrb[0].mxu0
  %2135 = vmatprep.mubr.bf16.mxu0 0
  %2136 = vmatmul.mubr.bf16.gmra.mrb[0].mxu0 %v834
  %v2137 = vpop.f32.mrb[0].mxu0
  %v2138 = vadd.f32 %v1930, %v2137
  %v2139 = vpop.f32.mrb[0].mxu0
  %v2140 = vpop.f32.mrb[0].mxu0
  %v2141 = vadd.f32 %v1933, %v2140
  %v2142 = vpop.f32.mrb[0].mxu0
  %2143 = vmatprep.mubr.bf16.mxu0 0
  %2144 = vmatmul.mubr.bf16.gmra.mrb[0].mxu0 %v841
  %v2145 = vpop.f32.mrb[0].mxu0
  %v2146 = vadd.f32 %v1938, %v2145
  %v2147 = vpop.f32.mrb[0].mxu0
  %v2148 = vpop.f32.mrb[0].mxu0
  %v2149 = vadd.f32 %v1941, %v2148
  %v2150 = vpop.f32.mrb[0].mxu0
  %2151 = vmatprep.mubr.bf16.mxu0 0
  %2152 = vmatmul.mubr.bf16.gmra.mrb[0].mxu0 %v848
  %v2153 = vpop.f32.mrb[0].mxu0
  %v2154 = vadd.f32 %v1946, %v2153
  %v2155 = vpop.f32.mrb[0].mxu0
  %v2156 = vpop.f32.mrb[0].mxu0
  %v2157 = vadd.f32 %v1949, %v2156
  %v2158 = vpop.f32.mrb[0].mxu0
  %2159 = vmatprep.mubr.bf16.mxu0 0
  %2160 = vmatmul.mubr.bf16.gmra.mrb[0].mxu0 %v855
  %v2161 = vpop.f32.mrb[0].mxu0
  %v2162 = vadd.f32 %v1954, %v2161
  %v2163 = vpop.f32.mrb[0].mxu0
  %v2164 = vpop.f32.mrb[0].mxu0
  %v2165 = vadd.f32 %v1957, %v2164
  %v2166 = vpop.f32.mrb[0].mxu0
  %2167 = vmatprep.mubr.bf16.mxu0 0
  %2168 = vmatmul.mubr.bf16.gmra.mrb[0].mxu0 %v862
  %v2169 = vpop.f32.mrb[0].mxu0
  %v2170 = vadd.f32 %v1962, %v2169
  %v2171 = vpop.f32.mrb[0].mxu0
  %v2172 = vpop.f32.mrb[0].mxu0
  %v2173 = vadd.f32 %v1965, %v2172
  %v2174 = vpop.f32.mrb[0].mxu0
  %2175 = vmatprep.mubr.bf16.mxu0 0
  %2176 = vmatmul.mubr.bf16.gmra.mrb[0].mxu0 %v869
  %v2177 = vpop.f32.mrb[0].mxu0
  %v2178 = vadd.f32 %v1970, %v2177
  %v2179 = vpop.f32.mrb[0].mxu0
  %v2180 = vpop.f32.mrb[0].mxu0
  %v2181 = vadd.f32 %v1973, %v2180
  %v2182 = vpop.f32.mrb[0].mxu0
  %2183 = vmatprep.mubr.bf16.mxu0 0
  %2184 = vmatmul.mubr.bf16.gmra.mrb[0].mxu0 %v876
  %v2185 = vpop.f32.mrb[0].mxu0
  %v2186 = vadd.f32 %v1978, %v2185
  %v2187 = vpop.f32.mrb[0].mxu0
  %v2188 = vpop.f32.mrb[0].mxu0
  %v2189 = vadd.f32 %v1981, %v2188
  %v2190 = vpop.f32.mrb[0].mxu0
  %2191 = vmatprep.mubr.bf16.mxu0 0
  %2192 = vmatmul.mubr.bf16.gmra.mrb[0].mxu0 %v883
  %v2193 = vpop.f32.mrb[0].mxu0
  %v2194 = vadd.f32 %v1986, %v2193
  %v2195 = vpop.f32.mrb[0].mxu0
  %v2196 = vpop.f32.mrb[0].mxu0
  %v2197 = vadd.f32 %v1989, %v2196
  %v2198 = vpop.f32.mrb[0].mxu0
  %2199 = vmatprep.mubr.bf16.mxu0 0
  %2200 = vmatmul.mubr.bf16.gmra.mrb[0].mxu0 %v890
  %v2201 = vpop.f32.mrb[0].mxu0
  %v2202 = vadd.f32 %v1994, %v2201
  %v2203 = vpop.f32.mrb[0].mxu0
  %v2204 = vpop.f32.mrb[0].mxu0
  %v2205 = vadd.f32 %v1997, %v2204
  %v2206 = vpop.f32.mrb[0].mxu0
  %2207 = vmatprep.mubr.bf16.mxu0 0
  %2208 = vmatmul.mubr.bf16.gmra.mrb[0].mxu0 %v897
  %v2209 = vpop.f32.mrb[0].mxu0
  %v2210 = vadd.f32 %v2002, %v2209
  %v2211 = vpop.f32.mrb[0].mxu0
  %v2212 = vpop.f32.mrb[0].mxu0
  %v2213 = vadd.f32 %v2005, %v2212
  %v2214 = vpop.f32.mrb[0].mxu0
  %2215 = vmatprep.mubr.bf16.mxu0 0
  %2216 = vmatmul.mubr.bf16.gmra.mrb[0].mxu0 %v904
  %v2217 = vpop.f32.mrb[0].mxu0
  %v2218 = vadd.f32 %v2010, %v2217
  %v2219 = vpop.f32.mrb[0].mxu0
  %v2220 = vpop.f32.mrb[0].mxu0
  %v2221 = vadd.f32 %v2013, %v2220
  %v2222 = vpop.f32.mrb[0].mxu0
  %2223 = vmatprep.mubr.bf16.mxu0 0
  %2224 = vmatmul.mubr.bf16.gmra.mrb[0].mxu0 %v911
  %v2225 = vpop.f32.mrb[0].mxu0
  %v2226 = vadd.f32 %v2018, %v2225
  %v2227 = vpop.f32.mrb[0].mxu0
  %v2228 = vpop.f32.mrb[0].mxu0
  %v2229 = vadd.f32 %v2021, %v2228
  %v2230 = vpop.f32.mrb[0].mxu0
  %2231 = vmatprep.mubr.bf16.mxu0 0
  %2232 = vmatmul.mubr.bf16.gmra.mrb[0].mxu0 %v918
  %v2233 = vpop.f32.mrb[0].mxu0
  %v2234 = vadd.f32 %v2026, %v2233
  %v2235 = vpop.f32.mrb[0].mxu0
  %v2236 = vpop.f32.mrb[0].mxu0
  %v2237 = vadd.f32 %v2029, %v2236
  %v2238 = vpop.f32.mrb[0].mxu0
  %2239 = vmatprep.mubr.bf16.mxu0 0
  %2240 = vmatmul.mubr.bf16.gmra.mrb[0].mxu0 %v925
  %v2241 = vpop.f32.mrb[0].mxu0
  %v2242 = vadd.f32 %v2034, %v2241
  %v2243 = vpop.f32.mrb[0].mxu0
  %v2244 = vpop.f32.mrb[0].mxu0
  %v2245 = vadd.f32 %v2037, %v2244
  %v2246 = vpop.f32.mrb[0].mxu0
  %2247 = vmatprep.mubr.bf16.mxu0 0
  %2248 = vmatmul.mubr.bf16.gmra.mrb[0].mxu0 %v932
  %v2249 = vpop.f32.mrb[0].mxu0
  %v2250 = vadd.f32 %v2042, %v2249
  %v2251 = vpop.f32.mrb[0].mxu0
  %v2252 = vpop.f32.mrb[0].mxu0
  %v2253 = vpop.f32.mrb[0].mxu0
  %2254 = vdwg.mxu0
  %v2255 = vmax.f32 %v2082, 0.0
  %v2256 = vmax.f32 %v2085, 0.0
  %v2257 = vmax.f32 %v2090, 0.0
  %v2258 = vmax.f32 %v2093, 0.0
  %v2259 = vmax.f32 %v2098, 0.0
  %v2260 = vmax.f32 %v2101, 0.0
  %v2261 = vmax.f32 %v2106, 0.0
  %v2262 = vmax.f32 %v2109, 0.0
  %v2263 = vmax.f32 %v2114, 0.0
  %v2264 = vmax.f32 %v2117, 0.0
  %v2265 = vmax.f32 %v2122, 0.0
  %v2266 = vmax.f32 %v2125, 0.0
  %v2267 = vmax.f32 %v2130, 0.0
  %v2268 = vmax.f32 %v2133, 0.0
  %v2269 = vmax.f32 %v2138, 0.0
  %v2270 = vmax.f32 %v2141, 0.0
  %v2271 = vmax.f32 %v2146, 0.0
  %v2272 = vmax.f32 %v2149, 0.0
  %v2273 = vmax.f32 %v2154, 0.0
  %v2274 = vmax.f32 %v2157, 0.0
  %v2275 = vmax.f32 %v2162, 0.0
  %v2276 = vmax.f32 %v2165, 0.0
  %v2277 = vmax.f32 %v2170, 0.0
  %v2278 = vmax.f32 %v2173, 0.0
  %v2279 = vmax.f32 %v2178, 0.0
  %v2280 = vmax.f32 %v2181, 0.0
  %v2281 = vmax.f32 %v2186, 0.0
  %v2282 = vmax.f32 %v2189, 0.0
  %v2283 = vmax.f32 %v2194, 0.0
  %v2284 = vmax.f32 %v2197, 0.0
  %v2285 = vmax.f32 %v2202, 0.0
  %v2286 = vmax.f32 %v2205, 0.0
  %v2287 = vmax.f32 %v2210, 0.0
  %v2288 = vmax.f32 %v2213, 0.0
  %v2289 = vmax.f32 %v2218, 0.0
  %v2290 = vmax.f32 %v2221, 0.0
  %v2291 = vmax.f32 %v2226, 0.0
  %v2292 = vmax.f32 %v2229, 0.0
  %v2293 = vmax.f32 %v2234, 0.0
  %v2294 = vmax.f32 %v2237, 0.0
  %v2295 = vmax.f32 %v2242, 0.0
  %v2296 = vmax.f32 %v2245, 0.0
  %v2297 = vmax.f32 %v2250, 0.0
  %v2298 = vpack.c.bf16 %v2256, %v2255
  %v2299 = vpack.c.bf16 %v2258, %v2257
  %v2300 = vpack.c.bf16 %v2260, %v2259
  %v2301 = vpack.c.bf16 %v2262, %v2261
  %v2302 = vpack.c.bf16 %v2264, %v2263
  %v2303 = vpack.c.bf16 %v2266, %v2265
  %v2304 = vpack.c.bf16 %v2268, %v2267
  %v2305 = vpack.c.bf16 %v2270, %v2269
  %v2306 = vpack.c.bf16 %v2272, %v2271
  %v2307 = vpack.c.bf16 %v2274, %v2273
  %v2308 = vpack.c.bf16 %v2276, %v2275
  %v2309 = vpack.c.bf16 %v2278, %v2277
  %v2310 = vpack.c.bf16 %v2280, %v2279
  %v2311 = vpack.c.bf16 %v2282, %v2281
  %v2312 = vpack.c.bf16 %v2284, %v2283
  %v2313 = vpack.c.bf16 %v2286, %v2285
  %v2314 = vpack.c.bf16 %v2288, %v2287
  %v2315 = vpack.c.bf16 %v2290, %v2289
  %v2316 = vpack.c.bf16 %v2292, %v2291
  %v2317 = vpack.c.bf16 %v2294, %v2293
  %v2318 = vpack.c.bf16 %v2296, %v2295
  %v2319 = vpack.c.bf16 %v2297, %v2297
  %v2342 = vunpack.c.l.b16 %v2298
  %v2343 = vunpack.c.h.b16 %v2298
  %v2344 = vunpack.c.l.b16 %v2299
  %v2345 = vunpack.c.h.b16 %v2299
  %v2346 = vunpack.c.l.b16 %v2300
  %v2347 = vunpack.c.h.b16 %v2300
  %v2348 = vunpack.c.l.b16 %v2301
  %v2349 = vunpack.c.h.b16 %v2301
  %v2350 = vunpack.c.l.b16 %v2302
  %v2351 = vunpack.c.h.b16 %v2302
  %v2352 = vunpack.c.l.b16 %v2303
  %v2353 = vunpack.c.h.b16 %v2303
  %v2354 = vunpack.c.l.b16 %v2304
  %v2355 = vunpack.c.h.b16 %v2304
  %v2356 = vunpack.c.l.b16 %v2305
  %v2357 = vunpack.c.h.b16 %v2305
  %v2358 = vunpack.c.l.b16 %v2306
  %v2359 = vunpack.c.h.b16 %v2306
  %v2360 = vunpack.c.l.b16 %v2307
  %v2361 = vunpack.c.h.b16 %v2307
  %v2362 = vunpack.c.l.b16 %v2308
  %v2363 = vunpack.c.h.b16 %v2308
  %v2364 = vunpack.c.l.b16 %v2309
  %v2365 = vunpack.c.h.b16 %v2309
  %v2366 = vunpack.c.l.b16 %v2310
  %v2367 = vunpack.c.h.b16 %v2310
  %v2368 = vunpack.c.l.b16 %v2311
  %v2369 = vunpack.c.h.b16 %v2311
  %v2370 = vunpack.c.l.b16 %v2312
  %v2371 = vunpack.c.h.b16 %v2312
  %v2372 = vunpack.c.l.b16 %v2313
  %v2373 = vunpack.c.h.b16 %v2313
  %v2374 = vunpack.c.l.b16 %v2314
  %v2375 = vunpack.c.h.b16 %v2314
  %v2376 = vunpack.c.l.b16 %v2315
  %v2377 = vunpack.c.h.b16 %v2315
  %v2378 = vunpack.c.l.b16 %v2316
  %v2379 = vunpack.c.h.b16 %v2316
  %v2380 = vunpack.c.l.b16 %v2317
  %v2381 = vunpack.c.h.b16 %v2317
  %v2382 = vunpack.c.l.b16 %v2318
  %v2383 = vunpack.c.h.b16 %v2318
  %v2384 = vunpack.c.l.b16 %v2319
  %v2385 = vpack.c.b16 %v2342, %v2342
  %v2386 = vpack.c.b16 %v2343, %v2343
  %v2387 = vpack.c.b16 %v2344, %v2344
  %v2388 = vpack.c.b16 %v2345, %v2345
  %v2389 = vpack.c.b16 %v2346, %v2346
  %v2390 = vpack.c.b16 %v2347, %v2347
  %v2391 = vpack.c.b16 %v2348, %v2348
  %v2392 = vpack.c.b16 %v2349, %v2349
  %v2393 = vpack.c.b16 %v2350, %v2350
  %v2394 = vpack.c.b16 %v2351, %v2351
  %v2395 = vpack.c.b16 %v2352, %v2352
  %v2396 = vpack.c.b16 %v2353, %v2353
  %v2397 = vpack.c.b16 %v2354, %v2354
  %v2398 = vpack.c.b16 %v2355, %v2355
  %v2399 = vpack.c.b16 %v2356, %v2356
  %v2400 = vpack.c.b16 %v2357, %v2357
  %v2401 = vpack.c.b16 %v2358, %v2358
  %v2402 = vpack.c.b16 %v2359, %v2359
  %v2403 = vpack.c.b16 %v2360, %v2360
  %v2404 = vpack.c.b16 %v2361, %v2361
  %v2405 = vpack.c.b16 %v2362, %v2362
  %v2406 = vpack.c.b16 %v2363, %v2363
  %v2407 = vpack.c.b16 %v2364, %v2364
  %v2408 = vpack.c.b16 %v2365, %v2365
  %v2409 = vpack.c.b16 %v2366, %v2366
  %v2410 = vpack.c.b16 %v2367, %v2367
  %v2411 = vpack.c.b16 %v2368, %v2368
  %v2412 = vpack.c.b16 %v2369, %v2369
  %v2413 = vpack.c.b16 %v2370, %v2370
  %v2414 = vpack.c.b16 %v2371, %v2371
  %v2415 = vpack.c.b16 %v2372, %v2372
  %v2416 = vpack.c.b16 %v2373, %v2373
  %v2417 = vpack.c.b16 %v2374, %v2374
  %v2418 = vpack.c.b16 %v2375, %v2375
  %v2419 = vpack.c.b16 %v2376, %v2376
  %v2420 = vpack.c.b16 %v2377, %v2377
  %v2421 = vpack.c.b16 %v2378, %v2378
  %v2422 = vpack.c.b16 %v2379, %v2379
  %v2423 = vpack.c.b16 %v2380, %v2380
  %v2424 = vpack.c.b16 %v2381, %v2381
  %v2425 = vpack.c.b16 %v2382, %v2382
  %v2426 = vpack.c.b16 %v2383, %v2383
  %v2427 = vpack.c.b16 %v2384, %v2384
  %vm2471 = vcmask 519168
  %2472 = vst.msk [vmem:[%s3] sm:$0xf] %vm2471, %v2385
  %2473 = vst.msk [vmem:[%s3 + $0x4] sm:$0xf] %vm2471, %v2386
  %2474 = vst.msk [vmem:[%s3 + $0x8] sm:$0xf] %vm2471, %v2387
  %2475 = vst.msk [vmem:[%s3 + $0xc] sm:$0xf] %vm2471, %v2388
  %2476 = vst.msk [vmem:[%s3 + $0x10] sm:$0xf] %vm2471, %v2389
  %2477 = vst.msk [vmem:[%s3 + $0x14] sm:$0xf] %vm2471, %v2390
  %2478 = vst.msk [vmem:[%s3 + $0x18] sm:$0xf] %vm2471, %v2391
  %2479 = vst.msk [vmem:[%s3 + $0x1c] sm:$0xf] %vm2471, %v2392
  %2480 = vst.msk [vmem:[%s3 + $0x20] sm:$0xf] %vm2471, %v2393
  %2481 = vst.msk [vmem:[%s3 + $0x24] sm:$0xf] %vm2471, %v2394
  %2482 = vst.msk [vmem:[%s3 + $0x28] sm:$0xf] %vm2471, %v2395
  %2483 = vst.msk [vmem:[%s3 + $0x2c] sm:$0xf] %vm2471, %v2396
  %2484 = vst.msk [vmem:[%s3 + $0x30] sm:$0xf] %vm2471, %v2397
  %2485 = vst.msk [vmem:[%s3 + $0x34] sm:$0xf] %vm2471, %v2398
  %2486 = vst.msk [vmem:[%s3 + $0x38] sm:$0xf] %vm2471, %v2399
  %2487 = vst.msk [vmem:[%s3 + $0x3c] sm:$0xf] %vm2471, %v2400
  %2488 = vst.msk [vmem:[%s3 + $0x40] sm:$0xf] %vm2471, %v2401
  %2489 = vst.msk [vmem:[%s3 + $0x44] sm:$0xf] %vm2471, %v2402
  %2490 = vst.msk [vmem:[%s3 + $0x48] sm:$0xf] %vm2471, %v2403
  %2491 = vst.msk [vmem:[%s3 + $0x4c] sm:$0xf] %vm2471, %v2404
  %2492 = vst.msk [vmem:[%s3 + $0x50] sm:$0xf] %vm2471, %v2405
  %2493 = vst.msk [vmem:[%s3 + $0x54] sm:$0xf] %vm2471, %v2406
  %2494 = vst.msk [vmem:[%s3 + $0x58] sm:$0xf] %vm2471, %v2407
  %2495 = vst.msk [vmem:[%s3 + $0x5c] sm:$0xf] %vm2471, %v2408
  %2496 = vst.msk [vmem:[%s3 + $0x60] sm:$0xf] %vm2471, %v2409
  %2497 = vst.msk [vmem:[%s3 + $0x64] sm:$0xf] %vm2471, %v2410
  %2498 = vst.msk [vmem:[%s3 + $0x68] sm:$0xf] %vm2471, %v2411
  %2499 = vst.msk [vmem:[%s3 + $0x6c] sm:$0xf] %vm2471, %v2412
  %2500 = vst.msk [vmem:[%s3 + $0x70] sm:$0xf] %vm2471, %v2413
  %2501 = vst.msk [vmem:[%s3 + $0x74] sm:$0xf] %vm2471, %v2414
  %2502 = vst.msk [vmem:[%s3 + $0x78] sm:$0xf] %vm2471, %v2415
  %2503 = vst.msk [vmem:[%s3 + $0x7c] sm:$0xf] %vm2471, %v2416
  %2504 = vst.msk [vmem:[%s3 + $0x80] sm:$0xf] %vm2471, %v2417
  %2505 = vst.msk [vmem:[%s3 + $0x84] sm:$0xf] %vm2471, %v2418
  %2506 = vst.msk [vmem:[%s3 + $0x88] sm:$0xf] %vm2471, %v2419
  %2507 = vst.msk [vmem:[%s3 + $0x8c] sm:$0xf] %vm2471, %v2420
  %2508 = vst.msk [vmem:[%s3 + $0x90] sm:$0xf] %vm2471, %v2421
  %2509 = vst.msk [vmem:[%s3 + $0x94] sm:$0xf] %vm2471, %v2422
  %2510 = vst.msk [vmem:[%s3 + $0x98] sm:$0xf] %vm2471, %v2423
  %2511 = vst.msk [vmem:[%s3 + $0x9c] sm:$0xf] %vm2471, %v2424
  %2512 = vst.msk [vmem:[%s3 + $0xa0] sm:$0xf] %vm2471, %v2425
  %2513 = vst.msk [vmem:[%s3 + $0xa4] sm:$0xf] %vm2471, %v2426
  %vm2514 = vcmask 516096
  %2515 = vst.msk [vmem:[%s3 + $0xa8] sm:$0x1] %vm2514, %v2427
  // Predicated region
  $region14: #{dqn_forward.4} parent=0 // pred_check
    _
  $region15: #{dqn_forward.4} parent=0 // pred_check_branch
    %2517 = sbr.rel (0) target = $region17
  $region16: #{dqn_forward.4} parent=0 // pred_region
    _
  $region17: #{dqn_forward.4} parent=0 // pred_fallthru
    _
  // Predicated region
  $region18: #{dqn_forward.4} parent=0 // pred_check
    _
  $region19: #{dqn_forward.4} parent=0 // pred_check_branch
    %2519 = sbr.rel (0) target = $region21
  $region20: #{dqn_forward.4} parent=0 // pred_region
    _
  $region21: #{dqn_forward.4} parent=0 // pred_fallthru
    _

// kernel: dqn_forward.5
$region0: #{dqn_forward.5}
  #allocation0 [shape = 'u32[]', space=smem, size = 0x4, offset = 0x4, fixed_abs, tag = 'smem constant byte address 0x4 - core index']
  #allocation1 [shape = 'u32[144,128]{1,0:T(1,128)}', space=vmem, size = 0x12000, scoped, tag = 'internal scratch']
  %s0 = inlined_call_operand.vmem [shape: bf16[2,10880], index: 0, kind: input, shape index: {}]
  %s1 = inlined_call_operand.vmem [shape: bf16[4,10880,128], index: 1, kind: input, shape index: {}]
  %s2 = inlined_call_operand.vmem [shape: f32[1,512], index: 2, kind: input, shape index: {}]
  %s3 = inlined_call_operand.vmem [shape: f32[512,4], index: 3, kind: input, shape index: {}]
  %s4 = inlined_call_operand.vmem [shape: f32[1,4], index: 4, kind: input, shape index: {}]
  %s5 = inlined_call_operand.hbm [shape: f32[2,4], index: 5, kind: output, shape index: {}]
  %s6 = sld [smem:[#allocation0]]
  $region61: #{dqn_forward.5} parent=0
    _
  %s8 = ssub.s32 1, %s6
  %s9 = scalar_select 0, %s8, %s6
  $region1: #{dqn_forward.5} parent=0
    #allocation2 [shape = 'u8[1024]{0}', space=vmem, size = 0x400, scoped, tag = 'output window, operand 0, single buffered']
    #allocation3 [shape = 's32[2]{0}', space=sflag, size = 0x8, scoped, tag = 'scoped memory for dqn_forward.5']
    %10 = vsyncpa [#allocation3], 0
    loop: start=0, step=1, limit=6
    $region2: #{dqn_forward.5} parent=1 // loop_pre_header
      _
    $region3: #{dqn_forward.5} parent=1 // loop_header
      %s12 = sphi 0, %s16
      %p13 = scmp.ge.s32.totalorder %s12, 6
      %s20 = sphi 0, %s20
      %s22 = sphi 0, %s20
      %s23 = sphi 0, %s22
      %s37 = sphi 0, %s23
      %s43 = sphi 0, %s45
      %s46 = sphi 0, %s43
      %s47 = sphi 0, %s46
      %s63 = sphi 0, %s47
      %s69 = sphi 0, %s71
      %s72 = sphi 0, %s69
      %s73 = sphi 0, %s72
      %s89 = sphi 0, %s73
      %s95 = sphi 0, %s97
      %s98 = sphi 0, %s95
      %s99 = sphi 0, %s98
      %s115 = sphi 0, %s99
      %s119 = sphi 0, %s119
      %s121 = sphi 0, %s119
      %s122 = sphi 0, %s121
      %s136 = sphi 0, %s122
      %s140 = sphi 0, %s140
      %s142 = sphi 0, %s140
      %s143 = sphi 0, %s142
      %s157 = sphi 0, %s143
    $region4: #{dqn_forward.5} parent=1 // loop_header_branch
      %15 = sbr.rel (%p13) target = $region8
    $region5: #{dqn_forward.5} parent=1 // loop_body
      %s17 = ssub.s32 %s12, 1
      %s18 = ssub.s32 %s12, 2
      %s19 = sadd.s32 %s12, 1
      %s21 = sadd.s32 %s20, 1
      %p24 = scmp.eq.s32.totalorder %s12, 3
      %p25 = scmp.ne.s32.totalorder %s20, %s22
      %p26 = scmp.eq.s32.totalorder %s12, 0
      %p27 = por %p25, %p26
      %p28 = scmp.ne.s32.totalorder %s20, %s22
      %p29 = scmp.eq.s32.totalorder %s17, 3
      %p30 = por %p28, %p29
      %p31 = scmp.ne.s32.totalorder %s22, %s23
      %p32 = scmp.eq.s32.totalorder %s17, 0
      %p33 = por %p31, %p32
      %p34 = scmp.ne.s32.totalorder %s22, %s23
      %p35 = scmp.eq.s32.totalorder %s18, 3
      %p36 = por %p34, %p35
      %p38 = scmp.ne.s32.totalorder %s23, %s37
      %p39 = scmp.eq.s32.totalorder %s18, 0
      %p40 = por %p38, %p39
      %s41 = ssub.s32 %s12, %s19
      %p42 = scmp.eq.s32.totalorder %s41, 0
      %s44 = sadd.s32 %s43, 1
      %s45 = scalar_select %p42, %s43, %s44
      %p48 = pneg %p42
      %p49 = scmp.eq.s32.totalorder %s12, 3
      %p50 = por %p48, %p49
      %p51 = scmp.ne.s32.totalorder %s43, %s46
      %p52 = scmp.eq.s32.totalorder %s12, 0
      %p53 = por %p51, %p52
      %p54 = scmp.ne.s32.totalorder %s43, %s46
      %p55 = scmp.eq.s32.totalorder %s17, 3
      %p56 = por %p54, %p55
      %p57 = scmp.ne.s32.totalorder %s46, %s47
      %p58 = scmp.eq.s32.totalorder %s17, 0
      %p59 = por %p57, %p58
      %p60 = scmp.ne.s32.totalorder %s46, %s47
      %p61 = scmp.eq.s32.totalorder %s18, 3
      %p62 = por %p60, %p61
      %p64 = scmp.ne.s32.totalorder %s47, %s63
      %p65 = scmp.eq.s32.totalorder %s18, 0
      %p66 = por %p64, %p65
      %s67 = ssub.s32 %s12, %s19
      %p68 = scmp.eq.s32.totalorder %s67, 0
      %s70 = sadd.s32 %s69, 1
      %s71 = scalar_select %p68, %s69, %s70
      %p74 = pneg %p68
      %p75 = scmp.eq.s32.totalorder %s12, 3
      %p76 = por %p74, %p75
      %p77 = scmp.ne.s32.totalorder %s69, %s72
      %p78 = scmp.eq.s32.totalorder %s12, 0
      %p79 = por %p77, %p78
      %p80 = scmp.ne.s32.totalorder %s69, %s72
      %p81 = scmp.eq.s32.totalorder %s17, 3
      %p82 = por %p80, %p81
      %p83 = scmp.ne.s32.totalorder %s72, %s73
      %p84 = scmp.eq.s32.totalorder %s17, 0
      %p85 = por %p83, %p84
      %p86 = scmp.ne.s32.totalorder %s72, %s73
      %p87 = scmp.eq.s32.totalorder %s18, 3
      %p88 = por %p86, %p87
      %p90 = scmp.ne.s32.totalorder %s73, %s89
      %p91 = scmp.eq.s32.totalorder %s18, 0
      %p92 = por %p90, %p91
      %s93 = ssub.s32 %s12, %s19
      %p94 = scmp.eq.s32.totalorder %s93, 0
      %s96 = sadd.s32 %s95, 1
      %s97 = scalar_select %p94, %s95, %s96
      %p100 = pneg %p94
      %p101 = scmp.eq.s32.totalorder %s12, 3
      %p102 = por %p100, %p101
      %p103 = scmp.ne.s32.totalorder %s95, %s98
      %p104 = scmp.eq.s32.totalorder %s12, 0
      %p105 = por %p103, %p104
      %p106 = scmp.ne.s32.totalorder %s95, %s98
      %p107 = scmp.eq.s32.totalorder %s17, 3
      %p108 = por %p106, %p107
      %p109 = scmp.ne.s32.totalorder %s98, %s99
      %p110 = scmp.eq.s32.totalorder %s17, 0
      %p111 = por %p109, %p110
      %p112 = scmp.ne.s32.totalorder %s98, %s99
      %p113 = scmp.eq.s32.totalorder %s18, 3
      %p114 = por %p112, %p113
      %p116 = scmp.ne.s32.totalorder %s99, %s115
      %p117 = scmp.eq.s32.totalorder %s18, 0
      %p118 = por %p116, %p117
      %s120 = sadd.s32 %s119, 1
      %p123 = scmp.eq.s32.totalorder %s12, 3
      %p124 = scmp.ne.s32.totalorder %s119, %s121
      %p125 = scmp.eq.s32.totalorder %s12, 0
      %p126 = por %p124, %p125
      %p127 = scmp.ne.s32.totalorder %s119, %s121
      %p128 = scmp.eq.s32.totalorder %s17, 3
      %p129 = por %p127, %p128
      %p130 = scmp.ne.s32.totalorder %s121, %s122
      %p131 = scmp.eq.s32.totalorder %s17, 0
      %p132 = por %p130, %p131
      %p133 = scmp.ne.s32.totalorder %s121, %s122
      %p134 = scmp.eq.s32.totalorder %s18, 3
      %p135 = por %p133, %p134
      %p137 = scmp.ne.s32.totalorder %s122, %s136
      %p138 = scmp.eq.s32.totalorder %s18, 0
      %p139 = por %p137, %p138
      %s141 = sadd.s32 %s140, 1
      %p144 = scmp.eq.s32.totalorder %s12, 3
      %p145 = scmp.ne.s32.totalorder %s140, %s142
      %p146 = scmp.eq.s32.totalorder %s12, 0
      %p147 = por %p145, %p146
      %p148 = scmp.ne.s32.totalorder %s140, %s142
      %p149 = scmp.eq.s32.totalorder %s17, 3
      %p150 = por %p148, %p149
      %p151 = scmp.ne.s32.totalorder %s142, %s143
      %p152 = scmp.eq.s32.totalorder %s17, 0
      %p153 = por %p151, %p152
      %p154 = scmp.ne.s32.totalorder %s142, %s143
      %p155 = scmp.eq.s32.totalorder %s18, 3
      %p156 = por %p154, %p155
      %p158 = scmp.ne.s32.totalorder %s143, %s157
      %p159 = scmp.eq.s32.totalorder %s18, 0
      %p160 = por %p158, %p159
      %p161 = scmp.le.s32.totalorder 1, %s12
      %p162 = scmp.lt.s32.totalorder %s12, 5
      %p163 = pnand %p161, %p162
      %p164 = pneg %p163
      // Predicated region
      $region9: #{dqn_forward.5} parent=5 // pred_check
        _
      $region10: #{dqn_forward.5} parent=5 // pred_check_branch
        %166 = sbr.rel (%p163) target = $region12
      $region11: #{dqn_forward.5} parent=5 // pred_region
        %s167 = ssub.s32 %s12, 1
        // Predicated region
        $region13: #{dqn_forward.5} parent=11 // pred_check
          %p168 = pneg %p33
        $region14: #{dqn_forward.5} parent=11 // pred_check_branch
          %170 = sbr.rel (%p168) target = $region16
        $region15: #{dqn_forward.5} parent=11 // pred_region
          _
        $region16: #{dqn_forward.5} parent=11 // pred_fallthru
          _
        // Predicated region
        $region17: #{dqn_forward.5} parent=11 // pred_check
          %p171 = pneg %p132
        $region18: #{dqn_forward.5} parent=11 // pred_check_branch
          %173 = sbr.rel (%p171) target = $region20
        $region19: #{dqn_forward.5} parent=11 // pred_region
          _
        $region20: #{dqn_forward.5} parent=11 // pred_fallthru
          _
      $region12: #{dqn_forward.5} parent=5 // pred_fallthru
        _
      %p174 = scmp.lt.s32.totalorder %s12, 4
      // Predicated region
      $region21: #{dqn_forward.5} parent=5 // pred_check
        %p175 = pneg %p174
      $region22: #{dqn_forward.5} parent=5 // pred_check_branch
        %177 = sbr.rel (%p175) target = $region24
      $region23: #{dqn_forward.5} parent=5 // pred_region
        // Predicated region
        $region25: #{dqn_forward.5} parent=23 // pred_check
          %p178 = pneg %p53
        $region26: #{dqn_forward.5} parent=23 // pred_check_branch
          %180 = sbr.rel (%p178) target = $region28
        $region27: #{dqn_forward.5} parent=23 // pred_region
          %p181 = scmp.lt.s32.totalorder %s12, 3
          %s182 = scalar_select %p181, %s12, 3
          %s183 = smul.addr %s182, 1360
          %s184 = smul.addr %s183, 4
          %s185 = scalar_lea.vmem %s1, %s184
        $region28: #{dqn_forward.5} parent=23 // pred_fallthru
          _
        // Predicated region
        $region29: #{dqn_forward.5} parent=23 // pred_check
          %p186 = pneg %p79
        $region30: #{dqn_forward.5} parent=23 // pred_check_branch
          %188 = sbr.rel (%p186) target = $region32
        $region31: #{dqn_forward.5} parent=23 // pred_region
          %p189 = scmp.lt.s32.totalorder %s12, 3
          %s190 = scalar_select %p189, %s12, 3
          %s191 = scalar_lea.vmem %s2, %s190
        $region32: #{dqn_forward.5} parent=23 // pred_fallthru
          _
        // Predicated region
        $region33: #{dqn_forward.5} parent=23 // pred_check
          %p192 = pneg %p105
        $region34: #{dqn_forward.5} parent=23 // pred_check_branch
          %194 = sbr.rel (%p192) target = $region36
        $region35: #{dqn_forward.5} parent=23 // pred_region
          %s195 = smul.u32 16, %s12
          %p196 = scmp.lt.s32.totalorder %s195, 63
          %s197 = scalar_select %p196, %s195, 63
          %s198 = smul.addr %s197, 8
          %s199 = scalar_lea.vmem %s3, %s198
          %s200 = smul.u32 16, %s12
        $region36: #{dqn_forward.5} parent=23 // pred_fallthru
          _
      $region24: #{dqn_forward.5} parent=5 // pred_fallthru
        _
      %p201 = scmp.le.s32.totalorder 1, %s12
      %p202 = scmp.lt.s32.totalorder %s12, 5
      %p203 = pnand %p201, %p202
      %p204 = pneg %p203
      // Predicated region
      $region37: #{dqn_forward.5} parent=5 // pred_check
        _
      $region38: #{dqn_forward.5} parent=5 // pred_check_branch
        %206 = sbr.rel (%p203) target = $region40
      $region39: #{dqn_forward.5} parent=5 // pred_region
        %s207 = ssub.s32 %s12, 1
        %p208 = pneg %p33
        %p209 = pneg %p30
        %p210 = scmp.lt.s32.totalorder %s17, 3
        %s211 = scalar_select %p210, %s17, 3
        %s212 = smul.addr %s211, 1360
        %s213 = smul.addr %s212, 4
        %s214 = scalar_lea.vmem %s1, %s213
        %p215 = pneg %p59
        %p216 = pneg %p56
        %p217 = scmp.lt.s32.totalorder %s17, 3
        %s218 = scalar_select %p217, %s17, 3
        %s219 = scalar_lea.vmem %s2, %s218
        %p220 = pneg %p85
        %p221 = pneg %p82
        %s222 = smul.u32 16, %s17
        %p223 = scmp.lt.s32.totalorder %s222, 63
        %s224 = scalar_select %p223, %s222, 63
        %s225 = smul.addr %s224, 8
        %s226 = scalar_lea.vmem %s3, %s225
        %p227 = pneg %p111
        %p228 = pneg %p108
        %p229 = pneg %p132
        %p230 = pneg %p129
        %p231 = pneg %p153
        %p232 = pneg %p150
        %p233 = scmp.lt.s32.totalorder %s17, 3
        %s234 = scalar_select %p233, %s17, 3
        %s235 = smul.addr %s234, 1360
        %s236 = smul.addr %s235, 4
        %s237 = scalar_lea.vmem %s1, %s236
        %p238 = scmp.lt.s32.totalorder %s17, 3
        %s239 = scalar_select %p238, %s17, 3
        %s240 = scalar_lea.vmem %s2, %s239
        %s241 = smul.u32 16, %s17
        %p242 = scmp.lt.s32.totalorder %s241, 63
        %s243 = scalar_select %p242, %s241, 63
        %s244 = smul.addr %s243, 8
        %s245 = scalar_lea.vmem %s3, %s244
        %s246 = smul.u32 16, %s17
        %v248 = vld [vmem:[%s0] sm:$0xff]
        %v249 = vld [vmem:[%s0 + $0x8] sm:$0xff]
        %v250 = vld [vmem:[%s0 + $0x10] sm:$0xff]
        %v251 = vld [vmem:[%s0 + $0x18] sm:$0xff]
        %v252 = vld [vmem:[%s0 + $0x20] sm:$0xff]
        %v253 = vld [vmem:[%s0 + $0x28] sm:$0xff]
        %v254 = vld [vmem:[%s0 + $0x30] sm:$0xff]
        %v255 = vld [vmem:[%s0 + $0x38] sm:$0xff]
        %v256 = vld [vmem:[%s0 + $0x40] sm:$0xff]
        %v257 = vld [vmem:[%s0 + $0x48] sm:$0xff]
        %v258 = vld [vmem:[%s0 + $0x50] sm:$0x1f]
        %v259 = vld [vmem:[%s237] sm:$0xf]
        %v260 = vld [vmem:[%s237 + $0x4] sm:$0xf]
        %v261 = vld [vmem:[%s237 + $0x8] sm:$0xf]
        %v262 = vld [vmem:[%s237 + $0xc] sm:$0xf]
        %v263 = vld [vmem:[%s237 + $0x10] sm:$0xf]
        %v264 = vld [vmem:[%s237 + $0x14] sm:$0xf]
        %v265 = vld [vmem:[%s237 + $0x18] sm:$0xf]
        %v266 = vld [vmem:[%s237 + $0x1c] sm:$0xf]
        %v267 = vld [vmem:[%s237 + $0x20] sm:$0xf]
        %v268 = vld [vmem:[%s237 + $0x24] sm:$0xf]
        %v269 = vld [vmem:[%s237 + $0x28] sm:$0xf]
        %v270 = vld [vmem:[%s237 + $0x2c] sm:$0xf]
        %v271 = vld [vmem:[%s237 + $0x30] sm:$0xf]
        %v272 = vld [vmem:[%s237 + $0x34] sm:$0xf]
        %v273 = vld [vmem:[%s237 + $0x38] sm:$0xf]
        %v274 = vld [vmem:[%s237 + $0x3c] sm:$0xf]
        %v275 = vld [vmem:[%s237 + $0x40] sm:$0xf]
        %v276 = vld [vmem:[%s237 + $0x44] sm:$0xf]
        %v277 = vld [vmem:[%s237 + $0x48] sm:$0xf]
        %v278 = vld [vmem:[%s237 + $0x4c] sm:$0xf]
        %v279 = vld [vmem:[%s237 + $0x50] sm:$0xf]
        %v280 = vld [vmem:[%s237 + $0x54] sm:$0xf]
        %v281 = vld [vmem:[%s237 + $0x58] sm:$0xf]
        %v282 = vld [vmem:[%s237 + $0x5c] sm:$0xf]
        %v283 = vld [vmem:[%s237 + $0x60] sm:$0xf]
        %v284 = vld [vmem:[%s237 + $0x64] sm:$0xf]
        %v285 = vld [vmem:[%s237 + $0x68] sm:$0xf]
        %v286 = vld [vmem:[%s237 + $0x6c] sm:$0xf]
        %v287 = vld [vmem:[%s237 + $0x70] sm:$0xf]
        %v288 = vld [vmem:[%s237 + $0x74] sm:$0xf]
        %v289 = vld [vmem:[%s237 + $0x78] sm:$0xf]
        %v290 = vld [vmem:[%s237 + $0x7c] sm:$0xf]
        %v291 = vld [vmem:[%s237 + $0x80] sm:$0xf]
        %v292 = vld [vmem:[%s237 + $0x84] sm:$0xf]
        %v293 = vld [vmem:[%s237 + $0x88] sm:$0xf]
        %v294 = vld [vmem:[%s237 + $0x8c] sm:$0xf]
        %v295 = vld [vmem:[%s237 + $0x90] sm:$0xf]
        %v296 = vld [vmem:[%s237 + $0x94] sm:$0xf]
        %v297 = vld [vmem:[%s237 + $0x98] sm:$0xf]
        %v298 = vld [vmem:[%s237 + $0x9c] sm:$0xf]
        %v299 = vld [vmem:[%s237 + $0xa0] sm:$0xf]
        %v300 = vld [vmem:[%s237 + $0xa4] sm:$0xf]
        %v301 = vld [vmem:[%s237 + $0xa8] sm:$0xf]
        %v302 = vld [vmem:[%s237 + $0xac] sm:$0xf]
        %v303 = vld [vmem:[%s237 + $0xb0] sm:$0xf]
        %v304 = vld [vmem:[%s237 + $0xb4] sm:$0xf]
        %v305 = vld [vmem:[%s237 + $0xb8] sm:$0xf]
        %v306 = vld [vmem:[%s237 + $0xbc] sm:$0xf]
        %v307 = vld [vmem:[%s237 + $0xc0] sm:$0xf]
        %v308 = vld [vmem:[%s237 + $0xc4] sm:$0xf]
        %v309 = vld [vmem:[%s237 + $0xc8] sm:$0xf]
        %v310 = vld [vmem:[%s237 + $0xcc] sm:$0xf]
        %v311 = vld [vmem:[%s237 + $0xd0] sm:$0xf]
        %v312 = vld [vmem:[%s237 + $0xd4] sm:$0xf]
        %v313 = vld [vmem:[%s237 + $0xd8] sm:$0xf]
        %v314 = vld [vmem:[%s237 + $0xdc] sm:$0xf]
        %v315 = vld [vmem:[%s237 + $0xe0] sm:$0xf]
        %v316 = vld [vmem:[%s237 + $0xe4] sm:$0xf]
        %v317 = vld [vmem:[%s237 + $0xe8] sm:$0xf]
        %v318 = vld [vmem:[%s237 + $0xec] sm:$0xf]
        %v319 = vld [vmem:[%s237 + $0xf0] sm:$0xf]
        %v320 = vld [vmem:[%s237 + $0xf4] sm:$0xf]
        %v321 = vld [vmem:[%s237 + $0xf8] sm:$0xf]
        %v322 = vld [vmem:[%s237 + $0xfc] sm:$0xf]
        %v323 = vld [vmem:[%s237 + $0x100] sm:$0xf]
        %v324 = vld [vmem:[%s237 + $0x104] sm:$0xf]
        %v325 = vld [vmem:[%s237 + $0x108] sm:$0xf]
        %v326 = vld [vmem:[%s237 + $0x10c] sm:$0xf]
        %v327 = vld [vmem:[%s237 + $0x110] sm:$0xf]
        %v328 = vld [vmem:[%s237 + $0x114] sm:$0xf]
        %v329 = vld [vmem:[%s237 + $0x118] sm:$0xf]
        %v330 = vld [vmem:[%s237 + $0x11c] sm:$0xf]
        %v331 = vld [vmem:[%s237 + $0x120] sm:$0xf]
        %v332 = vld [vmem:[%s237 + $0x124] sm:$0xf]
        %v333 = vld [vmem:[%s237 + $0x128] sm:$0xf]
        %v334 = vld [vmem:[%s237 + $0x12c] sm:$0xf]
        %v335 = vld [vmem:[%s237 + $0x130] sm:$0xf]
        %v336 = vld [vmem:[%s237 + $0x134] sm:$0xf]
        %v337 = vld [vmem:[%s237 + $0x138] sm:$0xf]
        %v338 = vld [vmem:[%s237 + $0x13c] sm:$0xf]
        %v339 = vld [vmem:[%s237 + $0x140] sm:$0xf]
        %v340 = vld [vmem:[%s237 + $0x144] sm:$0xf]
        %v341 = vld [vmem:[%s237 + $0x148] sm:$0xf]
        %v342 = vld [vmem:[%s237 + $0x14c] sm:$0xf]
        %v343 = vld [vmem:[%s237 + $0x150] sm:$0xf]
        %v344 = vld [vmem:[%s237 + $0x154] sm:$0xf]
        %v345 = vld [vmem:[%s237 + $0x158] sm:$0xf]
        %v346 = vld [vmem:[%s237 + $0x15c] sm:$0xf]
        %v347 = vld [vmem:[%s237 + $0x160] sm:$0xf]
        %v348 = vld [vmem:[%s237 + $0x164] sm:$0xf]
        %v349 = vld [vmem:[%s237 + $0x168] sm:$0xf]
        %v350 = vld [vmem:[%s237 + $0x16c] sm:$0xf]
        %v351 = vld [vmem:[%s237 + $0x170] sm:$0xf]
        %v352 = vld [vmem:[%s237 + $0x174] sm:$0xf]
        %v353 = vld [vmem:[%s237 + $0x178] sm:$0xf]
        %v354 = vld [vmem:[%s237 + $0x17c] sm:$0xf]
        %v355 = vld [vmem:[%s237 + $0x180] sm:$0xf]
        %v356 = vld [vmem:[%s237 + $0x184] sm:$0xf]
        %v357 = vld [vmem:[%s237 + $0x188] sm:$0xf]
        %v358 = vld [vmem:[%s237 + $0x18c] sm:$0xf]
        %v359 = vld [vmem:[%s237 + $0x190] sm:$0xf]
        %v360 = vld [vmem:[%s237 + $0x194] sm:$0xf]
        %v361 = vld [vmem:[%s237 + $0x198] sm:$0xf]
        %v362 = vld [vmem:[%s237 + $0x19c] sm:$0xf]
        %v363 = vld [vmem:[%s237 + $0x1a0] sm:$0xf]
        %v364 = vld [vmem:[%s237 + $0x1a4] sm:$0xf]
        %v365 = vld [vmem:[%s237 + $0x1a8] sm:$0xf]
        %v366 = vld [vmem:[%s237 + $0x1ac] sm:$0xf]
        %v367 = vld [vmem:[%s237 + $0x1b0] sm:$0xf]
        %v368 = vld [vmem:[%s237 + $0x1b4] sm:$0xf]
        %v369 = vld [vmem:[%s237 + $0x1b8] sm:$0xf]
        %v370 = vld [vmem:[%s237 + $0x1bc] sm:$0xf]
        %v371 = vld [vmem:[%s237 + $0x1c0] sm:$0xf]
        %v372 = vld [vmem:[%s237 + $0x1c4] sm:$0xf]
        %v373 = vld [vmem:[%s237 + $0x1c8] sm:$0xf]
        %v374 = vld [vmem:[%s237 + $0x1cc] sm:$0xf]
        %v375 = vld [vmem:[%s237 + $0x1d0] sm:$0xf]
        %v376 = vld [vmem:[%s237 + $0x1d4] sm:$0xf]
        %v377 = vld [vmem:[%s237 + $0x1d8] sm:$0xf]
        %v378 = vld [vmem:[%s237 + $0x1dc] sm:$0xf]
        %v379 = vld [vmem:[%s237 + $0x1e0] sm:$0xf]
        %v380 = vld [vmem:[%s237 + $0x1e4] sm:$0xf]
        %v381 = vld [vmem:[%s237 + $0x1e8] sm:$0xf]
        %v382 = vld [vmem:[%s237 + $0x1ec] sm:$0xf]
        %v383 = vld [vmem:[%s237 + $0x1f0] sm:$0xf]
        %v384 = vld [vmem:[%s237 + $0x1f4] sm:$0xf]
        %v385 = vld [vmem:[%s237 + $0x1f8] sm:$0xf]
        %v386 = vld [vmem:[%s237 + $0x1fc] sm:$0xf]
        %v387 = vld [vmem:[%s237 + $0x200] sm:$0xf]
        %v388 = vld [vmem:[%s237 + $0x204] sm:$0xf]
        %v389 = vld [vmem:[%s237 + $0x208] sm:$0xf]
        %v390 = vld [vmem:[%s237 + $0x20c] sm:$0xf]
        %v391 = vld [vmem:[%s237 + $0x210] sm:$0xf]
        %v392 = vld [vmem:[%s237 + $0x214] sm:$0xf]
        %v393 = vld [vmem:[%s237 + $0x218] sm:$0xf]
        %v394 = vld [vmem:[%s237 + $0x21c] sm:$0xf]
        %v395 = vld [vmem:[%s237 + $0x220] sm:$0xf]
        %v396 = vld [vmem:[%s237 + $0x224] sm:$0xf]
        %v397 = vld [vmem:[%s237 + $0x228] sm:$0xf]
        %v398 = vld [vmem:[%s237 + $0x22c] sm:$0xf]
        %v399 = vld [vmem:[%s237 + $0x230] sm:$0xf]
        %v400 = vld [vmem:[%s237 + $0x234] sm:$0xf]
        %v401 = vld [vmem:[%s237 + $0x238] sm:$0xf]
        %v402 = vld [vmem:[%s237 + $0x23c] sm:$0xf]
        %v403 = vld [vmem:[%s237 + $0x240] sm:$0xf]
        %v404 = vld [vmem:[%s237 + $0x244] sm:$0xf]
        %v405 = vld [vmem:[%s237 + $0x248] sm:$0xf]
        %v406 = vld [vmem:[%s237 + $0x24c] sm:$0xf]
        %v407 = vld [vmem:[%s237 + $0x250] sm:$0xf]
        %v408 = vld [vmem:[%s237 + $0x254] sm:$0xf]
        %v409 = vld [vmem:[%s237 + $0x258] sm:$0xf]
        %v410 = vld [vmem:[%s237 + $0x25c] sm:$0xf]
        %v411 = vld [vmem:[%s237 + $0x260] sm:$0xf]
        %v412 = vld [vmem:[%s237 + $0x264] sm:$0xf]
        %v413 = vld [vmem:[%s237 + $0x268] sm:$0xf]
        %v414 = vld [vmem:[%s237 + $0x26c] sm:$0xf]
        %v415 = vld [vmem:[%s237 + $0x270] sm:$0xf]
        %v416 = vld [vmem:[%s237 + $0x274] sm:$0xf]
        %v417 = vld [vmem:[%s237 + $0x278] sm:$0xf]
        %v418 = vld [vmem:[%s237 + $0x27c] sm:$0xf]
        %v419 = vld [vmem:[%s237 + $0x280] sm:$0xf]
        %v420 = vld [vmem:[%s237 + $0x284] sm:$0xf]
        %v421 = vld [vmem:[%s237 + $0x288] sm:$0xf]
        %v422 = vld [vmem:[%s237 + $0x28c] sm:$0xf]
        %v423 = vld [vmem:[%s237 + $0x290] sm:$0xf]
        %v424 = vld [vmem:[%s237 + $0x294] sm:$0xf]
        %v425 = vld [vmem:[%s237 + $0x298] sm:$0xf]
        %v426 = vld [vmem:[%s237 + $0x29c] sm:$0xf]
        %v427 = vld [vmem:[%s237 + $0x2a0] sm:$0xf]
        %v428 = vld [vmem:[%s237 + $0x2a4] sm:$0xf]
        %v429 = vld [vmem:[%s237 + $0x2a8] sm:$0xf]
        %v430 = vld [vmem:[%s237 + $0x2ac] sm:$0xf]
        %v431 = vld [vmem:[%s237 + $0x2b0] sm:$0xf]
        %v432 = vld [vmem:[%s237 + $0x2b4] sm:$0xf]
        %v433 = vld [vmem:[%s237 + $0x2b8] sm:$0xf]
        %v434 = vld [vmem:[%s237 + $0x2bc] sm:$0xf]
        %v435 = vld [vmem:[%s237 + $0x2c0] sm:$0xf]
        %v436 = vld [vmem:[%s237 + $0x2c4] sm:$0xf]
        %v437 = vld [vmem:[%s237 + $0x2c8] sm:$0xf]
        %v438 = vld [vmem:[%s237 + $0x2cc] sm:$0xf]
        %v439 = vld [vmem:[%s237 + $0x2d0] sm:$0xf]
        %v440 = vld [vmem:[%s237 + $0x2d4] sm:$0xf]
        %v441 = vld [vmem:[%s237 + $0x2d8] sm:$0xf]
        %v442 = vld [vmem:[%s237 + $0x2dc] sm:$0xf]
        %v443 = vld [vmem:[%s237 + $0x2e0] sm:$0xf]
        %v444 = vld [vmem:[%s237 + $0x2e4] sm:$0xf]
        %v445 = vld [vmem:[%s237 + $0x2e8] sm:$0xf]
        %v446 = vld [vmem:[%s237 + $0x2ec] sm:$0xf]
        %v447 = vld [vmem:[%s237 + $0x2f0] sm:$0xf]
        %v448 = vld [vmem:[%s237 + $0x2f4] sm:$0xf]
        %v449 = vld [vmem:[%s237 + $0x2f8] sm:$0xf]
        %v450 = vld [vmem:[%s237 + $0x2fc] sm:$0xf]
        %v451 = vld [vmem:[%s237 + $0x300] sm:$0xf]
        %v452 = vld [vmem:[%s237 + $0x304] sm:$0xf]
        %v453 = vld [vmem:[%s237 + $0x308] sm:$0xf]
        %v454 = vld [vmem:[%s237 + $0x30c] sm:$0xf]
        %v455 = vld [vmem:[%s237 + $0x310] sm:$0xf]
        %v456 = vld [vmem:[%s237 + $0x314] sm:$0xf]
        %v457 = vld [vmem:[%s237 + $0x318] sm:$0xf]
        %v458 = vld [vmem:[%s237 + $0x31c] sm:$0xf]
        %v459 = vld [vmem:[%s237 + $0x320] sm:$0xf]
        %v460 = vld [vmem:[%s237 + $0x324] sm:$0xf]
        %v461 = vld [vmem:[%s237 + $0x328] sm:$0xf]
        %v462 = vld [vmem:[%s237 + $0x32c] sm:$0xf]
        %v463 = vld [vmem:[%s237 + $0x330] sm:$0xf]
        %v464 = vld [vmem:[%s237 + $0x334] sm:$0xf]
        %v465 = vld [vmem:[%s237 + $0x338] sm:$0xf]
        %v466 = vld [vmem:[%s237 + $0x33c] sm:$0xf]
        %v467 = vld [vmem:[%s237 + $0x340] sm:$0xf]
        %v468 = vld [vmem:[%s237 + $0x344] sm:$0xf]
        %v469 = vld [vmem:[%s237 + $0x348] sm:$0xf]
        %v470 = vld [vmem:[%s237 + $0x34c] sm:$0xf]
        %v471 = vld [vmem:[%s237 + $0x350] sm:$0xf]
        %v472 = vld [vmem:[%s237 + $0x354] sm:$0xf]
        %v473 = vld [vmem:[%s237 + $0x358] sm:$0xf]
        %v474 = vld [vmem:[%s237 + $0x35c] sm:$0xf]
        %v475 = vld [vmem:[%s237 + $0x360] sm:$0xf]
        %v476 = vld [vmem:[%s237 + $0x364] sm:$0xf]
        %v477 = vld [vmem:[%s237 + $0x368] sm:$0xf]
        %v478 = vld [vmem:[%s237 + $0x36c] sm:$0xf]
        %v479 = vld [vmem:[%s237 + $0x370] sm:$0xf]
        %v480 = vld [vmem:[%s237 + $0x374] sm:$0xf]
        %v481 = vld [vmem:[%s237 + $0x378] sm:$0xf]
        %v482 = vld [vmem:[%s237 + $0x37c] sm:$0xf]
        %v483 = vld [vmem:[%s237 + $0x380] sm:$0xf]
        %v484 = vld [vmem:[%s237 + $0x384] sm:$0xf]
        %v485 = vld [vmem:[%s237 + $0x388] sm:$0xf]
        %v486 = vld [vmem:[%s237 + $0x38c] sm:$0xf]
        %v487 = vld [vmem:[%s237 + $0x390] sm:$0xf]
        %v488 = vld [vmem:[%s237 + $0x394] sm:$0xf]
        %v489 = vld [vmem:[%s237 + $0x398] sm:$0xf]
        %v490 = vld [vmem:[%s237 + $0x39c] sm:$0xf]
        %v491 = vld [vmem:[%s237 + $0x3a0] sm:$0xf]
        %v492 = vld [vmem:[%s237 + $0x3a4] sm:$0xf]
        %v493 = vld [vmem:[%s237 + $0x3a8] sm:$0xf]
        %v494 = vld [vmem:[%s237 + $0x3ac] sm:$0xf]
        %v495 = vld [vmem:[%s237 + $0x3b0] sm:$0xf]
        %v496 = vld [vmem:[%s237 + $0x3b4] sm:$0xf]
        %v497 = vld [vmem:[%s237 + $0x3b8] sm:$0xf]
        %v498 = vld [vmem:[%s237 + $0x3bc] sm:$0xf]
        %v499 = vld [vmem:[%s237 + $0x3c0] sm:$0xf]
        %v500 = vld [vmem:[%s237 + $0x3c4] sm:$0xf]
        %v501 = vld [vmem:[%s237 + $0x3c8] sm:$0xf]
        %v502 = vld [vmem:[%s237 + $0x3cc] sm:$0xf]
        %v503 = vld [vmem:[%s237 + $0x3d0] sm:$0xf]
        %v504 = vld [vmem:[%s237 + $0x3d4] sm:$0xf]
        %v505 = vld [vmem:[%s237 + $0x3d8] sm:$0xf]
        %v506 = vld [vmem:[%s237 + $0x3dc] sm:$0xf]
        %v507 = vld [vmem:[%s237 + $0x3e0] sm:$0xf]
        %v508 = vld [vmem:[%s237 + $0x3e4] sm:$0xf]
        %v509 = vld [vmem:[%s237 + $0x3e8] sm:$0xf]
        %v510 = vld [vmem:[%s237 + $0x3ec] sm:$0xf]
        %v511 = vld [vmem:[%s237 + $0x3f0] sm:$0xf]
        %v512 = vld [vmem:[%s237 + $0x3f4] sm:$0xf]
        %v513 = vld [vmem:[%s237 + $0x3f8] sm:$0xf]
        %v514 = vld [vmem:[%s237 + $0x3fc] sm:$0xf]
        %v515 = vld [vmem:[%s237 + $0x400] sm:$0xf]
        %v516 = vld [vmem:[%s237 + $0x404] sm:$0xf]
        %v517 = vld [vmem:[%s237 + $0x408] sm:$0xf]
        %v518 = vld [vmem:[%s237 + $0x40c] sm:$0xf]
        %v519 = vld [vmem:[%s237 + $0x410] sm:$0xf]
        %v520 = vld [vmem:[%s237 + $0x414] sm:$0xf]
        %v521 = vld [vmem:[%s237 + $0x418] sm:$0xf]
        %v522 = vld [vmem:[%s237 + $0x41c] sm:$0xf]
        %v523 = vld [vmem:[%s237 + $0x420] sm:$0xf]
        %v524 = vld [vmem:[%s237 + $0x424] sm:$0xf]
        %v525 = vld [vmem:[%s237 + $0x428] sm:$0xf]
        %v526 = vld [vmem:[%s237 + $0x42c] sm:$0xf]
        %v527 = vld [vmem:[%s237 + $0x430] sm:$0xf]
        %v528 = vld [vmem:[%s237 + $0x434] sm:$0xf]
        %v529 = vld [vmem:[%s237 + $0x438] sm:$0xf]
        %v530 = vld [vmem:[%s237 + $0x43c] sm:$0xf]
        %v531 = vld [vmem:[%s237 + $0x440] sm:$0xf]
        %v532 = vld [vmem:[%s237 + $0x444] sm:$0xf]
        %v533 = vld [vmem:[%s237 + $0x448] sm:$0xf]
        %v534 = vld [vmem:[%s237 + $0x44c] sm:$0xf]
        %v535 = vld [vmem:[%s237 + $0x450] sm:$0xf]
        %v536 = vld [vmem:[%s237 + $0x454] sm:$0xf]
        %v537 = vld [vmem:[%s237 + $0x458] sm:$0xf]
        %v538 = vld [vmem:[%s237 + $0x45c] sm:$0xf]
        %v539 = vld [vmem:[%s237 + $0x460] sm:$0xf]
        %v540 = vld [vmem:[%s237 + $0x464] sm:$0xf]
        %v541 = vld [vmem:[%s237 + $0x468] sm:$0xf]
        %v542 = vld [vmem:[%s237 + $0x46c] sm:$0xf]
        %v543 = vld [vmem:[%s237 + $0x470] sm:$0xf]
        %v544 = vld [vmem:[%s237 + $0x474] sm:$0xf]
        %v545 = vld [vmem:[%s237 + $0x478] sm:$0xf]
        %v546 = vld [vmem:[%s237 + $0x47c] sm:$0xf]
        %v547 = vld [vmem:[%s237 + $0x480] sm:$0xf]
        %v548 = vld [vmem:[%s237 + $0x484] sm:$0xf]
        %v549 = vld [vmem:[%s237 + $0x488] sm:$0xf]
        %v550 = vld [vmem:[%s237 + $0x48c] sm:$0xf]
        %v551 = vld [vmem:[%s237 + $0x490] sm:$0xf]
        %v552 = vld [vmem:[%s237 + $0x494] sm:$0xf]
        %v553 = vld [vmem:[%s237 + $0x498] sm:$0xf]
        %v554 = vld [vmem:[%s237 + $0x49c] sm:$0xf]
        %v555 = vld [vmem:[%s237 + $0x4a0] sm:$0xf]
        %v556 = vld [vmem:[%s237 + $0x4a4] sm:$0xf]
        %v557 = vld [vmem:[%s237 + $0x4a8] sm:$0xf]
        %v558 = vld [vmem:[%s237 + $0x4ac] sm:$0xf]
        %v559 = vld [vmem:[%s237 + $0x4b0] sm:$0xf]
        %v560 = vld [vmem:[%s237 + $0x4b4] sm:$0xf]
        %v561 = vld [vmem:[%s237 + $0x4b8] sm:$0xf]
        %v562 = vld [vmem:[%s237 + $0x4bc] sm:$0xf]
        %v563 = vld [vmem:[%s237 + $0x4c0] sm:$0xf]
        %v564 = vld [vmem:[%s237 + $0x4c4] sm:$0xf]
        %v565 = vld [vmem:[%s237 + $0x4c8] sm:$0xf]
        %v566 = vld [vmem:[%s237 + $0x4cc] sm:$0xf]
        %v567 = vld [vmem:[%s237 + $0x4d0] sm:$0xf]
        %v568 = vld [vmem:[%s237 + $0x4d4] sm:$0xf]
        %v569 = vld [vmem:[%s237 + $0x4d8] sm:$0xf]
        %v570 = vld [vmem:[%s237 + $0x4dc] sm:$0xf]
        %v571 = vld [vmem:[%s237 + $0x4e0] sm:$0xf]
        %v572 = vld [vmem:[%s237 + $0x4e4] sm:$0xf]
        %v573 = vld [vmem:[%s237 + $0x4e8] sm:$0xf]
        %v574 = vld [vmem:[%s237 + $0x4ec] sm:$0xf]
        %v575 = vld [vmem:[%s237 + $0x4f0] sm:$0xf]
        %v576 = vld [vmem:[%s237 + $0x4f4] sm:$0xf]
        %v577 = vld [vmem:[%s237 + $0x4f8] sm:$0xf]
        %v578 = vld [vmem:[%s237 + $0x4fc] sm:$0xf]
        %v579 = vld [vmem:[%s237 + $0x500] sm:$0xf]
        %v580 = vld [vmem:[%s237 + $0x504] sm:$0xf]
        %v581 = vld [vmem:[%s237 + $0x508] sm:$0xf]
        %v582 = vld [vmem:[%s237 + $0x50c] sm:$0xf]
        %v583 = vld [vmem:[%s237 + $0x510] sm:$0xf]
        %v584 = vld [vmem:[%s237 + $0x514] sm:$0xf]
        %v585 = vld [vmem:[%s237 + $0x518] sm:$0xf]
        %v586 = vld [vmem:[%s237 + $0x51c] sm:$0xf]
        %v587 = vld [vmem:[%s237 + $0x520] sm:$0xf]
        %v588 = vld [vmem:[%s237 + $0x524] sm:$0xf]
        %v589 = vld [vmem:[%s237 + $0x528] sm:$0xf]
        %v590 = vld [vmem:[%s237 + $0x52c] sm:$0xf]
        %v591 = vld [vmem:[%s237 + $0x530] sm:$0xf]
        %v592 = vld [vmem:[%s237 + $0x534] sm:$0xf]
        %v593 = vld [vmem:[%s237 + $0x538] sm:$0xf]
        %v594 = vld [vmem:[%s237 + $0x53c] sm:$0xf]
        %v595 = vld [vmem:[%s237 + $0x540] sm:$0xf]
        %v596 = vld [vmem:[%s237 + $0x544] sm:$0xf]
        %v597 = vld [vmem:[%s237 + $0x548] sm:$0xf]
        %v598 = vld [vmem:[%s237 + $0x54c] sm:$0xf]
        %v599 = vld [vmem:[%s237 + $0x550] sm:$0xf]
        %v600 = vld [vmem:[%s237 + $0x554] sm:$0xf]
        %v601 = vld [vmem:[%s237 + $0x558] sm:$0xf]
        %v602 = vld [vmem:[%s237 + $0x55c] sm:$0xf]
        %v603 = vld [vmem:[%s237 + $0x560] sm:$0xf]
        %v604 = vld [vmem:[%s237 + $0x564] sm:$0xf]
        %v605 = vld [vmem:[%s237 + $0x568] sm:$0xf]
        %v606 = vld [vmem:[%s237 + $0x56c] sm:$0xf]
        %v607 = vld [vmem:[%s237 + $0x570] sm:$0xf]
        %v608 = vld [vmem:[%s237 + $0x574] sm:$0xf]
        %v609 = vld [vmem:[%s237 + $0x578] sm:$0xf]
        %v610 = vld [vmem:[%s237 + $0x57c] sm:$0xf]
        %v611 = vld [vmem:[%s237 + $0x580] sm:$0xf]
        %v612 = vld [vmem:[%s237 + $0x584] sm:$0xf]
        %v613 = vld [vmem:[%s237 + $0x588] sm:$0xf]
        %v614 = vld [vmem:[%s237 + $0x58c] sm:$0xf]
        %v615 = vld [vmem:[%s237 + $0x590] sm:$0xf]
        %v616 = vld [vmem:[%s237 + $0x594] sm:$0xf]
        %v617 = vld [vmem:[%s237 + $0x598] sm:$0xf]
        %v618 = vld [vmem:[%s237 + $0x59c] sm:$0xf]
        %v619 = vld [vmem:[%s237 + $0x5a0] sm:$0xf]
        %v620 = vld [vmem:[%s237 + $0x5a4] sm:$0xf]
        %v621 = vld [vmem:[%s237 + $0x5a8] sm:$0xf]
        %v622 = vld [vmem:[%s237 + $0x5ac] sm:$0xf]
        %v623 = vld [vmem:[%s237 + $0x5b0] sm:$0xf]
        %v624 = vld [vmem:[%s237 + $0x5b4] sm:$0xf]
        %v625 = vld [vmem:[%s237 + $0x5b8] sm:$0xf]
        %v626 = vld [vmem:[%s237 + $0x5bc] sm:$0xf]
        %v627 = vld [vmem:[%s237 + $0x5c0] sm:$0xf]
        %v628 = vld [vmem:[%s237 + $0x5c4] sm:$0xf]
        %v629 = vld [vmem:[%s237 + $0x5c8] sm:$0xf]
        %v630 = vld [vmem:[%s237 + $0x5cc] sm:$0xf]
        %v631 = vld [vmem:[%s237 + $0x5d0] sm:$0xf]
        %v632 = vld [vmem:[%s237 + $0x5d4] sm:$0xf]
        %v633 = vld [vmem:[%s237 + $0x5d8] sm:$0xf]
        %v634 = vld [vmem:[%s237 + $0x5dc] sm:$0xf]
        %v635 = vld [vmem:[%s237 + $0x5e0] sm:$0xf]
        %v636 = vld [vmem:[%s237 + $0x5e4] sm:$0xf]
        %v637 = vld [vmem:[%s237 + $0x5e8] sm:$0xf]
        %v638 = vld [vmem:[%s237 + $0x5ec] sm:$0xf]
        %v639 = vld [vmem:[%s237 + $0x5f0] sm:$0xf]
        %v640 = vld [vmem:[%s237 + $0x5f4] sm:$0xf]
        %v641 = vld [vmem:[%s237 + $0x5f8] sm:$0xf]
        %v642 = vld [vmem:[%s237 + $0x5fc] sm:$0xf]
        %v643 = vld [vmem:[%s237 + $0x600] sm:$0xf]
        %v644 = vld [vmem:[%s237 + $0x604] sm:$0xf]
        %v645 = vld [vmem:[%s237 + $0x608] sm:$0xf]
        %v646 = vld [vmem:[%s237 + $0x60c] sm:$0xf]
        %v647 = vld [vmem:[%s237 + $0x610] sm:$0xf]
        %v648 = vld [vmem:[%s237 + $0x614] sm:$0xf]
        %v649 = vld [vmem:[%s237 + $0x618] sm:$0xf]
        %v650 = vld [vmem:[%s237 + $0x61c] sm:$0xf]
        %v651 = vld [vmem:[%s237 + $0x620] sm:$0xf]
        %v652 = vld [vmem:[%s237 + $0x624] sm:$0xf]
        %v653 = vld [vmem:[%s237 + $0x628] sm:$0xf]
        %v654 = vld [vmem:[%s237 + $0x62c] sm:$0xf]
        %v655 = vld [vmem:[%s237 + $0x630] sm:$0xf]
        %v656 = vld [vmem:[%s237 + $0x634] sm:$0xf]
        %v657 = vld [vmem:[%s237 + $0x638] sm:$0xf]
        %v658 = vld [vmem:[%s237 + $0x63c] sm:$0xf]
        %v659 = vld [vmem:[%s237 + $0x640] sm:$0xf]
        %v660 = vld [vmem:[%s237 + $0x644] sm:$0xf]
        %v661 = vld [vmem:[%s237 + $0x648] sm:$0xf]
        %v662 = vld [vmem:[%s237 + $0x64c] sm:$0xf]
        %v663 = vld [vmem:[%s237 + $0x650] sm:$0xf]
        %v664 = vld [vmem:[%s237 + $0x654] sm:$0xf]
        %v665 = vld [vmem:[%s237 + $0x658] sm:$0xf]
        %v666 = vld [vmem:[%s237 + $0x65c] sm:$0xf]
        %v667 = vld [vmem:[%s237 + $0x660] sm:$0xf]
        %v668 = vld [vmem:[%s237 + $0x664] sm:$0xf]
        %v669 = vld [vmem:[%s237 + $0x668] sm:$0xf]
        %v670 = vld [vmem:[%s237 + $0x66c] sm:$0xf]
        %v671 = vld [vmem:[%s237 + $0x670] sm:$0xf]
        %v672 = vld [vmem:[%s237 + $0x674] sm:$0xf]
        %v673 = vld [vmem:[%s237 + $0x678] sm:$0xf]
        %v674 = vld [vmem:[%s237 + $0x67c] sm:$0xf]
        %v675 = vld [vmem:[%s237 + $0x680] sm:$0xf]
        %v676 = vld [vmem:[%s237 + $0x684] sm:$0xf]
        %v677 = vld [vmem:[%s237 + $0x688] sm:$0xf]
        %v678 = vld [vmem:[%s237 + $0x68c] sm:$0xf]
        %v679 = vld [vmem:[%s237 + $0x690] sm:$0xf]
        %v680 = vld [vmem:[%s237 + $0x694] sm:$0xf]
        %v681 = vld [vmem:[%s237 + $0x698] sm:$0xf]
        %v682 = vld [vmem:[%s237 + $0x69c] sm:$0xf]
        %v683 = vld [vmem:[%s237 + $0x6a0] sm:$0xf]
        %v684 = vld [vmem:[%s237 + $0x6a4] sm:$0xf]
        %v685 = vld [vmem:[%s237 + $0x6a8] sm:$0xf]
        %v686 = vld [vmem:[%s237 + $0x6ac] sm:$0xf]
        %v687 = vld [vmem:[%s237 + $0x6b0] sm:$0xf]
        %v688 = vld [vmem:[%s237 + $0x6b4] sm:$0xf]
        %v689 = vld [vmem:[%s237 + $0x6b8] sm:$0xf]
        %v690 = vld [vmem:[%s237 + $0x6bc] sm:$0xf]
        %v691 = vld [vmem:[%s237 + $0x6c0] sm:$0xf]
        %v692 = vld [vmem:[%s237 + $0x6c4] sm:$0xf]
        %v693 = vld [vmem:[%s237 + $0x6c8] sm:$0xf]
        %v694 = vld [vmem:[%s237 + $0x6cc] sm:$0xf]
        %v695 = vld [vmem:[%s237 + $0x6d0] sm:$0xf]
        %v696 = vld [vmem:[%s237 + $0x6d4] sm:$0xf]
        %v697 = vld [vmem:[%s237 + $0x6d8] sm:$0xf]
        %v698 = vld [vmem:[%s237 + $0x6dc] sm:$0xf]
        %v699 = vld [vmem:[%s237 + $0x6e0] sm:$0xf]
        %v700 = vld [vmem:[%s237 + $0x6e4] sm:$0xf]
        %v701 = vld [vmem:[%s237 + $0x6e8] sm:$0xf]
        %v702 = vld [vmem:[%s237 + $0x6ec] sm:$0xf]
        %v703 = vld [vmem:[%s237 + $0x6f0] sm:$0xf]
        %v704 = vld [vmem:[%s237 + $0x6f4] sm:$0xf]
        %v705 = vld [vmem:[%s237 + $0x6f8] sm:$0xf]
        %v706 = vld [vmem:[%s237 + $0x6fc] sm:$0xf]
        %v707 = vld [vmem:[%s237 + $0x700] sm:$0xf]
        %v708 = vld [vmem:[%s237 + $0x704] sm:$0xf]
        %v709 = vld [vmem:[%s237 + $0x708] sm:$0xf]
        %v710 = vld [vmem:[%s237 + $0x70c] sm:$0xf]
        %v711 = vld [vmem:[%s237 + $0x710] sm:$0xf]
        %v712 = vld [vmem:[%s237 + $0x714] sm:$0xf]
        %v713 = vld [vmem:[%s237 + $0x718] sm:$0xf]
        %v714 = vld [vmem:[%s237 + $0x71c] sm:$0xf]
        %v715 = vld [vmem:[%s237 + $0x720] sm:$0xf]
        %v716 = vld [vmem:[%s237 + $0x724] sm:$0xf]
        %v717 = vld [vmem:[%s237 + $0x728] sm:$0xf]
        %v718 = vld [vmem:[%s237 + $0x72c] sm:$0xf]
        %v719 = vld [vmem:[%s237 + $0x730] sm:$0xf]
        %v720 = vld [vmem:[%s237 + $0x734] sm:$0xf]
        %v721 = vld [vmem:[%s237 + $0x738] sm:$0xf]
        %v722 = vld [vmem:[%s237 + $0x73c] sm:$0xf]
        %v723 = vld [vmem:[%s237 + $0x740] sm:$0xf]
        %v724 = vld [vmem:[%s237 + $0x744] sm:$0xf]
        %v725 = vld [vmem:[%s237 + $0x748] sm:$0xf]
        %v726 = vld [vmem:[%s237 + $0x74c] sm:$0xf]
        %v727 = vld [vmem:[%s237 + $0x750] sm:$0xf]
        %v728 = vld [vmem:[%s237 + $0x754] sm:$0xf]
        %v729 = vld [vmem:[%s237 + $0x758] sm:$0xf]
        %v730 = vld [vmem:[%s237 + $0x75c] sm:$0xf]
        %v731 = vld [vmem:[%s237 + $0x760] sm:$0xf]
        %v732 = vld [vmem:[%s237 + $0x764] sm:$0xf]
        %v733 = vld [vmem:[%s237 + $0x768] sm:$0xf]
        %v734 = vld [vmem:[%s237 + $0x76c] sm:$0xf]
        %v735 = vld [vmem:[%s237 + $0x770] sm:$0xf]
        %v736 = vld [vmem:[%s237 + $0x774] sm:$0xf]
        %v737 = vld [vmem:[%s237 + $0x778] sm:$0xf]
        %v738 = vld [vmem:[%s237 + $0x77c] sm:$0xf]
        %v739 = vld [vmem:[%s237 + $0x780] sm:$0xf]
        %v740 = vld [vmem:[%s237 + $0x784] sm:$0xf]
        %v741 = vld [vmem:[%s237 + $0x788] sm:$0xf]
        %v742 = vld [vmem:[%s237 + $0x78c] sm:$0xf]
        %v743 = vld [vmem:[%s237 + $0x790] sm:$0xf]
        %v744 = vld [vmem:[%s237 + $0x794] sm:$0xf]
        %v745 = vld [vmem:[%s237 + $0x798] sm:$0xf]
        %v746 = vld [vmem:[%s237 + $0x79c] sm:$0xf]
        %v747 = vld [vmem:[%s237 + $0x7a0] sm:$0xf]
        %v748 = vld [vmem:[%s237 + $0x7a4] sm:$0xf]
        %v749 = vld [vmem:[%s237 + $0x7a8] sm:$0xf]
        %v750 = vld [vmem:[%s237 + $0x7ac] sm:$0xf]
        %v751 = vld [vmem:[%s237 + $0x7b0] sm:$0xf]
        %v752 = vld [vmem:[%s237 + $0x7b4] sm:$0xf]
        %v753 = vld [vmem:[%s237 + $0x7b8] sm:$0xf]
        %v754 = vld [vmem:[%s237 + $0x7bc] sm:$0xf]
        %v755 = vld [vmem:[%s237 + $0x7c0] sm:$0xf]
        %v756 = vld [vmem:[%s237 + $0x7c4] sm:$0xf]
        %v757 = vld [vmem:[%s237 + $0x7c8] sm:$0xf]
        %v758 = vld [vmem:[%s237 + $0x7cc] sm:$0xf]
        %v759 = vld [vmem:[%s237 + $0x7d0] sm:$0xf]
        %v760 = vld [vmem:[%s237 + $0x7d4] sm:$0xf]
        %v761 = vld [vmem:[%s237 + $0x7d8] sm:$0xf]
        %v762 = vld [vmem:[%s237 + $0x7dc] sm:$0xf]
        %v763 = vld [vmem:[%s237 + $0x7e0] sm:$0xf]
        %v764 = vld [vmem:[%s237 + $0x7e4] sm:$0xf]
        %v765 = vld [vmem:[%s237 + $0x7e8] sm:$0xf]
        %v766 = vld [vmem:[%s237 + $0x7ec] sm:$0xf]
        %v767 = vld [vmem:[%s237 + $0x7f0] sm:$0xf]
        %v768 = vld [vmem:[%s237 + $0x7f4] sm:$0xf]
        %v769 = vld [vmem:[%s237 + $0x7f8] sm:$0xf]
        %v770 = vld [vmem:[%s237 + $0x7fc] sm:$0xf]
        %v771 = vld [vmem:[%s237 + $0x800] sm:$0xf]
        %v772 = vld [vmem:[%s237 + $0x804] sm:$0xf]
        %v773 = vld [vmem:[%s237 + $0x808] sm:$0xf]
        %v774 = vld [vmem:[%s237 + $0x80c] sm:$0xf]
        %v775 = vld [vmem:[%s237 + $0x810] sm:$0xf]
        %v776 = vld [vmem:[%s237 + $0x814] sm:$0xf]
        %v777 = vld [vmem:[%s237 + $0x818] sm:$0xf]
        %v778 = vld [vmem:[%s237 + $0x81c] sm:$0xf]
        %v779 = vld [vmem:[%s237 + $0x820] sm:$0xf]
        %v780 = vld [vmem:[%s237 + $0x824] sm:$0xf]
        %v781 = vld [vmem:[%s237 + $0x828] sm:$0xf]
        %v782 = vld [vmem:[%s237 + $0x82c] sm:$0xf]
        %v783 = vld [vmem:[%s237 + $0x830] sm:$0xf]
        %v784 = vld [vmem:[%s237 + $0x834] sm:$0xf]
        %v785 = vld [vmem:[%s237 + $0x838] sm:$0xf]
        %v786 = vld [vmem:[%s237 + $0x83c] sm:$0xf]
        %v787 = vld [vmem:[%s237 + $0x840] sm:$0xf]
        %v788 = vld [vmem:[%s237 + $0x844] sm:$0xf]
        %v789 = vld [vmem:[%s237 + $0x848] sm:$0xf]
        %v790 = vld [vmem:[%s237 + $0x84c] sm:$0xf]
        %v791 = vld [vmem:[%s237 + $0x850] sm:$0xf]
        %v792 = vld [vmem:[%s237 + $0x854] sm:$0xf]
        %v793 = vld [vmem:[%s237 + $0x858] sm:$0xf]
        %v794 = vld [vmem:[%s237 + $0x85c] sm:$0xf]
        %v795 = vld [vmem:[%s237 + $0x860] sm:$0xf]
        %v796 = vld [vmem:[%s237 + $0x864] sm:$0xf]
        %v797 = vld [vmem:[%s237 + $0x868] sm:$0xf]
        %v798 = vld [vmem:[%s237 + $0x86c] sm:$0xf]
        %v799 = vld [vmem:[%s237 + $0x870] sm:$0xf]
        %v800 = vld [vmem:[%s237 + $0x874] sm:$0xf]
        %v801 = vld [vmem:[%s237 + $0x878] sm:$0xf]
        %v802 = vld [vmem:[%s237 + $0x87c] sm:$0xf]
        %v803 = vld [vmem:[%s237 + $0x880] sm:$0xf]
        %v804 = vld [vmem:[%s237 + $0x884] sm:$0xf]
        %v805 = vld [vmem:[%s237 + $0x888] sm:$0xf]
        %v806 = vld [vmem:[%s237 + $0x88c] sm:$0xf]
        %v807 = vld [vmem:[%s237 + $0x890] sm:$0xf]
        %v808 = vld [vmem:[%s237 + $0x894] sm:$0xf]
        %v809 = vld [vmem:[%s237 + $0x898] sm:$0xf]
        %v810 = vld [vmem:[%s237 + $0x89c] sm:$0xf]
        %v811 = vld [vmem:[%s237 + $0x8a0] sm:$0xf]
        %v812 = vld [vmem:[%s237 + $0x8a4] sm:$0xf]
        %v813 = vld [vmem:[%s237 + $0x8a8] sm:$0xf]
        %v814 = vld [vmem:[%s237 + $0x8ac] sm:$0xf]
        %v815 = vld [vmem:[%s237 + $0x8b0] sm:$0xf]
        %v816 = vld [vmem:[%s237 + $0x8b4] sm:$0xf]
        %v817 = vld [vmem:[%s237 + $0x8b8] sm:$0xf]
        %v818 = vld [vmem:[%s237 + $0x8bc] sm:$0xf]
        %v819 = vld [vmem:[%s237 + $0x8c0] sm:$0xf]
        %v820 = vld [vmem:[%s237 + $0x8c4] sm:$0xf]
        %v821 = vld [vmem:[%s237 + $0x8c8] sm:$0xf]
        %v822 = vld [vmem:[%s237 + $0x8cc] sm:$0xf]
        %v823 = vld [vmem:[%s237 + $0x8d0] sm:$0xf]
        %v824 = vld [vmem:[%s237 + $0x8d4] sm:$0xf]
        %v825 = vld [vmem:[%s237 + $0x8d8] sm:$0xf]
        %v826 = vld [vmem:[%s237 + $0x8dc] sm:$0xf]
        %v827 = vld [vmem:[%s237 + $0x8e0] sm:$0xf]
        %v828 = vld [vmem:[%s237 + $0x8e4] sm:$0xf]
        %v829 = vld [vmem:[%s237 + $0x8e8] sm:$0xf]
        %v830 = vld [vmem:[%s237 + $0x8ec] sm:$0xf]
        %v831 = vld [vmem:[%s237 + $0x8f0] sm:$0xf]
        %v832 = vld [vmem:[%s237 + $0x8f4] sm:$0xf]
        %v833 = vld [vmem:[%s237 + $0x8f8] sm:$0xf]
        %v834 = vld [vmem:[%s237 + $0x8fc] sm:$0xf]
        %v835 = vld [vmem:[%s237 + $0x900] sm:$0xf]
        %v836 = vld [vmem:[%s237 + $0x904] sm:$0xf]
        %v837 = vld [vmem:[%s237 + $0x908] sm:$0xf]
        %v838 = vld [vmem:[%s237 + $0x90c] sm:$0xf]
        %v839 = vld [vmem:[%s237 + $0x910] sm:$0xf]
        %v840 = vld [vmem:[%s237 + $0x914] sm:$0xf]
        %v841 = vld [vmem:[%s237 + $0x918] sm:$0xf]
        %v842 = vld [vmem:[%s237 + $0x91c] sm:$0xf]
        %v843 = vld [vmem:[%s237 + $0x920] sm:$0xf]
        %v844 = vld [vmem:[%s237 + $0x924] sm:$0xf]
        %v845 = vld [vmem:[%s237 + $0x928] sm:$0xf]
        %v846 = vld [vmem:[%s237 + $0x92c] sm:$0xf]
        %v847 = vld [vmem:[%s237 + $0x930] sm:$0xf]
        %v848 = vld [vmem:[%s237 + $0x934] sm:$0xf]
        %v849 = vld [vmem:[%s237 + $0x938] sm:$0xf]
        %v850 = vld [vmem:[%s237 + $0x93c] sm:$0xf]
        %v851 = vld [vmem:[%s237 + $0x940] sm:$0xf]
        %v852 = vld [vmem:[%s237 + $0x944] sm:$0xf]
        %v853 = vld [vmem:[%s237 + $0x948] sm:$0xf]
        %v854 = vld [vmem:[%s237 + $0x94c] sm:$0xf]
        %v855 = vld [vmem:[%s237 + $0x950] sm:$0xf]
        %v856 = vld [vmem:[%s237 + $0x954] sm:$0xf]
        %v857 = vld [vmem:[%s237 + $0x958] sm:$0xf]
        %v858 = vld [vmem:[%s237 + $0x95c] sm:$0xf]
        %v859 = vld [vmem:[%s237 + $0x960] sm:$0xf]
        %v860 = vld [vmem:[%s237 + $0x964] sm:$0xf]
        %v861 = vld [vmem:[%s237 + $0x968] sm:$0xf]
        %v862 = vld [vmem:[%s237 + $0x96c] sm:$0xf]
        %v863 = vld [vmem:[%s237 + $0x970] sm:$0xf]
        %v864 = vld [vmem:[%s237 + $0x974] sm:$0xf]
        %v865 = vld [vmem:[%s237 + $0x978] sm:$0xf]
        %v866 = vld [vmem:[%s237 + $0x97c] sm:$0xf]
        %v867 = vld [vmem:[%s237 + $0x980] sm:$0xf]
        %v868 = vld [vmem:[%s237 + $0x984] sm:$0xf]
        %v869 = vld [vmem:[%s237 + $0x988] sm:$0xf]
        %v870 = vld [vmem:[%s237 + $0x98c] sm:$0xf]
        %v871 = vld [vmem:[%s237 + $0x990] sm:$0xf]
        %v872 = vld [vmem:[%s237 + $0x994] sm:$0xf]
        %v873 = vld [vmem:[%s237 + $0x998] sm:$0xf]
        %v874 = vld [vmem:[%s237 + $0x99c] sm:$0xf]
        %v875 = vld [vmem:[%s237 + $0x9a0] sm:$0xf]
        %v876 = vld [vmem:[%s237 + $0x9a4] sm:$0xf]
        %v877 = vld [vmem:[%s237 + $0x9a8] sm:$0xf]
        %v878 = vld [vmem:[%s237 + $0x9ac] sm:$0xf]
        %v879 = vld [vmem:[%s237 + $0x9b0] sm:$0xf]
        %v880 = vld [vmem:[%s237 + $0x9b4] sm:$0xf]
        %v881 = vld [vmem:[%s237 + $0x9b8] sm:$0xf]
        %v882 = vld [vmem:[%s237 + $0x9bc] sm:$0xf]
        %v883 = vld [vmem:[%s237 + $0x9c0] sm:$0xf]
        %v884 = vld [vmem:[%s237 + $0x9c4] sm:$0xf]
        %v885 = vld [vmem:[%s237 + $0x9c8] sm:$0xf]
        %v886 = vld [vmem:[%s237 + $0x9cc] sm:$0xf]
        %v887 = vld [vmem:[%s237 + $0x9d0] sm:$0xf]
        %v888 = vld [vmem:[%s237 + $0x9d4] sm:$0xf]
        %v889 = vld [vmem:[%s237 + $0x9d8] sm:$0xf]
        %v890 = vld [vmem:[%s237 + $0x9dc] sm:$0xf]
        %v891 = vld [vmem:[%s237 + $0x9e0] sm:$0xf]
        %v892 = vld [vmem:[%s237 + $0x9e4] sm:$0xf]
        %v893 = vld [vmem:[%s237 + $0x9e8] sm:$0xf]
        %v894 = vld [vmem:[%s237 + $0x9ec] sm:$0xf]
        %v895 = vld [vmem:[%s237 + $0x9f0] sm:$0xf]
        %v896 = vld [vmem:[%s237 + $0x9f4] sm:$0xf]
        %v897 = vld [vmem:[%s237 + $0x9f8] sm:$0xf]
        %v898 = vld [vmem:[%s237 + $0x9fc] sm:$0xf]
        %v899 = vld [vmem:[%s237 + $0xa00] sm:$0xf]
        %v900 = vld [vmem:[%s237 + $0xa04] sm:$0xf]
        %v901 = vld [vmem:[%s237 + $0xa08] sm:$0xf]
        %v902 = vld [vmem:[%s237 + $0xa0c] sm:$0xf]
        %v903 = vld [vmem:[%s237 + $0xa10] sm:$0xf]
        %v904 = vld [vmem:[%s237 + $0xa14] sm:$0xf]
        %v905 = vld [vmem:[%s237 + $0xa18] sm:$0xf]
        %v906 = vld [vmem:[%s237 + $0xa1c] sm:$0xf]
        %v907 = vld [vmem:[%s237 + $0xa20] sm:$0xf]
        %v908 = vld [vmem:[%s237 + $0xa24] sm:$0xf]
        %v909 = vld [vmem:[%s237 + $0xa28] sm:$0xf]
        %v910 = vld [vmem:[%s237 + $0xa2c] sm:$0xf]
        %v911 = vld [vmem:[%s237 + $0xa30] sm:$0xf]
        %v912 = vld [vmem:[%s237 + $0xa34] sm:$0xf]
        %v913 = vld [vmem:[%s237 + $0xa38] sm:$0xf]
        %v914 = vld [vmem:[%s237 + $0xa3c] sm:$0xf]
        %v915 = vld [vmem:[%s237 + $0xa40] sm:$0xf]
        %v916 = vld [vmem:[%s237 + $0xa44] sm:$0xf]
        %v917 = vld [vmem:[%s237 + $0xa48] sm:$0xf]
        %v918 = vld [vmem:[%s237 + $0xa4c] sm:$0xf]
        %v919 = vld [vmem:[%s237 + $0xa50] sm:$0xf]
        %v920 = vld [vmem:[%s237 + $0xa54] sm:$0xf]
        %v921 = vld [vmem:[%s237 + $0xa58] sm:$0xf]
        %v922 = vld [vmem:[%s237 + $0xa5c] sm:$0xf]
        %v923 = vld [vmem:[%s237 + $0xa60] sm:$0xf]
        %v924 = vld [vmem:[%s237 + $0xa64] sm:$0xf]
        %v925 = vld [vmem:[%s237 + $0xa68] sm:$0xf]
        %v926 = vld [vmem:[%s237 + $0xa6c] sm:$0xf]
        %v927 = vld [vmem:[%s237 + $0xa70] sm:$0xf]
        %v928 = vld [vmem:[%s237 + $0xa74] sm:$0xf]
        %v929 = vld [vmem:[%s237 + $0xa78] sm:$0xf]
        %v930 = vld [vmem:[%s237 + $0xa7c] sm:$0xf]
        %v931 = vld [vmem:[%s237 + $0xa80] sm:$0xf]
        %v932 = vld [vmem:[%s237 + $0xa84] sm:$0xf]
        %v933 = vld [vmem:[%s237 + $0xa88] sm:$0xf]
        %v934 = vld [vmem:[%s237 + $0xa8c] sm:$0xf]
        %v935 = vld [vmem:[%s237 + $0xa90] sm:$0xf]
        %v936 = vld [vmem:[%s237 + $0xa94] sm:$0xf]
        %v937 = vld [vmem:[%s237 + $0xa98] sm:$0xf]
        %v938 = vld [vmem:[%s237 + $0xa9c] sm:$0xf]
        %v939 = vld [vmem:[%s237 + $0xaa0] sm:$0xf]
        %v940 = vld [vmem:[%s237 + $0xaa4] sm:$0xf]
        %v941 = vld [vmem:[%s237 + $0xaa8] sm:$0xf]
        %v942 = vld [vmem:[%s237 + $0xaac] sm:$0xf]
        %v943 = vld [vmem:[%s237 + $0xab0] sm:$0xf]
        %v944 = vld [vmem:[%s237 + $0xab4] sm:$0xf]
        %v945 = vld [vmem:[%s237 + $0xab8] sm:$0xf]
        %v946 = vld [vmem:[%s237 + $0xabc] sm:$0xf]
        %v947 = vld [vmem:[%s237 + $0xac0] sm:$0xf]
        %v948 = vld [vmem:[%s237 + $0xac4] sm:$0xf]
        %v949 = vld [vmem:[%s237 + $0xac8] sm:$0xf]
        %v950 = vld [vmem:[%s237 + $0xacc] sm:$0xf]
        %v951 = vld [vmem:[%s237 + $0xad0] sm:$0xf]
        %v952 = vld [vmem:[%s237 + $0xad4] sm:$0xf]
        %v953 = vld [vmem:[%s237 + $0xad8] sm:$0xf]
        %v954 = vld [vmem:[%s237 + $0xadc] sm:$0xf]
        %v955 = vld [vmem:[%s237 + $0xae0] sm:$0xf]
        %v956 = vld [vmem:[%s237 + $0xae4] sm:$0xf]
        %v957 = vld [vmem:[%s237 + $0xae8] sm:$0xf]
        %v958 = vld [vmem:[%s237 + $0xaec] sm:$0xf]
        %v959 = vld [vmem:[%s237 + $0xaf0] sm:$0xf]
        %v960 = vld [vmem:[%s237 + $0xaf4] sm:$0xf]
        %v961 = vld [vmem:[%s237 + $0xaf8] sm:$0xf]
        %v962 = vld [vmem:[%s237 + $0xafc] sm:$0xf]
        %v963 = vld [vmem:[%s237 + $0xb00] sm:$0xf]
        %v964 = vld [vmem:[%s237 + $0xb04] sm:$0xf]
        %v965 = vld [vmem:[%s237 + $0xb08] sm:$0xf]
        %v966 = vld [vmem:[%s237 + $0xb0c] sm:$0xf]
        %v967 = vld [vmem:[%s237 + $0xb10] sm:$0xf]
        %v968 = vld [vmem:[%s237 + $0xb14] sm:$0xf]
        %v969 = vld [vmem:[%s237 + $0xb18] sm:$0xf]
        %v970 = vld [vmem:[%s237 + $0xb1c] sm:$0xf]
        %v971 = vld [vmem:[%s237 + $0xb20] sm:$0xf]
        %v972 = vld [vmem:[%s237 + $0xb24] sm:$0xf]
        %v973 = vld [vmem:[%s237 + $0xb28] sm:$0xf]
        %v974 = vld [vmem:[%s237 + $0xb2c] sm:$0xf]
        %v975 = vld [vmem:[%s237 + $0xb30] sm:$0xf]
        %v976 = vld [vmem:[%s237 + $0xb34] sm:$0xf]
        %v977 = vld [vmem:[%s237 + $0xb38] sm:$0xf]
        %v978 = vld [vmem:[%s237 + $0xb3c] sm:$0xf]
        %v979 = vld [vmem:[%s237 + $0xb40] sm:$0xf]
        %v980 = vld [vmem:[%s237 + $0xb44] sm:$0xf]
        %v981 = vld [vmem:[%s237 + $0xb48] sm:$0xf]
        %v982 = vld [vmem:[%s237 + $0xb4c] sm:$0xf]
        %v983 = vld [vmem:[%s237 + $0xb50] sm:$0xf]
        %v984 = vld [vmem:[%s237 + $0xb54] sm:$0xf]
        %v985 = vld [vmem:[%s237 + $0xb58] sm:$0xf]
        %v986 = vld [vmem:[%s237 + $0xb5c] sm:$0xf]
        %v987 = vld [vmem:[%s237 + $0xb60] sm:$0xf]
        %v988 = vld [vmem:[%s237 + $0xb64] sm:$0xf]
        %v989 = vld [vmem:[%s237 + $0xb68] sm:$0xf]
        %v990 = vld [vmem:[%s237 + $0xb6c] sm:$0xf]
        %v991 = vld [vmem:[%s237 + $0xb70] sm:$0xf]
        %v992 = vld [vmem:[%s237 + $0xb74] sm:$0xf]
        %v993 = vld [vmem:[%s237 + $0xb78] sm:$0xf]
        %v994 = vld [vmem:[%s237 + $0xb7c] sm:$0xf]
        %v995 = vld [vmem:[%s237 + $0xb80] sm:$0xf]
        %v996 = vld [vmem:[%s237 + $0xb84] sm:$0xf]
        %v997 = vld [vmem:[%s237 + $0xb88] sm:$0xf]
        %v998 = vld [vmem:[%s237 + $0xb8c] sm:$0xf]
        %v999 = vld [vmem:[%s237 + $0xb90] sm:$0xf]
        %v1000 = vld [vmem:[%s237 + $0xb94] sm:$0xf]
        %v1001 = vld [vmem:[%s237 + $0xb98] sm:$0xf]
        %v1002 = vld [vmem:[%s237 + $0xb9c] sm:$0xf]
        %v1003 = vld [vmem:[%s237 + $0xba0] sm:$0xf]
        %v1004 = vld [vmem:[%s237 + $0xba4] sm:$0xf]
        %v1005 = vld [vmem:[%s237 + $0xba8] sm:$0xf]
        %v1006 = vld [vmem:[%s237 + $0xbac] sm:$0xf]
        %v1007 = vld [vmem:[%s237 + $0xbb0] sm:$0xf]
        %v1008 = vld [vmem:[%s237 + $0xbb4] sm:$0xf]
        %v1009 = vld [vmem:[%s237 + $0xbb8] sm:$0xf]
        %v1010 = vld [vmem:[%s237 + $0xbbc] sm:$0xf]
        %v1011 = vld [vmem:[%s237 + $0xbc0] sm:$0xf]
        %v1012 = vld [vmem:[%s237 + $0xbc4] sm:$0xf]
        %v1013 = vld [vmem:[%s237 + $0xbc8] sm:$0xf]
        %v1014 = vld [vmem:[%s237 + $0xbcc] sm:$0xf]
        %v1015 = vld [vmem:[%s237 + $0xbd0] sm:$0xf]
        %v1016 = vld [vmem:[%s237 + $0xbd4] sm:$0xf]
        %v1017 = vld [vmem:[%s237 + $0xbd8] sm:$0xf]
        %v1018 = vld [vmem:[%s237 + $0xbdc] sm:$0xf]
        %v1019 = vld [vmem:[%s237 + $0xbe0] sm:$0xf]
        %v1020 = vld [vmem:[%s237 + $0xbe4] sm:$0xf]
        %v1021 = vld [vmem:[%s237 + $0xbe8] sm:$0xf]
        %v1022 = vld [vmem:[%s237 + $0xbec] sm:$0xf]
        %v1023 = vld [vmem:[%s237 + $0xbf0] sm:$0xf]
        %v1024 = vld [vmem:[%s237 + $0xbf4] sm:$0xf]
        %v1025 = vld [vmem:[%s237 + $0xbf8] sm:$0xf]
        %v1026 = vld [vmem:[%s237 + $0xbfc] sm:$0xf]
        %v1027 = vld [vmem:[%s237 + $0xc00] sm:$0xf]
        %v1028 = vld [vmem:[%s237 + $0xc04] sm:$0xf]
        %v1029 = vld [vmem:[%s237 + $0xc08] sm:$0xf]
        %v1030 = vld [vmem:[%s237 + $0xc0c] sm:$0xf]
        %v1031 = vld [vmem:[%s237 + $0xc10] sm:$0xf]
        %v1032 = vld [vmem:[%s237 + $0xc14] sm:$0xf]
        %v1033 = vld [vmem:[%s237 + $0xc18] sm:$0xf]
        %v1034 = vld [vmem:[%s237 + $0xc1c] sm:$0xf]
        %v1035 = vld [vmem:[%s237 + $0xc20] sm:$0xf]
        %v1036 = vld [vmem:[%s237 + $0xc24] sm:$0xf]
        %v1037 = vld [vmem:[%s237 + $0xc28] sm:$0xf]
        %v1038 = vld [vmem:[%s237 + $0xc2c] sm:$0xf]
        %v1039 = vld [vmem:[%s237 + $0xc30] sm:$0xf]
        %v1040 = vld [vmem:[%s237 + $0xc34] sm:$0xf]
        %v1041 = vld [vmem:[%s237 + $0xc38] sm:$0xf]
        %v1042 = vld [vmem:[%s237 + $0xc3c] sm:$0xf]
        %v1043 = vld [vmem:[%s237 + $0xc40] sm:$0xf]
        %v1044 = vld [vmem:[%s237 + $0xc44] sm:$0xf]
        %v1045 = vld [vmem:[%s237 + $0xc48] sm:$0xf]
        %v1046 = vld [vmem:[%s237 + $0xc4c] sm:$0xf]
        %v1047 = vld [vmem:[%s237 + $0xc50] sm:$0xf]
        %v1048 = vld [vmem:[%s237 + $0xc54] sm:$0xf]
        %v1049 = vld [vmem:[%s237 + $0xc58] sm:$0xf]
        %v1050 = vld [vmem:[%s237 + $0xc5c] sm:$0xf]
        %v1051 = vld [vmem:[%s237 + $0xc60] sm:$0xf]
        %v1052 = vld [vmem:[%s237 + $0xc64] sm:$0xf]
        %v1053 = vld [vmem:[%s237 + $0xc68] sm:$0xf]
        %v1054 = vld [vmem:[%s237 + $0xc6c] sm:$0xf]
        %v1055 = vld [vmem:[%s237 + $0xc70] sm:$0xf]
        %v1056 = vld [vmem:[%s237 + $0xc74] sm:$0xf]
        %v1057 = vld [vmem:[%s237 + $0xc78] sm:$0xf]
        %v1058 = vld [vmem:[%s237 + $0xc7c] sm:$0xf]
        %v1059 = vld [vmem:[%s237 + $0xc80] sm:$0xf]
        %v1060 = vld [vmem:[%s237 + $0xc84] sm:$0xf]
        %v1061 = vld [vmem:[%s237 + $0xc88] sm:$0xf]
        %v1062 = vld [vmem:[%s237 + $0xc8c] sm:$0xf]
        %v1063 = vld [vmem:[%s237 + $0xc90] sm:$0xf]
        %v1064 = vld [vmem:[%s237 + $0xc94] sm:$0xf]
        %v1065 = vld [vmem:[%s237 + $0xc98] sm:$0xf]
        %v1066 = vld [vmem:[%s237 + $0xc9c] sm:$0xf]
        %v1067 = vld [vmem:[%s237 + $0xca0] sm:$0xf]
        %v1068 = vld [vmem:[%s237 + $0xca4] sm:$0xf]
        %v1069 = vld [vmem:[%s237 + $0xca8] sm:$0xf]
        %v1070 = vld [vmem:[%s237 + $0xcac] sm:$0xf]
        %v1071 = vld [vmem:[%s237 + $0xcb0] sm:$0xf]
        %v1072 = vld [vmem:[%s237 + $0xcb4] sm:$0xf]
        %v1073 = vld [vmem:[%s237 + $0xcb8] sm:$0xf]
        %v1074 = vld [vmem:[%s237 + $0xcbc] sm:$0xf]
        %v1075 = vld [vmem:[%s237 + $0xcc0] sm:$0xf]
        %v1076 = vld [vmem:[%s237 + $0xcc4] sm:$0xf]
        %v1077 = vld [vmem:[%s237 + $0xcc8] sm:$0xf]
        %v1078 = vld [vmem:[%s237 + $0xccc] sm:$0xf]
        %v1079 = vld [vmem:[%s237 + $0xcd0] sm:$0xf]
        %v1080 = vld [vmem:[%s237 + $0xcd4] sm:$0xf]
        %v1081 = vld [vmem:[%s237 + $0xcd8] sm:$0xf]
        %v1082 = vld [vmem:[%s237 + $0xcdc] sm:$0xf]
        %v1083 = vld [vmem:[%s237 + $0xce0] sm:$0xf]
        %v1084 = vld [vmem:[%s237 + $0xce4] sm:$0xf]
        %v1085 = vld [vmem:[%s237 + $0xce8] sm:$0xf]
        %v1086 = vld [vmem:[%s237 + $0xcec] sm:$0xf]
        %v1087 = vld [vmem:[%s237 + $0xcf0] sm:$0xf]
        %v1088 = vld [vmem:[%s237 + $0xcf4] sm:$0xf]
        %v1089 = vld [vmem:[%s237 + $0xcf8] sm:$0xf]
        %v1090 = vld [vmem:[%s237 + $0xcfc] sm:$0xf]
        %v1091 = vld [vmem:[%s237 + $0xd00] sm:$0xf]
        %v1092 = vld [vmem:[%s237 + $0xd04] sm:$0xf]
        %v1093 = vld [vmem:[%s237 + $0xd08] sm:$0xf]
        %v1094 = vld [vmem:[%s237 + $0xd0c] sm:$0xf]
        %v1095 = vld [vmem:[%s237 + $0xd10] sm:$0xf]
        %v1096 = vld [vmem:[%s237 + $0xd14] sm:$0xf]
        %v1097 = vld [vmem:[%s237 + $0xd18] sm:$0xf]
        %v1098 = vld [vmem:[%s237 + $0xd1c] sm:$0xf]
        %v1099 = vld [vmem:[%s237 + $0xd20] sm:$0xf]
        %v1100 = vld [vmem:[%s237 + $0xd24] sm:$0xf]
        %v1101 = vld [vmem:[%s237 + $0xd28] sm:$0xf]
        %v1102 = vld [vmem:[%s237 + $0xd2c] sm:$0xf]
        %v1103 = vld [vmem:[%s237 + $0xd30] sm:$0xf]
        %v1104 = vld [vmem:[%s237 + $0xd34] sm:$0xf]
        %v1105 = vld [vmem:[%s237 + $0xd38] sm:$0xf]
        %v1106 = vld [vmem:[%s237 + $0xd3c] sm:$0xf]
        %v1107 = vld [vmem:[%s237 + $0xd40] sm:$0xf]
        %v1108 = vld [vmem:[%s237 + $0xd44] sm:$0xf]
        %v1109 = vld [vmem:[%s237 + $0xd48] sm:$0xf]
        %v1110 = vld [vmem:[%s237 + $0xd4c] sm:$0xf]
        %v1111 = vld [vmem:[%s237 + $0xd50] sm:$0xf]
        %v1112 = vld [vmem:[%s237 + $0xd54] sm:$0xf]
        %v1113 = vld [vmem:[%s237 + $0xd58] sm:$0xf]
        %v1114 = vld [vmem:[%s237 + $0xd5c] sm:$0xf]
        %v1115 = vld [vmem:[%s237 + $0xd60] sm:$0xf]
        %v1116 = vld [vmem:[%s237 + $0xd64] sm:$0xf]
        %v1117 = vld [vmem:[%s237 + $0xd68] sm:$0xf]
        %v1118 = vld [vmem:[%s237 + $0xd6c] sm:$0xf]
        %v1119 = vld [vmem:[%s237 + $0xd70] sm:$0xf]
        %v1120 = vld [vmem:[%s237 + $0xd74] sm:$0xf]
        %v1121 = vld [vmem:[%s237 + $0xd78] sm:$0xf]
        %v1122 = vld [vmem:[%s237 + $0xd7c] sm:$0xf]
        %v1123 = vld [vmem:[%s237 + $0xd80] sm:$0xf]
        %v1124 = vld [vmem:[%s237 + $0xd84] sm:$0xf]
        %v1125 = vld [vmem:[%s237 + $0xd88] sm:$0xf]
        %v1126 = vld [vmem:[%s237 + $0xd8c] sm:$0xf]
        %v1127 = vld [vmem:[%s237 + $0xd90] sm:$0xf]
        %v1128 = vld [vmem:[%s237 + $0xd94] sm:$0xf]
        %v1129 = vld [vmem:[%s237 + $0xd98] sm:$0xf]
        %v1130 = vld [vmem:[%s237 + $0xd9c] sm:$0xf]
        %v1131 = vld [vmem:[%s237 + $0xda0] sm:$0xf]
        %v1132 = vld [vmem:[%s237 + $0xda4] sm:$0xf]
        %v1133 = vld [vmem:[%s237 + $0xda8] sm:$0xf]
        %v1134 = vld [vmem:[%s237 + $0xdac] sm:$0xf]
        %v1135 = vld [vmem:[%s237 + $0xdb0] sm:$0xf]
        %v1136 = vld [vmem:[%s237 + $0xdb4] sm:$0xf]
        %v1137 = vld [vmem:[%s237 + $0xdb8] sm:$0xf]
        %v1138 = vld [vmem:[%s237 + $0xdbc] sm:$0xf]
        %v1139 = vld [vmem:[%s237 + $0xdc0] sm:$0xf]
        %v1140 = vld [vmem:[%s237 + $0xdc4] sm:$0xf]
        %v1141 = vld [vmem:[%s237 + $0xdc8] sm:$0xf]
        %v1142 = vld [vmem:[%s237 + $0xdcc] sm:$0xf]
        %v1143 = vld [vmem:[%s237 + $0xdd0] sm:$0xf]
        %v1144 = vld [vmem:[%s237 + $0xdd4] sm:$0xf]
        %v1145 = vld [vmem:[%s237 + $0xdd8] sm:$0xf]
        %v1146 = vld [vmem:[%s237 + $0xddc] sm:$0xf]
        %v1147 = vld [vmem:[%s237 + $0xde0] sm:$0xf]
        %v1148 = vld [vmem:[%s237 + $0xde4] sm:$0xf]
        %v1149 = vld [vmem:[%s237 + $0xde8] sm:$0xf]
        %v1150 = vld [vmem:[%s237 + $0xdec] sm:$0xf]
        %v1151 = vld [vmem:[%s237 + $0xdf0] sm:$0xf]
        %v1152 = vld [vmem:[%s237 + $0xdf4] sm:$0xf]
        %v1153 = vld [vmem:[%s237 + $0xdf8] sm:$0xf]
        %v1154 = vld [vmem:[%s237 + $0xdfc] sm:$0xf]
        %v1155 = vld [vmem:[%s237 + $0xe00] sm:$0xf]
        %v1156 = vld [vmem:[%s237 + $0xe04] sm:$0xf]
        %v1157 = vld [vmem:[%s237 + $0xe08] sm:$0xf]
        %v1158 = vld [vmem:[%s237 + $0xe0c] sm:$0xf]
        %v1159 = vld [vmem:[%s237 + $0xe10] sm:$0xf]
        %v1160 = vld [vmem:[%s237 + $0xe14] sm:$0xf]
        %v1161 = vld [vmem:[%s237 + $0xe18] sm:$0xf]
        %v1162 = vld [vmem:[%s237 + $0xe1c] sm:$0xf]
        %v1163 = vld [vmem:[%s237 + $0xe20] sm:$0xf]
        %v1164 = vld [vmem:[%s237 + $0xe24] sm:$0xf]
        %v1165 = vld [vmem:[%s237 + $0xe28] sm:$0xf]
        %v1166 = vld [vmem:[%s237 + $0xe2c] sm:$0xf]
        %v1167 = vld [vmem:[%s237 + $0xe30] sm:$0xf]
        %v1168 = vld [vmem:[%s237 + $0xe34] sm:$0xf]
        %v1169 = vld [vmem:[%s237 + $0xe38] sm:$0xf]
        %v1170 = vld [vmem:[%s237 + $0xe3c] sm:$0xf]
        %v1171 = vld [vmem:[%s237 + $0xe40] sm:$0xf]
        %v1172 = vld [vmem:[%s237 + $0xe44] sm:$0xf]
        %v1173 = vld [vmem:[%s237 + $0xe48] sm:$0xf]
        %v1174 = vld [vmem:[%s237 + $0xe4c] sm:$0xf]
        %v1175 = vld [vmem:[%s237 + $0xe50] sm:$0xf]
        %v1176 = vld [vmem:[%s237 + $0xe54] sm:$0xf]
        %v1177 = vld [vmem:[%s237 + $0xe58] sm:$0xf]
        %v1178 = vld [vmem:[%s237 + $0xe5c] sm:$0xf]
        %v1179 = vld [vmem:[%s237 + $0xe60] sm:$0xf]
        %v1180 = vld [vmem:[%s237 + $0xe64] sm:$0xf]
        %v1181 = vld [vmem:[%s237 + $0xe68] sm:$0xf]
        %v1182 = vld [vmem:[%s237 + $0xe6c] sm:$0xf]
        %v1183 = vld [vmem:[%s237 + $0xe70] sm:$0xf]
        %v1184 = vld [vmem:[%s237 + $0xe74] sm:$0xf]
        %v1185 = vld [vmem:[%s237 + $0xe78] sm:$0xf]
        %v1186 = vld [vmem:[%s237 + $0xe7c] sm:$0xf]
        %v1187 = vld [vmem:[%s237 + $0xe80] sm:$0xf]
        %v1188 = vld [vmem:[%s237 + $0xe84] sm:$0xf]
        %v1189 = vld [vmem:[%s237 + $0xe88] sm:$0xf]
        %v1190 = vld [vmem:[%s237 + $0xe8c] sm:$0xf]
        %v1191 = vld [vmem:[%s237 + $0xe90] sm:$0xf]
        %v1192 = vld [vmem:[%s237 + $0xe94] sm:$0xf]
        %v1193 = vld [vmem:[%s237 + $0xe98] sm:$0xf]
        %v1194 = vld [vmem:[%s237 + $0xe9c] sm:$0xf]
        %v1195 = vld [vmem:[%s237 + $0xea0] sm:$0xf]
        %v1196 = vld [vmem:[%s237 + $0xea4] sm:$0xf]
        %v1197 = vld [vmem:[%s237 + $0xea8] sm:$0xf]
        %v1198 = vld [vmem:[%s237 + $0xeac] sm:$0xf]
        %v1199 = vld [vmem:[%s237 + $0xeb0] sm:$0xf]
        %v1200 = vld [vmem:[%s237 + $0xeb4] sm:$0xf]
        %v1201 = vld [vmem:[%s237 + $0xeb8] sm:$0xf]
        %v1202 = vld [vmem:[%s237 + $0xebc] sm:$0xf]
        %v1203 = vld [vmem:[%s237 + $0xec0] sm:$0xf]
        %v1204 = vld [vmem:[%s237 + $0xec4] sm:$0xf]
        %v1205 = vld [vmem:[%s237 + $0xec8] sm:$0xf]
        %v1206 = vld [vmem:[%s237 + $0xecc] sm:$0xf]
        %v1207 = vld [vmem:[%s237 + $0xed0] sm:$0xf]
        %v1208 = vld [vmem:[%s237 + $0xed4] sm:$0xf]
        %v1209 = vld [vmem:[%s237 + $0xed8] sm:$0xf]
        %v1210 = vld [vmem:[%s237 + $0xedc] sm:$0xf]
        %v1211 = vld [vmem:[%s237 + $0xee0] sm:$0xf]
        %v1212 = vld [vmem:[%s237 + $0xee4] sm:$0xf]
        %v1213 = vld [vmem:[%s237 + $0xee8] sm:$0xf]
        %v1214 = vld [vmem:[%s237 + $0xeec] sm:$0xf]
        %v1215 = vld [vmem:[%s237 + $0xef0] sm:$0xf]
        %v1216 = vld [vmem:[%s237 + $0xef4] sm:$0xf]
        %v1217 = vld [vmem:[%s237 + $0xef8] sm:$0xf]
        %v1218 = vld [vmem:[%s237 + $0xefc] sm:$0xf]
        %v1219 = vld [vmem:[%s237 + $0xf00] sm:$0xf]
        %v1220 = vld [vmem:[%s237 + $0xf04] sm:$0xf]
        %v1221 = vld [vmem:[%s237 + $0xf08] sm:$0xf]
        %v1222 = vld [vmem:[%s237 + $0xf0c] sm:$0xf]
        %v1223 = vld [vmem:[%s237 + $0xf10] sm:$0xf]
        %v1224 = vld [vmem:[%s237 + $0xf14] sm:$0xf]
        %v1225 = vld [vmem:[%s237 + $0xf18] sm:$0xf]
        %v1226 = vld [vmem:[%s237 + $0xf1c] sm:$0xf]
        %v1227 = vld [vmem:[%s237 + $0xf20] sm:$0xf]
        %v1228 = vld [vmem:[%s237 + $0xf24] sm:$0xf]
        %v1229 = vld [vmem:[%s237 + $0xf28] sm:$0xf]
        %v1230 = vld [vmem:[%s237 + $0xf2c] sm:$0xf]
        %v1231 = vld [vmem:[%s237 + $0xf30] sm:$0xf]
        %v1232 = vld [vmem:[%s237 + $0xf34] sm:$0xf]
        %v1233 = vld [vmem:[%s237 + $0xf38] sm:$0xf]
        %v1234 = vld [vmem:[%s237 + $0xf3c] sm:$0xf]
        %v1235 = vld [vmem:[%s237 + $0xf40] sm:$0xf]
        %v1236 = vld [vmem:[%s237 + $0xf44] sm:$0xf]
        %v1237 = vld [vmem:[%s237 + $0xf48] sm:$0xf]
        %v1238 = vld [vmem:[%s237 + $0xf4c] sm:$0xf]
        %v1239 = vld [vmem:[%s237 + $0xf50] sm:$0xf]
        %v1240 = vld [vmem:[%s237 + $0xf54] sm:$0xf]
        %v1241 = vld [vmem:[%s237 + $0xf58] sm:$0xf]
        %v1242 = vld [vmem:[%s237 + $0xf5c] sm:$0xf]
        %v1243 = vld [vmem:[%s237 + $0xf60] sm:$0xf]
        %v1244 = vld [vmem:[%s237 + $0xf64] sm:$0xf]
        %v1245 = vld [vmem:[%s237 + $0xf68] sm:$0xf]
        %v1246 = vld [vmem:[%s237 + $0xf6c] sm:$0xf]
        %v1247 = vld [vmem:[%s237 + $0xf70] sm:$0xf]
        %v1248 = vld [vmem:[%s237 + $0xf74] sm:$0xf]
        %v1249 = vld [vmem:[%s237 + $0xf78] sm:$0xf]
        %v1250 = vld [vmem:[%s237 + $0xf7c] sm:$0xf]
        %v1251 = vld [vmem:[%s237 + $0xf80] sm:$0xf]
        %v1252 = vld [vmem:[%s237 + $0xf84] sm:$0xf]
        %v1253 = vld [vmem:[%s237 + $0xf88] sm:$0xf]
        %v1254 = vld [vmem:[%s237 + $0xf8c] sm:$0xf]
        %v1255 = vld [vmem:[%s237 + $0xf90] sm:$0xf]
        %v1256 = vld [vmem:[%s237 + $0xf94] sm:$0xf]
        %v1257 = vld [vmem:[%s237 + $0xf98] sm:$0xf]
        %v1258 = vld [vmem:[%s237 + $0xf9c] sm:$0xf]
        %v1259 = vld [vmem:[%s237 + $0xfa0] sm:$0xf]
        %v1260 = vld [vmem:[%s237 + $0xfa4] sm:$0xf]
        %v1261 = vld [vmem:[%s237 + $0xfa8] sm:$0xf]
        %v1262 = vld [vmem:[%s237 + $0xfac] sm:$0xf]
        %v1263 = vld [vmem:[%s237 + $0xfb0] sm:$0xf]
        %v1264 = vld [vmem:[%s237 + $0xfb4] sm:$0xf]
        %v1265 = vld [vmem:[%s237 + $0xfb8] sm:$0xf]
        %v1266 = vld [vmem:[%s237 + $0xfbc] sm:$0xf]
        %v1267 = vld [vmem:[%s237 + $0xfc0] sm:$0xf]
        %v1268 = vld [vmem:[%s237 + $0xfc4] sm:$0xf]
        %v1269 = vld [vmem:[%s237 + $0xfc8] sm:$0xf]
        %v1270 = vld [vmem:[%s237 + $0xfcc] sm:$0xf]
        %v1271 = vld [vmem:[%s237 + $0xfd0] sm:$0xf]
        %v1272 = vld [vmem:[%s237 + $0xfd4] sm:$0xf]
        %v1273 = vld [vmem:[%s237 + $0xfd8] sm:$0xf]
        %v1274 = vld [vmem:[%s237 + $0xfdc] sm:$0xf]
        %v1275 = vld [vmem:[%s237 + $0xfe0] sm:$0xf]
        %v1276 = vld [vmem:[%s237 + $0xfe4] sm:$0xf]
        %v1277 = vld [vmem:[%s237 + $0xfe8] sm:$0xf]
        %v1278 = vld [vmem:[%s237 + $0xfec] sm:$0xf]
        %v1279 = vld [vmem:[%s237 + $0xff0] sm:$0xf]
        %v1280 = vld [vmem:[%s237 + $0xff4] sm:$0xf]
        %v1281 = vld [vmem:[%s237 + $0xff8] sm:$0xf]
        %v1282 = vld [vmem:[%s237 + $0xffc] sm:$0xf]
        %v1283 = vld [vmem:[%s237 + $0x1000] sm:$0xf]
        %v1284 = vld [vmem:[%s237 + $0x1004] sm:$0xf]
        %v1285 = vld [vmem:[%s237 + $0x1008] sm:$0xf]
        %v1286 = vld [vmem:[%s237 + $0x100c] sm:$0xf]
        %v1287 = vld [vmem:[%s237 + $0x1010] sm:$0xf]
        %v1288 = vld [vmem:[%s237 + $0x1014] sm:$0xf]
        %v1289 = vld [vmem:[%s237 + $0x1018] sm:$0xf]
        %v1290 = vld [vmem:[%s237 + $0x101c] sm:$0xf]
        %v1291 = vld [vmem:[%s237 + $0x1020] sm:$0xf]
        %v1292 = vld [vmem:[%s237 + $0x1024] sm:$0xf]
        %v1293 = vld [vmem:[%s237 + $0x1028] sm:$0xf]
        %v1294 = vld [vmem:[%s237 + $0x102c] sm:$0xf]
        %v1295 = vld [vmem:[%s237 + $0x1030] sm:$0xf]
        %v1296 = vld [vmem:[%s237 + $0x1034] sm:$0xf]
        %v1297 = vld [vmem:[%s237 + $0x1038] sm:$0xf]
        %v1298 = vld [vmem:[%s237 + $0x103c] sm:$0xf]
        %v1299 = vld [vmem:[%s237 + $0x1040] sm:$0xf]
        %v1300 = vld [vmem:[%s237 + $0x1044] sm:$0xf]
        %v1301 = vld [vmem:[%s237 + $0x1048] sm:$0xf]
        %v1302 = vld [vmem:[%s237 + $0x104c] sm:$0xf]
        %v1303 = vld [vmem:[%s237 + $0x1050] sm:$0xf]
        %v1304 = vld [vmem:[%s237 + $0x1054] sm:$0xf]
        %v1305 = vld [vmem:[%s237 + $0x1058] sm:$0xf]
        %v1306 = vld [vmem:[%s237 + $0x105c] sm:$0xf]
        %v1307 = vld [vmem:[%s237 + $0x1060] sm:$0xf]
        %v1308 = vld [vmem:[%s237 + $0x1064] sm:$0xf]
        %v1309 = vld [vmem:[%s237 + $0x1068] sm:$0xf]
        %v1310 = vld [vmem:[%s237 + $0x106c] sm:$0xf]
        %v1311 = vld [vmem:[%s237 + $0x1070] sm:$0xf]
        %v1312 = vld [vmem:[%s237 + $0x1074] sm:$0xf]
        %v1313 = vld [vmem:[%s237 + $0x1078] sm:$0xf]
        %v1314 = vld [vmem:[%s237 + $0x107c] sm:$0xf]
        %v1315 = vld [vmem:[%s237 + $0x1080] sm:$0xf]
        %v1316 = vld [vmem:[%s237 + $0x1084] sm:$0xf]
        %v1317 = vld [vmem:[%s237 + $0x1088] sm:$0xf]
        %v1318 = vld [vmem:[%s237 + $0x108c] sm:$0xf]
        %v1319 = vld [vmem:[%s237 + $0x1090] sm:$0xf]
        %v1320 = vld [vmem:[%s237 + $0x1094] sm:$0xf]
        %v1321 = vld [vmem:[%s237 + $0x1098] sm:$0xf]
        %v1322 = vld [vmem:[%s237 + $0x109c] sm:$0xf]
        %v1323 = vld [vmem:[%s237 + $0x10a0] sm:$0xf]
        %v1324 = vld [vmem:[%s237 + $0x10a4] sm:$0xf]
        %v1325 = vld [vmem:[%s237 + $0x10a8] sm:$0xf]
        %v1326 = vld [vmem:[%s237 + $0x10ac] sm:$0xf]
        %v1327 = vld [vmem:[%s237 + $0x10b0] sm:$0xf]
        %v1328 = vld [vmem:[%s237 + $0x10b4] sm:$0xf]
        %v1329 = vld [vmem:[%s237 + $0x10b8] sm:$0xf]
        %v1330 = vld [vmem:[%s237 + $0x10bc] sm:$0xf]
        %v1331 = vld [vmem:[%s237 + $0x10c0] sm:$0xf]
        %v1332 = vld [vmem:[%s237 + $0x10c4] sm:$0xf]
        %v1333 = vld [vmem:[%s237 + $0x10c8] sm:$0xf]
        %v1334 = vld [vmem:[%s237 + $0x10cc] sm:$0xf]
        %v1335 = vld [vmem:[%s237 + $0x10d0] sm:$0xf]
        %v1336 = vld [vmem:[%s237 + $0x10d4] sm:$0xf]
        %v1337 = vld [vmem:[%s237 + $0x10d8] sm:$0xf]
        %v1338 = vld [vmem:[%s237 + $0x10dc] sm:$0xf]
        %v1339 = vld [vmem:[%s237 + $0x10e0] sm:$0xf]
        %v1340 = vld [vmem:[%s237 + $0x10e4] sm:$0xf]
        %v1341 = vld [vmem:[%s237 + $0x10e8] sm:$0xf]
        %v1342 = vld [vmem:[%s237 + $0x10ec] sm:$0xf]
        %v1343 = vld [vmem:[%s237 + $0x10f0] sm:$0xf]
        %v1344 = vld [vmem:[%s237 + $0x10f4] sm:$0xf]
        %v1345 = vld [vmem:[%s237 + $0x10f8] sm:$0xf]
        %v1346 = vld [vmem:[%s237 + $0x10fc] sm:$0xf]
        %v1347 = vld [vmem:[%s237 + $0x1100] sm:$0xf]
        %v1348 = vld [vmem:[%s237 + $0x1104] sm:$0xf]
        %v1349 = vld [vmem:[%s237 + $0x1108] sm:$0xf]
        %v1350 = vld [vmem:[%s237 + $0x110c] sm:$0xf]
        %v1351 = vld [vmem:[%s237 + $0x1110] sm:$0xf]
        %v1352 = vld [vmem:[%s237 + $0x1114] sm:$0xf]
        %v1353 = vld [vmem:[%s237 + $0x1118] sm:$0xf]
        %v1354 = vld [vmem:[%s237 + $0x111c] sm:$0xf]
        %v1355 = vld [vmem:[%s237 + $0x1120] sm:$0xf]
        %v1356 = vld [vmem:[%s237 + $0x1124] sm:$0xf]
        %v1357 = vld [vmem:[%s237 + $0x1128] sm:$0xf]
        %v1358 = vld [vmem:[%s237 + $0x112c] sm:$0xf]
        %v1359 = vld [vmem:[%s237 + $0x1130] sm:$0xf]
        %v1360 = vld [vmem:[%s237 + $0x1134] sm:$0xf]
        %v1361 = vld [vmem:[%s237 + $0x1138] sm:$0xf]
        %v1362 = vld [vmem:[%s237 + $0x113c] sm:$0xf]
        %v1363 = vld [vmem:[%s237 + $0x1140] sm:$0xf]
        %v1364 = vld [vmem:[%s237 + $0x1144] sm:$0xf]
        %v1365 = vld [vmem:[%s237 + $0x1148] sm:$0xf]
        %v1366 = vld [vmem:[%s237 + $0x114c] sm:$0xf]
        %v1367 = vld [vmem:[%s237 + $0x1150] sm:$0xf]
        %v1368 = vld [vmem:[%s237 + $0x1154] sm:$0xf]
        %v1369 = vld [vmem:[%s237 + $0x1158] sm:$0xf]
        %v1370 = vld [vmem:[%s237 + $0x115c] sm:$0xf]
        %v1371 = vld [vmem:[%s237 + $0x1160] sm:$0xf]
        %v1372 = vld [vmem:[%s237 + $0x1164] sm:$0xf]
        %v1373 = vld [vmem:[%s237 + $0x1168] sm:$0xf]
        %v1374 = vld [vmem:[%s237 + $0x116c] sm:$0xf]
        %v1375 = vld [vmem:[%s237 + $0x1170] sm:$0xf]
        %v1376 = vld [vmem:[%s237 + $0x1174] sm:$0xf]
        %v1377 = vld [vmem:[%s237 + $0x1178] sm:$0xf]
        %v1378 = vld [vmem:[%s237 + $0x117c] sm:$0xf]
        %v1379 = vld [vmem:[%s237 + $0x1180] sm:$0xf]
        %v1380 = vld [vmem:[%s237 + $0x1184] sm:$0xf]
        %v1381 = vld [vmem:[%s237 + $0x1188] sm:$0xf]
        %v1382 = vld [vmem:[%s237 + $0x118c] sm:$0xf]
        %v1383 = vld [vmem:[%s237 + $0x1190] sm:$0xf]
        %v1384 = vld [vmem:[%s237 + $0x1194] sm:$0xf]
        %v1385 = vld [vmem:[%s237 + $0x1198] sm:$0xf]
        %v1386 = vld [vmem:[%s237 + $0x119c] sm:$0xf]
        %v1387 = vld [vmem:[%s237 + $0x11a0] sm:$0xf]
        %v1388 = vld [vmem:[%s237 + $0x11a4] sm:$0xf]
        %v1389 = vld [vmem:[%s237 + $0x11a8] sm:$0xf]
        %v1390 = vld [vmem:[%s237 + $0x11ac] sm:$0xf]
        %v1391 = vld [vmem:[%s237 + $0x11b0] sm:$0xf]
        %v1392 = vld [vmem:[%s237 + $0x11b4] sm:$0xf]
        %v1393 = vld [vmem:[%s237 + $0x11b8] sm:$0xf]
        %v1394 = vld [vmem:[%s237 + $0x11bc] sm:$0xf]
        %v1395 = vld [vmem:[%s237 + $0x11c0] sm:$0xf]
        %v1396 = vld [vmem:[%s237 + $0x11c4] sm:$0xf]
        %v1397 = vld [vmem:[%s237 + $0x11c8] sm:$0xf]
        %v1398 = vld [vmem:[%s237 + $0x11cc] sm:$0xf]
        %v1399 = vld [vmem:[%s237 + $0x11d0] sm:$0xf]
        %v1400 = vld [vmem:[%s237 + $0x11d4] sm:$0xf]
        %v1401 = vld [vmem:[%s237 + $0x11d8] sm:$0xf]
        %v1402 = vld [vmem:[%s237 + $0x11dc] sm:$0xf]
        %v1403 = vld [vmem:[%s237 + $0x11e0] sm:$0xf]
        %v1404 = vld [vmem:[%s237 + $0x11e4] sm:$0xf]
        %v1405 = vld [vmem:[%s237 + $0x11e8] sm:$0xf]
        %v1406 = vld [vmem:[%s237 + $0x11ec] sm:$0xf]
        %v1407 = vld [vmem:[%s237 + $0x11f0] sm:$0xf]
        %v1408 = vld [vmem:[%s237 + $0x11f4] sm:$0xf]
        %v1409 = vld [vmem:[%s237 + $0x11f8] sm:$0xf]
        %v1410 = vld [vmem:[%s237 + $0x11fc] sm:$0xf]
        %v1411 = vld [vmem:[%s237 + $0x1200] sm:$0xf]
        %v1412 = vld [vmem:[%s237 + $0x1204] sm:$0xf]
        %v1413 = vld [vmem:[%s237 + $0x1208] sm:$0xf]
        %v1414 = vld [vmem:[%s237 + $0x120c] sm:$0xf]
        %v1415 = vld [vmem:[%s237 + $0x1210] sm:$0xf]
        %v1416 = vld [vmem:[%s237 + $0x1214] sm:$0xf]
        %v1417 = vld [vmem:[%s237 + $0x1218] sm:$0xf]
        %v1418 = vld [vmem:[%s237 + $0x121c] sm:$0xf]
        %v1419 = vld [vmem:[%s237 + $0x1220] sm:$0xf]
        %v1420 = vld [vmem:[%s237 + $0x1224] sm:$0xf]
        %v1421 = vld [vmem:[%s237 + $0x1228] sm:$0xf]
        %v1422 = vld [vmem:[%s237 + $0x122c] sm:$0xf]
        %v1423 = vld [vmem:[%s237 + $0x1230] sm:$0xf]
        %v1424 = vld [vmem:[%s237 + $0x1234] sm:$0xf]
        %v1425 = vld [vmem:[%s237 + $0x1238] sm:$0xf]
        %v1426 = vld [vmem:[%s237 + $0x123c] sm:$0xf]
        %v1427 = vld [vmem:[%s237 + $0x1240] sm:$0xf]
        %v1428 = vld [vmem:[%s237 + $0x1244] sm:$0xf]
        %v1429 = vld [vmem:[%s237 + $0x1248] sm:$0xf]
        %v1430 = vld [vmem:[%s237 + $0x124c] sm:$0xf]
        %v1431 = vld [vmem:[%s237 + $0x1250] sm:$0xf]
        %v1432 = vld [vmem:[%s237 + $0x1254] sm:$0xf]
        %v1433 = vld [vmem:[%s237 + $0x1258] sm:$0xf]
        %v1434 = vld [vmem:[%s237 + $0x125c] sm:$0xf]
        %v1435 = vld [vmem:[%s237 + $0x1260] sm:$0xf]
        %v1436 = vld [vmem:[%s237 + $0x1264] sm:$0xf]
        %v1437 = vld [vmem:[%s237 + $0x1268] sm:$0xf]
        %v1438 = vld [vmem:[%s237 + $0x126c] sm:$0xf]
        %v1439 = vld [vmem:[%s237 + $0x1270] sm:$0xf]
        %v1440 = vld [vmem:[%s237 + $0x1274] sm:$0xf]
        %v1441 = vld [vmem:[%s237 + $0x1278] sm:$0xf]
        %v1442 = vld [vmem:[%s237 + $0x127c] sm:$0xf]
        %v1443 = vld [vmem:[%s237 + $0x1280] sm:$0xf]
        %v1444 = vld [vmem:[%s237 + $0x1284] sm:$0xf]
        %v1445 = vld [vmem:[%s237 + $0x1288] sm:$0xf]
        %v1446 = vld [vmem:[%s237 + $0x128c] sm:$0xf]
        %v1447 = vld [vmem:[%s237 + $0x1290] sm:$0xf]
        %v1448 = vld [vmem:[%s237 + $0x1294] sm:$0xf]
        %v1449 = vld [vmem:[%s237 + $0x1298] sm:$0xf]
        %v1450 = vld [vmem:[%s237 + $0x129c] sm:$0xf]
        %v1451 = vld [vmem:[%s237 + $0x12a0] sm:$0xf]
        %v1452 = vld [vmem:[%s237 + $0x12a4] sm:$0xf]
        %v1453 = vld [vmem:[%s237 + $0x12a8] sm:$0xf]
        %v1454 = vld [vmem:[%s237 + $0x12ac] sm:$0xf]
        %v1455 = vld [vmem:[%s237 + $0x12b0] sm:$0xf]
        %v1456 = vld [vmem:[%s237 + $0x12b4] sm:$0xf]
        %v1457 = vld [vmem:[%s237 + $0x12b8] sm:$0xf]
        %v1458 = vld [vmem:[%s237 + $0x12bc] sm:$0xf]
        %v1459 = vld [vmem:[%s237 + $0x12c0] sm:$0xf]
        %v1460 = vld [vmem:[%s237 + $0x12c4] sm:$0xf]
        %v1461 = vld [vmem:[%s237 + $0x12c8] sm:$0xf]
        %v1462 = vld [vmem:[%s237 + $0x12cc] sm:$0xf]
        %v1463 = vld [vmem:[%s237 + $0x12d0] sm:$0xf]
        %v1464 = vld [vmem:[%s237 + $0x12d4] sm:$0xf]
        %v1465 = vld [vmem:[%s237 + $0x12d8] sm:$0xf]
        %v1466 = vld [vmem:[%s237 + $0x12dc] sm:$0xf]
        %v1467 = vld [vmem:[%s237 + $0x12e0] sm:$0xf]
        %v1468 = vld [vmem:[%s237 + $0x12e4] sm:$0xf]
        %v1469 = vld [vmem:[%s237 + $0x12e8] sm:$0xf]
        %v1470 = vld [vmem:[%s237 + $0x12ec] sm:$0xf]
        %v1471 = vld [vmem:[%s237 + $0x12f0] sm:$0xf]
        %v1472 = vld [vmem:[%s237 + $0x12f4] sm:$0xf]
        %v1473 = vld [vmem:[%s237 + $0x12f8] sm:$0xf]
        %v1474 = vld [vmem:[%s237 + $0x12fc] sm:$0xf]
        %v1475 = vld [vmem:[%s237 + $0x1300] sm:$0xf]
        %v1476 = vld [vmem:[%s237 + $0x1304] sm:$0xf]
        %v1477 = vld [vmem:[%s237 + $0x1308] sm:$0xf]
        %v1478 = vld [vmem:[%s237 + $0x130c] sm:$0xf]
        %v1479 = vld [vmem:[%s237 + $0x1310] sm:$0xf]
        %v1480 = vld [vmem:[%s237 + $0x1314] sm:$0xf]
        %v1481 = vld [vmem:[%s237 + $0x1318] sm:$0xf]
        %v1482 = vld [vmem:[%s237 + $0x131c] sm:$0xf]
        %v1483 = vld [vmem:[%s237 + $0x1320] sm:$0xf]
        %v1484 = vld [vmem:[%s237 + $0x1324] sm:$0xf]
        %v1485 = vld [vmem:[%s237 + $0x1328] sm:$0xf]
        %v1486 = vld [vmem:[%s237 + $0x132c] sm:$0xf]
        %v1487 = vld [vmem:[%s237 + $0x1330] sm:$0xf]
        %v1488 = vld [vmem:[%s237 + $0x1334] sm:$0xf]
        %v1489 = vld [vmem:[%s237 + $0x1338] sm:$0xf]
        %v1490 = vld [vmem:[%s237 + $0x133c] sm:$0xf]
        %v1491 = vld [vmem:[%s237 + $0x1340] sm:$0xf]
        %v1492 = vld [vmem:[%s237 + $0x1344] sm:$0xf]
        %v1493 = vld [vmem:[%s237 + $0x1348] sm:$0xf]
        %v1494 = vld [vmem:[%s237 + $0x134c] sm:$0xf]
        %v1495 = vld [vmem:[%s237 + $0x1350] sm:$0xf]
        %v1496 = vld [vmem:[%s237 + $0x1354] sm:$0xf]
        %v1497 = vld [vmem:[%s237 + $0x1358] sm:$0xf]
        %v1498 = vld [vmem:[%s237 + $0x135c] sm:$0xf]
        %v1499 = vld [vmem:[%s237 + $0x1360] sm:$0xf]
        %v1500 = vld [vmem:[%s237 + $0x1364] sm:$0xf]
        %v1501 = vld [vmem:[%s237 + $0x1368] sm:$0xf]
        %v1502 = vld [vmem:[%s237 + $0x136c] sm:$0xf]
        %v1503 = vld [vmem:[%s237 + $0x1370] sm:$0xf]
        %v1504 = vld [vmem:[%s237 + $0x1374] sm:$0xf]
        %v1505 = vld [vmem:[%s237 + $0x1378] sm:$0xf]
        %v1506 = vld [vmem:[%s237 + $0x137c] sm:$0xf]
        %v1507 = vld [vmem:[%s237 + $0x1380] sm:$0xf]
        %v1508 = vld [vmem:[%s237 + $0x1384] sm:$0xf]
        %v1509 = vld [vmem:[%s237 + $0x1388] sm:$0xf]
        %v1510 = vld [vmem:[%s237 + $0x138c] sm:$0xf]
        %v1511 = vld [vmem:[%s237 + $0x1390] sm:$0xf]
        %v1512 = vld [vmem:[%s237 + $0x1394] sm:$0xf]
        %v1513 = vld [vmem:[%s237 + $0x1398] sm:$0xf]
        %v1514 = vld [vmem:[%s237 + $0x139c] sm:$0xf]
        %v1515 = vld [vmem:[%s237 + $0x13a0] sm:$0xf]
        %v1516 = vld [vmem:[%s237 + $0x13a4] sm:$0xf]
        %v1517 = vld [vmem:[%s237 + $0x13a8] sm:$0xf]
        %v1518 = vld [vmem:[%s237 + $0x13ac] sm:$0xf]
        %v1519 = vld [vmem:[%s237 + $0x13b0] sm:$0xf]
        %v1520 = vld [vmem:[%s237 + $0x13b4] sm:$0xf]
        %v1521 = vld [vmem:[%s237 + $0x13b8] sm:$0xf]
        %v1522 = vld [vmem:[%s237 + $0x13bc] sm:$0xf]
        %v1523 = vld [vmem:[%s237 + $0x13c0] sm:$0xf]
        %v1524 = vld [vmem:[%s237 + $0x13c4] sm:$0xf]
        %v1525 = vld [vmem:[%s237 + $0x13c8] sm:$0xf]
        %v1526 = vld [vmem:[%s237 + $0x13cc] sm:$0xf]
        %v1527 = vld [vmem:[%s237 + $0x13d0] sm:$0xf]
        %v1528 = vld [vmem:[%s237 + $0x13d4] sm:$0xf]
        %v1529 = vld [vmem:[%s237 + $0x13d8] sm:$0xf]
        %v1530 = vld [vmem:[%s237 + $0x13dc] sm:$0xf]
        %v1531 = vld [vmem:[%s237 + $0x13e0] sm:$0xf]
        %v1532 = vld [vmem:[%s237 + $0x13e4] sm:$0xf]
        %v1533 = vld [vmem:[%s237 + $0x13e8] sm:$0xf]
        %v1534 = vld [vmem:[%s237 + $0x13ec] sm:$0xf]
        %v1535 = vld [vmem:[%s237 + $0x13f0] sm:$0xf]
        %v1536 = vld [vmem:[%s237 + $0x13f4] sm:$0xf]
        %v1537 = vld [vmem:[%s237 + $0x13f8] sm:$0xf]
        %v1538 = vld [vmem:[%s237 + $0x13fc] sm:$0xf]
        %v1539 = vld [vmem:[%s237 + $0x1400] sm:$0xf]
        %v1540 = vld [vmem:[%s237 + $0x1404] sm:$0xf]
        %v1541 = vld [vmem:[%s237 + $0x1408] sm:$0xf]
        %v1542 = vld [vmem:[%s237 + $0x140c] sm:$0xf]
        %v1543 = vld [vmem:[%s237 + $0x1410] sm:$0xf]
        %v1544 = vld [vmem:[%s237 + $0x1414] sm:$0xf]
        %v1545 = vld [vmem:[%s237 + $0x1418] sm:$0xf]
        %v1546 = vld [vmem:[%s237 + $0x141c] sm:$0xf]
        %v1547 = vld [vmem:[%s237 + $0x1420] sm:$0xf]
        %v1548 = vld [vmem:[%s237 + $0x1424] sm:$0xf]
        %v1549 = vld [vmem:[%s237 + $0x1428] sm:$0xf]
        %v1550 = vld [vmem:[%s237 + $0x142c] sm:$0xf]
        %v1551 = vld [vmem:[%s237 + $0x1430] sm:$0xf]
        %v1552 = vld [vmem:[%s237 + $0x1434] sm:$0xf]
        %v1553 = vld [vmem:[%s237 + $0x1438] sm:$0xf]
        %v1554 = vld [vmem:[%s237 + $0x143c] sm:$0xf]
        %v1555 = vld [vmem:[%s237 + $0x1440] sm:$0xf]
        %v1556 = vld [vmem:[%s237 + $0x1444] sm:$0xf]
        %v1557 = vld [vmem:[%s237 + $0x1448] sm:$0xf]
        %v1558 = vld [vmem:[%s237 + $0x144c] sm:$0xf]
        %v1559 = vld [vmem:[%s237 + $0x1450] sm:$0xf]
        %v1560 = vld [vmem:[%s237 + $0x1454] sm:$0xf]
        %v1561 = vld [vmem:[%s237 + $0x1458] sm:$0xf]
        %v1562 = vld [vmem:[%s237 + $0x145c] sm:$0xf]
        %v1563 = vld [vmem:[%s237 + $0x1460] sm:$0xf]
        %v1564 = vld [vmem:[%s237 + $0x1464] sm:$0xf]
        %v1565 = vld [vmem:[%s237 + $0x1468] sm:$0xf]
        %v1566 = vld [vmem:[%s237 + $0x146c] sm:$0xf]
        %v1567 = vld [vmem:[%s237 + $0x1470] sm:$0xf]
        %v1568 = vld [vmem:[%s237 + $0x1474] sm:$0xf]
        %v1569 = vld [vmem:[%s237 + $0x1478] sm:$0xf]
        %v1570 = vld [vmem:[%s237 + $0x147c] sm:$0xf]
        %v1571 = vld [vmem:[%s237 + $0x1480] sm:$0xf]
        %v1572 = vld [vmem:[%s237 + $0x1484] sm:$0xf]
        %v1573 = vld [vmem:[%s237 + $0x1488] sm:$0xf]
        %v1574 = vld [vmem:[%s237 + $0x148c] sm:$0xf]
        %v1575 = vld [vmem:[%s237 + $0x1490] sm:$0xf]
        %v1576 = vld [vmem:[%s237 + $0x1494] sm:$0xf]
        %v1577 = vld [vmem:[%s237 + $0x1498] sm:$0xf]
        %v1578 = vld [vmem:[%s237 + $0x149c] sm:$0xf]
        %v1579 = vld [vmem:[%s237 + $0x14a0] sm:$0xf]
        %v1580 = vld [vmem:[%s237 + $0x14a4] sm:$0xf]
        %v1581 = vld [vmem:[%s237 + $0x14a8] sm:$0xf]
        %v1582 = vld [vmem:[%s237 + $0x14ac] sm:$0xf]
        %v1583 = vld [vmem:[%s237 + $0x14b0] sm:$0xf]
        %v1584 = vld [vmem:[%s237 + $0x14b4] sm:$0xf]
        %v1585 = vld [vmem:[%s237 + $0x14b8] sm:$0xf]
        %v1586 = vld [vmem:[%s237 + $0x14bc] sm:$0xf]
        %v1587 = vld [vmem:[%s237 + $0x14c0] sm:$0xf]
        %v1588 = vld [vmem:[%s237 + $0x14c4] sm:$0xf]
        %v1589 = vld [vmem:[%s237 + $0x14c8] sm:$0xf]
        %v1590 = vld [vmem:[%s237 + $0x14cc] sm:$0xf]
        %v1591 = vld [vmem:[%s237 + $0x14d0] sm:$0xf]
        %v1592 = vld [vmem:[%s237 + $0x14d4] sm:$0xf]
        %v1593 = vld [vmem:[%s237 + $0x14d8] sm:$0xf]
        %v1594 = vld [vmem:[%s237 + $0x14dc] sm:$0xf]
        %v1595 = vld [vmem:[%s237 + $0x14e0] sm:$0xf]
        %v1596 = vld [vmem:[%s237 + $0x14e4] sm:$0xf]
        %v1597 = vld [vmem:[%s237 + $0x14e8] sm:$0xf]
        %v1598 = vld [vmem:[%s237 + $0x14ec] sm:$0xf]
        %v1599 = vld [vmem:[%s237 + $0x14f0] sm:$0xf]
        %v1600 = vld [vmem:[%s237 + $0x14f4] sm:$0xf]
        %v1601 = vld [vmem:[%s237 + $0x14f8] sm:$0xf]
        %v1602 = vld [vmem:[%s237 + $0x14fc] sm:$0xf]
        %v1603 = vld [vmem:[%s237 + $0x1500] sm:$0xf]
        %v1604 = vld [vmem:[%s237 + $0x1504] sm:$0xf]
        %v1605 = vld [vmem:[%s237 + $0x1508] sm:$0xf]
        %v1606 = vld [vmem:[%s237 + $0x150c] sm:$0xf]
        %v1607 = vld [vmem:[%s237 + $0x1510] sm:$0xf]
        %v1608 = vld [vmem:[%s237 + $0x1514] sm:$0xf]
        %v1609 = vld [vmem:[%s237 + $0x1518] sm:$0xf]
        %v1610 = vld [vmem:[%s237 + $0x151c] sm:$0xf]
        %v1611 = vld [vmem:[%s237 + $0x1520] sm:$0xf]
        %v1612 = vld [vmem:[%s237 + $0x1524] sm:$0xf]
        %v1613 = vld [vmem:[%s237 + $0x1528] sm:$0xf]
        %v1614 = vld [vmem:[%s237 + $0x152c] sm:$0xf]
        %v1615 = vld [vmem:[%s237 + $0x1530] sm:$0xf]
        %v1616 = vld [vmem:[%s237 + $0x1534] sm:$0xf]
        %v1617 = vld [vmem:[%s237 + $0x1538] sm:$0xf]
        %v1618 = vld [vmem:[%s237 + $0x153c] sm:$0xf]
        %v1619 = vld [vmem:[%s240] sm:$0x1]
        %v1621 = vlaneseq
        %v1622 = vshrl.u32 %v1621, 7
        %v1623 = vsub.s32 0, %v1622
        %v1624 = vrot.slane %v1619, %v1623
        %v1637 = vcombine.high %v248, %v248
        %v1639 = vunpack.c.l.s4 1966171168
        %v1640 = vunpack.c.0.s8 %v1639
        %v1641 = vlaneseq
        %v1642 = vshrl.u32 %v1641, 7
        %v1643 = vsub.s32 %v1640, %v1642
        %v1644 = vrot.slane %v248, %v1643
        %v1646 = vunpack.c.l.s4 1966171168
        %v1647 = vunpack.c.0.s8 %v1646
        %v1648 = vlaneseq
        %v1649 = vshrl.u32 %v1648, 7
        %v1650 = vsub.s32 %v1647, %v1649
        %v1651 = vrot.slane %v1637, %v1650
        %v1652 = vcombine.high %v1644, %v1644
        %v1653 = vcombine.high %v1651, %v1651
        %v1655 = vunpack.c.l.s4 1966171168
        %v1656 = vunpack.c.0.s8 %v1655
        %v1657 = vlaneseq
        %v1658 = vshrl.u32 %v1657, 7
        %v1659 = vsub.s32 %v1656, %v1658
        %v1660 = vrot.slane %v1644, %v1659
        %v1662 = vunpack.c.l.s4 1966171168
        %v1663 = vunpack.c.0.s8 %v1662
        %v1664 = vlaneseq
        %v1665 = vshrl.u32 %v1664, 7
        %v1666 = vsub.s32 %v1663, %v1665
        %v1667 = vrot.slane %v1651, %v1666
        %v1669 = vunpack.c.l.s4 1966171168
        %v1670 = vunpack.c.0.s8 %v1669
        %v1671 = vlaneseq
        %v1672 = vshrl.u32 %v1671, 7
        %v1673 = vsub.s32 %v1670, %v1672
        %v1674 = vrot.slane %v1652, %v1673
        %v1676 = vunpack.c.l.s4 1966171168
        %v1677 = vunpack.c.0.s8 %v1676
        %v1678 = vlaneseq
        %v1679 = vshrl.u32 %v1678, 7
        %v1680 = vsub.s32 %v1677, %v1679
        %v1681 = vrot.slane %v1653, %v1680
        %v1682 = vcombine.high %v1660, %v1660
        %v1683 = vcombine.high %v1667, %v1667
        %v1684 = vcombine.high %v1674, %v1674
        %v1685 = vcombine.high %v1681, %v1681
        %v1686 = vcombine.high %v249, %v249
        %v1688 = vunpack.c.l.s4 1966171168
        %v1689 = vunpack.c.0.s8 %v1688
        %v1690 = vlaneseq
        %v1691 = vshrl.u32 %v1690, 7
        %v1692 = vsub.s32 %v1689, %v1691
        %v1693 = vrot.slane %v249, %v1692
        %v1695 = vunpack.c.l.s4 1966171168
        %v1696 = vunpack.c.0.s8 %v1695
        %v1697 = vlaneseq
        %v1698 = vshrl.u32 %v1697, 7
        %v1699 = vsub.s32 %v1696, %v1698
        %v1700 = vrot.slane %v1686, %v1699
        %v1701 = vcombine.high %v1693, %v1693
        %v1702 = vcombine.high %v1700, %v1700
        %v1704 = vunpack.c.l.s4 1966171168
        %v1705 = vunpack.c.0.s8 %v1704
        %v1706 = vlaneseq
        %v1707 = vshrl.u32 %v1706, 7
        %v1708 = vsub.s32 %v1705, %v1707
        %v1709 = vrot.slane %v1693, %v1708
        %v1711 = vunpack.c.l.s4 1966171168
        %v1712 = vunpack.c.0.s8 %v1711
        %v1713 = vlaneseq
        %v1714 = vshrl.u32 %v1713, 7
        %v1715 = vsub.s32 %v1712, %v1714
        %v1716 = vrot.slane %v1700, %v1715
        %v1718 = vunpack.c.l.s4 1966171168
        %v1719 = vunpack.c.0.s8 %v1718
        %v1720 = vlaneseq
        %v1721 = vshrl.u32 %v1720, 7
        %v1722 = vsub.s32 %v1719, %v1721
        %v1723 = vrot.slane %v1701, %v1722
        %v1725 = vunpack.c.l.s4 1966171168
        %v1726 = vunpack.c.0.s8 %v1725
        %v1727 = vlaneseq
        %v1728 = vshrl.u32 %v1727, 7
        %v1729 = vsub.s32 %v1726, %v1728
        %v1730 = vrot.slane %v1702, %v1729
        %v1731 = vcombine.high %v1709, %v1709
        %v1732 = vcombine.high %v1716, %v1716
        %v1733 = vcombine.high %v1723, %v1723
        %v1734 = vcombine.high %v1730, %v1730
        %v1735 = vcombine.high %v250, %v250
        %v1737 = vunpack.c.l.s4 1966171168
        %v1738 = vunpack.c.0.s8 %v1737
        %v1739 = vlaneseq
        %v1740 = vshrl.u32 %v1739, 7
        %v1741 = vsub.s32 %v1738, %v1740
        %v1742 = vrot.slane %v250, %v1741
        %v1744 = vunpack.c.l.s4 1966171168
        %v1745 = vunpack.c.0.s8 %v1744
        %v1746 = vlaneseq
        %v1747 = vshrl.u32 %v1746, 7
        %v1748 = vsub.s32 %v1745, %v1747
        %v1749 = vrot.slane %v1735, %v1748
        %v1750 = vcombine.high %v1742, %v1742
        %v1751 = vcombine.high %v1749, %v1749
        %v1753 = vunpack.c.l.s4 1966171168
        %v1754 = vunpack.c.0.s8 %v1753
        %v1755 = vlaneseq
        %v1756 = vshrl.u32 %v1755, 7
        %v1757 = vsub.s32 %v1754, %v1756
        %v1758 = vrot.slane %v1742, %v1757
        %v1760 = vunpack.c.l.s4 1966171168
        %v1761 = vunpack.c.0.s8 %v1760
        %v1762 = vlaneseq
        %v1763 = vshrl.u32 %v1762, 7
        %v1764 = vsub.s32 %v1761, %v1763
        %v1765 = vrot.slane %v1749, %v1764
        %v1767 = vunpack.c.l.s4 1966171168
        %v1768 = vunpack.c.0.s8 %v1767
        %v1769 = vlaneseq
        %v1770 = vshrl.u32 %v1769, 7
        %v1771 = vsub.s32 %v1768, %v1770
        %v1772 = vrot.slane %v1750, %v1771
        %v1774 = vunpack.c.l.s4 1966171168
        %v1775 = vunpack.c.0.s8 %v1774
        %v1776 = vlaneseq
        %v1777 = vshrl.u32 %v1776, 7
        %v1778 = vsub.s32 %v1775, %v1777
        %v1779 = vrot.slane %v1751, %v1778
        %v1780 = vcombine.high %v1758, %v1758
        %v1781 = vcombine.high %v1765, %v1765
        %v1782 = vcombine.high %v1772, %v1772
        %v1783 = vcombine.high %v1779, %v1779
        %v1784 = vcombine.high %v251, %v251
        %v1786 = vunpack.c.l.s4 1966171168
        %v1787 = vunpack.c.0.s8 %v1786
        %v1788 = vlaneseq
        %v1789 = vshrl.u32 %v1788, 7
        %v1790 = vsub.s32 %v1787, %v1789
        %v1791 = vrot.slane %v251, %v1790
        %v1793 = vunpack.c.l.s4 1966171168
        %v1794 = vunpack.c.0.s8 %v1793
        %v1795 = vlaneseq
        %v1796 = vshrl.u32 %v1795, 7
        %v1797 = vsub.s32 %v1794, %v1796
        %v1798 = vrot.slane %v1784, %v1797
        %v1799 = vcombine.high %v1791, %v1791
        %v1800 = vcombine.high %v1798, %v1798
        %v1802 = vunpack.c.l.s4 1966171168
        %v1803 = vunpack.c.0.s8 %v1802
        %v1804 = vlaneseq
        %v1805 = vshrl.u32 %v1804, 7
        %v1806 = vsub.s32 %v1803, %v1805
        %v1807 = vrot.slane %v1791, %v1806
        %v1809 = vunpack.c.l.s4 1966171168
        %v1810 = vunpack.c.0.s8 %v1809
        %v1811 = vlaneseq
        %v1812 = vshrl.u32 %v1811, 7
        %v1813 = vsub.s32 %v1810, %v1812
        %v1814 = vrot.slane %v1798, %v1813
        %v1816 = vunpack.c.l.s4 1966171168
        %v1817 = vunpack.c.0.s8 %v1816
        %v1818 = vlaneseq
        %v1819 = vshrl.u32 %v1818, 7
        %v1820 = vsub.s32 %v1817, %v1819
        %v1821 = vrot.slane %v1799, %v1820
        %v1823 = vunpack.c.l.s4 1966171168
        %v1824 = vunpack.c.0.s8 %v1823
        %v1825 = vlaneseq
        %v1826 = vshrl.u32 %v1825, 7
        %v1827 = vsub.s32 %v1824, %v1826
        %v1828 = vrot.slane %v1800, %v1827
        %v1829 = vcombine.high %v1807, %v1807
        %v1830 = vcombine.high %v1814, %v1814
        %v1831 = vcombine.high %v1821, %v1821
        %v1832 = vcombine.high %v1828, %v1828
        %v1833 = vcombine.high %v252, %v252
        %v1835 = vunpack.c.l.s4 1966171168
        %v1836 = vunpack.c.0.s8 %v1835
        %v1837 = vlaneseq
        %v1838 = vshrl.u32 %v1837, 7
        %v1839 = vsub.s32 %v1836, %v1838
        %v1840 = vrot.slane %v252, %v1839
        %v1842 = vunpack.c.l.s4 1966171168
        %v1843 = vunpack.c.0.s8 %v1842
        %v1844 = vlaneseq
        %v1845 = vshrl.u32 %v1844, 7
        %v1846 = vsub.s32 %v1843, %v1845
        %v1847 = vrot.slane %v1833, %v1846
        %v1848 = vcombine.high %v1840, %v1840
        %v1849 = vcombine.high %v1847, %v1847
        %v1851 = vunpack.c.l.s4 1966171168
        %v1852 = vunpack.c.0.s8 %v1851
        %v1853 = vlaneseq
        %v1854 = vshrl.u32 %v1853, 7
        %v1855 = vsub.s32 %v1852, %v1854
        %v1856 = vrot.slane %v1840, %v1855
        %v1858 = vunpack.c.l.s4 1966171168
        %v1859 = vunpack.c.0.s8 %v1858
        %v1860 = vlaneseq
        %v1861 = vshrl.u32 %v1860, 7
        %v1862 = vsub.s32 %v1859, %v1861
        %v1863 = vrot.slane %v1847, %v1862
        %v1865 = vunpack.c.l.s4 1966171168
        %v1866 = vunpack.c.0.s8 %v1865
        %v1867 = vlaneseq
        %v1868 = vshrl.u32 %v1867, 7
        %v1869 = vsub.s32 %v1866, %v1868
        %v1870 = vrot.slane %v1848, %v1869
        %v1872 = vunpack.c.l.s4 1966171168
        %v1873 = vunpack.c.0.s8 %v1872
        %v1874 = vlaneseq
        %v1875 = vshrl.u32 %v1874, 7
        %v1876 = vsub.s32 %v1873, %v1875
        %v1877 = vrot.slane %v1849, %v1876
        %v1878 = vcombine.high %v1856, %v1856
        %v1879 = vcombine.high %v1863, %v1863
        %v1880 = vcombine.high %v1870, %v1870
        %v1881 = vcombine.high %v1877, %v1877
        %v1882 = vcombine.high %v253, %v253
        %v1884 = vunpack.c.l.s4 1966171168
        %v1885 = vunpack.c.0.s8 %v1884
        %v1886 = vlaneseq
        %v1887 = vshrl.u32 %v1886, 7
        %v1888 = vsub.s32 %v1885, %v1887
        %v1889 = vrot.slane %v253, %v1888
        %v1891 = vunpack.c.l.s4 1966171168
        %v1892 = vunpack.c.0.s8 %v1891
        %v1893 = vlaneseq
        %v1894 = vshrl.u32 %v1893, 7
        %v1895 = vsub.s32 %v1892, %v1894
        %v1896 = vrot.slane %v1882, %v1895
        %v1897 = vcombine.high %v1889, %v1889
        %v1898 = vcombine.high %v1896, %v1896
        %v1900 = vunpack.c.l.s4 1966171168
        %v1901 = vunpack.c.0.s8 %v1900
        %v1902 = vlaneseq
        %v1903 = vshrl.u32 %v1902, 7
        %v1904 = vsub.s32 %v1901, %v1903
        %v1905 = vrot.slane %v1889, %v1904
        %v1907 = vunpack.c.l.s4 1966171168
        %v1908 = vunpack.c.0.s8 %v1907
        %v1909 = vlaneseq
        %v1910 = vshrl.u32 %v1909, 7
        %v1911 = vsub.s32 %v1908, %v1910
        %v1912 = vrot.slane %v1896, %v1911
        %v1914 = vunpack.c.l.s4 1966171168
        %v1915 = vunpack.c.0.s8 %v1914
        %v1916 = vlaneseq
        %v1917 = vshrl.u32 %v1916, 7
        %v1918 = vsub.s32 %v1915, %v1917
        %v1919 = vrot.slane %v1897, %v1918
        %v1921 = vunpack.c.l.s4 1966171168
        %v1922 = vunpack.c.0.s8 %v1921
        %v1923 = vlaneseq
        %v1924 = vshrl.u32 %v1923, 7
        %v1925 = vsub.s32 %v1922, %v1924
        %v1926 = vrot.slane %v1898, %v1925
        %v1927 = vcombine.high %v1905, %v1905
        %v1928 = vcombine.high %v1912, %v1912
        %v1929 = vcombine.high %v1919, %v1919
        %v1930 = vcombine.high %v1926, %v1926
        %v1931 = vcombine.high %v254, %v254
        %v1933 = vunpack.c.l.s4 1966171168
        %v1934 = vunpack.c.0.s8 %v1933
        %v1935 = vlaneseq
        %v1936 = vshrl.u32 %v1935, 7
        %v1937 = vsub.s32 %v1934, %v1936
        %v1938 = vrot.slane %v254, %v1937
        %v1940 = vunpack.c.l.s4 1966171168
        %v1941 = vunpack.c.0.s8 %v1940
        %v1942 = vlaneseq
        %v1943 = vshrl.u32 %v1942, 7
        %v1944 = vsub.s32 %v1941, %v1943
        %v1945 = vrot.slane %v1931, %v1944
        %v1946 = vcombine.high %v1938, %v1938
        %v1947 = vcombine.high %v1945, %v1945
        %v1949 = vunpack.c.l.s4 1966171168
        %v1950 = vunpack.c.0.s8 %v1949
        %v1951 = vlaneseq
        %v1952 = vshrl.u32 %v1951, 7
        %v1953 = vsub.s32 %v1950, %v1952
        %v1954 = vrot.slane %v1938, %v1953
        %v1956 = vunpack.c.l.s4 1966171168
        %v1957 = vunpack.c.0.s8 %v1956
        %v1958 = vlaneseq
        %v1959 = vshrl.u32 %v1958, 7
        %v1960 = vsub.s32 %v1957, %v1959
        %v1961 = vrot.slane %v1945, %v1960
        %v1963 = vunpack.c.l.s4 1966171168
        %v1964 = vunpack.c.0.s8 %v1963
        %v1965 = vlaneseq
        %v1966 = vshrl.u32 %v1965, 7
        %v1967 = vsub.s32 %v1964, %v1966
        %v1968 = vrot.slane %v1946, %v1967
        %v1970 = vunpack.c.l.s4 1966171168
        %v1971 = vunpack.c.0.s8 %v1970
        %v1972 = vlaneseq
        %v1973 = vshrl.u32 %v1972, 7
        %v1974 = vsub.s32 %v1971, %v1973
        %v1975 = vrot.slane %v1947, %v1974
        %v1976 = vcombine.high %v1954, %v1954
        %v1977 = vcombine.high %v1961, %v1961
        %v1978 = vcombine.high %v1968, %v1968
        %v1979 = vcombine.high %v1975, %v1975
        %v1980 = vcombine.high %v255, %v255
        %v1982 = vunpack.c.l.s4 1966171168
        %v1983 = vunpack.c.0.s8 %v1982
        %v1984 = vlaneseq
        %v1985 = vshrl.u32 %v1984, 7
        %v1986 = vsub.s32 %v1983, %v1985
        %v1987 = vrot.slane %v255, %v1986
        %v1989 = vunpack.c.l.s4 1966171168
        %v1990 = vunpack.c.0.s8 %v1989
        %v1991 = vlaneseq
        %v1992 = vshrl.u32 %v1991, 7
        %v1993 = vsub.s32 %v1990, %v1992
        %v1994 = vrot.slane %v1980, %v1993
        %v1995 = vcombine.high %v1987, %v1987
        %v1996 = vcombine.high %v1994, %v1994
        %v1998 = vunpack.c.l.s4 1966171168
        %v1999 = vunpack.c.0.s8 %v1998
        %v2000 = vlaneseq
        %v2001 = vshrl.u32 %v2000, 7
        %v2002 = vsub.s32 %v1999, %v2001
        %v2003 = vrot.slane %v1987, %v2002
        %v2005 = vunpack.c.l.s4 1966171168
        %v2006 = vunpack.c.0.s8 %v2005
        %v2007 = vlaneseq
        %v2008 = vshrl.u32 %v2007, 7
        %v2009 = vsub.s32 %v2006, %v2008
        %v2010 = vrot.slane %v1994, %v2009
        %v2012 = vunpack.c.l.s4 1966171168
        %v2013 = vunpack.c.0.s8 %v2012
        %v2014 = vlaneseq
        %v2015 = vshrl.u32 %v2014, 7
        %v2016 = vsub.s32 %v2013, %v2015
        %v2017 = vrot.slane %v1995, %v2016
        %v2019 = vunpack.c.l.s4 1966171168
        %v2020 = vunpack.c.0.s8 %v2019
        %v2021 = vlaneseq
        %v2022 = vshrl.u32 %v2021, 7
        %v2023 = vsub.s32 %v2020, %v2022
        %v2024 = vrot.slane %v1996, %v2023
        %v2025 = vcombine.high %v2003, %v2003
        %v2026 = vcombine.high %v2010, %v2010
        %v2027 = vcombine.high %v2017, %v2017
        %v2028 = vcombine.high %v2024, %v2024
        %v2029 = vcombine.high %v256, %v256
        %v2031 = vunpack.c.l.s4 1966171168
        %v2032 = vunpack.c.0.s8 %v2031
        %v2033 = vlaneseq
        %v2034 = vshrl.u32 %v2033, 7
        %v2035 = vsub.s32 %v2032, %v2034
        %v2036 = vrot.slane %v256, %v2035
        %v2038 = vunpack.c.l.s4 1966171168
        %v2039 = vunpack.c.0.s8 %v2038
        %v2040 = vlaneseq
        %v2041 = vshrl.u32 %v2040, 7
        %v2042 = vsub.s32 %v2039, %v2041
        %v2043 = vrot.slane %v2029, %v2042
        %v2044 = vcombine.high %v2036, %v2036
        %v2045 = vcombine.high %v2043, %v2043
        %v2047 = vunpack.c.l.s4 1966171168
        %v2048 = vunpack.c.0.s8 %v2047
        %v2049 = vlaneseq
        %v2050 = vshrl.u32 %v2049, 7
        %v2051 = vsub.s32 %v2048, %v2050
        %v2052 = vrot.slane %v2036, %v2051
        %v2054 = vunpack.c.l.s4 1966171168
        %v2055 = vunpack.c.0.s8 %v2054
        %v2056 = vlaneseq
        %v2057 = vshrl.u32 %v2056, 7
        %v2058 = vsub.s32 %v2055, %v2057
        %v2059 = vrot.slane %v2043, %v2058
        %v2061 = vunpack.c.l.s4 1966171168
        %v2062 = vunpack.c.0.s8 %v2061
        %v2063 = vlaneseq
        %v2064 = vshrl.u32 %v2063, 7
        %v2065 = vsub.s32 %v2062, %v2064
        %v2066 = vrot.slane %v2044, %v2065
        %v2068 = vunpack.c.l.s4 1966171168
        %v2069 = vunpack.c.0.s8 %v2068
        %v2070 = vlaneseq
        %v2071 = vshrl.u32 %v2070, 7
        %v2072 = vsub.s32 %v2069, %v2071
        %v2073 = vrot.slane %v2045, %v2072
        %v2074 = vcombine.high %v2052, %v2052
        %v2075 = vcombine.high %v2059, %v2059
        %v2076 = vcombine.high %v2066, %v2066
        %v2077 = vcombine.high %v2073, %v2073
        %v2078 = vcombine.high %v257, %v257
        %v2080 = vunpack.c.l.s4 1966171168
        %v2081 = vunpack.c.0.s8 %v2080
        %v2082 = vlaneseq
        %v2083 = vshrl.u32 %v2082, 7
        %v2084 = vsub.s32 %v2081, %v2083
        %v2085 = vrot.slane %v257, %v2084
        %v2087 = vunpack.c.l.s4 1966171168
        %v2088 = vunpack.c.0.s8 %v2087
        %v2089 = vlaneseq
        %v2090 = vshrl.u32 %v2089, 7
        %v2091 = vsub.s32 %v2088, %v2090
        %v2092 = vrot.slane %v2078, %v2091
        %v2093 = vcombine.high %v2085, %v2085
        %v2094 = vcombine.high %v2092, %v2092
        %v2096 = vunpack.c.l.s4 1966171168
        %v2097 = vunpack.c.0.s8 %v2096
        %v2098 = vlaneseq
        %v2099 = vshrl.u32 %v2098, 7
        %v2100 = vsub.s32 %v2097, %v2099
        %v2101 = vrot.slane %v2085, %v2100
        %v2103 = vunpack.c.l.s4 1966171168
        %v2104 = vunpack.c.0.s8 %v2103
        %v2105 = vlaneseq
        %v2106 = vshrl.u32 %v2105, 7
        %v2107 = vsub.s32 %v2104, %v2106
        %v2108 = vrot.slane %v2092, %v2107
        %v2110 = vunpack.c.l.s4 1966171168
        %v2111 = vunpack.c.0.s8 %v2110
        %v2112 = vlaneseq
        %v2113 = vshrl.u32 %v2112, 7
        %v2114 = vsub.s32 %v2111, %v2113
        %v2115 = vrot.slane %v2093, %v2114
        %v2117 = vunpack.c.l.s4 1966171168
        %v2118 = vunpack.c.0.s8 %v2117
        %v2119 = vlaneseq
        %v2120 = vshrl.u32 %v2119, 7
        %v2121 = vsub.s32 %v2118, %v2120
        %v2122 = vrot.slane %v2094, %v2121
        %v2123 = vcombine.high %v2101, %v2101
        %v2124 = vcombine.high %v2108, %v2108
        %v2125 = vcombine.high %v2115, %v2115
        %v2126 = vcombine.high %v2122, %v2122
        %v2127 = vcombine.high %v258, %v258
        %v2129 = vunpack.c.l.s4 1966171168
        %v2130 = vunpack.c.0.s8 %v2129
        %v2131 = vlaneseq
        %v2132 = vshrl.u32 %v2131, 7
        %v2133 = vsub.s32 %v2130, %v2132
        %v2134 = vrot.slane %v258, %v2133
        %v2136 = vunpack.c.l.s4 1966171168
        %v2137 = vunpack.c.0.s8 %v2136
        %v2138 = vlaneseq
        %v2139 = vshrl.u32 %v2138, 7
        %v2140 = vsub.s32 %v2137, %v2139
        %v2141 = vrot.slane %v2127, %v2140
        %v2142 = vcombine.high %v2134, %v2134
        %v2144 = vunpack.c.l.s4 1966171168
        %v2145 = vunpack.c.0.s8 %v2144
        %v2146 = vlaneseq
        %v2147 = vshrl.u32 %v2146, 7
        %v2148 = vsub.s32 %v2145, %v2147
        %v2149 = vrot.slane %v2134, %v2148
        %v2151 = vunpack.c.l.s4 1966171168
        %v2152 = vunpack.c.0.s8 %v2151
        %v2153 = vlaneseq
        %v2154 = vshrl.u32 %v2153, 7
        %v2155 = vsub.s32 %v2152, %v2154
        %v2156 = vrot.slane %v2141, %v2155
        %v2158 = vunpack.c.l.s4 1966171168
        %v2159 = vunpack.c.0.s8 %v2158
        %v2160 = vlaneseq
        %v2161 = vshrl.u32 %v2160, 7
        %v2162 = vsub.s32 %v2159, %v2161
        %v2163 = vrot.slane %v2142, %v2162
        %v2164 = vcombine.high %v2149, %v2149
        %v2165 = vcombine.high %v2163, %v2163
        %v3611 = vunpack.c.l.b16 %v259
        %v3612 = vunpack.c.l.b16 %v260
        %v3613 = vunpack.c.l.b16 %v261
        %v3614 = vunpack.c.l.b16 %v262
        %v3615 = vunpack.c.l.b16 %v263
        %v3616 = vunpack.c.l.b16 %v264
        %v3617 = vunpack.c.l.b16 %v265
        %v3618 = vunpack.c.l.b16 %v266
        %v3619 = vunpack.c.l.b16 %v267
        %v3620 = vunpack.c.l.b16 %v268
        %v3621 = vunpack.c.l.b16 %v269
        %v3622 = vunpack.c.l.b16 %v270
        %v3623 = vunpack.c.l.b16 %v271
        %v3624 = vunpack.c.l.b16 %v272
        %v3625 = vunpack.c.l.b16 %v273
        %v3626 = vunpack.c.l.b16 %v274
        %v3627 = vunpack.c.l.b16 %v275
        %v3628 = vunpack.c.l.b16 %v276
        %v3629 = vunpack.c.l.b16 %v277
        %v3630 = vunpack.c.l.b16 %v278
        %v3631 = vunpack.c.l.b16 %v279
        %v3632 = vunpack.c.l.b16 %v280
        %v3633 = vunpack.c.l.b16 %v281
        %v3634 = vunpack.c.l.b16 %v282
        %v3635 = vunpack.c.l.b16 %v283
        %v3636 = vunpack.c.l.b16 %v284
        %v3637 = vunpack.c.l.b16 %v285
        %v3638 = vunpack.c.l.b16 %v286
        %v3639 = vunpack.c.l.b16 %v287
        %v3640 = vunpack.c.l.b16 %v288
        %v3641 = vunpack.c.l.b16 %v289
        %v3642 = vunpack.c.l.b16 %v290
        %v3643 = vunpack.c.l.b16 %v291
        %v3644 = vunpack.c.l.b16 %v292
        %v3645 = vunpack.c.l.b16 %v293
        %v3646 = vunpack.c.l.b16 %v294
        %v3647 = vunpack.c.l.b16 %v295
        %v3648 = vunpack.c.l.b16 %v296
        %v3649 = vunpack.c.l.b16 %v297
        %v3650 = vunpack.c.l.b16 %v298
        %v3651 = vunpack.c.l.b16 %v299
        %v3652 = vunpack.c.l.b16 %v300
        %v3653 = vunpack.c.l.b16 %v301
        %v3654 = vunpack.c.l.b16 %v302
        %v3655 = vunpack.c.l.b16 %v303
        %v3656 = vunpack.c.l.b16 %v304
        %v3657 = vunpack.c.l.b16 %v305
        %v3658 = vunpack.c.l.b16 %v306
        %v3659 = vunpack.c.l.b16 %v307
        %v3660 = vunpack.c.l.b16 %v308
        %v3661 = vunpack.c.l.b16 %v309
        %v3662 = vunpack.c.l.b16 %v310
        %v3663 = vunpack.c.l.b16 %v311
        %v3664 = vunpack.c.l.b16 %v312
        %v3665 = vunpack.c.l.b16 %v313
        %v3666 = vunpack.c.l.b16 %v314
        %v3667 = vunpack.c.l.b16 %v315
        %v3668 = vunpack.c.l.b16 %v316
        %v3669 = vunpack.c.l.b16 %v317
        %v3670 = vunpack.c.l.b16 %v318
        %v3671 = vunpack.c.l.b16 %v319
        %v3672 = vunpack.c.l.b16 %v320
        %v3673 = vunpack.c.l.b16 %v321
        %v3674 = vunpack.c.l.b16 %v322
        %v3675 = vunpack.c.l.b16 %v323
        %v3676 = vunpack.c.l.b16 %v324
        %v3677 = vunpack.c.l.b16 %v325
        %v3678 = vunpack.c.l.b16 %v326
        %v3679 = vunpack.c.l.b16 %v327
        %v3680 = vunpack.c.l.b16 %v328
        %v3681 = vunpack.c.l.b16 %v329
        %v3682 = vunpack.c.l.b16 %v330
        %v3683 = vunpack.c.l.b16 %v331
        %v3684 = vunpack.c.l.b16 %v332
        %v3685 = vunpack.c.l.b16 %v333
        %v3686 = vunpack.c.l.b16 %v334
        %v3687 = vunpack.c.l.b16 %v335
        %v3688 = vunpack.c.l.b16 %v336
        %v3689 = vunpack.c.l.b16 %v337
        %v3690 = vunpack.c.l.b16 %v338
        %v3691 = vunpack.c.l.b16 %v339
        %v3692 = vunpack.c.l.b16 %v340
        %v3693 = vunpack.c.l.b16 %v341
        %v3694 = vunpack.c.l.b16 %v342
        %v3695 = vunpack.c.l.b16 %v343
        %v3696 = vunpack.c.l.b16 %v344
        %v3697 = vunpack.c.l.b16 %v345
        %v3698 = vunpack.c.l.b16 %v346
        %v3699 = vunpack.c.l.b16 %v347
        %v3700 = vunpack.c.l.b16 %v348
        %v3701 = vunpack.c.l.b16 %v349
        %v3702 = vunpack.c.l.b16 %v350
        %v3703 = vunpack.c.l.b16 %v351
        %v3704 = vunpack.c.l.b16 %v352
        %v3705 = vunpack.c.l.b16 %v353
        %v3706 = vunpack.c.l.b16 %v354
        %v3707 = vunpack.c.l.b16 %v355
        %v3708 = vunpack.c.l.b16 %v356
        %v3709 = vunpack.c.l.b16 %v357
        %v3710 = vunpack.c.l.b16 %v358
        %v3711 = vunpack.c.l.b16 %v359
        %v3712 = vunpack.c.l.b16 %v360
        %v3713 = vunpack.c.l.b16 %v361
        %v3714 = vunpack.c.l.b16 %v362
        %v3715 = vunpack.c.l.b16 %v363
        %v3716 = vunpack.c.l.b16 %v364
        %v3717 = vunpack.c.l.b16 %v365
        %v3718 = vunpack.c.l.b16 %v366
        %v3719 = vunpack.c.l.b16 %v367
        %v3720 = vunpack.c.l.b16 %v368
        %v3721 = vunpack.c.l.b16 %v369
        %v3722 = vunpack.c.l.b16 %v370
        %v3723 = vunpack.c.l.b16 %v371
        %v3724 = vunpack.c.l.b16 %v372
        %v3725 = vunpack.c.l.b16 %v373
        %v3726 = vunpack.c.l.b16 %v374
        %v3727 = vunpack.c.l.b16 %v375
        %v3728 = vunpack.c.l.b16 %v376
        %v3729 = vunpack.c.l.b16 %v377
        %v3730 = vunpack.c.l.b16 %v378
        %v3731 = vunpack.c.l.b16 %v379
        %v3732 = vunpack.c.l.b16 %v380
        %v3733 = vunpack.c.l.b16 %v381
        %v3734 = vunpack.c.l.b16 %v382
        %v3735 = vunpack.c.l.b16 %v383
        %v3736 = vunpack.c.l.b16 %v384
        %v3737 = vunpack.c.l.b16 %v385
        %v3738 = vunpack.c.l.b16 %v386
        %v3739 = vunpack.c.l.b16 %v387
        %v3740 = vunpack.c.l.b16 %v388
        %v3741 = vunpack.c.l.b16 %v389
        %v3742 = vunpack.c.l.b16 %v390
        %v3743 = vunpack.c.l.b16 %v391
        %v3744 = vunpack.c.l.b16 %v392
        %v3745 = vunpack.c.l.b16 %v393
        %v3746 = vunpack.c.l.b16 %v394
        %v3747 = vunpack.c.l.b16 %v395
        %v3748 = vunpack.c.l.b16 %v396
        %v3749 = vunpack.c.l.b16 %v397
        %v3750 = vunpack.c.l.b16 %v398
        %v3751 = vunpack.c.l.b16 %v399
        %v3752 = vunpack.c.l.b16 %v400
        %v3753 = vunpack.c.l.b16 %v401
        %v3754 = vunpack.c.l.b16 %v402
        %v3755 = vunpack.c.l.b16 %v403
        %v3756 = vunpack.c.l.b16 %v404
        %v3757 = vunpack.c.l.b16 %v405
        %v3758 = vunpack.c.l.b16 %v406
        %v3759 = vunpack.c.l.b16 %v407
        %v3760 = vunpack.c.l.b16 %v408
        %v3761 = vunpack.c.l.b16 %v409
        %v3762 = vunpack.c.l.b16 %v410
        %v3763 = vunpack.c.l.b16 %v411
        %v3764 = vunpack.c.l.b16 %v412
        %v3765 = vunpack.c.l.b16 %v413
        %v3766 = vunpack.c.l.b16 %v414
        %v3767 = vunpack.c.l.b16 %v415
        %v3768 = vunpack.c.l.b16 %v416
        %v3769 = vunpack.c.l.b16 %v417
        %v3770 = vunpack.c.l.b16 %v418
        %v3771 = vunpack.c.l.b16 %v419
        %v3772 = vunpack.c.l.b16 %v420
        %v3773 = vunpack.c.l.b16 %v421
        %v3774 = vunpack.c.l.b16 %v422
        %v3775 = vunpack.c.l.b16 %v423
        %v3776 = vunpack.c.l.b16 %v424
        %v3777 = vunpack.c.l.b16 %v425
        %v3778 = vunpack.c.l.b16 %v426
        %v3779 = vunpack.c.l.b16 %v427
        %v3780 = vunpack.c.l.b16 %v428
        %v3781 = vunpack.c.l.b16 %v429
        %v3782 = vunpack.c.l.b16 %v430
        %v3783 = vunpack.c.l.b16 %v431
        %v3784 = vunpack.c.l.b16 %v432
        %v3785 = vunpack.c.l.b16 %v433
        %v3786 = vunpack.c.l.b16 %v434
        %v3787 = vunpack.c.l.b16 %v435
        %v3788 = vunpack.c.l.b16 %v436
        %v3789 = vunpack.c.l.b16 %v437
        %v3790 = vunpack.c.l.b16 %v438
        %v3791 = vunpack.c.l.b16 %v439
        %v3792 = vunpack.c.l.b16 %v440
        %v3793 = vunpack.c.l.b16 %v441
        %v3794 = vunpack.c.l.b16 %v442
        %v3795 = vunpack.c.l.b16 %v443
        %v3796 = vunpack.c.l.b16 %v444
        %v3797 = vunpack.c.l.b16 %v445
        %v3798 = vunpack.c.l.b16 %v446
        %v3799 = vunpack.c.l.b16 %v447
        %v3800 = vunpack.c.l.b16 %v448
        %v3801 = vunpack.c.l.b16 %v449
        %v3802 = vunpack.c.l.b16 %v450
        %v3803 = vunpack.c.l.b16 %v451
        %v3804 = vunpack.c.l.b16 %v452
        %v3805 = vunpack.c.l.b16 %v453
        %v3806 = vunpack.c.l.b16 %v454
        %v3807 = vunpack.c.l.b16 %v455
        %v3808 = vunpack.c.l.b16 %v456
        %v3809 = vunpack.c.l.b16 %v457
        %v3810 = vunpack.c.l.b16 %v458
        %v3811 = vunpack.c.l.b16 %v459
        %v3812 = vunpack.c.l.b16 %v460
        %v3813 = vunpack.c.l.b16 %v461
        %v3814 = vunpack.c.l.b16 %v462
        %v3815 = vunpack.c.l.b16 %v463
        %v3816 = vunpack.c.l.b16 %v464
        %v3817 = vunpack.c.l.b16 %v465
        %v3818 = vunpack.c.l.b16 %v466
        %v3819 = vunpack.c.l.b16 %v467
        %v3820 = vunpack.c.l.b16 %v468
        %v3821 = vunpack.c.l.b16 %v469
        %v3822 = vunpack.c.l.b16 %v470
        %v3823 = vunpack.c.l.b16 %v471
        %v3824 = vunpack.c.l.b16 %v472
        %v3825 = vunpack.c.l.b16 %v473
        %v3826 = vunpack.c.l.b16 %v474
        %v3827 = vunpack.c.l.b16 %v475
        %v3828 = vunpack.c.l.b16 %v476
        %v3829 = vunpack.c.l.b16 %v477
        %v3830 = vunpack.c.l.b16 %v478
        %v3831 = vunpack.c.l.b16 %v479
        %v3832 = vunpack.c.l.b16 %v480
        %v3833 = vunpack.c.l.b16 %v481
        %v3834 = vunpack.c.l.b16 %v482
        %v3835 = vunpack.c.l.b16 %v483
        %v3836 = vunpack.c.l.b16 %v484
        %v3837 = vunpack.c.l.b16 %v485
        %v3838 = vunpack.c.l.b16 %v486
        %v3839 = vunpack.c.l.b16 %v487
        %v3840 = vunpack.c.l.b16 %v488
        %v3841 = vunpack.c.l.b16 %v489
        %v3842 = vunpack.c.l.b16 %v490
        %v3843 = vunpack.c.l.b16 %v491
        %v3844 = vunpack.c.l.b16 %v492
        %v3845 = vunpack.c.l.b16 %v493
        %v3846 = vunpack.c.l.b16 %v494
        %v3847 = vunpack.c.l.b16 %v495
        %v3848 = vunpack.c.l.b16 %v496
        %v3849 = vunpack.c.l.b16 %v497
        %v3850 = vunpack.c.l.b16 %v498
        %v3851 = vunpack.c.l.b16 %v499
        %v3852 = vunpack.c.l.b16 %v500
        %v3853 = vunpack.c.l.b16 %v501
        %v3854 = vunpack.c.l.b16 %v502
        %v3855 = vunpack.c.l.b16 %v503
        %v3856 = vunpack.c.l.b16 %v504
        %v3857 = vunpack.c.l.b16 %v505
        %v3858 = vunpack.c.l.b16 %v506
        %v3859 = vunpack.c.l.b16 %v507
        %v3860 = vunpack.c.l.b16 %v508
        %v3861 = vunpack.c.l.b16 %v509
        %v3862 = vunpack.c.l.b16 %v510
        %v3863 = vunpack.c.l.b16 %v511
        %v3864 = vunpack.c.l.b16 %v512
        %v3865 = vunpack.c.l.b16 %v513
        %v3866 = vunpack.c.l.b16 %v514
        %v3867 = vunpack.c.l.b16 %v515
        %v3868 = vunpack.c.l.b16 %v516
        %v3869 = vunpack.c.l.b16 %v517
        %v3870 = vunpack.c.l.b16 %v518
        %v3871 = vunpack.c.l.b16 %v519
        %v3872 = vunpack.c.l.b16 %v520
        %v3873 = vunpack.c.l.b16 %v521
        %v3874 = vunpack.c.l.b16 %v522
        %v3875 = vunpack.c.l.b16 %v523
        %v3876 = vunpack.c.l.b16 %v524
        %v3877 = vunpack.c.l.b16 %v525
        %v3878 = vunpack.c.l.b16 %v526
        %v3879 = vunpack.c.l.b16 %v527
        %v3880 = vunpack.c.l.b16 %v528
        %v3881 = vunpack.c.l.b16 %v529
        %v3882 = vunpack.c.l.b16 %v530
        %v3883 = vunpack.c.l.b16 %v531
        %v3884 = vunpack.c.l.b16 %v532
        %v3885 = vunpack.c.l.b16 %v533
        %v3886 = vunpack.c.l.b16 %v534
        %v3887 = vunpack.c.l.b16 %v535
        %v3888 = vunpack.c.l.b16 %v536
        %v3889 = vunpack.c.l.b16 %v537
        %v3890 = vunpack.c.l.b16 %v538
        %v3891 = vunpack.c.l.b16 %v539
        %v3892 = vunpack.c.l.b16 %v540
        %v3893 = vunpack.c.l.b16 %v541
        %v3894 = vunpack.c.l.b16 %v542
        %v3895 = vunpack.c.l.b16 %v543
        %v3896 = vunpack.c.l.b16 %v544
        %v3897 = vunpack.c.l.b16 %v545
        %v3898 = vunpack.c.l.b16 %v546
        %v3899 = vunpack.c.l.b16 %v547
        %v3900 = vunpack.c.l.b16 %v548
        %v3901 = vunpack.c.l.b16 %v549
        %v3902 = vunpack.c.l.b16 %v550
        %v3903 = vunpack.c.l.b16 %v551
        %v3904 = vunpack.c.l.b16 %v552
        %v3905 = vunpack.c.l.b16 %v553
        %v3906 = vunpack.c.l.b16 %v554
        %v3907 = vunpack.c.l.b16 %v555
        %v3908 = vunpack.c.l.b16 %v556
        %v3909 = vunpack.c.l.b16 %v557
        %v3910 = vunpack.c.l.b16 %v558
        %v3911 = vunpack.c.l.b16 %v559
        %v3912 = vunpack.c.l.b16 %v560
        %v3913 = vunpack.c.l.b16 %v561
        %v3914 = vunpack.c.l.b16 %v562
        %v3915 = vunpack.c.l.b16 %v563
        %v3916 = vunpack.c.l.b16 %v564
        %v3917 = vunpack.c.l.b16 %v565
        %v3918 = vunpack.c.l.b16 %v566
        %v3919 = vunpack.c.l.b16 %v567
        %v3920 = vunpack.c.l.b16 %v568
        %v3921 = vunpack.c.l.b16 %v569
        %v3922 = vunpack.c.l.b16 %v570
        %v3923 = vunpack.c.l.b16 %v571
        %v3924 = vunpack.c.l.b16 %v572
        %v3925 = vunpack.c.l.b16 %v573
        %v3926 = vunpack.c.l.b16 %v574
        %v3927 = vunpack.c.l.b16 %v575
        %v3928 = vunpack.c.l.b16 %v576
        %v3929 = vunpack.c.l.b16 %v577
        %v3930 = vunpack.c.l.b16 %v578
        %v3931 = vunpack.c.l.b16 %v579
        %v3932 = vunpack.c.l.b16 %v580
        %v3933 = vunpack.c.l.b16 %v581
        %v3934 = vunpack.c.l.b16 %v582
        %v3935 = vunpack.c.l.b16 %v583
        %v3936 = vunpack.c.l.b16 %v584
        %v3937 = vunpack.c.l.b16 %v585
        %v3938 = vunpack.c.l.b16 %v586
        %v3939 = vunpack.c.l.b16 %v587
        %v3940 = vunpack.c.l.b16 %v588
        %v3941 = vunpack.c.l.b16 %v589
        %v3942 = vunpack.c.l.b16 %v590
        %v3943 = vunpack.c.l.b16 %v591
        %v3944 = vunpack.c.l.b16 %v592
        %v3945 = vunpack.c.l.b16 %v593
        %v3946 = vunpack.c.l.b16 %v594
        %v3947 = vunpack.c.l.b16 %v595
        %v3948 = vunpack.c.l.b16 %v596
        %v3949 = vunpack.c.l.b16 %v597
        %v3950 = vunpack.c.l.b16 %v598
        %v3951 = vunpack.c.l.b16 %v599
        %v3952 = vunpack.c.l.b16 %v600
        %v3953 = vunpack.c.l.b16 %v601
        %v3954 = vunpack.c.l.b16 %v602
        %v3955 = vunpack.c.l.b16 %v603
        %v3956 = vunpack.c.l.b16 %v604
        %v3957 = vunpack.c.l.b16 %v605
        %v3958 = vunpack.c.l.b16 %v606
        %v3959 = vunpack.c.l.b16 %v607
        %v3960 = vunpack.c.l.b16 %v608
        %v3961 = vunpack.c.l.b16 %v609
        %v3962 = vunpack.c.l.b16 %v610
        %v3963 = vunpack.c.l.b16 %v611
        %v3964 = vunpack.c.l.b16 %v612
        %v3965 = vunpack.c.l.b16 %v613
        %v3966 = vunpack.c.l.b16 %v614
        %v3967 = vunpack.c.l.b16 %v615
        %v3968 = vunpack.c.l.b16 %v616
        %v3969 = vunpack.c.l.b16 %v617
        %v3970 = vunpack.c.l.b16 %v618
        %v3971 = vunpack.c.l.b16 %v619
        %v3972 = vunpack.c.l.b16 %v620
        %v3973 = vunpack.c.l.b16 %v621
        %v3974 = vunpack.c.l.b16 %v622
        %v3975 = vunpack.c.l.b16 %v623
        %v3976 = vunpack.c.l.b16 %v624
        %v3977 = vunpack.c.l.b16 %v625
        %v3978 = vunpack.c.l.b16 %v626
        %v3979 = vunpack.c.l.b16 %v627
        %v3980 = vunpack.c.l.b16 %v628
        %v3981 = vunpack.c.l.b16 %v629
        %v3982 = vunpack.c.l.b16 %v630
        %v3983 = vunpack.c.l.b16 %v631
        %v3984 = vunpack.c.l.b16 %v632
        %v3985 = vunpack.c.l.b16 %v633
        %v3986 = vunpack.c.l.b16 %v634
        %v3987 = vunpack.c.l.b16 %v635
        %v3988 = vunpack.c.l.b16 %v636
        %v3989 = vunpack.c.l.b16 %v637
        %v3990 = vunpack.c.l.b16 %v638
        %v3991 = vunpack.c.l.b16 %v639
        %v3992 = vunpack.c.l.b16 %v640
        %v3993 = vunpack.c.l.b16 %v641
        %v3994 = vunpack.c.l.b16 %v642
        %v3995 = vunpack.c.l.b16 %v643
        %v3996 = vunpack.c.l.b16 %v644
        %v3997 = vunpack.c.l.b16 %v645
        %v3998 = vunpack.c.l.b16 %v646
        %v3999 = vunpack.c.l.b16 %v647
        %v4000 = vunpack.c.l.b16 %v648
        %v4001 = vunpack.c.l.b16 %v649
        %v4002 = vunpack.c.l.b16 %v650
        %v4003 = vunpack.c.l.b16 %v651
        %v4004 = vunpack.c.l.b16 %v652
        %v4005 = vunpack.c.l.b16 %v653
        %v4006 = vunpack.c.l.b16 %v654
        %v4007 = vunpack.c.l.b16 %v655
        %v4008 = vunpack.c.l.b16 %v656
        %v4009 = vunpack.c.l.b16 %v657
        %v4010 = vunpack.c.l.b16 %v658
        %v4011 = vunpack.c.l.b16 %v659
        %v4012 = vunpack.c.l.b16 %v660
        %v4013 = vunpack.c.l.b16 %v661
        %v4014 = vunpack.c.l.b16 %v662
        %v4015 = vunpack.c.l.b16 %v663
        %v4016 = vunpack.c.l.b16 %v664
        %v4017 = vunpack.c.l.b16 %v665
        %v4018 = vunpack.c.l.b16 %v666
        %v4019 = vunpack.c.l.b16 %v667
        %v4020 = vunpack.c.l.b16 %v668
        %v4021 = vunpack.c.l.b16 %v669
        %v4022 = vunpack.c.l.b16 %v670
        %v4023 = vunpack.c.l.b16 %v671
        %v4024 = vunpack.c.l.b16 %v672
        %v4025 = vunpack.c.l.b16 %v673
        %v4026 = vunpack.c.l.b16 %v674
        %v4027 = vunpack.c.l.b16 %v675
        %v4028 = vunpack.c.l.b16 %v676
        %v4029 = vunpack.c.l.b16 %v677
        %v4030 = vunpack.c.l.b16 %v678
        %v4031 = vunpack.c.l.b16 %v679
        %v4032 = vunpack.c.l.b16 %v680
        %v4033 = vunpack.c.l.b16 %v681
        %v4034 = vunpack.c.l.b16 %v682
        %v4035 = vunpack.c.l.b16 %v683
        %v4036 = vunpack.c.l.b16 %v684
        %v4037 = vunpack.c.l.b16 %v685
        %v4038 = vunpack.c.l.b16 %v686
        %v4039 = vunpack.c.l.b16 %v687
        %v4040 = vunpack.c.l.b16 %v688
        %v4041 = vunpack.c.l.b16 %v689
        %v4042 = vunpack.c.l.b16 %v690
        %v4043 = vunpack.c.l.b16 %v691
        %v4044 = vunpack.c.l.b16 %v692
        %v4045 = vunpack.c.l.b16 %v693
        %v4046 = vunpack.c.l.b16 %v694
        %v4047 = vunpack.c.l.b16 %v695
        %v4048 = vunpack.c.l.b16 %v696
        %v4049 = vunpack.c.l.b16 %v697
        %v4050 = vunpack.c.l.b16 %v698
        %v4051 = vunpack.c.l.b16 %v699
        %v4052 = vunpack.c.l.b16 %v700
        %v4053 = vunpack.c.l.b16 %v701
        %v4054 = vunpack.c.l.b16 %v702
        %v4055 = vunpack.c.l.b16 %v703
        %v4056 = vunpack.c.l.b16 %v704
        %v4057 = vunpack.c.l.b16 %v705
        %v4058 = vunpack.c.l.b16 %v706
        %v4059 = vunpack.c.l.b16 %v707
        %v4060 = vunpack.c.l.b16 %v708
        %v4061 = vunpack.c.l.b16 %v709
        %v4062 = vunpack.c.l.b16 %v710
        %v4063 = vunpack.c.l.b16 %v711
        %v4064 = vunpack.c.l.b16 %v712
        %v4065 = vunpack.c.l.b16 %v713
        %v4066 = vunpack.c.l.b16 %v714
        %v4067 = vunpack.c.l.b16 %v715
        %v4068 = vunpack.c.l.b16 %v716
        %v4069 = vunpack.c.l.b16 %v717
        %v4070 = vunpack.c.l.b16 %v718
        %v4071 = vunpack.c.l.b16 %v719
        %v4072 = vunpack.c.l.b16 %v720
        %v4073 = vunpack.c.l.b16 %v721
        %v4074 = vunpack.c.l.b16 %v722
        %v4075 = vunpack.c.l.b16 %v723
        %v4076 = vunpack.c.l.b16 %v724
        %v4077 = vunpack.c.l.b16 %v725
        %v4078 = vunpack.c.l.b16 %v726
        %v4079 = vunpack.c.l.b16 %v727
        %v4080 = vunpack.c.l.b16 %v728
        %v4081 = vunpack.c.l.b16 %v729
        %v4082 = vunpack.c.l.b16 %v730
        %v4083 = vunpack.c.l.b16 %v731
        %v4084 = vunpack.c.l.b16 %v732
        %v4085 = vunpack.c.l.b16 %v733
        %v4086 = vunpack.c.l.b16 %v734
        %v4087 = vunpack.c.l.b16 %v735
        %v4088 = vunpack.c.l.b16 %v736
        %v4089 = vunpack.c.l.b16 %v737
        %v4090 = vunpack.c.l.b16 %v738
        %v4091 = vunpack.c.l.b16 %v739
        %v4092 = vunpack.c.l.b16 %v740
        %v4093 = vunpack.c.l.b16 %v741
        %v4094 = vunpack.c.l.b16 %v742
        %v4095 = vunpack.c.l.b16 %v743
        %v4096 = vunpack.c.l.b16 %v744
        %v4097 = vunpack.c.l.b16 %v745
        %v4098 = vunpack.c.l.b16 %v746
        %v4099 = vunpack.c.l.b16 %v747
        %v4100 = vunpack.c.l.b16 %v748
        %v4101 = vunpack.c.l.b16 %v749
        %v4102 = vunpack.c.l.b16 %v750
        %v4103 = vunpack.c.l.b16 %v751
        %v4104 = vunpack.c.l.b16 %v752
        %v4105 = vunpack.c.l.b16 %v753
        %v4106 = vunpack.c.l.b16 %v754
        %v4107 = vunpack.c.l.b16 %v755
        %v4108 = vunpack.c.l.b16 %v756
        %v4109 = vunpack.c.l.b16 %v757
        %v4110 = vunpack.c.l.b16 %v758
        %v4111 = vunpack.c.l.b16 %v759
        %v4112 = vunpack.c.l.b16 %v760
        %v4113 = vunpack.c.l.b16 %v761
        %v4114 = vunpack.c.l.b16 %v762
        %v4115 = vunpack.c.l.b16 %v763
        %v4116 = vunpack.c.l.b16 %v764
        %v4117 = vunpack.c.l.b16 %v765
        %v4118 = vunpack.c.l.b16 %v766
        %v4119 = vunpack.c.l.b16 %v767
        %v4120 = vunpack.c.l.b16 %v768
        %v4121 = vunpack.c.l.b16 %v769
        %v4122 = vunpack.c.l.b16 %v770
        %v4123 = vunpack.c.l.b16 %v771
        %v4124 = vunpack.c.l.b16 %v772
        %v4125 = vunpack.c.l.b16 %v773
        %v4126 = vunpack.c.l.b16 %v774
        %v4127 = vunpack.c.l.b16 %v775
        %v4128 = vunpack.c.l.b16 %v776
        %v4129 = vunpack.c.l.b16 %v777
        %v4130 = vunpack.c.l.b16 %v778
        %v4131 = vunpack.c.l.b16 %v779
        %v4132 = vunpack.c.l.b16 %v780
        %v4133 = vunpack.c.l.b16 %v781
        %v4134 = vunpack.c.l.b16 %v782
        %v4135 = vunpack.c.l.b16 %v783
        %v4136 = vunpack.c.l.b16 %v784
        %v4137 = vunpack.c.l.b16 %v785
        %v4138 = vunpack.c.l.b16 %v786
        %v4139 = vunpack.c.l.b16 %v787
        %v4140 = vunpack.c.l.b16 %v788
        %v4141 = vunpack.c.l.b16 %v789
        %v4142 = vunpack.c.l.b16 %v790
        %v4143 = vunpack.c.l.b16 %v791
        %v4144 = vunpack.c.l.b16 %v792
        %v4145 = vunpack.c.l.b16 %v793
        %v4146 = vunpack.c.l.b16 %v794
        %v4147 = vunpack.c.l.b16 %v795
        %v4148 = vunpack.c.l.b16 %v796
        %v4149 = vunpack.c.l.b16 %v797
        %v4150 = vunpack.c.l.b16 %v798
        %v4151 = vunpack.c.l.b16 %v799
        %v4152 = vunpack.c.l.b16 %v800
        %v4153 = vunpack.c.l.b16 %v801
        %v4154 = vunpack.c.l.b16 %v802
        %v4155 = vunpack.c.l.b16 %v803
        %v4156 = vunpack.c.l.b16 %v804
        %v4157 = vunpack.c.l.b16 %v805
        %v4158 = vunpack.c.l.b16 %v806
        %v4159 = vunpack.c.l.b16 %v807
        %v4160 = vunpack.c.l.b16 %v808
        %v4161 = vunpack.c.l.b16 %v809
        %v4162 = vunpack.c.l.b16 %v810
        %v4163 = vunpack.c.l.b16 %v811
        %v4164 = vunpack.c.l.b16 %v812
        %v4165 = vunpack.c.l.b16 %v813
        %v4166 = vunpack.c.l.b16 %v814
        %v4167 = vunpack.c.l.b16 %v815
        %v4168 = vunpack.c.l.b16 %v816
        %v4169 = vunpack.c.l.b16 %v817
        %v4170 = vunpack.c.l.b16 %v818
        %v4171 = vunpack.c.l.b16 %v819
        %v4172 = vunpack.c.l.b16 %v820
        %v4173 = vunpack.c.l.b16 %v821
        %v4174 = vunpack.c.l.b16 %v822
        %v4175 = vunpack.c.l.b16 %v823
        %v4176 = vunpack.c.l.b16 %v824
        %v4177 = vunpack.c.l.b16 %v825
        %v4178 = vunpack.c.l.b16 %v826
        %v4179 = vunpack.c.l.b16 %v827
        %v4180 = vunpack.c.l.b16 %v828
        %v4181 = vunpack.c.l.b16 %v829
        %v4182 = vunpack.c.l.b16 %v830
        %v4183 = vunpack.c.l.b16 %v831
        %v4184 = vunpack.c.l.b16 %v832
        %v4185 = vunpack.c.l.b16 %v833
        %v4186 = vunpack.c.l.b16 %v834
        %v4187 = vunpack.c.l.b16 %v835
        %v4188 = vunpack.c.l.b16 %v836
        %v4189 = vunpack.c.l.b16 %v837
        %v4190 = vunpack.c.l.b16 %v838
        %v4191 = vunpack.c.l.b16 %v839
        %v4192 = vunpack.c.l.b16 %v840
        %v4193 = vunpack.c.l.b16 %v841
        %v4194 = vunpack.c.l.b16 %v842
        %v4195 = vunpack.c.l.b16 %v843
        %v4196 = vunpack.c.l.b16 %v844
        %v4197 = vunpack.c.l.b16 %v845
        %v4198 = vunpack.c.l.b16 %v846
        %v4199 = vunpack.c.l.b16 %v847
        %v4200 = vunpack.c.l.b16 %v848
        %v4201 = vunpack.c.l.b16 %v849
        %v4202 = vunpack.c.l.b16 %v850
        %v4203 = vunpack.c.l.b16 %v851
        %v4204 = vunpack.c.l.b16 %v852
        %v4205 = vunpack.c.l.b16 %v853
        %v4206 = vunpack.c.l.b16 %v854
        %v4207 = vunpack.c.l.b16 %v855
        %v4208 = vunpack.c.l.b16 %v856
        %v4209 = vunpack.c.l.b16 %v857
        %v4210 = vunpack.c.l.b16 %v858
        %v4211 = vunpack.c.l.b16 %v859
        %v4212 = vunpack.c.l.b16 %v860
        %v4213 = vunpack.c.l.b16 %v861
        %v4214 = vunpack.c.l.b16 %v862
        %v4215 = vunpack.c.l.b16 %v863
        %v4216 = vunpack.c.l.b16 %v864
        %v4217 = vunpack.c.l.b16 %v865
        %v4218 = vunpack.c.l.b16 %v866
        %v4219 = vunpack.c.l.b16 %v867
        %v4220 = vunpack.c.l.b16 %v868
        %v4221 = vunpack.c.l.b16 %v869
        %v4222 = vunpack.c.l.b16 %v870
        %v4223 = vunpack.c.l.b16 %v871
        %v4224 = vunpack.c.l.b16 %v872
        %v4225 = vunpack.c.l.b16 %v873
        %v4226 = vunpack.c.l.b16 %v874
        %v4227 = vunpack.c.l.b16 %v875
        %v4228 = vunpack.c.l.b16 %v876
        %v4229 = vunpack.c.l.b16 %v877
        %v4230 = vunpack.c.l.b16 %v878
        %v4231 = vunpack.c.l.b16 %v879
        %v4232 = vunpack.c.l.b16 %v880
        %v4233 = vunpack.c.l.b16 %v881
        %v4234 = vunpack.c.l.b16 %v882
        %v4235 = vunpack.c.l.b16 %v883
        %v4236 = vunpack.c.l.b16 %v884
        %v4237 = vunpack.c.l.b16 %v885
        %v4238 = vunpack.c.l.b16 %v886
        %v4239 = vunpack.c.l.b16 %v887
        %v4240 = vunpack.c.l.b16 %v888
        %v4241 = vunpack.c.l.b16 %v889
        %v4242 = vunpack.c.l.b16 %v890
        %v4243 = vunpack.c.l.b16 %v891
        %v4244 = vunpack.c.l.b16 %v892
        %v4245 = vunpack.c.l.b16 %v893
        %v4246 = vunpack.c.l.b16 %v894
        %v4247 = vunpack.c.l.b16 %v895
        %v4248 = vunpack.c.l.b16 %v896
        %v4249 = vunpack.c.l.b16 %v897
        %v4250 = vunpack.c.l.b16 %v898
        %v4251 = vunpack.c.l.b16 %v899
        %v4252 = vunpack.c.l.b16 %v900
        %v4253 = vunpack.c.l.b16 %v901
        %v4254 = vunpack.c.l.b16 %v902
        %v4255 = vunpack.c.l.b16 %v903
        %v4256 = vunpack.c.l.b16 %v904
        %v4257 = vunpack.c.l.b16 %v905
        %v4258 = vunpack.c.l.b16 %v906
        %v4259 = vunpack.c.l.b16 %v907
        %v4260 = vunpack.c.l.b16 %v908
        %v4261 = vunpack.c.l.b16 %v909
        %v4262 = vunpack.c.l.b16 %v910
        %v4263 = vunpack.c.l.b16 %v911
        %v4264 = vunpack.c.l.b16 %v912
        %v4265 = vunpack.c.l.b16 %v913
        %v4266 = vunpack.c.l.b16 %v914
        %v4267 = vunpack.c.l.b16 %v915
        %v4268 = vunpack.c.l.b16 %v916
        %v4269 = vunpack.c.l.b16 %v917
        %v4270 = vunpack.c.l.b16 %v918
        %v4271 = vunpack.c.l.b16 %v919
        %v4272 = vunpack.c.l.b16 %v920
        %v4273 = vunpack.c.l.b16 %v921
        %v4274 = vunpack.c.l.b16 %v922
        %v4275 = vunpack.c.l.b16 %v923
        %v4276 = vunpack.c.l.b16 %v924
        %v4277 = vunpack.c.l.b16 %v925
        %v4278 = vunpack.c.l.b16 %v926
        %v4279 = vunpack.c.l.b16 %v927
        %v4280 = vunpack.c.l.b16 %v928
        %v4281 = vunpack.c.l.b16 %v929
        %v4282 = vunpack.c.l.b16 %v930
        %v4283 = vunpack.c.l.b16 %v931
        %v4284 = vunpack.c.l.b16 %v932
        %v4285 = vunpack.c.l.b16 %v933
        %v4286 = vunpack.c.l.b16 %v934
        %v4287 = vunpack.c.l.b16 %v935
        %v4288 = vunpack.c.l.b16 %v936
        %v4289 = vunpack.c.l.b16 %v937
        %v4290 = vunpack.c.l.b16 %v938
        %v4291 = vunpack.c.l.b16 %v939
        %v4292 = vunpack.c.l.b16 %v940
        %v4293 = vunpack.c.l.b16 %v941
        %v4294 = vunpack.c.l.b16 %v942
        %v4295 = vunpack.c.l.b16 %v943
        %v4296 = vunpack.c.l.b16 %v944
        %v4297 = vunpack.c.l.b16 %v945
        %v4298 = vunpack.c.l.b16 %v946
        %v4299 = vunpack.c.l.b16 %v947
        %v4300 = vunpack.c.l.b16 %v948
        %v4301 = vunpack.c.l.b16 %v949
        %v4302 = vunpack.c.l.b16 %v950
        %v4303 = vunpack.c.l.b16 %v951
        %v4304 = vunpack.c.l.b16 %v952
        %v4305 = vunpack.c.l.b16 %v953
        %v4306 = vunpack.c.l.b16 %v954
        %v4307 = vunpack.c.l.b16 %v955
        %v4308 = vunpack.c.l.b16 %v956
        %v4309 = vunpack.c.l.b16 %v957
        %v4310 = vunpack.c.l.b16 %v958
        %v4311 = vunpack.c.l.b16 %v959
        %v4312 = vunpack.c.l.b16 %v960
        %v4313 = vunpack.c.l.b16 %v961
        %v4314 = vunpack.c.l.b16 %v962
        %v4315 = vunpack.c.l.b16 %v963
        %v4316 = vunpack.c.l.b16 %v964
        %v4317 = vunpack.c.l.b16 %v965
        %v4318 = vunpack.c.l.b16 %v966
        %v4319 = vunpack.c.l.b16 %v967
        %v4320 = vunpack.c.l.b16 %v968
        %v4321 = vunpack.c.l.b16 %v969
        %v4322 = vunpack.c.l.b16 %v970
        %v4323 = vunpack.c.l.b16 %v971
        %v4324 = vunpack.c.l.b16 %v972
        %v4325 = vunpack.c.l.b16 %v973
        %v4326 = vunpack.c.l.b16 %v974
        %v4327 = vunpack.c.l.b16 %v975
        %v4328 = vunpack.c.l.b16 %v976
        %v4329 = vunpack.c.l.b16 %v977
        %v4330 = vunpack.c.l.b16 %v978
        %v4331 = vunpack.c.l.b16 %v979
        %v4332 = vunpack.c.l.b16 %v980
        %v4333 = vunpack.c.l.b16 %v981
        %v4334 = vunpack.c.l.b16 %v982
        %v4335 = vunpack.c.l.b16 %v983
        %v4336 = vunpack.c.l.b16 %v984
        %v4337 = vunpack.c.l.b16 %v985
        %v4338 = vunpack.c.l.b16 %v986
        %v4339 = vunpack.c.l.b16 %v987
        %v4340 = vunpack.c.l.b16 %v988
        %v4341 = vunpack.c.l.b16 %v989
        %v4342 = vunpack.c.l.b16 %v990
        %v4343 = vunpack.c.l.b16 %v991
        %v4344 = vunpack.c.l.b16 %v992
        %v4345 = vunpack.c.l.b16 %v993
        %v4346 = vunpack.c.l.b16 %v994
        %v4347 = vunpack.c.l.b16 %v995
        %v4348 = vunpack.c.l.b16 %v996
        %v4349 = vunpack.c.l.b16 %v997
        %v4350 = vunpack.c.l.b16 %v998
        %v4351 = vunpack.c.l.b16 %v999
        %v4352 = vunpack.c.l.b16 %v1000
        %v4353 = vunpack.c.l.b16 %v1001
        %v4354 = vunpack.c.l.b16 %v1002
        %v4355 = vunpack.c.l.b16 %v1003
        %v4356 = vunpack.c.l.b16 %v1004
        %v4357 = vunpack.c.l.b16 %v1005
        %v4358 = vunpack.c.l.b16 %v1006
        %v4359 = vunpack.c.l.b16 %v1007
        %v4360 = vunpack.c.l.b16 %v1008
        %v4361 = vunpack.c.l.b16 %v1009
        %v4362 = vunpack.c.l.b16 %v1010
        %v4363 = vunpack.c.l.b16 %v1011
        %v4364 = vunpack.c.l.b16 %v1012
        %v4365 = vunpack.c.l.b16 %v1013
        %v4366 = vunpack.c.l.b16 %v1014
        %v4367 = vunpack.c.l.b16 %v1015
        %v4368 = vunpack.c.l.b16 %v1016
        %v4369 = vunpack.c.l.b16 %v1017
        %v4370 = vunpack.c.l.b16 %v1018
        %v4371 = vunpack.c.l.b16 %v1019
        %v4372 = vunpack.c.l.b16 %v1020
        %v4373 = vunpack.c.l.b16 %v1021
        %v4374 = vunpack.c.l.b16 %v1022
        %v4375 = vunpack.c.l.b16 %v1023
        %v4376 = vunpack.c.l.b16 %v1024
        %v4377 = vunpack.c.l.b16 %v1025
        %v4378 = vunpack.c.l.b16 %v1026
        %v4379 = vunpack.c.l.b16 %v1027
        %v4380 = vunpack.c.l.b16 %v1028
        %v4381 = vunpack.c.l.b16 %v1029
        %v4382 = vunpack.c.l.b16 %v1030
        %v4383 = vunpack.c.l.b16 %v1031
        %v4384 = vunpack.c.l.b16 %v1032
        %v4385 = vunpack.c.l.b16 %v1033
        %v4386 = vunpack.c.l.b16 %v1034
        %v4387 = vunpack.c.l.b16 %v1035
        %v4388 = vunpack.c.l.b16 %v1036
        %v4389 = vunpack.c.l.b16 %v1037
        %v4390 = vunpack.c.l.b16 %v1038
        %v4391 = vunpack.c.l.b16 %v1039
        %v4392 = vunpack.c.l.b16 %v1040
        %v4393 = vunpack.c.l.b16 %v1041
        %v4394 = vunpack.c.l.b16 %v1042
        %v4395 = vunpack.c.l.b16 %v1043
        %v4396 = vunpack.c.l.b16 %v1044
        %v4397 = vunpack.c.l.b16 %v1045
        %v4398 = vunpack.c.l.b16 %v1046
        %v4399 = vunpack.c.l.b16 %v1047
        %v4400 = vunpack.c.l.b16 %v1048
        %v4401 = vunpack.c.l.b16 %v1049
        %v4402 = vunpack.c.l.b16 %v1050
        %v4403 = vunpack.c.l.b16 %v1051
        %v4404 = vunpack.c.l.b16 %v1052
        %v4405 = vunpack.c.l.b16 %v1053
        %v4406 = vunpack.c.l.b16 %v1054
        %v4407 = vunpack.c.l.b16 %v1055
        %v4408 = vunpack.c.l.b16 %v1056
        %v4409 = vunpack.c.l.b16 %v1057
        %v4410 = vunpack.c.l.b16 %v1058
        %v4411 = vunpack.c.l.b16 %v1059
        %v4412 = vunpack.c.l.b16 %v1060
        %v4413 = vunpack.c.l.b16 %v1061
        %v4414 = vunpack.c.l.b16 %v1062
        %v4415 = vunpack.c.l.b16 %v1063
        %v4416 = vunpack.c.l.b16 %v1064
        %v4417 = vunpack.c.l.b16 %v1065
        %v4418 = vunpack.c.l.b16 %v1066
        %v4419 = vunpack.c.l.b16 %v1067
        %v4420 = vunpack.c.l.b16 %v1068
        %v4421 = vunpack.c.l.b16 %v1069
        %v4422 = vunpack.c.l.b16 %v1070
        %v4423 = vunpack.c.l.b16 %v1071
        %v4424 = vunpack.c.l.b16 %v1072
        %v4425 = vunpack.c.l.b16 %v1073
        %v4426 = vunpack.c.l.b16 %v1074
        %v4427 = vunpack.c.l.b16 %v1075
        %v4428 = vunpack.c.l.b16 %v1076
        %v4429 = vunpack.c.l.b16 %v1077
        %v4430 = vunpack.c.l.b16 %v1078
        %v4431 = vunpack.c.l.b16 %v1079
        %v4432 = vunpack.c.l.b16 %v1080
        %v4433 = vunpack.c.l.b16 %v1081
        %v4434 = vunpack.c.l.b16 %v1082
        %v4435 = vunpack.c.l.b16 %v1083
        %v4436 = vunpack.c.l.b16 %v1084
        %v4437 = vunpack.c.l.b16 %v1085
        %v4438 = vunpack.c.l.b16 %v1086
        %v4439 = vunpack.c.l.b16 %v1087
        %v4440 = vunpack.c.l.b16 %v1088
        %v4441 = vunpack.c.l.b16 %v1089
        %v4442 = vunpack.c.l.b16 %v1090
        %v4443 = vunpack.c.l.b16 %v1091
        %v4444 = vunpack.c.l.b16 %v1092
        %v4445 = vunpack.c.l.b16 %v1093
        %v4446 = vunpack.c.l.b16 %v1094
        %v4447 = vunpack.c.l.b16 %v1095
        %v4448 = vunpack.c.l.b16 %v1096
        %v4449 = vunpack.c.l.b16 %v1097
        %v4450 = vunpack.c.l.b16 %v1098
        %v4451 = vunpack.c.l.b16 %v1099
        %v4452 = vunpack.c.l.b16 %v1100
        %v4453 = vunpack.c.l.b16 %v1101
        %v4454 = vunpack.c.l.b16 %v1102
        %v4455 = vunpack.c.l.b16 %v1103
        %v4456 = vunpack.c.l.b16 %v1104
        %v4457 = vunpack.c.l.b16 %v1105
        %v4458 = vunpack.c.l.b16 %v1106
        %v4459 = vunpack.c.l.b16 %v1107
        %v4460 = vunpack.c.l.b16 %v1108
        %v4461 = vunpack.c.l.b16 %v1109
        %v4462 = vunpack.c.l.b16 %v1110
        %v4463 = vunpack.c.l.b16 %v1111
        %v4464 = vunpack.c.l.b16 %v1112
        %v4465 = vunpack.c.l.b16 %v1113
        %v4466 = vunpack.c.l.b16 %v1114
        %v4467 = vunpack.c.l.b16 %v1115
        %v4468 = vunpack.c.l.b16 %v1116
        %v4469 = vunpack.c.l.b16 %v1117
        %v4470 = vunpack.c.l.b16 %v1118
        %v4471 = vunpack.c.l.b16 %v1119
        %v4472 = vunpack.c.l.b16 %v1120
        %v4473 = vunpack.c.l.b16 %v1121
        %v4474 = vunpack.c.l.b16 %v1122
        %v4475 = vunpack.c.l.b16 %v1123
        %v4476 = vunpack.c.l.b16 %v1124
        %v4477 = vunpack.c.l.b16 %v1125
        %v4478 = vunpack.c.l.b16 %v1126
        %v4479 = vunpack.c.l.b16 %v1127
        %v4480 = vunpack.c.l.b16 %v1128
        %v4481 = vunpack.c.l.b16 %v1129
        %v4482 = vunpack.c.l.b16 %v1130
        %v4483 = vunpack.c.l.b16 %v1131
        %v4484 = vunpack.c.l.b16 %v1132
        %v4485 = vunpack.c.l.b16 %v1133
        %v4486 = vunpack.c.l.b16 %v1134
        %v4487 = vunpack.c.l.b16 %v1135
        %v4488 = vunpack.c.l.b16 %v1136
        %v4489 = vunpack.c.l.b16 %v1137
        %v4490 = vunpack.c.l.b16 %v1138
        %v4491 = vunpack.c.l.b16 %v1139
        %v4492 = vunpack.c.l.b16 %v1140
        %v4493 = vunpack.c.l.b16 %v1141
        %v4494 = vunpack.c.l.b16 %v1142
        %v4495 = vunpack.c.l.b16 %v1143
        %v4496 = vunpack.c.l.b16 %v1144
        %v4497 = vunpack.c.l.b16 %v1145
        %v4498 = vunpack.c.l.b16 %v1146
        %v4499 = vunpack.c.l.b16 %v1147
        %v4500 = vunpack.c.l.b16 %v1148
        %v4501 = vunpack.c.l.b16 %v1149
        %v4502 = vunpack.c.l.b16 %v1150
        %v4503 = vunpack.c.l.b16 %v1151
        %v4504 = vunpack.c.l.b16 %v1152
        %v4505 = vunpack.c.l.b16 %v1153
        %v4506 = vunpack.c.l.b16 %v1154
        %v4507 = vunpack.c.l.b16 %v1155
        %v4508 = vunpack.c.l.b16 %v1156
        %v4509 = vunpack.c.l.b16 %v1157
        %v4510 = vunpack.c.l.b16 %v1158
        %v4511 = vunpack.c.l.b16 %v1159
        %v4512 = vunpack.c.l.b16 %v1160
        %v4513 = vunpack.c.l.b16 %v1161
        %v4514 = vunpack.c.l.b16 %v1162
        %v4515 = vunpack.c.l.b16 %v1163
        %v4516 = vunpack.c.l.b16 %v1164
        %v4517 = vunpack.c.l.b16 %v1165
        %v4518 = vunpack.c.l.b16 %v1166
        %v4519 = vunpack.c.l.b16 %v1167
        %v4520 = vunpack.c.l.b16 %v1168
        %v4521 = vunpack.c.l.b16 %v1169
        %v4522 = vunpack.c.l.b16 %v1170
        %v4523 = vunpack.c.l.b16 %v1171
        %v4524 = vunpack.c.l.b16 %v1172
        %v4525 = vunpack.c.l.b16 %v1173
        %v4526 = vunpack.c.l.b16 %v1174
        %v4527 = vunpack.c.l.b16 %v1175
        %v4528 = vunpack.c.l.b16 %v1176
        %v4529 = vunpack.c.l.b16 %v1177
        %v4530 = vunpack.c.l.b16 %v1178
        %v4531 = vunpack.c.l.b16 %v1179
        %v4532 = vunpack.c.l.b16 %v1180
        %v4533 = vunpack.c.l.b16 %v1181
        %v4534 = vunpack.c.l.b16 %v1182
        %v4535 = vunpack.c.l.b16 %v1183
        %v4536 = vunpack.c.l.b16 %v1184
        %v4537 = vunpack.c.l.b16 %v1185
        %v4538 = vunpack.c.l.b16 %v1186
        %v4539 = vunpack.c.l.b16 %v1187
        %v4540 = vunpack.c.l.b16 %v1188
        %v4541 = vunpack.c.l.b16 %v1189
        %v4542 = vunpack.c.l.b16 %v1190
        %v4543 = vunpack.c.l.b16 %v1191
        %v4544 = vunpack.c.l.b16 %v1192
        %v4545 = vunpack.c.l.b16 %v1193
        %v4546 = vunpack.c.l.b16 %v1194
        %v4547 = vunpack.c.l.b16 %v1195
        %v4548 = vunpack.c.l.b16 %v1196
        %v4549 = vunpack.c.l.b16 %v1197
        %v4550 = vunpack.c.l.b16 %v1198
        %v4551 = vunpack.c.l.b16 %v1199
        %v4552 = vunpack.c.l.b16 %v1200
        %v4553 = vunpack.c.l.b16 %v1201
        %v4554 = vunpack.c.l.b16 %v1202
        %v4555 = vunpack.c.l.b16 %v1203
        %v4556 = vunpack.c.l.b16 %v1204
        %v4557 = vunpack.c.l.b16 %v1205
        %v4558 = vunpack.c.l.b16 %v1206
        %v4559 = vunpack.c.l.b16 %v1207
        %v4560 = vunpack.c.l.b16 %v1208
        %v4561 = vunpack.c.l.b16 %v1209
        %v4562 = vunpack.c.l.b16 %v1210
        %v4563 = vunpack.c.l.b16 %v1211
        %v4564 = vunpack.c.l.b16 %v1212
        %v4565 = vunpack.c.l.b16 %v1213
        %v4566 = vunpack.c.l.b16 %v1214
        %v4567 = vunpack.c.l.b16 %v1215
        %v4568 = vunpack.c.l.b16 %v1216
        %v4569 = vunpack.c.l.b16 %v1217
        %v4570 = vunpack.c.l.b16 %v1218
        %v4571 = vunpack.c.l.b16 %v1219
        %v4572 = vunpack.c.l.b16 %v1220
        %v4573 = vunpack.c.l.b16 %v1221
        %v4574 = vunpack.c.l.b16 %v1222
        %v4575 = vunpack.c.l.b16 %v1223
        %v4576 = vunpack.c.l.b16 %v1224
        %v4577 = vunpack.c.l.b16 %v1225
        %v4578 = vunpack.c.l.b16 %v1226
        %v4579 = vunpack.c.l.b16 %v1227
        %v4580 = vunpack.c.l.b16 %v1228
        %v4581 = vunpack.c.l.b16 %v1229
        %v4582 = vunpack.c.l.b16 %v1230
        %v4583 = vunpack.c.l.b16 %v1231
        %v4584 = vunpack.c.l.b16 %v1232
        %v4585 = vunpack.c.l.b16 %v1233
        %v4586 = vunpack.c.l.b16 %v1234
        %v4587 = vunpack.c.l.b16 %v1235
        %v4588 = vunpack.c.l.b16 %v1236
        %v4589 = vunpack.c.l.b16 %v1237
        %v4590 = vunpack.c.l.b16 %v1238
        %v4591 = vunpack.c.l.b16 %v1239
        %v4592 = vunpack.c.l.b16 %v1240
        %v4593 = vunpack.c.l.b16 %v1241
        %v4594 = vunpack.c.l.b16 %v1242
        %v4595 = vunpack.c.l.b16 %v1243
        %v4596 = vunpack.c.l.b16 %v1244
        %v4597 = vunpack.c.l.b16 %v1245
        %v4598 = vunpack.c.l.b16 %v1246
        %v4599 = vunpack.c.l.b16 %v1247
        %v4600 = vunpack.c.l.b16 %v1248
        %v4601 = vunpack.c.l.b16 %v1249
        %v4602 = vunpack.c.l.b16 %v1250
        %v4603 = vunpack.c.l.b16 %v1251
        %v4604 = vunpack.c.l.b16 %v1252
        %v4605 = vunpack.c.l.b16 %v1253
        %v4606 = vunpack.c.l.b16 %v1254
        %v4607 = vunpack.c.l.b16 %v1255
        %v4608 = vunpack.c.l.b16 %v1256
        %v4609 = vunpack.c.l.b16 %v1257
        %v4610 = vunpack.c.l.b16 %v1258
        %v4611 = vunpack.c.l.b16 %v1259
        %v4612 = vunpack.c.l.b16 %v1260
        %v4613 = vunpack.c.l.b16 %v1261
        %v4614 = vunpack.c.l.b16 %v1262
        %v4615 = vunpack.c.l.b16 %v1263
        %v4616 = vunpack.c.l.b16 %v1264
        %v4617 = vunpack.c.l.b16 %v1265
        %v4618 = vunpack.c.l.b16 %v1266
        %v4619 = vunpack.c.l.b16 %v1267
        %v4620 = vunpack.c.l.b16 %v1268
        %v4621 = vunpack.c.l.b16 %v1269
        %v4622 = vunpack.c.l.b16 %v1270
        %v4623 = vunpack.c.l.b16 %v1271
        %v4624 = vunpack.c.l.b16 %v1272
        %v4625 = vunpack.c.l.b16 %v1273
        %v4626 = vunpack.c.l.b16 %v1274
        %v4627 = vunpack.c.l.b16 %v1275
        %v4628 = vunpack.c.l.b16 %v1276
        %v4629 = vunpack.c.l.b16 %v1277
        %v4630 = vunpack.c.l.b16 %v1278
        %v4631 = vunpack.c.l.b16 %v1279
        %v4632 = vunpack.c.l.b16 %v1280
        %v4633 = vunpack.c.l.b16 %v1281
        %v4634 = vunpack.c.l.b16 %v1282
        %v4635 = vunpack.c.l.b16 %v1283
        %v4636 = vunpack.c.l.b16 %v1284
        %v4637 = vunpack.c.l.b16 %v1285
        %v4638 = vunpack.c.l.b16 %v1286
        %v4639 = vunpack.c.l.b16 %v1287
        %v4640 = vunpack.c.l.b16 %v1288
        %v4641 = vunpack.c.l.b16 %v1289
        %v4642 = vunpack.c.l.b16 %v1290
        %v4643 = vunpack.c.l.b16 %v1291
        %v4644 = vunpack.c.l.b16 %v1292
        %v4645 = vunpack.c.l.b16 %v1293
        %v4646 = vunpack.c.l.b16 %v1294
        %v4647 = vunpack.c.l.b16 %v1295
        %v4648 = vunpack.c.l.b16 %v1296
        %v4649 = vunpack.c.l.b16 %v1297
        %v4650 = vunpack.c.l.b16 %v1298
        %v4651 = vunpack.c.l.b16 %v1299
        %v4652 = vunpack.c.l.b16 %v1300
        %v4653 = vunpack.c.l.b16 %v1301
        %v4654 = vunpack.c.l.b16 %v1302
        %v4655 = vunpack.c.l.b16 %v1303
        %v4656 = vunpack.c.l.b16 %v1304
        %v4657 = vunpack.c.l.b16 %v1305
        %v4658 = vunpack.c.l.b16 %v1306
        %v4659 = vunpack.c.l.b16 %v1307
        %v4660 = vunpack.c.l.b16 %v1308
        %v4661 = vunpack.c.l.b16 %v1309
        %v4662 = vunpack.c.l.b16 %v1310
        %v4663 = vunpack.c.l.b16 %v1311
        %v4664 = vunpack.c.l.b16 %v1312
        %v4665 = vunpack.c.l.b16 %v1313
        %v4666 = vunpack.c.l.b16 %v1314
        %v4667 = vunpack.c.l.b16 %v1315
        %v4668 = vunpack.c.l.b16 %v1316
        %v4669 = vunpack.c.l.b16 %v1317
        %v4670 = vunpack.c.l.b16 %v1318
        %v4671 = vunpack.c.l.b16 %v1319
        %v4672 = vunpack.c.l.b16 %v1320
        %v4673 = vunpack.c.l.b16 %v1321
        %v4674 = vunpack.c.l.b16 %v1322
        %v4675 = vunpack.c.l.b16 %v1323
        %v4676 = vunpack.c.l.b16 %v1324
        %v4677 = vunpack.c.l.b16 %v1325
        %v4678 = vunpack.c.l.b16 %v1326
        %v4679 = vunpack.c.l.b16 %v1327
        %v4680 = vunpack.c.l.b16 %v1328
        %v4681 = vunpack.c.l.b16 %v1329
        %v4682 = vunpack.c.l.b16 %v1330
        %v4683 = vunpack.c.l.b16 %v1331
        %v4684 = vunpack.c.l.b16 %v1332
        %v4685 = vunpack.c.l.b16 %v1333
        %v4686 = vunpack.c.l.b16 %v1334
        %v4687 = vunpack.c.l.b16 %v1335
        %v4688 = vunpack.c.l.b16 %v1336
        %v4689 = vunpack.c.l.b16 %v1337
        %v4690 = vunpack.c.l.b16 %v1338
        %v4691 = vunpack.c.l.b16 %v1339
        %v4692 = vunpack.c.l.b16 %v1340
        %v4693 = vunpack.c.l.b16 %v1341
        %v4694 = vunpack.c.l.b16 %v1342
        %v4695 = vunpack.c.l.b16 %v1343
        %v4696 = vunpack.c.l.b16 %v1344
        %v4697 = vunpack.c.l.b16 %v1345
        %v4698 = vunpack.c.l.b16 %v1346
        %v4699 = vunpack.c.l.b16 %v1347
        %v4700 = vunpack.c.l.b16 %v1348
        %v4701 = vunpack.c.l.b16 %v1349
        %v4702 = vunpack.c.l.b16 %v1350
        %v4703 = vunpack.c.l.b16 %v1351
        %v4704 = vunpack.c.l.b16 %v1352
        %v4705 = vunpack.c.l.b16 %v1353
        %v4706 = vunpack.c.l.b16 %v1354
        %v4707 = vunpack.c.l.b16 %v1355
        %v4708 = vunpack.c.l.b16 %v1356
        %v4709 = vunpack.c.l.b16 %v1357
        %v4710 = vunpack.c.l.b16 %v1358
        %v4711 = vunpack.c.l.b16 %v1359
        %v4712 = vunpack.c.l.b16 %v1360
        %v4713 = vunpack.c.l.b16 %v1361
        %v4714 = vunpack.c.l.b16 %v1362
        %v4715 = vunpack.c.l.b16 %v1363
        %v4716 = vunpack.c.l.b16 %v1364
        %v4717 = vunpack.c.l.b16 %v1365
        %v4718 = vunpack.c.l.b16 %v1366
        %v4719 = vunpack.c.l.b16 %v1367
        %v4720 = vunpack.c.l.b16 %v1368
        %v4721 = vunpack.c.l.b16 %v1369
        %v4722 = vunpack.c.l.b16 %v1370
        %v4723 = vunpack.c.l.b16 %v1371
        %v4724 = vunpack.c.l.b16 %v1372
        %v4725 = vunpack.c.l.b16 %v1373
        %v4726 = vunpack.c.l.b16 %v1374
        %v4727 = vunpack.c.l.b16 %v1375
        %v4728 = vunpack.c.l.b16 %v1376
        %v4729 = vunpack.c.l.b16 %v1377
        %v4730 = vunpack.c.l.b16 %v1378
        %v4731 = vunpack.c.l.b16 %v1379
        %v4732 = vunpack.c.l.b16 %v1380
        %v4733 = vunpack.c.l.b16 %v1381
        %v4734 = vunpack.c.l.b16 %v1382
        %v4735 = vunpack.c.l.b16 %v1383
        %v4736 = vunpack.c.l.b16 %v1384
        %v4737 = vunpack.c.l.b16 %v1385
        %v4738 = vunpack.c.l.b16 %v1386
        %v4739 = vunpack.c.l.b16 %v1387
        %v4740 = vunpack.c.l.b16 %v1388
        %v4741 = vunpack.c.l.b16 %v1389
        %v4742 = vunpack.c.l.b16 %v1390
        %v4743 = vunpack.c.l.b16 %v1391
        %v4744 = vunpack.c.l.b16 %v1392
        %v4745 = vunpack.c.l.b16 %v1393
        %v4746 = vunpack.c.l.b16 %v1394
        %v4747 = vunpack.c.l.b16 %v1395
        %v4748 = vunpack.c.l.b16 %v1396
        %v4749 = vunpack.c.l.b16 %v1397
        %v4750 = vunpack.c.l.b16 %v1398
        %v4751 = vunpack.c.l.b16 %v1399
        %v4752 = vunpack.c.l.b16 %v1400
        %v4753 = vunpack.c.l.b16 %v1401
        %v4754 = vunpack.c.l.b16 %v1402
        %v4755 = vunpack.c.l.b16 %v1403
        %v4756 = vunpack.c.l.b16 %v1404
        %v4757 = vunpack.c.l.b16 %v1405
        %v4758 = vunpack.c.l.b16 %v1406
        %v4759 = vunpack.c.l.b16 %v1407
        %v4760 = vunpack.c.l.b16 %v1408
        %v4761 = vunpack.c.l.b16 %v1409
        %v4762 = vunpack.c.l.b16 %v1410
        %v4763 = vunpack.c.l.b16 %v1411
        %v4764 = vunpack.c.l.b16 %v1412
        %v4765 = vunpack.c.l.b16 %v1413
        %v4766 = vunpack.c.l.b16 %v1414
        %v4767 = vunpack.c.l.b16 %v1415
        %v4768 = vunpack.c.l.b16 %v1416
        %v4769 = vunpack.c.l.b16 %v1417
        %v4770 = vunpack.c.l.b16 %v1418
        %v4771 = vunpack.c.l.b16 %v1419
        %v4772 = vunpack.c.l.b16 %v1420
        %v4773 = vunpack.c.l.b16 %v1421
        %v4774 = vunpack.c.l.b16 %v1422
        %v4775 = vunpack.c.l.b16 %v1423
        %v4776 = vunpack.c.l.b16 %v1424
        %v4777 = vunpack.c.l.b16 %v1425
        %v4778 = vunpack.c.l.b16 %v1426
        %v4779 = vunpack.c.l.b16 %v1427
        %v4780 = vunpack.c.l.b16 %v1428
        %v4781 = vunpack.c.l.b16 %v1429
        %v4782 = vunpack.c.l.b16 %v1430
        %v4783 = vunpack.c.l.b16 %v1431
        %v4784 = vunpack.c.l.b16 %v1432
        %v4785 = vunpack.c.l.b16 %v1433
        %v4786 = vunpack.c.l.b16 %v1434
        %v4787 = vunpack.c.l.b16 %v1435
        %v4788 = vunpack.c.l.b16 %v1436
        %v4789 = vunpack.c.l.b16 %v1437
        %v4790 = vunpack.c.l.b16 %v1438
        %v4791 = vunpack.c.l.b16 %v1439
        %v4792 = vunpack.c.l.b16 %v1440
        %v4793 = vunpack.c.l.b16 %v1441
        %v4794 = vunpack.c.l.b16 %v1442
        %v4795 = vunpack.c.l.b16 %v1443
        %v4796 = vunpack.c.l.b16 %v1444
        %v4797 = vunpack.c.l.b16 %v1445
        %v4798 = vunpack.c.l.b16 %v1446
        %v4799 = vunpack.c.l.b16 %v1447
        %v4800 = vunpack.c.l.b16 %v1448
        %v4801 = vunpack.c.l.b16 %v1449
        %v4802 = vunpack.c.l.b16 %v1450
        %v4803 = vunpack.c.l.b16 %v1451
        %v4804 = vunpack.c.l.b16 %v1452
        %v4805 = vunpack.c.l.b16 %v1453
        %v4806 = vunpack.c.l.b16 %v1454
        %v4807 = vunpack.c.l.b16 %v1455
        %v4808 = vunpack.c.l.b16 %v1456
        %v4809 = vunpack.c.l.b16 %v1457
        %v4810 = vunpack.c.l.b16 %v1458
        %v4811 = vunpack.c.l.b16 %v1459
        %v4812 = vunpack.c.l.b16 %v1460
        %v4813 = vunpack.c.l.b16 %v1461
        %v4814 = vunpack.c.l.b16 %v1462
        %v4815 = vunpack.c.l.b16 %v1463
        %v4816 = vunpack.c.l.b16 %v1464
        %v4817 = vunpack.c.l.b16 %v1465
        %v4818 = vunpack.c.l.b16 %v1466
        %v4819 = vunpack.c.l.b16 %v1467
        %v4820 = vunpack.c.l.b16 %v1468
        %v4821 = vunpack.c.l.b16 %v1469
        %v4822 = vunpack.c.l.b16 %v1470
        %v4823 = vunpack.c.l.b16 %v1471
        %v4824 = vunpack.c.l.b16 %v1472
        %v4825 = vunpack.c.l.b16 %v1473
        %v4826 = vunpack.c.l.b16 %v1474
        %v4827 = vunpack.c.l.b16 %v1475
        %v4828 = vunpack.c.l.b16 %v1476
        %v4829 = vunpack.c.l.b16 %v1477
        %v4830 = vunpack.c.l.b16 %v1478
        %v4831 = vunpack.c.l.b16 %v1479
        %v4832 = vunpack.c.l.b16 %v1480
        %v4833 = vunpack.c.l.b16 %v1481
        %v4834 = vunpack.c.l.b16 %v1482
        %v4835 = vunpack.c.l.b16 %v1483
        %v4836 = vunpack.c.l.b16 %v1484
        %v4837 = vunpack.c.l.b16 %v1485
        %v4838 = vunpack.c.l.b16 %v1486
        %v4839 = vunpack.c.l.b16 %v1487
        %v4840 = vunpack.c.l.b16 %v1488
        %v4841 = vunpack.c.l.b16 %v1489
        %v4842 = vunpack.c.l.b16 %v1490
        %v4843 = vunpack.c.l.b16 %v1491
        %v4844 = vunpack.c.l.b16 %v1492
        %v4845 = vunpack.c.l.b16 %v1493
        %v4846 = vunpack.c.l.b16 %v1494
        %v4847 = vunpack.c.l.b16 %v1495
        %v4848 = vunpack.c.l.b16 %v1496
        %v4849 = vunpack.c.l.b16 %v1497
        %v4850 = vunpack.c.l.b16 %v1498
        %v4851 = vunpack.c.l.b16 %v1499
        %v4852 = vunpack.c.l.b16 %v1500
        %v4853 = vunpack.c.l.b16 %v1501
        %v4854 = vunpack.c.l.b16 %v1502
        %v4855 = vunpack.c.l.b16 %v1503
        %v4856 = vunpack.c.l.b16 %v1504
        %v4857 = vunpack.c.l.b16 %v1505
        %v4858 = vunpack.c.l.b16 %v1506
        %v4859 = vunpack.c.l.b16 %v1507
        %v4860 = vunpack.c.l.b16 %v1508
        %v4861 = vunpack.c.l.b16 %v1509
        %v4862 = vunpack.c.l.b16 %v1510
        %v4863 = vunpack.c.l.b16 %v1511
        %v4864 = vunpack.c.l.b16 %v1512
        %v4865 = vunpack.c.l.b16 %v1513
        %v4866 = vunpack.c.l.b16 %v1514
        %v4867 = vunpack.c.l.b16 %v1515
        %v4868 = vunpack.c.l.b16 %v1516
        %v4869 = vunpack.c.l.b16 %v1517
        %v4870 = vunpack.c.l.b16 %v1518
        %v4871 = vunpack.c.l.b16 %v1519
        %v4872 = vunpack.c.l.b16 %v1520
        %v4873 = vunpack.c.l.b16 %v1521
        %v4874 = vunpack.c.l.b16 %v1522
        %v4875 = vunpack.c.l.b16 %v1523
        %v4876 = vunpack.c.l.b16 %v1524
        %v4877 = vunpack.c.l.b16 %v1525
        %v4878 = vunpack.c.l.b16 %v1526
        %v4879 = vunpack.c.l.b16 %v1527
        %v4880 = vunpack.c.l.b16 %v1528
        %v4881 = vunpack.c.l.b16 %v1529
        %v4882 = vunpack.c.l.b16 %v1530
        %v4883 = vunpack.c.l.b16 %v1531
        %v4884 = vunpack.c.l.b16 %v1532
        %v4885 = vunpack.c.l.b16 %v1533
        %v4886 = vunpack.c.l.b16 %v1534
        %v4887 = vunpack.c.l.b16 %v1535
        %v4888 = vunpack.c.l.b16 %v1536
        %v4889 = vunpack.c.l.b16 %v1537
        %v4890 = vunpack.c.l.b16 %v1538
        %v4891 = vunpack.c.l.b16 %v1539
        %v4892 = vunpack.c.l.b16 %v1540
        %v4893 = vunpack.c.l.b16 %v1541
        %v4894 = vunpack.c.l.b16 %v1542
        %v4895 = vunpack.c.l.b16 %v1543
        %v4896 = vunpack.c.l.b16 %v1544
        %v4897 = vunpack.c.l.b16 %v1545
        %v4898 = vunpack.c.l.b16 %v1546
        %v4899 = vunpack.c.l.b16 %v1547
        %v4900 = vunpack.c.l.b16 %v1548
        %v4901 = vunpack.c.l.b16 %v1549
        %v4902 = vunpack.c.l.b16 %v1550
        %v4903 = vunpack.c.l.b16 %v1551
        %v4904 = vunpack.c.l.b16 %v1552
        %v4905 = vunpack.c.l.b16 %v1553
        %v4906 = vunpack.c.l.b16 %v1554
        %v4907 = vunpack.c.l.b16 %v1555
        %v4908 = vunpack.c.l.b16 %v1556
        %v4909 = vunpack.c.l.b16 %v1557
        %v4910 = vunpack.c.l.b16 %v1558
        %v4911 = vunpack.c.l.b16 %v1559
        %v4912 = vunpack.c.l.b16 %v1560
        %v4913 = vunpack.c.l.b16 %v1561
        %v4914 = vunpack.c.l.b16 %v1562
        %v4915 = vunpack.c.l.b16 %v1563
        %v4916 = vunpack.c.l.b16 %v1564
        %v4917 = vunpack.c.l.b16 %v1565
        %v4918 = vunpack.c.l.b16 %v1566
        %v4919 = vunpack.c.l.b16 %v1567
        %v4920 = vunpack.c.l.b16 %v1568
        %v4921 = vunpack.c.l.b16 %v1569
        %v4922 = vunpack.c.l.b16 %v1570
        %v4923 = vunpack.c.l.b16 %v1571
        %v4924 = vunpack.c.l.b16 %v1572
        %v4925 = vunpack.c.l.b16 %v1573
        %v4926 = vunpack.c.l.b16 %v1574
        %v4927 = vunpack.c.l.b16 %v1575
        %v4928 = vunpack.c.l.b16 %v1576
        %v4929 = vunpack.c.l.b16 %v1577
        %v4930 = vunpack.c.l.b16 %v1578
        %v4931 = vunpack.c.l.b16 %v1579
        %v4932 = vunpack.c.l.b16 %v1580
        %v4933 = vunpack.c.l.b16 %v1581
        %v4934 = vunpack.c.l.b16 %v1582
        %v4935 = vunpack.c.l.b16 %v1583
        %v4936 = vunpack.c.l.b16 %v1584
        %v4937 = vunpack.c.l.b16 %v1585
        %v4938 = vunpack.c.l.b16 %v1586
        %v4939 = vunpack.c.l.b16 %v1587
        %v4940 = vunpack.c.l.b16 %v1588
        %v4941 = vunpack.c.l.b16 %v1589
        %v4942 = vunpack.c.l.b16 %v1590
        %v4943 = vunpack.c.l.b16 %v1591
        %v4944 = vunpack.c.l.b16 %v1592
        %v4945 = vunpack.c.l.b16 %v1593
        %v4946 = vunpack.c.l.b16 %v1594
        %v4947 = vunpack.c.l.b16 %v1595
        %v4948 = vunpack.c.l.b16 %v1596
        %v4949 = vunpack.c.l.b16 %v1597
        %v4950 = vunpack.c.l.b16 %v1598
        %v4951 = vunpack.c.l.b16 %v1599
        %v4952 = vunpack.c.l.b16 %v1600
        %v4953 = vunpack.c.l.b16 %v1601
        %v4954 = vunpack.c.l.b16 %v1602
        %v4955 = vunpack.c.l.b16 %v1603
        %v4956 = vunpack.c.l.b16 %v1604
        %v4957 = vunpack.c.l.b16 %v1605
        %v4958 = vunpack.c.l.b16 %v1606
        %v4959 = vunpack.c.l.b16 %v1607
        %v4960 = vunpack.c.l.b16 %v1608
        %v4961 = vunpack.c.l.b16 %v1609
        %v4962 = vunpack.c.l.b16 %v1610
        %v4963 = vunpack.c.l.b16 %v1611
        %v4964 = vunpack.c.l.b16 %v1612
        %v4965 = vunpack.c.l.b16 %v1613
        %v4966 = vunpack.c.l.b16 %v1614
        %v4967 = vunpack.c.l.b16 %v1615
        %v4968 = vunpack.c.l.b16 %v1616
        %v4969 = vunpack.c.l.b16 %v1617
        %v4970 = vunpack.c.l.b16 %v1618
        %v4971 = vpack.c.b16 %v3612, %v3611
        %v4972 = vpack.c.b16 %v3614, %v3613
        %v4973 = vpack.c.b16 %v3616, %v3615
        %v4974 = vpack.c.b16 %v3618, %v3617
        %v4975 = vpack.c.b16 %v3620, %v3619
        %v4976 = vpack.c.b16 %v3622, %v3621
        %v4977 = vpack.c.b16 %v3624, %v3623
        %v4978 = vpack.c.b16 %v3626, %v3625
        %v4979 = vpack.c.b16 %v3628, %v3627
        %v4980 = vpack.c.b16 %v3630, %v3629
        %v4981 = vpack.c.b16 %v3632, %v3631
        %v4982 = vpack.c.b16 %v3634, %v3633
        %v4983 = vpack.c.b16 %v3636, %v3635
        %v4984 = vpack.c.b16 %v3638, %v3637
        %v4985 = vpack.c.b16 %v3640, %v3639
        %v4986 = vpack.c.b16 %v3642, %v3641
        %v4987 = vpack.c.b16 %v3644, %v3643
        %v4988 = vpack.c.b16 %v3646, %v3645
        %v4989 = vpack.c.b16 %v3648, %v3647
        %v4990 = vpack.c.b16 %v3650, %v3649
        %v4991 = vpack.c.b16 %v3652, %v3651
        %v4992 = vpack.c.b16 %v3654, %v3653
        %v4993 = vpack.c.b16 %v3656, %v3655
        %v4994 = vpack.c.b16 %v3658, %v3657
        %v4995 = vpack.c.b16 %v3660, %v3659
        %v4996 = vpack.c.b16 %v3662, %v3661
        %v4997 = vpack.c.b16 %v3664, %v3663
        %v4998 = vpack.c.b16 %v3666, %v3665
        %v4999 = vpack.c.b16 %v3668, %v3667
        %v5000 = vpack.c.b16 %v3670, %v3669
        %v5001 = vpack.c.b16 %v3672, %v3671
        %v5002 = vpack.c.b16 %v3674, %v3673
        %v5003 = vpack.c.b16 %v3676, %v3675
        %v5004 = vpack.c.b16 %v3678, %v3677
        %v5005 = vpack.c.b16 %v3680, %v3679
        %v5006 = vpack.c.b16 %v3682, %v3681
        %v5007 = vpack.c.b16 %v3684, %v3683
        %v5008 = vpack.c.b16 %v3686, %v3685
        %v5009 = vpack.c.b16 %v3688, %v3687
        %v5010 = vpack.c.b16 %v3690, %v3689
        %v5011 = vpack.c.b16 %v3692, %v3691
        %v5012 = vpack.c.b16 %v3694, %v3693
        %v5013 = vpack.c.b16 %v3696, %v3695
        %v5014 = vpack.c.b16 %v3698, %v3697
        %v5015 = vpack.c.b16 %v3700, %v3699
        %v5016 = vpack.c.b16 %v3702, %v3701
        %v5017 = vpack.c.b16 %v3704, %v3703
        %v5018 = vpack.c.b16 %v3706, %v3705
        %v5019 = vpack.c.b16 %v3708, %v3707
        %v5020 = vpack.c.b16 %v3710, %v3709
        %v5021 = vpack.c.b16 %v3712, %v3711
        %v5022 = vpack.c.b16 %v3714, %v3713
        %v5023 = vpack.c.b16 %v3716, %v3715
        %v5024 = vpack.c.b16 %v3718, %v3717
        %v5025 = vpack.c.b16 %v3720, %v3719
        %v5026 = vpack.c.b16 %v3722, %v3721
        %v5027 = vpack.c.b16 %v3724, %v3723
        %v5028 = vpack.c.b16 %v3726, %v3725
        %v5029 = vpack.c.b16 %v3728, %v3727
        %v5030 = vpack.c.b16 %v3730, %v3729
        %v5031 = vpack.c.b16 %v3732, %v3731
        %v5032 = vpack.c.b16 %v3734, %v3733
        %v5033 = vpack.c.b16 %v3736, %v3735
        %v5034 = vpack.c.b16 %v3738, %v3737
        %v5035 = vpack.c.b16 %v3740, %v3739
        %v5036 = vpack.c.b16 %v3742, %v3741
        %v5037 = vpack.c.b16 %v3744, %v3743
        %v5038 = vpack.c.b16 %v3746, %v3745
        %v5039 = vpack.c.b16 %v3748, %v3747
        %v5040 = vpack.c.b16 %v3750, %v3749
        %v5041 = vpack.c.b16 %v3752, %v3751
        %v5042 = vpack.c.b16 %v3754, %v3753
        %v5043 = vpack.c.b16 %v3756, %v3755
        %v5044 = vpack.c.b16 %v3758, %v3757
        %v5045 = vpack.c.b16 %v3760, %v3759
        %v5046 = vpack.c.b16 %v3762, %v3761
        %v5047 = vpack.c.b16 %v3764, %v3763
        %v5048 = vpack.c.b16 %v3766, %v3765
        %v5049 = vpack.c.b16 %v3768, %v3767
        %v5050 = vpack.c.b16 %v3770, %v3769
        %v5051 = vpack.c.b16 %v3772, %v3771
        %v5052 = vpack.c.b16 %v3774, %v3773
        %v5053 = vpack.c.b16 %v3776, %v3775
        %v5054 = vpack.c.b16 %v3778, %v3777
        %v5055 = vpack.c.b16 %v3780, %v3779
        %v5056 = vpack.c.b16 %v3782, %v3781
        %v5057 = vpack.c.b16 %v3784, %v3783
        %v5058 = vpack.c.b16 %v3786, %v3785
        %v5059 = vpack.c.b16 %v3788, %v3787
        %v5060 = vpack.c.b16 %v3790, %v3789
        %v5061 = vpack.c.b16 %v3792, %v3791
        %v5062 = vpack.c.b16 %v3794, %v3793
        %v5063 = vpack.c.b16 %v3796, %v3795
        %v5064 = vpack.c.b16 %v3798, %v3797
        %v5065 = vpack.c.b16 %v3800, %v3799
        %v5066 = vpack.c.b16 %v3802, %v3801
        %v5067 = vpack.c.b16 %v3804, %v3803
        %v5068 = vpack.c.b16 %v3806, %v3805
        %v5069 = vpack.c.b16 %v3808, %v3807
        %v5070 = vpack.c.b16 %v3810, %v3809
        %v5071 = vpack.c.b16 %v3812, %v3811
        %v5072 = vpack.c.b16 %v3814, %v3813
        %v5073 = vpack.c.b16 %v3816, %v3815
        %v5074 = vpack.c.b16 %v3818, %v3817
        %v5075 = vpack.c.b16 %v3820, %v3819
        %v5076 = vpack.c.b16 %v3822, %v3821
        %v5077 = vpack.c.b16 %v3824, %v3823
        %v5078 = vpack.c.b16 %v3826, %v3825
        %v5079 = vpack.c.b16 %v3828, %v3827
        %v5080 = vpack.c.b16 %v3830, %v3829
        %v5081 = vpack.c.b16 %v3832, %v3831
        %v5082 = vpack.c.b16 %v3834, %v3833
        %v5083 = vpack.c.b16 %v3836, %v3835
        %v5084 = vpack.c.b16 %v3838, %v3837
        %v5085 = vpack.c.b16 %v3840, %v3839
        %v5086 = vpack.c.b16 %v3842, %v3841
        %v5087 = vpack.c.b16 %v3844, %v3843
        %v5088 = vpack.c.b16 %v3846, %v3845
        %v5089 = vpack.c.b16 %v3848, %v3847
        %v5090 = vpack.c.b16 %v3850, %v3849
        %v5091 = vpack.c.b16 %v3852, %v3851
        %v5092 = vpack.c.b16 %v3854, %v3853
        %v5093 = vpack.c.b16 %v3856, %v3855
        %v5094 = vpack.c.b16 %v3858, %v3857
        %v5095 = vpack.c.b16 %v3860, %v3859
        %v5096 = vpack.c.b16 %v3862, %v3861
        %v5097 = vpack.c.b16 %v3864, %v3863
        %v5098 = vpack.c.b16 %v3866, %v3865
        %v5099 = vpack.c.b16 %v3868, %v3867
        %v5100 = vpack.c.b16 %v3870, %v3869
        %v5101 = vpack.c.b16 %v3872, %v3871
        %v5102 = vpack.c.b16 %v3874, %v3873
        %v5103 = vpack.c.b16 %v3876, %v3875
        %v5104 = vpack.c.b16 %v3878, %v3877
        %v5105 = vpack.c.b16 %v3880, %v3879
        %v5106 = vpack.c.b16 %v3882, %v3881
        %v5107 = vpack.c.b16 %v3884, %v3883
        %v5108 = vpack.c.b16 %v3886, %v3885
        %v5109 = vpack.c.b16 %v3888, %v3887
        %v5110 = vpack.c.b16 %v3890, %v3889
        %v5111 = vpack.c.b16 %v3892, %v3891
        %v5112 = vpack.c.b16 %v3894, %v3893
        %v5113 = vpack.c.b16 %v3896, %v3895
        %v5114 = vpack.c.b16 %v3898, %v3897
        %v5115 = vpack.c.b16 %v3900, %v3899
        %v5116 = vpack.c.b16 %v3902, %v3901
        %v5117 = vpack.c.b16 %v3904, %v3903
        %v5118 = vpack.c.b16 %v3906, %v3905
        %v5119 = vpack.c.b16 %v3908, %v3907
        %v5120 = vpack.c.b16 %v3910, %v3909
        %v5121 = vpack.c.b16 %v3912, %v3911
        %v5122 = vpack.c.b16 %v3914, %v3913
        %v5123 = vpack.c.b16 %v3916, %v3915
        %v5124 = vpack.c.b16 %v3918, %v3917
        %v5125 = vpack.c.b16 %v3920, %v3919
        %v5126 = vpack.c.b16 %v3922, %v3921
        %v5127 = vpack.c.b16 %v3924, %v3923
        %v5128 = vpack.c.b16 %v3926, %v3925
        %v5129 = vpack.c.b16 %v3928, %v3927
        %v5130 = vpack.c.b16 %v3930, %v3929
        %v5131 = vpack.c.b16 %v3932, %v3931
        %v5132 = vpack.c.b16 %v3934, %v3933
        %v5133 = vpack.c.b16 %v3936, %v3935
        %v5134 = vpack.c.b16 %v3938, %v3937
        %v5135 = vpack.c.b16 %v3940, %v3939
        %v5136 = vpack.c.b16 %v3942, %v3941
        %v5137 = vpack.c.b16 %v3944, %v3943
        %v5138 = vpack.c.b16 %v3946, %v3945
        %v5139 = vpack.c.b16 %v3948, %v3947
        %v5140 = vpack.c.b16 %v3950, %v3949
        %v5141 = vpack.c.b16 %v3952, %v3951
        %v5142 = vpack.c.b16 %v3954, %v3953
        %v5143 = vpack.c.b16 %v3956, %v3955
        %v5144 = vpack.c.b16 %v3958, %v3957
        %v5145 = vpack.c.b16 %v3960, %v3959
        %v5146 = vpack.c.b16 %v3962, %v3961
        %v5147 = vpack.c.b16 %v3964, %v3963
        %v5148 = vpack.c.b16 %v3966, %v3965
        %v5149 = vpack.c.b16 %v3968, %v3967
        %v5150 = vpack.c.b16 %v3970, %v3969
        %v5151 = vpack.c.b16 %v3972, %v3971
        %v5152 = vpack.c.b16 %v3974, %v3973
        %v5153 = vpack.c.b16 %v3976, %v3975
        %v5154 = vpack.c.b16 %v3978, %v3977
        %v5155 = vpack.c.b16 %v3980, %v3979
        %v5156 = vpack.c.b16 %v3982, %v3981
        %v5157 = vpack.c.b16 %v3984, %v3983
        %v5158 = vpack.c.b16 %v3986, %v3985
        %v5159 = vpack.c.b16 %v3988, %v3987
        %v5160 = vpack.c.b16 %v3990, %v3989
        %v5161 = vpack.c.b16 %v3992, %v3991
        %v5162 = vpack.c.b16 %v3994, %v3993
        %v5163 = vpack.c.b16 %v3996, %v3995
        %v5164 = vpack.c.b16 %v3998, %v3997
        %v5165 = vpack.c.b16 %v4000, %v3999
        %v5166 = vpack.c.b16 %v4002, %v4001
        %v5167 = vpack.c.b16 %v4004, %v4003
        %v5168 = vpack.c.b16 %v4006, %v4005
        %v5169 = vpack.c.b16 %v4008, %v4007
        %v5170 = vpack.c.b16 %v4010, %v4009
        %v5171 = vpack.c.b16 %v4012, %v4011
        %v5172 = vpack.c.b16 %v4014, %v4013
        %v5173 = vpack.c.b16 %v4016, %v4015
        %v5174 = vpack.c.b16 %v4018, %v4017
        %v5175 = vpack.c.b16 %v4020, %v4019
        %v5176 = vpack.c.b16 %v4022, %v4021
        %v5177 = vpack.c.b16 %v4024, %v4023
        %v5178 = vpack.c.b16 %v4026, %v4025
        %v5179 = vpack.c.b16 %v4028, %v4027
        %v5180 = vpack.c.b16 %v4030, %v4029
        %v5181 = vpack.c.b16 %v4032, %v4031
        %v5182 = vpack.c.b16 %v4034, %v4033
        %v5183 = vpack.c.b16 %v4036, %v4035
        %v5184 = vpack.c.b16 %v4038, %v4037
        %v5185 = vpack.c.b16 %v4040, %v4039
        %v5186 = vpack.c.b16 %v4042, %v4041
        %v5187 = vpack.c.b16 %v4044, %v4043
        %v5188 = vpack.c.b16 %v4046, %v4045
        %v5189 = vpack.c.b16 %v4048, %v4047
        %v5190 = vpack.c.b16 %v4050, %v4049
        %v5191 = vpack.c.b16 %v4052, %v4051
        %v5192 = vpack.c.b16 %v4054, %v4053
        %v5193 = vpack.c.b16 %v4056, %v4055
        %v5194 = vpack.c.b16 %v4058, %v4057
        %v5195 = vpack.c.b16 %v4060, %v4059
        %v5196 = vpack.c.b16 %v4062, %v4061
        %v5197 = vpack.c.b16 %v4064, %v4063
        %v5198 = vpack.c.b16 %v4066, %v4065
        %v5199 = vpack.c.b16 %v4068, %v4067
        %v5200 = vpack.c.b16 %v4070, %v4069
        %v5201 = vpack.c.b16 %v4072, %v4071
        %v5202 = vpack.c.b16 %v4074, %v4073
        %v5203 = vpack.c.b16 %v4076, %v4075
        %v5204 = vpack.c.b16 %v4078, %v4077
        %v5205 = vpack.c.b16 %v4080, %v4079
        %v5206 = vpack.c.b16 %v4082, %v4081
        %v5207 = vpack.c.b16 %v4084, %v4083
        %v5208 = vpack.c.b16 %v4086, %v4085
        %v5209 = vpack.c.b16 %v4088, %v4087
        %v5210 = vpack.c.b16 %v4090, %v4089
        %v5211 = vpack.c.b16 %v4092, %v4091
        %v5212 = vpack.c.b16 %v4094, %v4093
        %v5213 = vpack.c.b16 %v4096, %v4095
        %v5214 = vpack.c.b16 %v4098, %v4097
        %v5215 = vpack.c.b16 %v4100, %v4099
        %v5216 = vpack.c.b16 %v4102, %v4101
        %v5217 = vpack.c.b16 %v4104, %v4103
        %v5218 = vpack.c.b16 %v4106, %v4105
        %v5219 = vpack.c.b16 %v4108, %v4107
        %v5220 = vpack.c.b16 %v4110, %v4109
        %v5221 = vpack.c.b16 %v4112, %v4111
        %v5222 = vpack.c.b16 %v4114, %v4113
        %v5223 = vpack.c.b16 %v4116, %v4115
        %v5224 = vpack.c.b16 %v4118, %v4117
        %v5225 = vpack.c.b16 %v4120, %v4119
        %v5226 = vpack.c.b16 %v4122, %v4121
        %v5227 = vpack.c.b16 %v4124, %v4123
        %v5228 = vpack.c.b16 %v4126, %v4125
        %v5229 = vpack.c.b16 %v4128, %v4127
        %v5230 = vpack.c.b16 %v4130, %v4129
        %v5231 = vpack.c.b16 %v4132, %v4131
        %v5232 = vpack.c.b16 %v4134, %v4133
        %v5233 = vpack.c.b16 %v4136, %v4135
        %v5234 = vpack.c.b16 %v4138, %v4137
        %v5235 = vpack.c.b16 %v4140, %v4139
        %v5236 = vpack.c.b16 %v4142, %v4141
        %v5237 = vpack.c.b16 %v4144, %v4143
        %v5238 = vpack.c.b16 %v4146, %v4145
        %v5239 = vpack.c.b16 %v4148, %v4147
        %v5240 = vpack.c.b16 %v4150, %v4149
        %v5241 = vpack.c.b16 %v4152, %v4151
        %v5242 = vpack.c.b16 %v4154, %v4153
        %v5243 = vpack.c.b16 %v4156, %v4155
        %v5244 = vpack.c.b16 %v4158, %v4157
        %v5245 = vpack.c.b16 %v4160, %v4159
        %v5246 = vpack.c.b16 %v4162, %v4161
        %v5247 = vpack.c.b16 %v4164, %v4163
        %v5248 = vpack.c.b16 %v4166, %v4165
        %v5249 = vpack.c.b16 %v4168, %v4167
        %v5250 = vpack.c.b16 %v4170, %v4169
        %v5251 = vpack.c.b16 %v4172, %v4171
        %v5252 = vpack.c.b16 %v4174, %v4173
        %v5253 = vpack.c.b16 %v4176, %v4175
        %v5254 = vpack.c.b16 %v4178, %v4177
        %v5255 = vpack.c.b16 %v4180, %v4179
        %v5256 = vpack.c.b16 %v4182, %v4181
        %v5257 = vpack.c.b16 %v4184, %v4183
        %v5258 = vpack.c.b16 %v4186, %v4185
        %v5259 = vpack.c.b16 %v4188, %v4187
        %v5260 = vpack.c.b16 %v4190, %v4189
        %v5261 = vpack.c.b16 %v4192, %v4191
        %v5262 = vpack.c.b16 %v4194, %v4193
        %v5263 = vpack.c.b16 %v4196, %v4195
        %v5264 = vpack.c.b16 %v4198, %v4197
        %v5265 = vpack.c.b16 %v4200, %v4199
        %v5266 = vpack.c.b16 %v4202, %v4201
        %v5267 = vpack.c.b16 %v4204, %v4203
        %v5268 = vpack.c.b16 %v4206, %v4205
        %v5269 = vpack.c.b16 %v4208, %v4207
        %v5270 = vpack.c.b16 %v4210, %v4209
        %v5271 = vpack.c.b16 %v4212, %v4211
        %v5272 = vpack.c.b16 %v4214, %v4213
        %v5273 = vpack.c.b16 %v4216, %v4215
        %v5274 = vpack.c.b16 %v4218, %v4217
        %v5275 = vpack.c.b16 %v4220, %v4219
        %v5276 = vpack.c.b16 %v4222, %v4221
        %v5277 = vpack.c.b16 %v4224, %v4223
        %v5278 = vpack.c.b16 %v4226, %v4225
        %v5279 = vpack.c.b16 %v4228, %v4227
        %v5280 = vpack.c.b16 %v4230, %v4229
        %v5281 = vpack.c.b16 %v4232, %v4231
        %v5282 = vpack.c.b16 %v4234, %v4233
        %v5283 = vpack.c.b16 %v4236, %v4235
        %v5284 = vpack.c.b16 %v4238, %v4237
        %v5285 = vpack.c.b16 %v4240, %v4239
        %v5286 = vpack.c.b16 %v4242, %v4241
        %v5287 = vpack.c.b16 %v4244, %v4243
        %v5288 = vpack.c.b16 %v4246, %v4245
        %v5289 = vpack.c.b16 %v4248, %v4247
        %v5290 = vpack.c.b16 %v4250, %v4249
        %v5291 = vpack.c.b16 %v4252, %v4251
        %v5292 = vpack.c.b16 %v4254, %v4253
        %v5293 = vpack.c.b16 %v4256, %v4255
        %v5294 = vpack.c.b16 %v4258, %v4257
        %v5295 = vpack.c.b16 %v4260, %v4259
        %v5296 = vpack.c.b16 %v4262, %v4261
        %v5297 = vpack.c.b16 %v4264, %v4263
        %v5298 = vpack.c.b16 %v4266, %v4265
        %v5299 = vpack.c.b16 %v4268, %v4267
        %v5300 = vpack.c.b16 %v4270, %v4269
        %v5301 = vpack.c.b16 %v4272, %v4271
        %v5302 = vpack.c.b16 %v4274, %v4273
        %v5303 = vpack.c.b16 %v4276, %v4275
        %v5304 = vpack.c.b16 %v4278, %v4277
        %v5305 = vpack.c.b16 %v4280, %v4279
        %v5306 = vpack.c.b16 %v4282, %v4281
        %v5307 = vpack.c.b16 %v4284, %v4283
        %v5308 = vpack.c.b16 %v4286, %v4285
        %v5309 = vpack.c.b16 %v4288, %v4287
        %v5310 = vpack.c.b16 %v4290, %v4289
        %v5311 = vpack.c.b16 %v4292, %v4291
        %v5312 = vpack.c.b16 %v4294, %v4293
        %v5313 = vpack.c.b16 %v4296, %v4295
        %v5314 = vpack.c.b16 %v4298, %v4297
        %v5315 = vpack.c.b16 %v4300, %v4299
        %v5316 = vpack.c.b16 %v4302, %v4301
        %v5317 = vpack.c.b16 %v4304, %v4303
        %v5318 = vpack.c.b16 %v4306, %v4305
        %v5319 = vpack.c.b16 %v4308, %v4307
        %v5320 = vpack.c.b16 %v4310, %v4309
        %v5321 = vpack.c.b16 %v4312, %v4311
        %v5322 = vpack.c.b16 %v4314, %v4313
        %v5323 = vpack.c.b16 %v4316, %v4315
        %v5324 = vpack.c.b16 %v4318, %v4317
        %v5325 = vpack.c.b16 %v4320, %v4319
        %v5326 = vpack.c.b16 %v4322, %v4321
        %v5327 = vpack.c.b16 %v4324, %v4323
        %v5328 = vpack.c.b16 %v4326, %v4325
        %v5329 = vpack.c.b16 %v4328, %v4327
        %v5330 = vpack.c.b16 %v4330, %v4329
        %v5331 = vpack.c.b16 %v4332, %v4331
        %v5332 = vpack.c.b16 %v4334, %v4333
        %v5333 = vpack.c.b16 %v4336, %v4335
        %v5334 = vpack.c.b16 %v4338, %v4337
        %v5335 = vpack.c.b16 %v4340, %v4339
        %v5336 = vpack.c.b16 %v4342, %v4341
        %v5337 = vpack.c.b16 %v4344, %v4343
        %v5338 = vpack.c.b16 %v4346, %v4345
        %v5339 = vpack.c.b16 %v4348, %v4347
        %v5340 = vpack.c.b16 %v4350, %v4349
        %v5341 = vpack.c.b16 %v4352, %v4351
        %v5342 = vpack.c.b16 %v4354, %v4353
        %v5343 = vpack.c.b16 %v4356, %v4355
        %v5344 = vpack.c.b16 %v4358, %v4357
        %v5345 = vpack.c.b16 %v4360, %v4359
        %v5346 = vpack.c.b16 %v4362, %v4361
        %v5347 = vpack.c.b16 %v4364, %v4363
        %v5348 = vpack.c.b16 %v4366, %v4365
        %v5349 = vpack.c.b16 %v4368, %v4367
        %v5350 = vpack.c.b16 %v4370, %v4369
        %v5351 = vpack.c.b16 %v4372, %v4371
        %v5352 = vpack.c.b16 %v4374, %v4373
        %v5353 = vpack.c.b16 %v4376, %v4375
        %v5354 = vpack.c.b16 %v4378, %v4377
        %v5355 = vpack.c.b16 %v4380, %v4379
        %v5356 = vpack.c.b16 %v4382, %v4381
        %v5357 = vpack.c.b16 %v4384, %v4383
        %v5358 = vpack.c.b16 %v4386, %v4385
        %v5359 = vpack.c.b16 %v4388, %v4387
        %v5360 = vpack.c.b16 %v4390, %v4389
        %v5361 = vpack.c.b16 %v4392, %v4391
        %v5362 = vpack.c.b16 %v4394, %v4393
        %v5363 = vpack.c.b16 %v4396, %v4395
        %v5364 = vpack.c.b16 %v4398, %v4397
        %v5365 = vpack.c.b16 %v4400, %v4399
        %v5366 = vpack.c.b16 %v4402, %v4401
        %v5367 = vpack.c.b16 %v4404, %v4403
        %v5368 = vpack.c.b16 %v4406, %v4405
        %v5369 = vpack.c.b16 %v4408, %v4407
        %v5370 = vpack.c.b16 %v4410, %v4409
        %v5371 = vpack.c.b16 %v4412, %v4411
        %v5372 = vpack.c.b16 %v4414, %v4413
        %v5373 = vpack.c.b16 %v4416, %v4415
        %v5374 = vpack.c.b16 %v4418, %v4417
        %v5375 = vpack.c.b16 %v4420, %v4419
        %v5376 = vpack.c.b16 %v4422, %v4421
        %v5377 = vpack.c.b16 %v4424, %v4423
        %v5378 = vpack.c.b16 %v4426, %v4425
        %v5379 = vpack.c.b16 %v4428, %v4427
        %v5380 = vpack.c.b16 %v4430, %v4429
        %v5381 = vpack.c.b16 %v4432, %v4431
        %v5382 = vpack.c.b16 %v4434, %v4433
        %v5383 = vpack.c.b16 %v4436, %v4435
        %v5384 = vpack.c.b16 %v4438, %v4437
        %v5385 = vpack.c.b16 %v4440, %v4439
        %v5386 = vpack.c.b16 %v4442, %v4441
        %v5387 = vpack.c.b16 %v4444, %v4443
        %v5388 = vpack.c.b16 %v4446, %v4445
        %v5389 = vpack.c.b16 %v4448, %v4447
        %v5390 = vpack.c.b16 %v4450, %v4449
        %v5391 = vpack.c.b16 %v4452, %v4451
        %v5392 = vpack.c.b16 %v4454, %v4453
        %v5393 = vpack.c.b16 %v4456, %v4455
        %v5394 = vpack.c.b16 %v4458, %v4457
        %v5395 = vpack.c.b16 %v4460, %v4459
        %v5396 = vpack.c.b16 %v4462, %v4461
        %v5397 = vpack.c.b16 %v4464, %v4463
        %v5398 = vpack.c.b16 %v4466, %v4465
        %v5399 = vpack.c.b16 %v4468, %v4467
        %v5400 = vpack.c.b16 %v4470, %v4469
        %v5401 = vpack.c.b16 %v4472, %v4471
        %v5402 = vpack.c.b16 %v4474, %v4473
        %v5403 = vpack.c.b16 %v4476, %v4475
        %v5404 = vpack.c.b16 %v4478, %v4477
        %v5405 = vpack.c.b16 %v4480, %v4479
        %v5406 = vpack.c.b16 %v4482, %v4481
        %v5407 = vpack.c.b16 %v4484, %v4483
        %v5408 = vpack.c.b16 %v4486, %v4485
        %v5409 = vpack.c.b16 %v4488, %v4487
        %v5410 = vpack.c.b16 %v4490, %v4489
        %v5411 = vpack.c.b16 %v4492, %v4491
        %v5412 = vpack.c.b16 %v4494, %v4493
        %v5413 = vpack.c.b16 %v4496, %v4495
        %v5414 = vpack.c.b16 %v4498, %v4497
        %v5415 = vpack.c.b16 %v4500, %v4499
        %v5416 = vpack.c.b16 %v4502, %v4501
        %v5417 = vpack.c.b16 %v4504, %v4503
        %v5418 = vpack.c.b16 %v4506, %v4505
        %v5419 = vpack.c.b16 %v4508, %v4507
        %v5420 = vpack.c.b16 %v4510, %v4509
        %v5421 = vpack.c.b16 %v4512, %v4511
        %v5422 = vpack.c.b16 %v4514, %v4513
        %v5423 = vpack.c.b16 %v4516, %v4515
        %v5424 = vpack.c.b16 %v4518, %v4517
        %v5425 = vpack.c.b16 %v4520, %v4519
        %v5426 = vpack.c.b16 %v4522, %v4521
        %v5427 = vpack.c.b16 %v4524, %v4523
        %v5428 = vpack.c.b16 %v4526, %v4525
        %v5429 = vpack.c.b16 %v4528, %v4527
        %v5430 = vpack.c.b16 %v4530, %v4529
        %v5431 = vpack.c.b16 %v4532, %v4531
        %v5432 = vpack.c.b16 %v4534, %v4533
        %v5433 = vpack.c.b16 %v4536, %v4535
        %v5434 = vpack.c.b16 %v4538, %v4537
        %v5435 = vpack.c.b16 %v4540, %v4539
        %v5436 = vpack.c.b16 %v4542, %v4541
        %v5437 = vpack.c.b16 %v4544, %v4543
        %v5438 = vpack.c.b16 %v4546, %v4545
        %v5439 = vpack.c.b16 %v4548, %v4547
        %v5440 = vpack.c.b16 %v4550, %v4549
        %v5441 = vpack.c.b16 %v4552, %v4551
        %v5442 = vpack.c.b16 %v4554, %v4553
        %v5443 = vpack.c.b16 %v4556, %v4555
        %v5444 = vpack.c.b16 %v4558, %v4557
        %v5445 = vpack.c.b16 %v4560, %v4559
        %v5446 = vpack.c.b16 %v4562, %v4561
        %v5447 = vpack.c.b16 %v4564, %v4563
        %v5448 = vpack.c.b16 %v4566, %v4565
        %v5449 = vpack.c.b16 %v4568, %v4567
        %v5450 = vpack.c.b16 %v4570, %v4569
        %v5451 = vpack.c.b16 %v4572, %v4571
        %v5452 = vpack.c.b16 %v4574, %v4573
        %v5453 = vpack.c.b16 %v4576, %v4575
        %v5454 = vpack.c.b16 %v4578, %v4577
        %v5455 = vpack.c.b16 %v4580, %v4579
        %v5456 = vpack.c.b16 %v4582, %v4581
        %v5457 = vpack.c.b16 %v4584, %v4583
        %v5458 = vpack.c.b16 %v4586, %v4585
        %v5459 = vpack.c.b16 %v4588, %v4587
        %v5460 = vpack.c.b16 %v4590, %v4589
        %v5461 = vpack.c.b16 %v4592, %v4591
        %v5462 = vpack.c.b16 %v4594, %v4593
        %v5463 = vpack.c.b16 %v4596, %v4595
        %v5464 = vpack.c.b16 %v4598, %v4597
        %v5465 = vpack.c.b16 %v4600, %v4599
        %v5466 = vpack.c.b16 %v4602, %v4601
        %v5467 = vpack.c.b16 %v4604, %v4603
        %v5468 = vpack.c.b16 %v4606, %v4605
        %v5469 = vpack.c.b16 %v4608, %v4607
        %v5470 = vpack.c.b16 %v4610, %v4609
        %v5471 = vpack.c.b16 %v4612, %v4611
        %v5472 = vpack.c.b16 %v4614, %v4613
        %v5473 = vpack.c.b16 %v4616, %v4615
        %v5474 = vpack.c.b16 %v4618, %v4617
        %v5475 = vpack.c.b16 %v4620, %v4619
        %v5476 = vpack.c.b16 %v4622, %v4621
        %v5477 = vpack.c.b16 %v4624, %v4623
        %v5478 = vpack.c.b16 %v4626, %v4625
        %v5479 = vpack.c.b16 %v4628, %v4627
        %v5480 = vpack.c.b16 %v4630, %v4629
        %v5481 = vpack.c.b16 %v4632, %v4631
        %v5482 = vpack.c.b16 %v4634, %v4633
        %v5483 = vpack.c.b16 %v4636, %v4635
        %v5484 = vpack.c.b16 %v4638, %v4637
        %v5485 = vpack.c.b16 %v4640, %v4639
        %v5486 = vpack.c.b16 %v4642, %v4641
        %v5487 = vpack.c.b16 %v4644, %v4643
        %v5488 = vpack.c.b16 %v4646, %v4645
        %v5489 = vpack.c.b16 %v4648, %v4647
        %v5490 = vpack.c.b16 %v4650, %v4649
        %v5491 = vpack.c.b16 %v4652, %v4651
        %v5492 = vpack.c.b16 %v4654, %v4653
        %v5493 = vpack.c.b16 %v4656, %v4655
        %v5494 = vpack.c.b16 %v4658, %v4657
        %v5495 = vpack.c.b16 %v4660, %v4659
        %v5496 = vpack.c.b16 %v4662, %v4661
        %v5497 = vpack.c.b16 %v4664, %v4663
        %v5498 = vpack.c.b16 %v4666, %v4665
        %v5499 = vpack.c.b16 %v4668, %v4667
        %v5500 = vpack.c.b16 %v4670, %v4669
        %v5501 = vpack.c.b16 %v4672, %v4671
        %v5502 = vpack.c.b16 %v4674, %v4673
        %v5503 = vpack.c.b16 %v4676, %v4675
        %v5504 = vpack.c.b16 %v4678, %v4677
        %v5505 = vpack.c.b16 %v4680, %v4679
        %v5506 = vpack.c.b16 %v4682, %v4681
        %v5507 = vpack.c.b16 %v4684, %v4683
        %v5508 = vpack.c.b16 %v4686, %v4685
        %v5509 = vpack.c.b16 %v4688, %v4687
        %v5510 = vpack.c.b16 %v4690, %v4689
        %v5511 = vpack.c.b16 %v4692, %v4691
        %v5512 = vpack.c.b16 %v4694, %v4693
        %v5513 = vpack.c.b16 %v4696, %v4695
        %v5514 = vpack.c.b16 %v4698, %v4697
        %v5515 = vpack.c.b16 %v4700, %v4699
        %v5516 = vpack.c.b16 %v4702, %v4701
        %v5517 = vpack.c.b16 %v4704, %v4703
        %v5518 = vpack.c.b16 %v4706, %v4705
        %v5519 = vpack.c.b16 %v4708, %v4707
        %v5520 = vpack.c.b16 %v4710, %v4709
        %v5521 = vpack.c.b16 %v4712, %v4711
        %v5522 = vpack.c.b16 %v4714, %v4713
        %v5523 = vpack.c.b16 %v4716, %v4715
        %v5524 = vpack.c.b16 %v4718, %v4717
        %v5525 = vpack.c.b16 %v4720, %v4719
        %v5526 = vpack.c.b16 %v4722, %v4721
        %v5527 = vpack.c.b16 %v4724, %v4723
        %v5528 = vpack.c.b16 %v4726, %v4725
        %v5529 = vpack.c.b16 %v4728, %v4727
        %v5530 = vpack.c.b16 %v4730, %v4729
        %v5531 = vpack.c.b16 %v4732, %v4731
        %v5532 = vpack.c.b16 %v4734, %v4733
        %v5533 = vpack.c.b16 %v4736, %v4735
        %v5534 = vpack.c.b16 %v4738, %v4737
        %v5535 = vpack.c.b16 %v4740, %v4739
        %v5536 = vpack.c.b16 %v4742, %v4741
        %v5537 = vpack.c.b16 %v4744, %v4743
        %v5538 = vpack.c.b16 %v4746, %v4745
        %v5539 = vpack.c.b16 %v4748, %v4747
        %v5540 = vpack.c.b16 %v4750, %v4749
        %v5541 = vpack.c.b16 %v4752, %v4751
        %v5542 = vpack.c.b16 %v4754, %v4753
        %v5543 = vpack.c.b16 %v4756, %v4755
        %v5544 = vpack.c.b16 %v4758, %v4757
        %v5545 = vpack.c.b16 %v4760, %v4759
        %v5546 = vpack.c.b16 %v4762, %v4761
        %v5547 = vpack.c.b16 %v4764, %v4763
        %v5548 = vpack.c.b16 %v4766, %v4765
        %v5549 = vpack.c.b16 %v4768, %v4767
        %v5550 = vpack.c.b16 %v4770, %v4769
        %v5551 = vpack.c.b16 %v4772, %v4771
        %v5552 = vpack.c.b16 %v4774, %v4773
        %v5553 = vpack.c.b16 %v4776, %v4775
        %v5554 = vpack.c.b16 %v4778, %v4777
        %v5555 = vpack.c.b16 %v4780, %v4779
        %v5556 = vpack.c.b16 %v4782, %v4781
        %v5557 = vpack.c.b16 %v4784, %v4783
        %v5558 = vpack.c.b16 %v4786, %v4785
        %v5559 = vpack.c.b16 %v4788, %v4787
        %v5560 = vpack.c.b16 %v4790, %v4789
        %v5561 = vpack.c.b16 %v4792, %v4791
        %v5562 = vpack.c.b16 %v4794, %v4793
        %v5563 = vpack.c.b16 %v4796, %v4795
        %v5564 = vpack.c.b16 %v4798, %v4797
        %v5565 = vpack.c.b16 %v4800, %v4799
        %v5566 = vpack.c.b16 %v4802, %v4801
        %v5567 = vpack.c.b16 %v4804, %v4803
        %v5568 = vpack.c.b16 %v4806, %v4805
        %v5569 = vpack.c.b16 %v4808, %v4807
        %v5570 = vpack.c.b16 %v4810, %v4809
        %v5571 = vpack.c.b16 %v4812, %v4811
        %v5572 = vpack.c.b16 %v4814, %v4813
        %v5573 = vpack.c.b16 %v4816, %v4815
        %v5574 = vpack.c.b16 %v4818, %v4817
        %v5575 = vpack.c.b16 %v4820, %v4819
        %v5576 = vpack.c.b16 %v4822, %v4821
        %v5577 = vpack.c.b16 %v4824, %v4823
        %v5578 = vpack.c.b16 %v4826, %v4825
        %v5579 = vpack.c.b16 %v4828, %v4827
        %v5580 = vpack.c.b16 %v4830, %v4829
        %v5581 = vpack.c.b16 %v4832, %v4831
        %v5582 = vpack.c.b16 %v4834, %v4833
        %v5583 = vpack.c.b16 %v4836, %v4835
        %v5584 = vpack.c.b16 %v4838, %v4837
        %v5585 = vpack.c.b16 %v4840, %v4839
        %v5586 = vpack.c.b16 %v4842, %v4841
        %v5587 = vpack.c.b16 %v4844, %v4843
        %v5588 = vpack.c.b16 %v4846, %v4845
        %v5589 = vpack.c.b16 %v4848, %v4847
        %v5590 = vpack.c.b16 %v4850, %v4849
        %v5591 = vpack.c.b16 %v4852, %v4851
        %v5592 = vpack.c.b16 %v4854, %v4853
        %v5593 = vpack.c.b16 %v4856, %v4855
        %v5594 = vpack.c.b16 %v4858, %v4857
        %v5595 = vpack.c.b16 %v4860, %v4859
        %v5596 = vpack.c.b16 %v4862, %v4861
        %v5597 = vpack.c.b16 %v4864, %v4863
        %v5598 = vpack.c.b16 %v4866, %v4865
        %v5599 = vpack.c.b16 %v4868, %v4867
        %v5600 = vpack.c.b16 %v4870, %v4869
        %v5601 = vpack.c.b16 %v4872, %v4871
        %v5602 = vpack.c.b16 %v4874, %v4873
        %v5603 = vpack.c.b16 %v4876, %v4875
        %v5604 = vpack.c.b16 %v4878, %v4877
        %v5605 = vpack.c.b16 %v4880, %v4879
        %v5606 = vpack.c.b16 %v4882, %v4881
        %v5607 = vpack.c.b16 %v4884, %v4883
        %v5608 = vpack.c.b16 %v4886, %v4885
        %v5609 = vpack.c.b16 %v4888, %v4887
        %v5610 = vpack.c.b16 %v4890, %v4889
        %v5611 = vpack.c.b16 %v4892, %v4891
        %v5612 = vpack.c.b16 %v4894, %v4893
        %v5613 = vpack.c.b16 %v4896, %v4895
        %v5614 = vpack.c.b16 %v4898, %v4897
        %v5615 = vpack.c.b16 %v4900, %v4899
        %v5616 = vpack.c.b16 %v4902, %v4901
        %v5617 = vpack.c.b16 %v4904, %v4903
        %v5618 = vpack.c.b16 %v4906, %v4905
        %v5619 = vpack.c.b16 %v4908, %v4907
        %v5620 = vpack.c.b16 %v4910, %v4909
        %v5621 = vpack.c.b16 %v4912, %v4911
        %v5622 = vpack.c.b16 %v4914, %v4913
        %v5623 = vpack.c.b16 %v4916, %v4915
        %v5624 = vpack.c.b16 %v4918, %v4917
        %v5625 = vpack.c.b16 %v4920, %v4919
        %v5626 = vpack.c.b16 %v4922, %v4921
        %v5627 = vpack.c.b16 %v4924, %v4923
        %v5628 = vpack.c.b16 %v4926, %v4925
        %v5629 = vpack.c.b16 %v4928, %v4927
        %v5630 = vpack.c.b16 %v4930, %v4929
        %v5631 = vpack.c.b16 %v4932, %v4931
        %v5632 = vpack.c.b16 %v4934, %v4933
        %v5633 = vpack.c.b16 %v4936, %v4935
        %v5634 = vpack.c.b16 %v4938, %v4937
        %v5635 = vpack.c.b16 %v4940, %v4939
        %v5636 = vpack.c.b16 %v4942, %v4941
        %v5637 = vpack.c.b16 %v4944, %v4943
        %v5638 = vpack.c.b16 %v4946, %v4945
        %v5639 = vpack.c.b16 %v4948, %v4947
        %v5640 = vpack.c.b16 %v4950, %v4949
        %v5641 = vpack.c.b16 %v4952, %v4951
        %v5642 = vpack.c.b16 %v4954, %v4953
        %v5643 = vpack.c.b16 %v4956, %v4955
        %v5644 = vpack.c.b16 %v4958, %v4957
        %v5645 = vpack.c.b16 %v4960, %v4959
        %v5646 = vpack.c.b16 %v4962, %v4961
        %v5647 = vpack.c.b16 %v4964, %v4963
        %v5648 = vpack.c.b16 %v4966, %v4965
        %v5649 = vpack.c.b16 %v4968, %v4967
        %v5650 = vpack.c.b16 %v4970, %v4969
        %6331 = vmatprep.subr.bf16.mxu0 0
        %6332 = vmatpush1.bf16.msra.mxu0 %v4971
        %6333 = vmatprep.subr.bf16.mxu0 0
        %6334 = vmatpush1.bf16.msra.mxu0 %v4972
        %6335 = vmatprep.subr.bf16.mxu0 0
        %6336 = vmatpush1.bf16.msra.mxu0 %v4973
        %6337 = vmatprep.subr.bf16.mxu0 0
        %6338 = vmatpush1.bf16.msra.mxu0 %v4974
        %6339 = vmatprep.subr.bf16.mxu0 0
        %6340 = vmatpush1.bf16.msra.mxu0 %v4975
        %6341 = vmatprep.subr.bf16.mxu0 0
        %6342 = vmatpush1.bf16.msra.mxu0 %v4976
        %6343 = vmatprep.subr.bf16.mxu0 0
        %6344 = vmatpush1.bf16.msra.mxu0 %v4977
        %6345 = vmatprep.subr.bf16.mxu0 0
        %6346 = vmatpush1.bf16.msra.mxu0 %v4978
        %6347 = vmatprep.subr.bf16.mxu0 0
        %6348 = vmatpush1.bf16.msra.mxu0 %v4979
        %6349 = vmatprep.subr.bf16.mxu0 0
        %6350 = vmatpush1.bf16.msra.mxu0 %v4980
        %6351 = vmatprep.subr.bf16.mxu0 0
        %6352 = vmatpush1.bf16.msra.mxu0 %v4981
        %6353 = vmatprep.subr.bf16.mxu0 0
        %6354 = vmatpush1.bf16.msra.mxu0 %v4982
        %6355 = vmatprep.subr.bf16.mxu0 0
        %6356 = vmatpush1.bf16.msra.mxu0 %v4983
        %6357 = vmatprep.subr.bf16.mxu0 0
        %6358 = vmatpush1.bf16.msra.mxu0 %v4984
        %6359 = vmatprep.subr.bf16.mxu0 0
        %6360 = vmatpush1.bf16.msra.mxu0 %v4985
        %6361 = vmatprep.subr.bf16.mxu0 0
        %6362 = vmatpush1.bf16.msra.mxu0 %v4986
        %6363 = vmatprep.mubr.bf16.mxu0 %v1674
        %6364 = vmatmul.mubr.bf16.gmra.mrb[0].mxu0 %v1660
        %v6365 = vpop.f32.mrb[0].mxu0
        %v6366 = vadd.f32 %v1624, %v6365
        %v6367 = vpop.f32.mrb[0].mxu0
        %v6368 = vpop.f32.mrb[0].mxu0
        %v6369 = vpop.f32.mrb[0].mxu0
        %6370 = vdwg.mxu0
        %6371 = vmatprep.subr.bf16.mxu0 0
        %6372 = vmatpush1.bf16.msra.mxu0 %v4987
        %6373 = vmatprep.subr.bf16.mxu0 0
        %6374 = vmatpush1.bf16.msra.mxu0 %v4988
        %6375 = vmatprep.subr.bf16.mxu0 0
        %6376 = vmatpush1.bf16.msra.mxu0 %v4989
        %6377 = vmatprep.subr.bf16.mxu0 0
        %6378 = vmatpush1.bf16.msra.mxu0 %v4990
        %6379 = vmatprep.subr.bf16.mxu0 0
        %6380 = vmatpush1.bf16.msra.mxu0 %v4991
        %6381 = vmatprep.subr.bf16.mxu0 0
        %6382 = vmatpush1.bf16.msra.mxu0 %v4992
        %6383 = vmatprep.subr.bf16.mxu0 0
        %6384 = vmatpush1.bf16.msra.mxu0 %v4993
        %6385 = vmatprep.subr.bf16.mxu0 0
        %6386 = vmatpush1.bf16.msra.mxu0 %v4994
        %6387 = vmatprep.subr.bf16.mxu0 0
        %6388 = vmatpush1.bf16.msra.mxu0 %v4995
        %6389 = vmatprep.subr.bf16.mxu0 0
        %6390 = vmatpush1.bf16.msra.mxu0 %v4996
        %6391 = vmatprep.subr.bf16.mxu0 0
        %6392 = vmatpush1.bf16.msra.mxu0 %v4997
        %6393 = vmatprep.subr.bf16.mxu0 0
        %6394 = vmatpush1.bf16.msra.mxu0 %v4998
        %6395 = vmatprep.subr.bf16.mxu0 0
        %6396 = vmatpush1.bf16.msra.mxu0 %v4999
        %6397 = vmatprep.subr.bf16.mxu0 0
        %6398 = vmatpush1.bf16.msra.mxu0 %v5000
        %6399 = vmatprep.subr.bf16.mxu0 0
        %6400 = vmatpush1.bf16.msra.mxu0 %v5001
        %6401 = vmatprep.subr.bf16.mxu0 0
        %6402 = vmatpush1.bf16.msra.mxu0 %v5002
        %6403 = vmatprep.mubr.bf16.mxu0 %v1684
        %6404 = vmatmul.mubr.bf16.gmra.mrb[0].mxu0 %v1682
        %v6405 = vpop.f32.mrb[0].mxu0
        %v6406 = vadd.f32 %v6366, %v6405
        %v6407 = vpop.f32.mrb[0].mxu0
        %v6408 = vpop.f32.mrb[0].mxu0
        %v6409 = vpop.f32.mrb[0].mxu0
        %6410 = vdwg.mxu0
        %6411 = vmatprep.subr.bf16.mxu0 0
        %6412 = vmatpush1.bf16.msra.mxu0 %v5003
        %6413 = vmatprep.subr.bf16.mxu0 0
        %6414 = vmatpush1.bf16.msra.mxu0 %v5004
        %6415 = vmatprep.subr.bf16.mxu0 0
        %6416 = vmatpush1.bf16.msra.mxu0 %v5005
        %6417 = vmatprep.subr.bf16.mxu0 0
        %6418 = vmatpush1.bf16.msra.mxu0 %v5006
        %6419 = vmatprep.subr.bf16.mxu0 0
        %6420 = vmatpush1.bf16.msra.mxu0 %v5007
        %6421 = vmatprep.subr.bf16.mxu0 0
        %6422 = vmatpush1.bf16.msra.mxu0 %v5008
        %6423 = vmatprep.subr.bf16.mxu0 0
        %6424 = vmatpush1.bf16.msra.mxu0 %v5009
        %6425 = vmatprep.subr.bf16.mxu0 0
        %6426 = vmatpush1.bf16.msra.mxu0 %v5010
        %6427 = vmatprep.subr.bf16.mxu0 0
        %6428 = vmatpush1.bf16.msra.mxu0 %v5011
        %6429 = vmatprep.subr.bf16.mxu0 0
        %6430 = vmatpush1.bf16.msra.mxu0 %v5012
        %6431 = vmatprep.subr.bf16.mxu0 0
        %6432 = vmatpush1.bf16.msra.mxu0 %v5013
        %6433 = vmatprep.subr.bf16.mxu0 0
        %6434 = vmatpush1.bf16.msra.mxu0 %v5014
        %6435 = vmatprep.subr.bf16.mxu0 0
        %6436 = vmatpush1.bf16.msra.mxu0 %v5015
        %6437 = vmatprep.subr.bf16.mxu0 0
        %6438 = vmatpush1.bf16.msra.mxu0 %v5016
        %6439 = vmatprep.subr.bf16.mxu0 0
        %6440 = vmatpush1.bf16.msra.mxu0 %v5017
        %6441 = vmatprep.subr.bf16.mxu0 0
        %6442 = vmatpush1.bf16.msra.mxu0 %v5018
        %6443 = vmatprep.mubr.bf16.mxu0 %v1681
        %6444 = vmatmul.mubr.bf16.gmra.mrb[0].mxu0 %v1667
        %v6445 = vpop.f32.mrb[0].mxu0
        %v6446 = vadd.f32 %v6406, %v6445
        %v6447 = vpop.f32.mrb[0].mxu0
        %v6448 = vpop.f32.mrb[0].mxu0
        %v6449 = vpop.f32.mrb[0].mxu0
        %6450 = vdwg.mxu0
        %6451 = vmatprep.subr.bf16.mxu0 0
        %6452 = vmatpush1.bf16.msra.mxu0 %v5019
        %6453 = vmatprep.subr.bf16.mxu0 0
        %6454 = vmatpush1.bf16.msra.mxu0 %v5020
        %6455 = vmatprep.subr.bf16.mxu0 0
        %6456 = vmatpush1.bf16.msra.mxu0 %v5021
        %6457 = vmatprep.subr.bf16.mxu0 0
        %6458 = vmatpush1.bf16.msra.mxu0 %v5022
        %6459 = vmatprep.subr.bf16.mxu0 0
        %6460 = vmatpush1.bf16.msra.mxu0 %v5023
        %6461 = vmatprep.subr.bf16.mxu0 0
        %6462 = vmatpush1.bf16.msra.mxu0 %v5024
        %6463 = vmatprep.subr.bf16.mxu0 0
        %6464 = vmatpush1.bf16.msra.mxu0 %v5025
        %6465 = vmatprep.subr.bf16.mxu0 0
        %6466 = vmatpush1.bf16.msra.mxu0 %v5026
        %6467 = vmatprep.subr.bf16.mxu0 0
        %6468 = vmatpush1.bf16.msra.mxu0 %v5027
        %6469 = vmatprep.subr.bf16.mxu0 0
        %6470 = vmatpush1.bf16.msra.mxu0 %v5028
        %6471 = vmatprep.subr.bf16.mxu0 0
        %6472 = vmatpush1.bf16.msra.mxu0 %v5029
        %6473 = vmatprep.subr.bf16.mxu0 0
        %6474 = vmatpush1.bf16.msra.mxu0 %v5030
        %6475 = vmatprep.subr.bf16.mxu0 0
        %6476 = vmatpush1.bf16.msra.mxu0 %v5031
        %6477 = vmatprep.subr.bf16.mxu0 0
        %6478 = vmatpush1.bf16.msra.mxu0 %v5032
        %6479 = vmatprep.subr.bf16.mxu0 0
        %6480 = vmatpush1.bf16.msra.mxu0 %v5033
        %6481 = vmatprep.subr.bf16.mxu0 0
        %6482 = vmatpush1.bf16.msra.mxu0 %v5034
        %6483 = vmatprep.mubr.bf16.mxu0 %v1685
        %6484 = vmatmul.mubr.bf16.gmra.mrb[0].mxu0 %v1683
        %v6485 = vpop.f32.mrb[0].mxu0
        %v6486 = vadd.f32 %v6446, %v6485
        %v6487 = vpop.f32.mrb[0].mxu0
        %v6488 = vpop.f32.mrb[0].mxu0
        %v6489 = vpop.f32.mrb[0].mxu0
        %6490 = vdwg.mxu0
        %6491 = vmatprep.subr.bf16.mxu0 0
        %6492 = vmatpush1.bf16.msra.mxu0 %v5035
        %6493 = vmatprep.subr.bf16.mxu0 0
        %6494 = vmatpush1.bf16.msra.mxu0 %v5036
        %6495 = vmatprep.subr.bf16.mxu0 0
        %6496 = vmatpush1.bf16.msra.mxu0 %v5037
        %6497 = vmatprep.subr.bf16.mxu0 0
        %6498 = vmatpush1.bf16.msra.mxu0 %v5038
        %6499 = vmatprep.subr.bf16.mxu0 0
        %6500 = vmatpush1.bf16.msra.mxu0 %v5039
        %6501 = vmatprep.subr.bf16.mxu0 0
        %6502 = vmatpush1.bf16.msra.mxu0 %v5040
        %6503 = vmatprep.subr.bf16.mxu0 0
        %6504 = vmatpush1.bf16.msra.mxu0 %v5041
        %6505 = vmatprep.subr.bf16.mxu0 0
        %6506 = vmatpush1.bf16.msra.mxu0 %v5042
        %6507 = vmatprep.subr.bf16.mxu0 0
        %6508 = vmatpush1.bf16.msra.mxu0 %v5043
        %6509 = vmatprep.subr.bf16.mxu0 0
        %6510 = vmatpush1.bf16.msra.mxu0 %v5044
        %6511 = vmatprep.subr.bf16.mxu0 0
        %6512 = vmatpush1.bf16.msra.mxu0 %v5045
        %6513 = vmatprep.subr.bf16.mxu0 0
        %6514 = vmatpush1.bf16.msra.mxu0 %v5046
        %6515 = vmatprep.subr.bf16.mxu0 0
        %6516 = vmatpush1.bf16.msra.mxu0 %v5047
        %6517 = vmatprep.subr.bf16.mxu0 0
        %6518 = vmatpush1.bf16.msra.mxu0 %v5048
        %6519 = vmatprep.subr.bf16.mxu0 0
        %6520 = vmatpush1.bf16.msra.mxu0 %v5049
        %6521 = vmatprep.subr.bf16.mxu0 0
        %6522 = vmatpush1.bf16.msra.mxu0 %v5050
        %6523 = vmatprep.mubr.bf16.mxu0 %v1723
        %6524 = vmatmul.mubr.bf16.gmra.mrb[0].mxu0 %v1709
        %v6525 = vpop.f32.mrb[0].mxu0
        %v6526 = vadd.f32 %v6486, %v6525
        %v6527 = vpop.f32.mrb[0].mxu0
        %v6528 = vpop.f32.mrb[0].mxu0
        %v6529 = vpop.f32.mrb[0].mxu0
        %6530 = vdwg.mxu0
        %6531 = vmatprep.subr.bf16.mxu0 0
        %6532 = vmatpush1.bf16.msra.mxu0 %v5051
        %6533 = vmatprep.subr.bf16.mxu0 0
        %6534 = vmatpush1.bf16.msra.mxu0 %v5052
        %6535 = vmatprep.subr.bf16.mxu0 0
        %6536 = vmatpush1.bf16.msra.mxu0 %v5053
        %6537 = vmatprep.subr.bf16.mxu0 0
        %6538 = vmatpush1.bf16.msra.mxu0 %v5054
        %6539 = vmatprep.subr.bf16.mxu0 0
        %6540 = vmatpush1.bf16.msra.mxu0 %v5055
        %6541 = vmatprep.subr.bf16.mxu0 0
        %6542 = vmatpush1.bf16.msra.mxu0 %v5056
        %6543 = vmatprep.subr.bf16.mxu0 0
        %6544 = vmatpush1.bf16.msra.mxu0 %v5057
        %6545 = vmatprep.subr.bf16.mxu0 0
        %6546 = vmatpush1.bf16.msra.mxu0 %v5058
        %6547 = vmatprep.subr.bf16.mxu0 0
        %6548 = vmatpush1.bf16.msra.mxu0 %v5059
        %6549 = vmatprep.subr.bf16.mxu0 0
        %6550 = vmatpush1.bf16.msra.mxu0 %v5060
        %6551 = vmatprep.subr.bf16.mxu0 0
        %6552 = vmatpush1.bf16.msra.mxu0 %v5061
        %6553 = vmatprep.subr.bf16.mxu0 0
        %6554 = vmatpush1.bf16.msra.mxu0 %v5062
        %6555 = vmatprep.subr.bf16.mxu0 0
        %6556 = vmatpush1.bf16.msra.mxu0 %v5063
        %6557 = vmatprep.subr.bf16.mxu0 0
        %6558 = vmatpush1.bf16.msra.mxu0 %v5064
        %6559 = vmatprep.subr.bf16.mxu0 0
        %6560 = vmatpush1.bf16.msra.mxu0 %v5065
        %6561 = vmatprep.subr.bf16.mxu0 0
        %6562 = vmatpush1.bf16.msra.mxu0 %v5066
        %6563 = vmatprep.mubr.bf16.mxu0 %v1733
        %6564 = vmatmul.mubr.bf16.gmra.mrb[0].mxu0 %v1731
        %v6565 = vpop.f32.mrb[0].mxu0
        %v6566 = vadd.f32 %v6526, %v6565
        %v6567 = vpop.f32.mrb[0].mxu0
        %v6568 = vpop.f32.mrb[0].mxu0
        %v6569 = vpop.f32.mrb[0].mxu0
        %6570 = vdwg.mxu0
        %6571 = vmatprep.subr.bf16.mxu0 0
        %6572 = vmatpush1.bf16.msra.mxu0 %v5067
        %6573 = vmatprep.subr.bf16.mxu0 0
        %6574 = vmatpush1.bf16.msra.mxu0 %v5068
        %6575 = vmatprep.subr.bf16.mxu0 0
        %6576 = vmatpush1.bf16.msra.mxu0 %v5069
        %6577 = vmatprep.subr.bf16.mxu0 0
        %6578 = vmatpush1.bf16.msra.mxu0 %v5070
        %6579 = vmatprep.subr.bf16.mxu0 0
        %6580 = vmatpush1.bf16.msra.mxu0 %v5071
        %6581 = vmatprep.subr.bf16.mxu0 0
        %6582 = vmatpush1.bf16.msra.mxu0 %v5072
        %6583 = vmatprep.subr.bf16.mxu0 0
        %6584 = vmatpush1.bf16.msra.mxu0 %v5073
        %6585 = vmatprep.subr.bf16.mxu0 0
        %6586 = vmatpush1.bf16.msra.mxu0 %v5074
        %6587 = vmatprep.subr.bf16.mxu0 0
        %6588 = vmatpush1.bf16.msra.mxu0 %v5075
        %6589 = vmatprep.subr.bf16.mxu0 0
        %6590 = vmatpush1.bf16.msra.mxu0 %v5076
        %6591 = vmatprep.subr.bf16.mxu0 0
        %6592 = vmatpush1.bf16.msra.mxu0 %v5077
        %6593 = vmatprep.subr.bf16.mxu0 0
        %6594 = vmatpush1.bf16.msra.mxu0 %v5078
        %6595 = vmatprep.subr.bf16.mxu0 0
        %6596 = vmatpush1.bf16.msra.mxu0 %v5079
        %6597 = vmatprep.subr.bf16.mxu0 0
        %6598 = vmatpush1.bf16.msra.mxu0 %v5080
        %6599 = vmatprep.subr.bf16.mxu0 0
        %6600 = vmatpush1.bf16.msra.mxu0 %v5081
        %6601 = vmatprep.subr.bf16.mxu0 0
        %6602 = vmatpush1.bf16.msra.mxu0 %v5082
        %6603 = vmatprep.mubr.bf16.mxu0 %v1730
        %6604 = vmatmul.mubr.bf16.gmra.mrb[0].mxu0 %v1716
        %v6605 = vpop.f32.mrb[0].mxu0
        %v6606 = vadd.f32 %v6566, %v6605
        %v6607 = vpop.f32.mrb[0].mxu0
        %v6608 = vpop.f32.mrb[0].mxu0
        %v6609 = vpop.f32.mrb[0].mxu0
        %6610 = vdwg.mxu0
        %6611 = vmatprep.subr.bf16.mxu0 0
        %6612 = vmatpush1.bf16.msra.mxu0 %v5083
        %6613 = vmatprep.subr.bf16.mxu0 0
        %6614 = vmatpush1.bf16.msra.mxu0 %v5084
        %6615 = vmatprep.subr.bf16.mxu0 0
        %6616 = vmatpush1.bf16.msra.mxu0 %v5085
        %6617 = vmatprep.subr.bf16.mxu0 0
        %6618 = vmatpush1.bf16.msra.mxu0 %v5086
        %6619 = vmatprep.subr.bf16.mxu0 0
        %6620 = vmatpush1.bf16.msra.mxu0 %v5087
        %6621 = vmatprep.subr.bf16.mxu0 0
        %6622 = vmatpush1.bf16.msra.mxu0 %v5088
        %6623 = vmatprep.subr.bf16.mxu0 0
        %6624 = vmatpush1.bf16.msra.mxu0 %v5089
        %6625 = vmatprep.subr.bf16.mxu0 0
        %6626 = vmatpush1.bf16.msra.mxu0 %v5090
        %6627 = vmatprep.subr.bf16.mxu0 0
        %6628 = vmatpush1.bf16.msra.mxu0 %v5091
        %6629 = vmatprep.subr.bf16.mxu0 0
        %6630 = vmatpush1.bf16.msra.mxu0 %v5092
        %6631 = vmatprep.subr.bf16.mxu0 0
        %6632 = vmatpush1.bf16.msra.mxu0 %v5093
        %6633 = vmatprep.subr.bf16.mxu0 0
        %6634 = vmatpush1.bf16.msra.mxu0 %v5094
        %6635 = vmatprep.subr.bf16.mxu0 0
        %6636 = vmatpush1.bf16.msra.mxu0 %v5095
        %6637 = vmatprep.subr.bf16.mxu0 0
        %6638 = vmatpush1.bf16.msra.mxu0 %v5096
        %6639 = vmatprep.subr.bf16.mxu0 0
        %6640 = vmatpush1.bf16.msra.mxu0 %v5097
        %6641 = vmatprep.subr.bf16.mxu0 0
        %6642 = vmatpush1.bf16.msra.mxu0 %v5098
        %6643 = vmatprep.mubr.bf16.mxu0 %v1734
        %6644 = vmatmul.mubr.bf16.gmra.mrb[0].mxu0 %v1732
        %v6645 = vpop.f32.mrb[0].mxu0
        %v6646 = vadd.f32 %v6606, %v6645
        %v6647 = vpop.f32.mrb[0].mxu0
        %v6648 = vpop.f32.mrb[0].mxu0
        %v6649 = vpop.f32.mrb[0].mxu0
        %6650 = vdwg.mxu0
        %6651 = vmatprep.subr.bf16.mxu0 0
        %6652 = vmatpush1.bf16.msra.mxu0 %v5099
        %6653 = vmatprep.subr.bf16.mxu0 0
        %6654 = vmatpush1.bf16.msra.mxu0 %v5100
        %6655 = vmatprep.subr.bf16.mxu0 0
        %6656 = vmatpush1.bf16.msra.mxu0 %v5101
        %6657 = vmatprep.subr.bf16.mxu0 0
        %6658 = vmatpush1.bf16.msra.mxu0 %v5102
        %6659 = vmatprep.subr.bf16.mxu0 0
        %6660 = vmatpush1.bf16.msra.mxu0 %v5103
        %6661 = vmatprep.subr.bf16.mxu0 0
        %6662 = vmatpush1.bf16.msra.mxu0 %v5104
        %6663 = vmatprep.subr.bf16.mxu0 0
        %6664 = vmatpush1.bf16.msra.mxu0 %v5105
        %6665 = vmatprep.subr.bf16.mxu0 0
        %6666 = vmatpush1.bf16.msra.mxu0 %v5106
        %6667 = vmatprep.subr.bf16.mxu0 0
        %6668 = vmatpush1.bf16.msra.mxu0 %v5107
        %6669 = vmatprep.subr.bf16.mxu0 0
        %6670 = vmatpush1.bf16.msra.mxu0 %v5108
        %6671 = vmatprep.subr.bf16.mxu0 0
        %6672 = vmatpush1.bf16.msra.mxu0 %v5109
        %6673 = vmatprep.subr.bf16.mxu0 0
        %6674 = vmatpush1.bf16.msra.mxu0 %v5110
        %6675 = vmatprep.subr.bf16.mxu0 0
        %6676 = vmatpush1.bf16.msra.mxu0 %v5111
        %6677 = vmatprep.subr.bf16.mxu0 0
        %6678 = vmatpush1.bf16.msra.mxu0 %v5112
        %6679 = vmatprep.subr.bf16.mxu0 0
        %6680 = vmatpush1.bf16.msra.mxu0 %v5113
        %6681 = vmatprep.subr.bf16.mxu0 0
        %6682 = vmatpush1.bf16.msra.mxu0 %v5114
        %6683 = vmatprep.mubr.bf16.mxu0 %v1772
        %6684 = vmatmul.mubr.bf16.gmra.mrb[0].mxu0 %v1758
        %v6685 = vpop.f32.mrb[0].mxu0
        %v6686 = vadd.f32 %v6646, %v6685
        %v6687 = vpop.f32.mrb[0].mxu0
        %v6688 = vpop.f32.mrb[0].mxu0
        %v6689 = vpop.f32.mrb[0].mxu0
        %6690 = vdwg.mxu0
        %6691 = vmatprep.subr.bf16.mxu0 0
        %6692 = vmatpush1.bf16.msra.mxu0 %v5115
        %6693 = vmatprep.subr.bf16.mxu0 0
        %6694 = vmatpush1.bf16.msra.mxu0 %v5116
        %6695 = vmatprep.subr.bf16.mxu0 0
        %6696 = vmatpush1.bf16.msra.mxu0 %v5117
        %6697 = vmatprep.subr.bf16.mxu0 0
        %6698 = vmatpush1.bf16.msra.mxu0 %v5118
        %6699 = vmatprep.subr.bf16.mxu0 0
        %6700 = vmatpush1.bf16.msra.mxu0 %v5119
        %6701 = vmatprep.subr.bf16.mxu0 0
        %6702 = vmatpush1.bf16.msra.mxu0 %v5120
        %6703 = vmatprep.subr.bf16.mxu0 0
        %6704 = vmatpush1.bf16.msra.mxu0 %v5121
        %6705 = vmatprep.subr.bf16.mxu0 0
        %6706 = vmatpush1.bf16.msra.mxu0 %v5122
        %6707 = vmatprep.subr.bf16.mxu0 0
        %6708 = vmatpush1.bf16.msra.mxu0 %v5123
        %6709 = vmatprep.subr.bf16.mxu0 0
        %6710 = vmatpush1.bf16.msra.mxu0 %v5124
        %6711 = vmatprep.subr.bf16.mxu0 0
        %6712 = vmatpush1.bf16.msra.mxu0 %v5125
        %6713 = vmatprep.subr.bf16.mxu0 0
        %6714 = vmatpush1.bf16.msra.mxu0 %v5126
        %6715 = vmatprep.subr.bf16.mxu0 0
        %6716 = vmatpush1.bf16.msra.mxu0 %v5127
        %6717 = vmatprep.subr.bf16.mxu0 0
        %6718 = vmatpush1.bf16.msra.mxu0 %v5128
        %6719 = vmatprep.subr.bf16.mxu0 0
        %6720 = vmatpush1.bf16.msra.mxu0 %v5129
        %6721 = vmatprep.subr.bf16.mxu0 0
        %6722 = vmatpush1.bf16.msra.mxu0 %v5130
        %6723 = vmatprep.mubr.bf16.mxu0 %v1782
        %6724 = vmatmul.mubr.bf16.gmra.mrb[0].mxu0 %v1780
        %v6725 = vpop.f32.mrb[0].mxu0
        %v6726 = vadd.f32 %v6686, %v6725
        %v6727 = vpop.f32.mrb[0].mxu0
        %v6728 = vpop.f32.mrb[0].mxu0
        %v6729 = vpop.f32.mrb[0].mxu0
        %6730 = vdwg.mxu0
        %6731 = vmatprep.subr.bf16.mxu0 0
        %6732 = vmatpush1.bf16.msra.mxu0 %v5131
        %6733 = vmatprep.subr.bf16.mxu0 0
        %6734 = vmatpush1.bf16.msra.mxu0 %v5132
        %6735 = vmatprep.subr.bf16.mxu0 0
        %6736 = vmatpush1.bf16.msra.mxu0 %v5133
        %6737 = vmatprep.subr.bf16.mxu0 0
        %6738 = vmatpush1.bf16.msra.mxu0 %v5134
        %6739 = vmatprep.subr.bf16.mxu0 0
        %6740 = vmatpush1.bf16.msra.mxu0 %v5135
        %6741 = vmatprep.subr.bf16.mxu0 0
        %6742 = vmatpush1.bf16.msra.mxu0 %v5136
        %6743 = vmatprep.subr.bf16.mxu0 0
        %6744 = vmatpush1.bf16.msra.mxu0 %v5137
        %6745 = vmatprep.subr.bf16.mxu0 0
        %6746 = vmatpush1.bf16.msra.mxu0 %v5138
        %6747 = vmatprep.subr.bf16.mxu0 0
        %6748 = vmatpush1.bf16.msra.mxu0 %v5139
        %6749 = vmatprep.subr.bf16.mxu0 0
        %6750 = vmatpush1.bf16.msra.mxu0 %v5140
        %6751 = vmatprep.subr.bf16.mxu0 0
        %6752 = vmatpush1.bf16.msra.mxu0 %v5141
        %6753 = vmatprep.subr.bf16.mxu0 0
        %6754 = vmatpush1.bf16.msra.mxu0 %v5142
        %6755 = vmatprep.subr.bf16.mxu0 0
        %6756 = vmatpush1.bf16.msra.mxu0 %v5143
        %6757 = vmatprep.subr.bf16.mxu0 0
        %6758 = vmatpush1.bf16.msra.mxu0 %v5144
        %6759 = vmatprep.subr.bf16.mxu0 0
        %6760 = vmatpush1.bf16.msra.mxu0 %v5145
        %6761 = vmatprep.subr.bf16.mxu0 0
        %6762 = vmatpush1.bf16.msra.mxu0 %v5146
        %6763 = vmatprep.mubr.bf16.mxu0 %v1779
        %6764 = vmatmul.mubr.bf16.gmra.mrb[0].mxu0 %v1765
        %v6765 = vpop.f32.mrb[0].mxu0
        %v6766 = vadd.f32 %v6726, %v6765
        %v6767 = vpop.f32.mrb[0].mxu0
        %v6768 = vpop.f32.mrb[0].mxu0
        %v6769 = vpop.f32.mrb[0].mxu0
        %6770 = vdwg.mxu0
        %6771 = vmatprep.subr.bf16.mxu0 0
        %6772 = vmatpush1.bf16.msra.mxu0 %v5147
        %6773 = vmatprep.subr.bf16.mxu0 0
        %6774 = vmatpush1.bf16.msra.mxu0 %v5148
        %6775 = vmatprep.subr.bf16.mxu0 0
        %6776 = vmatpush1.bf16.msra.mxu0 %v5149
        %6777 = vmatprep.subr.bf16.mxu0 0
        %6778 = vmatpush1.bf16.msra.mxu0 %v5150
        %6779 = vmatprep.subr.bf16.mxu0 0
        %6780 = vmatpush1.bf16.msra.mxu0 %v5151
        %6781 = vmatprep.subr.bf16.mxu0 0
        %6782 = vmatpush1.bf16.msra.mxu0 %v5152
        %6783 = vmatprep.subr.bf16.mxu0 0
        %6784 = vmatpush1.bf16.msra.mxu0 %v5153
        %6785 = vmatprep.subr.bf16.mxu0 0
        %6786 = vmatpush1.bf16.msra.mxu0 %v5154
        %6787 = vmatprep.subr.bf16.mxu0 0
        %6788 = vmatpush1.bf16.msra.mxu0 %v5155
        %6789 = vmatprep.subr.bf16.mxu0 0
        %6790 = vmatpush1.bf16.msra.mxu0 %v5156
        %6791 = vmatprep.subr.bf16.mxu0 0
        %6792 = vmatpush1.bf16.msra.mxu0 %v5157
        %6793 = vmatprep.subr.bf16.mxu0 0
        %6794 = vmatpush1.bf16.msra.mxu0 %v5158
        %6795 = vmatprep.subr.bf16.mxu0 0
        %6796 = vmatpush1.bf16.msra.mxu0 %v5159
        %6797 = vmatprep.subr.bf16.mxu0 0
        %6798 = vmatpush1.bf16.msra.mxu0 %v5160
        %6799 = vmatprep.subr.bf16.mxu0 0
        %6800 = vmatpush1.bf16.msra.mxu0 %v5161
        %6801 = vmatprep.subr.bf16.mxu0 0
        %6802 = vmatpush1.bf16.msra.mxu0 %v5162
        %6803 = vmatprep.mubr.bf16.mxu0 %v1783
        %6804 = vmatmul.mubr.bf16.gmra.mrb[0].mxu0 %v1781
        %v6805 = vpop.f32.mrb[0].mxu0
        %v6806 = vadd.f32 %v6766, %v6805
        %v6807 = vpop.f32.mrb[0].mxu0
        %v6808 = vpop.f32.mrb[0].mxu0
        %v6809 = vpop.f32.mrb[0].mxu0
        %6810 = vdwg.mxu0
        %6811 = vmatprep.subr.bf16.mxu0 0
        %6812 = vmatpush1.bf16.msra.mxu0 %v5163
        %6813 = vmatprep.subr.bf16.mxu0 0
        %6814 = vmatpush1.bf16.msra.mxu0 %v5164
        %6815 = vmatprep.subr.bf16.mxu0 0
        %6816 = vmatpush1.bf16.msra.mxu0 %v5165
        %6817 = vmatprep.subr.bf16.mxu0 0
        %6818 = vmatpush1.bf16.msra.mxu0 %v5166
        %6819 = vmatprep.subr.bf16.mxu0 0
        %6820 = vmatpush1.bf16.msra.mxu0 %v5167
        %6821 = vmatprep.subr.bf16.mxu0 0
        %6822 = vmatpush1.bf16.msra.mxu0 %v5168
        %6823 = vmatprep.subr.bf16.mxu0 0
        %6824 = vmatpush1.bf16.msra.mxu0 %v5169
        %6825 = vmatprep.subr.bf16.mxu0 0
        %6826 = vmatpush1.bf16.msra.mxu0 %v5170
        %6827 = vmatprep.subr.bf16.mxu0 0
        %6828 = vmatpush1.bf16.msra.mxu0 %v5171
        %6829 = vmatprep.subr.bf16.mxu0 0
        %6830 = vmatpush1.bf16.msra.mxu0 %v5172
        %6831 = vmatprep.subr.bf16.mxu0 0
        %6832 = vmatpush1.bf16.msra.mxu0 %v5173
        %6833 = vmatprep.subr.bf16.mxu0 0
        %6834 = vmatpush1.bf16.msra.mxu0 %v5174
        %6835 = vmatprep.subr.bf16.mxu0 0
        %6836 = vmatpush1.bf16.msra.mxu0 %v5175
        %6837 = vmatprep.subr.bf16.mxu0 0
        %6838 = vmatpush1.bf16.msra.mxu0 %v5176
        %6839 = vmatprep.subr.bf16.mxu0 0
        %6840 = vmatpush1.bf16.msra.mxu0 %v5177
        %6841 = vmatprep.subr.bf16.mxu0 0
        %6842 = vmatpush1.bf16.msra.mxu0 %v5178
        %6843 = vmatprep.mubr.bf16.mxu0 %v1821
        %6844 = vmatmul.mubr.bf16.gmra.mrb[0].mxu0 %v1807
        %v6845 = vpop.f32.mrb[0].mxu0
        %v6846 = vadd.f32 %v6806, %v6845
        %v6847 = vpop.f32.mrb[0].mxu0
        %v6848 = vpop.f32.mrb[0].mxu0
        %v6849 = vpop.f32.mrb[0].mxu0
        %6850 = vdwg.mxu0
        %6851 = vmatprep.subr.bf16.mxu0 0
        %6852 = vmatpush1.bf16.msra.mxu0 %v5179
        %6853 = vmatprep.subr.bf16.mxu0 0
        %6854 = vmatpush1.bf16.msra.mxu0 %v5180
        %6855 = vmatprep.subr.bf16.mxu0 0
        %6856 = vmatpush1.bf16.msra.mxu0 %v5181
        %6857 = vmatprep.subr.bf16.mxu0 0
        %6858 = vmatpush1.bf16.msra.mxu0 %v5182
        %6859 = vmatprep.subr.bf16.mxu0 0
        %6860 = vmatpush1.bf16.msra.mxu0 %v5183
        %6861 = vmatprep.subr.bf16.mxu0 0
        %6862 = vmatpush1.bf16.msra.mxu0 %v5184
        %6863 = vmatprep.subr.bf16.mxu0 0
        %6864 = vmatpush1.bf16.msra.mxu0 %v5185
        %6865 = vmatprep.subr.bf16.mxu0 0
        %6866 = vmatpush1.bf16.msra.mxu0 %v5186
        %6867 = vmatprep.subr.bf16.mxu0 0
        %6868 = vmatpush1.bf16.msra.mxu0 %v5187
        %6869 = vmatprep.subr.bf16.mxu0 0
        %6870 = vmatpush1.bf16.msra.mxu0 %v5188
        %6871 = vmatprep.subr.bf16.mxu0 0
        %6872 = vmatpush1.bf16.msra.mxu0 %v5189
        %6873 = vmatprep.subr.bf16.mxu0 0
        %6874 = vmatpush1.bf16.msra.mxu0 %v5190
        %6875 = vmatprep.subr.bf16.mxu0 0
        %6876 = vmatpush1.bf16.msra.mxu0 %v5191
        %6877 = vmatprep.subr.bf16.mxu0 0
        %6878 = vmatpush1.bf16.msra.mxu0 %v5192
        %6879 = vmatprep.subr.bf16.mxu0 0
        %6880 = vmatpush1.bf16.msra.mxu0 %v5193
        %6881 = vmatprep.subr.bf16.mxu0 0
        %6882 = vmatpush1.bf16.msra.mxu0 %v5194
        %6883 = vmatprep.mubr.bf16.mxu0 %v1831
        %6884 = vmatmul.mubr.bf16.gmra.mrb[0].mxu0 %v1829
        %v6885 = vpop.f32.mrb[0].mxu0
        %v6886 = vadd.f32 %v6846, %v6885
        %v6887 = vpop.f32.mrb[0].mxu0
        %v6888 = vpop.f32.mrb[0].mxu0
        %v6889 = vpop.f32.mrb[0].mxu0
        %6890 = vdwg.mxu0
        %6891 = vmatprep.subr.bf16.mxu0 0
        %6892 = vmatpush1.bf16.msra.mxu0 %v5195
        %6893 = vmatprep.subr.bf16.mxu0 0
        %6894 = vmatpush1.bf16.msra.mxu0 %v5196
        %6895 = vmatprep.subr.bf16.mxu0 0
        %6896 = vmatpush1.bf16.msra.mxu0 %v5197
        %6897 = vmatprep.subr.bf16.mxu0 0
        %6898 = vmatpush1.bf16.msra.mxu0 %v5198
        %6899 = vmatprep.subr.bf16.mxu0 0
        %6900 = vmatpush1.bf16.msra.mxu0 %v5199
        %6901 = vmatprep.subr.bf16.mxu0 0
        %6902 = vmatpush1.bf16.msra.mxu0 %v5200
        %6903 = vmatprep.subr.bf16.mxu0 0
        %6904 = vmatpush1.bf16.msra.mxu0 %v5201
        %6905 = vmatprep.subr.bf16.mxu0 0
        %6906 = vmatpush1.bf16.msra.mxu0 %v5202
        %6907 = vmatprep.subr.bf16.mxu0 0
        %6908 = vmatpush1.bf16.msra.mxu0 %v5203
        %6909 = vmatprep.subr.bf16.mxu0 0
        %6910 = vmatpush1.bf16.msra.mxu0 %v5204
        %6911 = vmatprep.subr.bf16.mxu0 0
        %6912 = vmatpush1.bf16.msra.mxu0 %v5205
        %6913 = vmatprep.subr.bf16.mxu0 0
        %6914 = vmatpush1.bf16.msra.mxu0 %v5206
        %6915 = vmatprep.subr.bf16.mxu0 0
        %6916 = vmatpush1.bf16.msra.mxu0 %v5207
        %6917 = vmatprep.subr.bf16.mxu0 0
        %6918 = vmatpush1.bf16.msra.mxu0 %v5208
        %6919 = vmatprep.subr.bf16.mxu0 0
        %6920 = vmatpush1.bf16.msra.mxu0 %v5209
        %6921 = vmatprep.subr.bf16.mxu0 0
        %6922 = vmatpush1.bf16.msra.mxu0 %v5210
        %6923 = vmatprep.mubr.bf16.mxu0 %v1828
        %6924 = vmatmul.mubr.bf16.gmra.mrb[0].mxu0 %v1814
        %v6925 = vpop.f32.mrb[0].mxu0
        %v6926 = vadd.f32 %v6886, %v6925
        %v6927 = vpop.f32.mrb[0].mxu0
        %v6928 = vpop.f32.mrb[0].mxu0
        %v6929 = vpop.f32.mrb[0].mxu0
        %6930 = vdwg.mxu0
        %6931 = vmatprep.subr.bf16.mxu0 0
        %6932 = vmatpush1.bf16.msra.mxu0 %v5211
        %6933 = vmatprep.subr.bf16.mxu0 0
        %6934 = vmatpush1.bf16.msra.mxu0 %v5212
        %6935 = vmatprep.subr.bf16.mxu0 0
        %6936 = vmatpush1.bf16.msra.mxu0 %v5213
        %6937 = vmatprep.subr.bf16.mxu0 0
        %6938 = vmatpush1.bf16.msra.mxu0 %v5214
        %6939 = vmatprep.subr.bf16.mxu0 0
        %6940 = vmatpush1.bf16.msra.mxu0 %v5215
        %6941 = vmatprep.subr.bf16.mxu0 0
        %6942 = vmatpush1.bf16.msra.mxu0 %v5216
        %6943 = vmatprep.subr.bf16.mxu0 0
        %6944 = vmatpush1.bf16.msra.mxu0 %v5217
        %6945 = vmatprep.subr.bf16.mxu0 0
        %6946 = vmatpush1.bf16.msra.mxu0 %v5218
        %6947 = vmatprep.subr.bf16.mxu0 0
        %6948 = vmatpush1.bf16.msra.mxu0 %v5219
        %6949 = vmatprep.subr.bf16.mxu0 0
        %6950 = vmatpush1.bf16.msra.mxu0 %v5220
        %6951 = vmatprep.subr.bf16.mxu0 0
        %6952 = vmatpush1.bf16.msra.mxu0 %v5221
        %6953 = vmatprep.subr.bf16.mxu0 0
        %6954 = vmatpush1.bf16.msra.mxu0 %v5222
        %6955 = vmatprep.subr.bf16.mxu0 0
        %6956 = vmatpush1.bf16.msra.mxu0 %v5223
        %6957 = vmatprep.subr.bf16.mxu0 0
        %6958 = vmatpush1.bf16.msra.mxu0 %v5224
        %6959 = vmatprep.subr.bf16.mxu0 0
        %6960 = vmatpush1.bf16.msra.mxu0 %v5225
        %6961 = vmatprep.subr.bf16.mxu0 0
        %6962 = vmatpush1.bf16.msra.mxu0 %v5226
        %6963 = vmatprep.mubr.bf16.mxu0 %v1832
        %6964 = vmatmul.mubr.bf16.gmra.mrb[0].mxu0 %v1830
        %v6965 = vpop.f32.mrb[0].mxu0
        %v6966 = vadd.f32 %v6926, %v6965
        %v6967 = vpop.f32.mrb[0].mxu0
        %v6968 = vpop.f32.mrb[0].mxu0
        %v6969 = vpop.f32.mrb[0].mxu0
        %6970 = vdwg.mxu0
        %6971 = vmatprep.subr.bf16.mxu0 0
        %6972 = vmatpush1.bf16.msra.mxu0 %v5227
        %6973 = vmatprep.subr.bf16.mxu0 0
        %6974 = vmatpush1.bf16.msra.mxu0 %v5228
        %6975 = vmatprep.subr.bf16.mxu0 0
        %6976 = vmatpush1.bf16.msra.mxu0 %v5229
        %6977 = vmatprep.subr.bf16.mxu0 0
        %6978 = vmatpush1.bf16.msra.mxu0 %v5230
        %6979 = vmatprep.subr.bf16.mxu0 0
        %6980 = vmatpush1.bf16.msra.mxu0 %v5231
        %6981 = vmatprep.subr.bf16.mxu0 0
        %6982 = vmatpush1.bf16.msra.mxu0 %v5232
        %6983 = vmatprep.subr.bf16.mxu0 0
        %6984 = vmatpush1.bf16.msra.mxu0 %v5233
        %6985 = vmatprep.subr.bf16.mxu0 0
        %6986 = vmatpush1.bf16.msra.mxu0 %v5234
        %6987 = vmatprep.subr.bf16.mxu0 0
        %6988 = vmatpush1.bf16.msra.mxu0 %v5235
        %6989 = vmatprep.subr.bf16.mxu0 0
        %6990 = vmatpush1.bf16.msra.mxu0 %v5236
        %6991 = vmatprep.subr.bf16.mxu0 0
        %6992 = vmatpush1.bf16.msra.mxu0 %v5237
        %6993 = vmatprep.subr.bf16.mxu0 0
        %6994 = vmatpush1.bf16.msra.mxu0 %v5238
        %6995 = vmatprep.subr.bf16.mxu0 0
        %6996 = vmatpush1.bf16.msra.mxu0 %v5239
        %6997 = vmatprep.subr.bf16.mxu0 0
        %6998 = vmatpush1.bf16.msra.mxu0 %v5240
        %6999 = vmatprep.subr.bf16.mxu0 0
        %7000 = vmatpush1.bf16.msra.mxu0 %v5241
        %7001 = vmatprep.subr.bf16.mxu0 0
        %7002 = vmatpush1.bf16.msra.mxu0 %v5242
        %7003 = vmatprep.mubr.bf16.mxu0 %v1870
        %7004 = vmatmul.mubr.bf16.gmra.mrb[0].mxu0 %v1856
        %v7005 = vpop.f32.mrb[0].mxu0
        %v7006 = vadd.f32 %v6966, %v7005
        %v7007 = vpop.f32.mrb[0].mxu0
        %v7008 = vpop.f32.mrb[0].mxu0
        %v7009 = vpop.f32.mrb[0].mxu0
        %7010 = vdwg.mxu0
        %7011 = vmatprep.subr.bf16.mxu0 0
        %7012 = vmatpush1.bf16.msra.mxu0 %v5243
        %7013 = vmatprep.subr.bf16.mxu0 0
        %7014 = vmatpush1.bf16.msra.mxu0 %v5244
        %7015 = vmatprep.subr.bf16.mxu0 0
        %7016 = vmatpush1.bf16.msra.mxu0 %v5245
        %7017 = vmatprep.subr.bf16.mxu0 0
        %7018 = vmatpush1.bf16.msra.mxu0 %v5246
        %7019 = vmatprep.subr.bf16.mxu0 0
        %7020 = vmatpush1.bf16.msra.mxu0 %v5247
        %7021 = vmatprep.subr.bf16.mxu0 0
        %7022 = vmatpush1.bf16.msra.mxu0 %v5248
        %7023 = vmatprep.subr.bf16.mxu0 0
        %7024 = vmatpush1.bf16.msra.mxu0 %v5249
        %7025 = vmatprep.subr.bf16.mxu0 0
        %7026 = vmatpush1.bf16.msra.mxu0 %v5250
        %7027 = vmatprep.subr.bf16.mxu0 0
        %7028 = vmatpush1.bf16.msra.mxu0 %v5251
        %7029 = vmatprep.subr.bf16.mxu0 0
        %7030 = vmatpush1.bf16.msra.mxu0 %v5252
        %7031 = vmatprep.subr.bf16.mxu0 0
        %7032 = vmatpush1.bf16.msra.mxu0 %v5253
        %7033 = vmatprep.subr.bf16.mxu0 0
        %7034 = vmatpush1.bf16.msra.mxu0 %v5254
        %7035 = vmatprep.subr.bf16.mxu0 0
        %7036 = vmatpush1.bf16.msra.mxu0 %v5255
        %7037 = vmatprep.subr.bf16.mxu0 0
        %7038 = vmatpush1.bf16.msra.mxu0 %v5256
        %7039 = vmatprep.subr.bf16.mxu0 0
        %7040 = vmatpush1.bf16.msra.mxu0 %v5257
        %7041 = vmatprep.subr.bf16.mxu0 0
        %7042 = vmatpush1.bf16.msra.mxu0 %v5258
        %7043 = vmatprep.mubr.bf16.mxu0 %v1880
        %7044 = vmatmul.mubr.bf16.gmra.mrb[0].mxu0 %v1878
        %v7045 = vpop.f32.mrb[0].mxu0
        %v7046 = vadd.f32 %v7006, %v7045
        %v7047 = vpop.f32.mrb[0].mxu0
        %v7048 = vpop.f32.mrb[0].mxu0
        %v7049 = vpop.f32.mrb[0].mxu0
        %7050 = vdwg.mxu0
        %7051 = vmatprep.subr.bf16.mxu0 0
        %7052 = vmatpush1.bf16.msra.mxu0 %v5259
        %7053 = vmatprep.subr.bf16.mxu0 0
        %7054 = vmatpush1.bf16.msra.mxu0 %v5260
        %7055 = vmatprep.subr.bf16.mxu0 0
        %7056 = vmatpush1.bf16.msra.mxu0 %v5261
        %7057 = vmatprep.subr.bf16.mxu0 0
        %7058 = vmatpush1.bf16.msra.mxu0 %v5262
        %7059 = vmatprep.subr.bf16.mxu0 0
        %7060 = vmatpush1.bf16.msra.mxu0 %v5263
        %7061 = vmatprep.subr.bf16.mxu0 0
        %7062 = vmatpush1.bf16.msra.mxu0 %v5264
        %7063 = vmatprep.subr.bf16.mxu0 0
        %7064 = vmatpush1.bf16.msra.mxu0 %v5265
        %7065 = vmatprep.subr.bf16.mxu0 0
        %7066 = vmatpush1.bf16.msra.mxu0 %v5266
        %7067 = vmatprep.subr.bf16.mxu0 0
        %7068 = vmatpush1.bf16.msra.mxu0 %v5267
        %7069 = vmatprep.subr.bf16.mxu0 0
        %7070 = vmatpush1.bf16.msra.mxu0 %v5268
        %7071 = vmatprep.subr.bf16.mxu0 0
        %7072 = vmatpush1.bf16.msra.mxu0 %v5269
        %7073 = vmatprep.subr.bf16.mxu0 0
        %7074 = vmatpush1.bf16.msra.mxu0 %v5270
        %7075 = vmatprep.subr.bf16.mxu0 0
        %7076 = vmatpush1.bf16.msra.mxu0 %v5271
        %7077 = vmatprep.subr.bf16.mxu0 0
        %7078 = vmatpush1.bf16.msra.mxu0 %v5272
        %7079 = vmatprep.subr.bf16.mxu0 0
        %7080 = vmatpush1.bf16.msra.mxu0 %v5273
        %7081 = vmatprep.subr.bf16.mxu0 0
        %7082 = vmatpush1.bf16.msra.mxu0 %v5274
        %7083 = vmatprep.mubr.bf16.mxu0 %v1877
        %7084 = vmatmul.mubr.bf16.gmra.mrb[0].mxu0 %v1863
        %v7085 = vpop.f32.mrb[0].mxu0
        %v7086 = vadd.f32 %v7046, %v7085
        %v7087 = vpop.f32.mrb[0].mxu0
        %v7088 = vpop.f32.mrb[0].mxu0
        %v7089 = vpop.f32.mrb[0].mxu0
        %7090 = vdwg.mxu0
        %7091 = vmatprep.subr.bf16.mxu0 0
        %7092 = vmatpush1.bf16.msra.mxu0 %v5275
        %7093 = vmatprep.subr.bf16.mxu0 0
        %7094 = vmatpush1.bf16.msra.mxu0 %v5276
        %7095 = vmatprep.subr.bf16.mxu0 0
        %7096 = vmatpush1.bf16.msra.mxu0 %v5277
        %7097 = vmatprep.subr.bf16.mxu0 0
        %7098 = vmatpush1.bf16.msra.mxu0 %v5278
        %7099 = vmatprep.subr.bf16.mxu0 0
        %7100 = vmatpush1.bf16.msra.mxu0 %v5279
        %7101 = vmatprep.subr.bf16.mxu0 0
        %7102 = vmatpush1.bf16.msra.mxu0 %v5280
        %7103 = vmatprep.subr.bf16.mxu0 0
        %7104 = vmatpush1.bf16.msra.mxu0 %v5281
        %7105 = vmatprep.subr.bf16.mxu0 0
        %7106 = vmatpush1.bf16.msra.mxu0 %v5282
        %7107 = vmatprep.subr.bf16.mxu0 0
        %7108 = vmatpush1.bf16.msra.mxu0 %v5283
        %7109 = vmatprep.subr.bf16.mxu0 0
        %7110 = vmatpush1.bf16.msra.mxu0 %v5284
        %7111 = vmatprep.subr.bf16.mxu0 0
        %7112 = vmatpush1.bf16.msra.mxu0 %v5285
        %7113 = vmatprep.subr.bf16.mxu0 0
        %7114 = vmatpush1.bf16.msra.mxu0 %v5286
        %7115 = vmatprep.subr.bf16.mxu0 0
        %7116 = vmatpush1.bf16.msra.mxu0 %v5287
        %7117 = vmatprep.subr.bf16.mxu0 0
        %7118 = vmatpush1.bf16.msra.mxu0 %v5288
        %7119 = vmatprep.subr.bf16.mxu0 0
        %7120 = vmatpush1.bf16.msra.mxu0 %v5289
        %7121 = vmatprep.subr.bf16.mxu0 0
        %7122 = vmatpush1.bf16.msra.mxu0 %v5290
        %7123 = vmatprep.mubr.bf16.mxu0 %v1881
        %7124 = vmatmul.mubr.bf16.gmra.mrb[0].mxu0 %v1879
        %v7125 = vpop.f32.mrb[0].mxu0
        %v7126 = vadd.f32 %v7086, %v7125
        %v7127 = vpop.f32.mrb[0].mxu0
        %v7128 = vpop.f32.mrb[0].mxu0
        %v7129 = vpop.f32.mrb[0].mxu0
        %7130 = vdwg.mxu0
        %7131 = vmatprep.subr.bf16.mxu0 0
        %7132 = vmatpush1.bf16.msra.mxu0 %v5291
        %7133 = vmatprep.subr.bf16.mxu0 0
        %7134 = vmatpush1.bf16.msra.mxu0 %v5292
        %7135 = vmatprep.subr.bf16.mxu0 0
        %7136 = vmatpush1.bf16.msra.mxu0 %v5293
        %7137 = vmatprep.subr.bf16.mxu0 0
        %7138 = vmatpush1.bf16.msra.mxu0 %v5294
        %7139 = vmatprep.subr.bf16.mxu0 0
        %7140 = vmatpush1.bf16.msra.mxu0 %v5295
        %7141 = vmatprep.subr.bf16.mxu0 0
        %7142 = vmatpush1.bf16.msra.mxu0 %v5296
        %7143 = vmatprep.subr.bf16.mxu0 0
        %7144 = vmatpush1.bf16.msra.mxu0 %v5297
        %7145 = vmatprep.subr.bf16.mxu0 0
        %7146 = vmatpush1.bf16.msra.mxu0 %v5298
        %7147 = vmatprep.subr.bf16.mxu0 0
        %7148 = vmatpush1.bf16.msra.mxu0 %v5299
        %7149 = vmatprep.subr.bf16.mxu0 0
        %7150 = vmatpush1.bf16.msra.mxu0 %v5300
        %7151 = vmatprep.subr.bf16.mxu0 0
        %7152 = vmatpush1.bf16.msra.mxu0 %v5301
        %7153 = vmatprep.subr.bf16.mxu0 0
        %7154 = vmatpush1.bf16.msra.mxu0 %v5302
        %7155 = vmatprep.subr.bf16.mxu0 0
        %7156 = vmatpush1.bf16.msra.mxu0 %v5303
        %7157 = vmatprep.subr.bf16.mxu0 0
        %7158 = vmatpush1.bf16.msra.mxu0 %v5304
        %7159 = vmatprep.subr.bf16.mxu0 0
        %7160 = vmatpush1.bf16.msra.mxu0 %v5305
        %7161 = vmatprep.subr.bf16.mxu0 0
        %7162 = vmatpush1.bf16.msra.mxu0 %v5306
        %7163 = vmatprep.mubr.bf16.mxu0 %v1919
        %7164 = vmatmul.mubr.bf16.gmra.mrb[0].mxu0 %v1905
        %v7165 = vpop.f32.mrb[0].mxu0
        %v7166 = vadd.f32 %v7126, %v7165
        %v7167 = vpop.f32.mrb[0].mxu0
        %v7168 = vpop.f32.mrb[0].mxu0
        %v7169 = vpop.f32.mrb[0].mxu0
        %7170 = vdwg.mxu0
        %7171 = vmatprep.subr.bf16.mxu0 0
        %7172 = vmatpush1.bf16.msra.mxu0 %v5307
        %7173 = vmatprep.subr.bf16.mxu0 0
        %7174 = vmatpush1.bf16.msra.mxu0 %v5308
        %7175 = vmatprep.subr.bf16.mxu0 0
        %7176 = vmatpush1.bf16.msra.mxu0 %v5309
        %7177 = vmatprep.subr.bf16.mxu0 0
        %7178 = vmatpush1.bf16.msra.mxu0 %v5310
        %7179 = vmatprep.subr.bf16.mxu0 0
        %7180 = vmatpush1.bf16.msra.mxu0 %v5311
        %7181 = vmatprep.subr.bf16.mxu0 0
        %7182 = vmatpush1.bf16.msra.mxu0 %v5312
        %7183 = vmatprep.subr.bf16.mxu0 0
        %7184 = vmatpush1.bf16.msra.mxu0 %v5313
        %7185 = vmatprep.subr.bf16.mxu0 0
        %7186 = vmatpush1.bf16.msra.mxu0 %v5314
        %7187 = vmatprep.subr.bf16.mxu0 0
        %7188 = vmatpush1.bf16.msra.mxu0 %v5315
        %7189 = vmatprep.subr.bf16.mxu0 0
        %7190 = vmatpush1.bf16.msra.mxu0 %v5316
        %7191 = vmatprep.subr.bf16.mxu0 0
        %7192 = vmatpush1.bf16.msra.mxu0 %v5317
        %7193 = vmatprep.subr.bf16.mxu0 0
        %7194 = vmatpush1.bf16.msra.mxu0 %v5318
        %7195 = vmatprep.subr.bf16.mxu0 0
        %7196 = vmatpush1.bf16.msra.mxu0 %v5319
        %7197 = vmatprep.subr.bf16.mxu0 0
        %7198 = vmatpush1.bf16.msra.mxu0 %v5320
        %7199 = vmatprep.subr.bf16.mxu0 0
        %7200 = vmatpush1.bf16.msra.mxu0 %v5321
        %7201 = vmatprep.subr.bf16.mxu0 0
        %7202 = vmatpush1.bf16.msra.mxu0 %v5322
        %7203 = vmatprep.mubr.bf16.mxu0 %v1929
        %7204 = vmatmul.mubr.bf16.gmra.mrb[0].mxu0 %v1927
        %v7205 = vpop.f32.mrb[0].mxu0
        %v7206 = vadd.f32 %v7166, %v7205
        %v7207 = vpop.f32.mrb[0].mxu0
        %v7208 = vpop.f32.mrb[0].mxu0
        %v7209 = vpop.f32.mrb[0].mxu0
        %7210 = vdwg.mxu0
        %7211 = vmatprep.subr.bf16.mxu0 0
        %7212 = vmatpush1.bf16.msra.mxu0 %v5323
        %7213 = vmatprep.subr.bf16.mxu0 0
        %7214 = vmatpush1.bf16.msra.mxu0 %v5324
        %7215 = vmatprep.subr.bf16.mxu0 0
        %7216 = vmatpush1.bf16.msra.mxu0 %v5325
        %7217 = vmatprep.subr.bf16.mxu0 0
        %7218 = vmatpush1.bf16.msra.mxu0 %v5326
        %7219 = vmatprep.subr.bf16.mxu0 0
        %7220 = vmatpush1.bf16.msra.mxu0 %v5327
        %7221 = vmatprep.subr.bf16.mxu0 0
        %7222 = vmatpush1.bf16.msra.mxu0 %v5328
        %7223 = vmatprep.subr.bf16.mxu0 0
        %7224 = vmatpush1.bf16.msra.mxu0 %v5329
        %7225 = vmatprep.subr.bf16.mxu0 0
        %7226 = vmatpush1.bf16.msra.mxu0 %v5330
        %7227 = vmatprep.subr.bf16.mxu0 0
        %7228 = vmatpush1.bf16.msra.mxu0 %v5331
        %7229 = vmatprep.subr.bf16.mxu0 0
        %7230 = vmatpush1.bf16.msra.mxu0 %v5332
        %7231 = vmatprep.subr.bf16.mxu0 0
        %7232 = vmatpush1.bf16.msra.mxu0 %v5333
        %7233 = vmatprep.subr.bf16.mxu0 0
        %7234 = vmatpush1.bf16.msra.mxu0 %v5334
        %7235 = vmatprep.subr.bf16.mxu0 0
        %7236 = vmatpush1.bf16.msra.mxu0 %v5335
        %7237 = vmatprep.subr.bf16.mxu0 0
        %7238 = vmatpush1.bf16.msra.mxu0 %v5336
        %7239 = vmatprep.subr.bf16.mxu0 0
        %7240 = vmatpush1.bf16.msra.mxu0 %v5337
        %7241 = vmatprep.subr.bf16.mxu0 0
        %7242 = vmatpush1.bf16.msra.mxu0 %v5338
        %7243 = vmatprep.mubr.bf16.mxu0 %v1926
        %7244 = vmatmul.mubr.bf16.gmra.mrb[0].mxu0 %v1912
        %v7245 = vpop.f32.mrb[0].mxu0
        %v7246 = vadd.f32 %v7206, %v7245
        %v7247 = vpop.f32.mrb[0].mxu0
        %v7248 = vpop.f32.mrb[0].mxu0
        %v7249 = vpop.f32.mrb[0].mxu0
        %7250 = vdwg.mxu0
        %7251 = vmatprep.subr.bf16.mxu0 0
        %7252 = vmatpush1.bf16.msra.mxu0 %v5339
        %7253 = vmatprep.subr.bf16.mxu0 0
        %7254 = vmatpush1.bf16.msra.mxu0 %v5340
        %7255 = vmatprep.subr.bf16.mxu0 0
        %7256 = vmatpush1.bf16.msra.mxu0 %v5341
        %7257 = vmatprep.subr.bf16.mxu0 0
        %7258 = vmatpush1.bf16.msra.mxu0 %v5342
        %7259 = vmatprep.subr.bf16.mxu0 0
        %7260 = vmatpush1.bf16.msra.mxu0 %v5343
        %7261 = vmatprep.subr.bf16.mxu0 0
        %7262 = vmatpush1.bf16.msra.mxu0 %v5344
        %7263 = vmatprep.subr.bf16.mxu0 0
        %7264 = vmatpush1.bf16.msra.mxu0 %v5345
        %7265 = vmatprep.subr.bf16.mxu0 0
        %7266 = vmatpush1.bf16.msra.mxu0 %v5346
        %7267 = vmatprep.subr.bf16.mxu0 0
        %7268 = vmatpush1.bf16.msra.mxu0 %v5347
        %7269 = vmatprep.subr.bf16.mxu0 0
        %7270 = vmatpush1.bf16.msra.mxu0 %v5348
        %7271 = vmatprep.subr.bf16.mxu0 0
        %7272 = vmatpush1.bf16.msra.mxu0 %v5349
        %7273 = vmatprep.subr.bf16.mxu0 0
        %7274 = vmatpush1.bf16.msra.mxu0 %v5350
        %7275 = vmatprep.subr.bf16.mxu0 0
        %7276 = vmatpush1.bf16.msra.mxu0 %v5351
        %7277 = vmatprep.subr.bf16.mxu0 0
        %7278 = vmatpush1.bf16.msra.mxu0 %v5352
        %7279 = vmatprep.subr.bf16.mxu0 0
        %7280 = vmatpush1.bf16.msra.mxu0 %v5353
        %7281 = vmatprep.subr.bf16.mxu0 0
        %7282 = vmatpush1.bf16.msra.mxu0 %v5354
        %7283 = vmatprep.mubr.bf16.mxu0 %v1930
        %7284 = vmatmul.mubr.bf16.gmra.mrb[0].mxu0 %v1928
        %v7285 = vpop.f32.mrb[0].mxu0
        %v7286 = vadd.f32 %v7246, %v7285
        %v7287 = vpop.f32.mrb[0].mxu0
        %v7288 = vpop.f32.mrb[0].mxu0
        %v7289 = vpop.f32.mrb[0].mxu0
        %7290 = vdwg.mxu0
        %7291 = vmatprep.subr.bf16.mxu0 0
        %7292 = vmatpush1.bf16.msra.mxu0 %v5355
        %7293 = vmatprep.subr.bf16.mxu0 0
        %7294 = vmatpush1.bf16.msra.mxu0 %v5356
        %7295 = vmatprep.subr.bf16.mxu0 0
        %7296 = vmatpush1.bf16.msra.mxu0 %v5357
        %7297 = vmatprep.subr.bf16.mxu0 0
        %7298 = vmatpush1.bf16.msra.mxu0 %v5358
        %7299 = vmatprep.subr.bf16.mxu0 0
        %7300 = vmatpush1.bf16.msra.mxu0 %v5359
        %7301 = vmatprep.subr.bf16.mxu0 0
        %7302 = vmatpush1.bf16.msra.mxu0 %v5360
        %7303 = vmatprep.subr.bf16.mxu0 0
        %7304 = vmatpush1.bf16.msra.mxu0 %v5361
        %7305 = vmatprep.subr.bf16.mxu0 0
        %7306 = vmatpush1.bf16.msra.mxu0 %v5362
        %7307 = vmatprep.subr.bf16.mxu0 0
        %7308 = vmatpush1.bf16.msra.mxu0 %v5363
        %7309 = vmatprep.subr.bf16.mxu0 0
        %7310 = vmatpush1.bf16.msra.mxu0 %v5364
        %7311 = vmatprep.subr.bf16.mxu0 0
        %7312 = vmatpush1.bf16.msra.mxu0 %v5365
        %7313 = vmatprep.subr.bf16.mxu0 0
        %7314 = vmatpush1.bf16.msra.mxu0 %v5366
        %7315 = vmatprep.subr.bf16.mxu0 0
        %7316 = vmatpush1.bf16.msra.mxu0 %v5367
        %7317 = vmatprep.subr.bf16.mxu0 0
        %7318 = vmatpush1.bf16.msra.mxu0 %v5368
        %7319 = vmatprep.subr.bf16.mxu0 0
        %7320 = vmatpush1.bf16.msra.mxu0 %v5369
        %7321 = vmatprep.subr.bf16.mxu0 0
        %7322 = vmatpush1.bf16.msra.mxu0 %v5370
        %7323 = vmatprep.mubr.bf16.mxu0 %v1968
        %7324 = vmatmul.mubr.bf16.gmra.mrb[0].mxu0 %v1954
        %v7325 = vpop.f32.mrb[0].mxu0
        %v7326 = vadd.f32 %v7286, %v7325
        %v7327 = vpop.f32.mrb[0].mxu0
        %v7328 = vpop.f32.mrb[0].mxu0
        %v7329 = vpop.f32.mrb[0].mxu0
        %7330 = vdwg.mxu0
        %7331 = vmatprep.subr.bf16.mxu0 0
        %7332 = vmatpush1.bf16.msra.mxu0 %v5371
        %7333 = vmatprep.subr.bf16.mxu0 0
        %7334 = vmatpush1.bf16.msra.mxu0 %v5372
        %7335 = vmatprep.subr.bf16.mxu0 0
        %7336 = vmatpush1.bf16.msra.mxu0 %v5373
        %7337 = vmatprep.subr.bf16.mxu0 0
        %7338 = vmatpush1.bf16.msra.mxu0 %v5374
        %7339 = vmatprep.subr.bf16.mxu0 0
        %7340 = vmatpush1.bf16.msra.mxu0 %v5375
        %7341 = vmatprep.subr.bf16.mxu0 0
        %7342 = vmatpush1.bf16.msra.mxu0 %v5376
        %7343 = vmatprep.subr.bf16.mxu0 0
        %7344 = vmatpush1.bf16.msra.mxu0 %v5377
        %7345 = vmatprep.subr.bf16.mxu0 0
        %7346 = vmatpush1.bf16.msra.mxu0 %v5378
        %7347 = vmatprep.subr.bf16.mxu0 0
        %7348 = vmatpush1.bf16.msra.mxu0 %v5379
        %7349 = vmatprep.subr.bf16.mxu0 0
        %7350 = vmatpush1.bf16.msra.mxu0 %v5380
        %7351 = vmatprep.subr.bf16.mxu0 0
        %7352 = vmatpush1.bf16.msra.mxu0 %v5381
        %7353 = vmatprep.subr.bf16.mxu0 0
        %7354 = vmatpush1.bf16.msra.mxu0 %v5382
        %7355 = vmatprep.subr.bf16.mxu0 0
        %7356 = vmatpush1.bf16.msra.mxu0 %v5383
        %7357 = vmatprep.subr.bf16.mxu0 0
        %7358 = vmatpush1.bf16.msra.mxu0 %v5384
        %7359 = vmatprep.subr.bf16.mxu0 0
        %7360 = vmatpush1.bf16.msra.mxu0 %v5385
        %7361 = vmatprep.subr.bf16.mxu0 0
        %7362 = vmatpush1.bf16.msra.mxu0 %v5386
        %7363 = vmatprep.mubr.bf16.mxu0 %v1978
        %7364 = vmatmul.mubr.bf16.gmra.mrb[0].mxu0 %v1976
        %v7365 = vpop.f32.mrb[0].mxu0
        %v7366 = vadd.f32 %v7326, %v7365
        %v7367 = vpop.f32.mrb[0].mxu0
        %v7368 = vpop.f32.mrb[0].mxu0
        %v7369 = vpop.f32.mrb[0].mxu0
        %7370 = vdwg.mxu0
        %7371 = vmatprep.subr.bf16.mxu0 0
        %7372 = vmatpush1.bf16.msra.mxu0 %v5387
        %7373 = vmatprep.subr.bf16.mxu0 0
        %7374 = vmatpush1.bf16.msra.mxu0 %v5388
        %7375 = vmatprep.subr.bf16.mxu0 0
        %7376 = vmatpush1.bf16.msra.mxu0 %v5389
        %7377 = vmatprep.subr.bf16.mxu0 0
        %7378 = vmatpush1.bf16.msra.mxu0 %v5390
        %7379 = vmatprep.subr.bf16.mxu0 0
        %7380 = vmatpush1.bf16.msra.mxu0 %v5391
        %7381 = vmatprep.subr.bf16.mxu0 0
        %7382 = vmatpush1.bf16.msra.mxu0 %v5392
        %7383 = vmatprep.subr.bf16.mxu0 0
        %7384 = vmatpush1.bf16.msra.mxu0 %v5393
        %7385 = vmatprep.subr.bf16.mxu0 0
        %7386 = vmatpush1.bf16.msra.mxu0 %v5394
        %7387 = vmatprep.subr.bf16.mxu0 0
        %7388 = vmatpush1.bf16.msra.mxu0 %v5395
        %7389 = vmatprep.subr.bf16.mxu0 0
        %7390 = vmatpush1.bf16.msra.mxu0 %v5396
        %7391 = vmatprep.subr.bf16.mxu0 0
        %7392 = vmatpush1.bf16.msra.mxu0 %v5397
        %7393 = vmatprep.subr.bf16.mxu0 0
        %7394 = vmatpush1.bf16.msra.mxu0 %v5398
        %7395 = vmatprep.subr.bf16.mxu0 0
        %7396 = vmatpush1.bf16.msra.mxu0 %v5399
        %7397 = vmatprep.subr.bf16.mxu0 0
        %7398 = vmatpush1.bf16.msra.mxu0 %v5400
        %7399 = vmatprep.subr.bf16.mxu0 0
        %7400 = vmatpush1.bf16.msra.mxu0 %v5401
        %7401 = vmatprep.subr.bf16.mxu0 0
        %7402 = vmatpush1.bf16.msra.mxu0 %v5402
        %7403 = vmatprep.mubr.bf16.mxu0 %v1975
        %7404 = vmatmul.mubr.bf16.gmra.mrb[0].mxu0 %v1961
        %v7405 = vpop.f32.mrb[0].mxu0
        %v7406 = vadd.f32 %v7366, %v7405
        %v7407 = vpop.f32.mrb[0].mxu0
        %v7408 = vpop.f32.mrb[0].mxu0
        %v7409 = vpop.f32.mrb[0].mxu0
        %7410 = vdwg.mxu0
        %7411 = vmatprep.subr.bf16.mxu0 0
        %7412 = vmatpush1.bf16.msra.mxu0 %v5403
        %7413 = vmatprep.subr.bf16.mxu0 0
        %7414 = vmatpush1.bf16.msra.mxu0 %v5404
        %7415 = vmatprep.subr.bf16.mxu0 0
        %7416 = vmatpush1.bf16.msra.mxu0 %v5405
        %7417 = vmatprep.subr.bf16.mxu0 0
        %7418 = vmatpush1.bf16.msra.mxu0 %v5406
        %7419 = vmatprep.subr.bf16.mxu0 0
        %7420 = vmatpush1.bf16.msra.mxu0 %v5407
        %7421 = vmatprep.subr.bf16.mxu0 0
        %7422 = vmatpush1.bf16.msra.mxu0 %v5408
        %7423 = vmatprep.subr.bf16.mxu0 0
        %7424 = vmatpush1.bf16.msra.mxu0 %v5409
        %7425 = vmatprep.subr.bf16.mxu0 0
        %7426 = vmatpush1.bf16.msra.mxu0 %v5410
        %7427 = vmatprep.subr.bf16.mxu0 0
        %7428 = vmatpush1.bf16.msra.mxu0 %v5411
        %7429 = vmatprep.subr.bf16.mxu0 0
        %7430 = vmatpush1.bf16.msra.mxu0 %v5412
        %7431 = vmatprep.subr.bf16.mxu0 0
        %7432 = vmatpush1.bf16.msra.mxu0 %v5413
        %7433 = vmatprep.subr.bf16.mxu0 0
        %7434 = vmatpush1.bf16.msra.mxu0 %v5414
        %7435 = vmatprep.subr.bf16.mxu0 0
        %7436 = vmatpush1.bf16.msra.mxu0 %v5415
        %7437 = vmatprep.subr.bf16.mxu0 0
        %7438 = vmatpush1.bf16.msra.mxu0 %v5416
        %7439 = vmatprep.subr.bf16.mxu0 0
        %7440 = vmatpush1.bf16.msra.mxu0 %v5417
        %7441 = vmatprep.subr.bf16.mxu0 0
        %7442 = vmatpush1.bf16.msra.mxu0 %v5418
        %7443 = vmatprep.mubr.bf16.mxu0 %v1979
        %7444 = vmatmul.mubr.bf16.gmra.mrb[0].mxu0 %v1977
        %v7445 = vpop.f32.mrb[0].mxu0
        %v7446 = vadd.f32 %v7406, %v7445
        %v7447 = vpop.f32.mrb[0].mxu0
        %v7448 = vpop.f32.mrb[0].mxu0
        %v7449 = vpop.f32.mrb[0].mxu0
        %7450 = vdwg.mxu0
        %7451 = vmatprep.subr.bf16.mxu0 0
        %7452 = vmatpush1.bf16.msra.mxu0 %v5419
        %7453 = vmatprep.subr.bf16.mxu0 0
        %7454 = vmatpush1.bf16.msra.mxu0 %v5420
        %7455 = vmatprep.subr.bf16.mxu0 0
        %7456 = vmatpush1.bf16.msra.mxu0 %v5421
        %7457 = vmatprep.subr.bf16.mxu0 0
        %7458 = vmatpush1.bf16.msra.mxu0 %v5422
        %7459 = vmatprep.subr.bf16.mxu0 0
        %7460 = vmatpush1.bf16.msra.mxu0 %v5423
        %7461 = vmatprep.subr.bf16.mxu0 0
        %7462 = vmatpush1.bf16.msra.mxu0 %v5424
        %7463 = vmatprep.subr.bf16.mxu0 0
        %7464 = vmatpush1.bf16.msra.mxu0 %v5425
        %7465 = vmatprep.subr.bf16.mxu0 0
        %7466 = vmatpush1.bf16.msra.mxu0 %v5426
        %7467 = vmatprep.subr.bf16.mxu0 0
        %7468 = vmatpush1.bf16.msra.mxu0 %v5427
        %7469 = vmatprep.subr.bf16.mxu0 0
        %7470 = vmatpush1.bf16.msra.mxu0 %v5428
        %7471 = vmatprep.subr.bf16.mxu0 0
        %7472 = vmatpush1.bf16.msra.mxu0 %v5429
        %7473 = vmatprep.subr.bf16.mxu0 0
        %7474 = vmatpush1.bf16.msra.mxu0 %v5430
        %7475 = vmatprep.subr.bf16.mxu0 0
        %7476 = vmatpush1.bf16.msra.mxu0 %v5431
        %7477 = vmatprep.subr.bf16.mxu0 0
        %7478 = vmatpush1.bf16.msra.mxu0 %v5432
        %7479 = vmatprep.subr.bf16.mxu0 0
        %7480 = vmatpush1.bf16.msra.mxu0 %v5433
        %7481 = vmatprep.subr.bf16.mxu0 0
        %7482 = vmatpush1.bf16.msra.mxu0 %v5434
        %7483 = vmatprep.mubr.bf16.mxu0 %v2017
        %7484 = vmatmul.mubr.bf16.gmra.mrb[0].mxu0 %v2003
        %v7485 = vpop.f32.mrb[0].mxu0
        %v7486 = vadd.f32 %v7446, %v7485
        %v7487 = vpop.f32.mrb[0].mxu0
        %v7488 = vpop.f32.mrb[0].mxu0
        %v7489 = vpop.f32.mrb[0].mxu0
        %7490 = vdwg.mxu0
        %7491 = vmatprep.subr.bf16.mxu0 0
        %7492 = vmatpush1.bf16.msra.mxu0 %v5435
        %7493 = vmatprep.subr.bf16.mxu0 0
        %7494 = vmatpush1.bf16.msra.mxu0 %v5436
        %7495 = vmatprep.subr.bf16.mxu0 0
        %7496 = vmatpush1.bf16.msra.mxu0 %v5437
        %7497 = vmatprep.subr.bf16.mxu0 0
        %7498 = vmatpush1.bf16.msra.mxu0 %v5438
        %7499 = vmatprep.subr.bf16.mxu0 0
        %7500 = vmatpush1.bf16.msra.mxu0 %v5439
        %7501 = vmatprep.subr.bf16.mxu0 0
        %7502 = vmatpush1.bf16.msra.mxu0 %v5440
        %7503 = vmatprep.subr.bf16.mxu0 0
        %7504 = vmatpush1.bf16.msra.mxu0 %v5441
        %7505 = vmatprep.subr.bf16.mxu0 0
        %7506 = vmatpush1.bf16.msra.mxu0 %v5442
        %7507 = vmatprep.subr.bf16.mxu0 0
        %7508 = vmatpush1.bf16.msra.mxu0 %v5443
        %7509 = vmatprep.subr.bf16.mxu0 0
        %7510 = vmatpush1.bf16.msra.mxu0 %v5444
        %7511 = vmatprep.subr.bf16.mxu0 0
        %7512 = vmatpush1.bf16.msra.mxu0 %v5445
        %7513 = vmatprep.subr.bf16.mxu0 0
        %7514 = vmatpush1.bf16.msra.mxu0 %v5446
        %7515 = vmatprep.subr.bf16.mxu0 0
        %7516 = vmatpush1.bf16.msra.mxu0 %v5447
        %7517 = vmatprep.subr.bf16.mxu0 0
        %7518 = vmatpush1.bf16.msra.mxu0 %v5448
        %7519 = vmatprep.subr.bf16.mxu0 0
        %7520 = vmatpush1.bf16.msra.mxu0 %v5449
        %7521 = vmatprep.subr.bf16.mxu0 0
        %7522 = vmatpush1.bf16.msra.mxu0 %v5450
        %7523 = vmatprep.mubr.bf16.mxu0 %v2027
        %7524 = vmatmul.mubr.bf16.gmra.mrb[0].mxu0 %v2025
        %v7525 = vpop.f32.mrb[0].mxu0
        %v7526 = vadd.f32 %v7486, %v7525
        %v7527 = vpop.f32.mrb[0].mxu0
        %v7528 = vpop.f32.mrb[0].mxu0
        %v7529 = vpop.f32.mrb[0].mxu0
        %7530 = vdwg.mxu0
        %7531 = vmatprep.subr.bf16.mxu0 0
        %7532 = vmatpush1.bf16.msra.mxu0 %v5451
        %7533 = vmatprep.subr.bf16.mxu0 0
        %7534 = vmatpush1.bf16.msra.mxu0 %v5452
        %7535 = vmatprep.subr.bf16.mxu0 0
        %7536 = vmatpush1.bf16.msra.mxu0 %v5453
        %7537 = vmatprep.subr.bf16.mxu0 0
        %7538 = vmatpush1.bf16.msra.mxu0 %v5454
        %7539 = vmatprep.subr.bf16.mxu0 0
        %7540 = vmatpush1.bf16.msra.mxu0 %v5455
        %7541 = vmatprep.subr.bf16.mxu0 0
        %7542 = vmatpush1.bf16.msra.mxu0 %v5456
        %7543 = vmatprep.subr.bf16.mxu0 0
        %7544 = vmatpush1.bf16.msra.mxu0 %v5457
        %7545 = vmatprep.subr.bf16.mxu0 0
        %7546 = vmatpush1.bf16.msra.mxu0 %v5458
        %7547 = vmatprep.subr.bf16.mxu0 0
        %7548 = vmatpush1.bf16.msra.mxu0 %v5459
        %7549 = vmatprep.subr.bf16.mxu0 0
        %7550 = vmatpush1.bf16.msra.mxu0 %v5460
        %7551 = vmatprep.subr.bf16.mxu0 0
        %7552 = vmatpush1.bf16.msra.mxu0 %v5461
        %7553 = vmatprep.subr.bf16.mxu0 0
        %7554 = vmatpush1.bf16.msra.mxu0 %v5462
        %7555 = vmatprep.subr.bf16.mxu0 0
        %7556 = vmatpush1.bf16.msra.mxu0 %v5463
        %7557 = vmatprep.subr.bf16.mxu0 0
        %7558 = vmatpush1.bf16.msra.mxu0 %v5464
        %7559 = vmatprep.subr.bf16.mxu0 0
        %7560 = vmatpush1.bf16.msra.mxu0 %v5465
        %7561 = vmatprep.subr.bf16.mxu0 0
        %7562 = vmatpush1.bf16.msra.mxu0 %v5466
        %7563 = vmatprep.mubr.bf16.mxu0 %v2024
        %7564 = vmatmul.mubr.bf16.gmra.mrb[0].mxu0 %v2010
        %v7565 = vpop.f32.mrb[0].mxu0
        %v7566 = vadd.f32 %v7526, %v7565
        %v7567 = vpop.f32.mrb[0].mxu0
        %v7568 = vpop.f32.mrb[0].mxu0
        %v7569 = vpop.f32.mrb[0].mxu0
        %7570 = vdwg.mxu0
        %7571 = vmatprep.subr.bf16.mxu0 0
        %7572 = vmatpush1.bf16.msra.mxu0 %v5467
        %7573 = vmatprep.subr.bf16.mxu0 0
        %7574 = vmatpush1.bf16.msra.mxu0 %v5468
        %7575 = vmatprep.subr.bf16.mxu0 0
        %7576 = vmatpush1.bf16.msra.mxu0 %v5469
        %7577 = vmatprep.subr.bf16.mxu0 0
        %7578 = vmatpush1.bf16.msra.mxu0 %v5470
        %7579 = vmatprep.subr.bf16.mxu0 0
        %7580 = vmatpush1.bf16.msra.mxu0 %v5471
        %7581 = vmatprep.subr.bf16.mxu0 0
        %7582 = vmatpush1.bf16.msra.mxu0 %v5472
        %7583 = vmatprep.subr.bf16.mxu0 0
        %7584 = vmatpush1.bf16.msra.mxu0 %v5473
        %7585 = vmatprep.subr.bf16.mxu0 0
        %7586 = vmatpush1.bf16.msra.mxu0 %v5474
        %7587 = vmatprep.subr.bf16.mxu0 0
        %7588 = vmatpush1.bf16.msra.mxu0 %v5475
        %7589 = vmatprep.subr.bf16.mxu0 0
        %7590 = vmatpush1.bf16.msra.mxu0 %v5476
        %7591 = vmatprep.subr.bf16.mxu0 0
        %7592 = vmatpush1.bf16.msra.mxu0 %v5477
        %7593 = vmatprep.subr.bf16.mxu0 0
        %7594 = vmatpush1.bf16.msra.mxu0 %v5478
        %7595 = vmatprep.subr.bf16.mxu0 0
        %7596 = vmatpush1.bf16.msra.mxu0 %v5479
        %7597 = vmatprep.subr.bf16.mxu0 0
        %7598 = vmatpush1.bf16.msra.mxu0 %v5480
        %7599 = vmatprep.subr.bf16.mxu0 0
        %7600 = vmatpush1.bf16.msra.mxu0 %v5481
        %7601 = vmatprep.subr.bf16.mxu0 0
        %7602 = vmatpush1.bf16.msra.mxu0 %v5482
        %7603 = vmatprep.mubr.bf16.mxu0 %v2028
        %7604 = vmatmul.mubr.bf16.gmra.mrb[0].mxu0 %v2026
        %v7605 = vpop.f32.mrb[0].mxu0
        %v7606 = vadd.f32 %v7566, %v7605
        %v7607 = vpop.f32.mrb[0].mxu0
        %v7608 = vpop.f32.mrb[0].mxu0
        %v7609 = vpop.f32.mrb[0].mxu0
        %7610 = vdwg.mxu0
        %7611 = vmatprep.subr.bf16.mxu0 0
        %7612 = vmatpush1.bf16.msra.mxu0 %v5483
        %7613 = vmatprep.subr.bf16.mxu0 0
        %7614 = vmatpush1.bf16.msra.mxu0 %v5484
        %7615 = vmatprep.subr.bf16.mxu0 0
        %7616 = vmatpush1.bf16.msra.mxu0 %v5485
        %7617 = vmatprep.subr.bf16.mxu0 0
        %7618 = vmatpush1.bf16.msra.mxu0 %v5486
        %7619 = vmatprep.subr.bf16.mxu0 0
        %7620 = vmatpush1.bf16.msra.mxu0 %v5487
        %7621 = vmatprep.subr.bf16.mxu0 0
        %7622 = vmatpush1.bf16.msra.mxu0 %v5488
        %7623 = vmatprep.subr.bf16.mxu0 0
        %7624 = vmatpush1.bf16.msra.mxu0 %v5489
        %7625 = vmatprep.subr.bf16.mxu0 0
        %7626 = vmatpush1.bf16.msra.mxu0 %v5490
        %7627 = vmatprep.subr.bf16.mxu0 0
        %7628 = vmatpush1.bf16.msra.mxu0 %v5491
        %7629 = vmatprep.subr.bf16.mxu0 0
        %7630 = vmatpush1.bf16.msra.mxu0 %v5492
        %7631 = vmatprep.subr.bf16.mxu0 0
        %7632 = vmatpush1.bf16.msra.mxu0 %v5493
        %7633 = vmatprep.subr.bf16.mxu0 0
        %7634 = vmatpush1.bf16.msra.mxu0 %v5494
        %7635 = vmatprep.subr.bf16.mxu0 0
        %7636 = vmatpush1.bf16.msra.mxu0 %v5495
        %7637 = vmatprep.subr.bf16.mxu0 0
        %7638 = vmatpush1.bf16.msra.mxu0 %v5496
        %7639 = vmatprep.subr.bf16.mxu0 0
        %7640 = vmatpush1.bf16.msra.mxu0 %v5497
        %7641 = vmatprep.subr.bf16.mxu0 0
        %7642 = vmatpush1.bf16.msra.mxu0 %v5498
        %7643 = vmatprep.mubr.bf16.mxu0 %v2066
        %7644 = vmatmul.mubr.bf16.gmra.mrb[0].mxu0 %v2052
        %v7645 = vpop.f32.mrb[0].mxu0
        %v7646 = vadd.f32 %v7606, %v7645
        %v7647 = vpop.f32.mrb[0].mxu0
        %v7648 = vpop.f32.mrb[0].mxu0
        %v7649 = vpop.f32.mrb[0].mxu0
        %7650 = vdwg.mxu0
        %7651 = vmatprep.subr.bf16.mxu0 0
        %7652 = vmatpush1.bf16.msra.mxu0 %v5499
        %7653 = vmatprep.subr.bf16.mxu0 0
        %7654 = vmatpush1.bf16.msra.mxu0 %v5500
        %7655 = vmatprep.subr.bf16.mxu0 0
        %7656 = vmatpush1.bf16.msra.mxu0 %v5501
        %7657 = vmatprep.subr.bf16.mxu0 0
        %7658 = vmatpush1.bf16.msra.mxu0 %v5502
        %7659 = vmatprep.subr.bf16.mxu0 0
        %7660 = vmatpush1.bf16.msra.mxu0 %v5503
        %7661 = vmatprep.subr.bf16.mxu0 0
        %7662 = vmatpush1.bf16.msra.mxu0 %v5504
        %7663 = vmatprep.subr.bf16.mxu0 0
        %7664 = vmatpush1.bf16.msra.mxu0 %v5505
        %7665 = vmatprep.subr.bf16.mxu0 0
        %7666 = vmatpush1.bf16.msra.mxu0 %v5506
        %7667 = vmatprep.subr.bf16.mxu0 0
        %7668 = vmatpush1.bf16.msra.mxu0 %v5507
        %7669 = vmatprep.subr.bf16.mxu0 0
        %7670 = vmatpush1.bf16.msra.mxu0 %v5508
        %7671 = vmatprep.subr.bf16.mxu0 0
        %7672 = vmatpush1.bf16.msra.mxu0 %v5509
        %7673 = vmatprep.subr.bf16.mxu0 0
        %7674 = vmatpush1.bf16.msra.mxu0 %v5510
        %7675 = vmatprep.subr.bf16.mxu0 0
        %7676 = vmatpush1.bf16.msra.mxu0 %v5511
        %7677 = vmatprep.subr.bf16.mxu0 0
        %7678 = vmatpush1.bf16.msra.mxu0 %v5512
        %7679 = vmatprep.subr.bf16.mxu0 0
        %7680 = vmatpush1.bf16.msra.mxu0 %v5513
        %7681 = vmatprep.subr.bf16.mxu0 0
        %7682 = vmatpush1.bf16.msra.mxu0 %v5514
        %7683 = vmatprep.mubr.bf16.mxu0 %v2076
        %7684 = vmatmul.mubr.bf16.gmra.mrb[0].mxu0 %v2074
        %v7685 = vpop.f32.mrb[0].mxu0
        %v7686 = vadd.f32 %v7646, %v7685
        %v7687 = vpop.f32.mrb[0].mxu0
        %v7688 = vpop.f32.mrb[0].mxu0
        %v7689 = vpop.f32.mrb[0].mxu0
        %7690 = vdwg.mxu0
        %7691 = vmatprep.subr.bf16.mxu0 0
        %7692 = vmatpush1.bf16.msra.mxu0 %v5515
        %7693 = vmatprep.subr.bf16.mxu0 0
        %7694 = vmatpush1.bf16.msra.mxu0 %v5516
        %7695 = vmatprep.subr.bf16.mxu0 0
        %7696 = vmatpush1.bf16.msra.mxu0 %v5517
        %7697 = vmatprep.subr.bf16.mxu0 0
        %7698 = vmatpush1.bf16.msra.mxu0 %v5518
        %7699 = vmatprep.subr.bf16.mxu0 0
        %7700 = vmatpush1.bf16.msra.mxu0 %v5519
        %7701 = vmatprep.subr.bf16.mxu0 0
        %7702 = vmatpush1.bf16.msra.mxu0 %v5520
        %7703 = vmatprep.subr.bf16.mxu0 0
        %7704 = vmatpush1.bf16.msra.mxu0 %v5521
        %7705 = vmatprep.subr.bf16.mxu0 0
        %7706 = vmatpush1.bf16.msra.mxu0 %v5522
        %7707 = vmatprep.subr.bf16.mxu0 0
        %7708 = vmatpush1.bf16.msra.mxu0 %v5523
        %7709 = vmatprep.subr.bf16.mxu0 0
        %7710 = vmatpush1.bf16.msra.mxu0 %v5524
        %7711 = vmatprep.subr.bf16.mxu0 0
        %7712 = vmatpush1.bf16.msra.mxu0 %v5525
        %7713 = vmatprep.subr.bf16.mxu0 0
        %7714 = vmatpush1.bf16.msra.mxu0 %v5526
        %7715 = vmatprep.subr.bf16.mxu0 0
        %7716 = vmatpush1.bf16.msra.mxu0 %v5527
        %7717 = vmatprep.subr.bf16.mxu0 0
        %7718 = vmatpush1.bf16.msra.mxu0 %v5528
        %7719 = vmatprep.subr.bf16.mxu0 0
        %7720 = vmatpush1.bf16.msra.mxu0 %v5529
        %7721 = vmatprep.subr.bf16.mxu0 0
        %7722 = vmatpush1.bf16.msra.mxu0 %v5530
        %7723 = vmatprep.mubr.bf16.mxu0 %v2073
        %7724 = vmatmul.mubr.bf16.gmra.mrb[0].mxu0 %v2059
        %v7725 = vpop.f32.mrb[0].mxu0
        %v7726 = vadd.f32 %v7686, %v7725
        %v7727 = vpop.f32.mrb[0].mxu0
        %v7728 = vpop.f32.mrb[0].mxu0
        %v7729 = vpop.f32.mrb[0].mxu0
        %7730 = vdwg.mxu0
        %7731 = vmatprep.subr.bf16.mxu0 0
        %7732 = vmatpush1.bf16.msra.mxu0 %v5531
        %7733 = vmatprep.subr.bf16.mxu0 0
        %7734 = vmatpush1.bf16.msra.mxu0 %v5532
        %7735 = vmatprep.subr.bf16.mxu0 0
        %7736 = vmatpush1.bf16.msra.mxu0 %v5533
        %7737 = vmatprep.subr.bf16.mxu0 0
        %7738 = vmatpush1.bf16.msra.mxu0 %v5534
        %7739 = vmatprep.subr.bf16.mxu0 0
        %7740 = vmatpush1.bf16.msra.mxu0 %v5535
        %7741 = vmatprep.subr.bf16.mxu0 0
        %7742 = vmatpush1.bf16.msra.mxu0 %v5536
        %7743 = vmatprep.subr.bf16.mxu0 0
        %7744 = vmatpush1.bf16.msra.mxu0 %v5537
        %7745 = vmatprep.subr.bf16.mxu0 0
        %7746 = vmatpush1.bf16.msra.mxu0 %v5538
        %7747 = vmatprep.subr.bf16.mxu0 0
        %7748 = vmatpush1.bf16.msra.mxu0 %v5539
        %7749 = vmatprep.subr.bf16.mxu0 0
        %7750 = vmatpush1.bf16.msra.mxu0 %v5540
        %7751 = vmatprep.subr.bf16.mxu0 0
        %7752 = vmatpush1.bf16.msra.mxu0 %v5541
        %7753 = vmatprep.subr.bf16.mxu0 0
        %7754 = vmatpush1.bf16.msra.mxu0 %v5542
        %7755 = vmatprep.subr.bf16.mxu0 0
        %7756 = vmatpush1.bf16.msra.mxu0 %v5543
        %7757 = vmatprep.subr.bf16.mxu0 0
        %7758 = vmatpush1.bf16.msra.mxu0 %v5544
        %7759 = vmatprep.subr.bf16.mxu0 0
        %7760 = vmatpush1.bf16.msra.mxu0 %v5545
        %7761 = vmatprep.subr.bf16.mxu0 0
        %7762 = vmatpush1.bf16.msra.mxu0 %v5546
        %7763 = vmatprep.mubr.bf16.mxu0 %v2077
        %7764 = vmatmul.mubr.bf16.gmra.mrb[0].mxu0 %v2075
        %v7765 = vpop.f32.mrb[0].mxu0
        %v7766 = vadd.f32 %v7726, %v7765
        %v7767 = vpop.f32.mrb[0].mxu0
        %v7768 = vpop.f32.mrb[0].mxu0
        %v7769 = vpop.f32.mrb[0].mxu0
        %7770 = vdwg.mxu0
        %7771 = vmatprep.subr.bf16.mxu0 0
        %7772 = vmatpush1.bf16.msra.mxu0 %v5547
        %7773 = vmatprep.subr.bf16.mxu0 0
        %7774 = vmatpush1.bf16.msra.mxu0 %v5548
        %7775 = vmatprep.subr.bf16.mxu0 0
        %7776 = vmatpush1.bf16.msra.mxu0 %v5549
        %7777 = vmatprep.subr.bf16.mxu0 0
        %7778 = vmatpush1.bf16.msra.mxu0 %v5550
        %7779 = vmatprep.subr.bf16.mxu0 0
        %7780 = vmatpush1.bf16.msra.mxu0 %v5551
        %7781 = vmatprep.subr.bf16.mxu0 0
        %7782 = vmatpush1.bf16.msra.mxu0 %v5552
        %7783 = vmatprep.subr.bf16.mxu0 0
        %7784 = vmatpush1.bf16.msra.mxu0 %v5553
        %7785 = vmatprep.subr.bf16.mxu0 0
        %7786 = vmatpush1.bf16.msra.mxu0 %v5554
        %7787 = vmatprep.subr.bf16.mxu0 0
        %7788 = vmatpush1.bf16.msra.mxu0 %v5555
        %7789 = vmatprep.subr.bf16.mxu0 0
        %7790 = vmatpush1.bf16.msra.mxu0 %v5556
        %7791 = vmatprep.subr.bf16.mxu0 0
        %7792 = vmatpush1.bf16.msra.mxu0 %v5557
        %7793 = vmatprep.subr.bf16.mxu0 0
        %7794 = vmatpush1.bf16.msra.mxu0 %v5558
        %7795 = vmatprep.subr.bf16.mxu0 0
        %7796 = vmatpush1.bf16.msra.mxu0 %v5559
        %7797 = vmatprep.subr.bf16.mxu0 0
        %7798 = vmatpush1.bf16.msra.mxu0 %v5560
        %7799 = vmatprep.subr.bf16.mxu0 0
        %7800 = vmatpush1.bf16.msra.mxu0 %v5561
        %7801 = vmatprep.subr.bf16.mxu0 0
        %7802 = vmatpush1.bf16.msra.mxu0 %v5562
        %7803 = vmatprep.mubr.bf16.mxu0 %v2115
        %7804 = vmatmul.mubr.bf16.gmra.mrb[0].mxu0 %v2101
        %v7805 = vpop.f32.mrb[0].mxu0
        %v7806 = vadd.f32 %v7766, %v7805
        %v7807 = vpop.f32.mrb[0].mxu0
        %v7808 = vpop.f32.mrb[0].mxu0
        %v7809 = vpop.f32.mrb[0].mxu0
        %7810 = vdwg.mxu0
        %7811 = vmatprep.subr.bf16.mxu0 0
        %7812 = vmatpush1.bf16.msra.mxu0 %v5563
        %7813 = vmatprep.subr.bf16.mxu0 0
        %7814 = vmatpush1.bf16.msra.mxu0 %v5564
        %7815 = vmatprep.subr.bf16.mxu0 0
        %7816 = vmatpush1.bf16.msra.mxu0 %v5565
        %7817 = vmatprep.subr.bf16.mxu0 0
        %7818 = vmatpush1.bf16.msra.mxu0 %v5566
        %7819 = vmatprep.subr.bf16.mxu0 0
        %7820 = vmatpush1.bf16.msra.mxu0 %v5567
        %7821 = vmatprep.subr.bf16.mxu0 0
        %7822 = vmatpush1.bf16.msra.mxu0 %v5568
        %7823 = vmatprep.subr.bf16.mxu0 0
        %7824 = vmatpush1.bf16.msra.mxu0 %v5569
        %7825 = vmatprep.subr.bf16.mxu0 0
        %7826 = vmatpush1.bf16.msra.mxu0 %v5570
        %7827 = vmatprep.subr.bf16.mxu0 0
        %7828 = vmatpush1.bf16.msra.mxu0 %v5571
        %7829 = vmatprep.subr.bf16.mxu0 0
        %7830 = vmatpush1.bf16.msra.mxu0 %v5572
        %7831 = vmatprep.subr.bf16.mxu0 0
        %7832 = vmatpush1.bf16.msra.mxu0 %v5573
        %7833 = vmatprep.subr.bf16.mxu0 0
        %7834 = vmatpush1.bf16.msra.mxu0 %v5574
        %7835 = vmatprep.subr.bf16.mxu0 0
        %7836 = vmatpush1.bf16.msra.mxu0 %v5575
        %7837 = vmatprep.subr.bf16.mxu0 0
        %7838 = vmatpush1.bf16.msra.mxu0 %v5576
        %7839 = vmatprep.subr.bf16.mxu0 0
        %7840 = vmatpush1.bf16.msra.mxu0 %v5577
        %7841 = vmatprep.subr.bf16.mxu0 0
        %7842 = vmatpush1.bf16.msra.mxu0 %v5578
        %7843 = vmatprep.mubr.bf16.mxu0 %v2125
        %7844 = vmatmul.mubr.bf16.gmra.mrb[0].mxu0 %v2123
        %v7845 = vpop.f32.mrb[0].mxu0
        %v7846 = vadd.f32 %v7806, %v7845
        %v7847 = vpop.f32.mrb[0].mxu0
        %v7848 = vpop.f32.mrb[0].mxu0
        %v7849 = vpop.f32.mrb[0].mxu0
        %7850 = vdwg.mxu0
        %7851 = vmatprep.subr.bf16.mxu0 0
        %7852 = vmatpush1.bf16.msra.mxu0 %v5579
        %7853 = vmatprep.subr.bf16.mxu0 0
        %7854 = vmatpush1.bf16.msra.mxu0 %v5580
        %7855 = vmatprep.subr.bf16.mxu0 0
        %7856 = vmatpush1.bf16.msra.mxu0 %v5581
        %7857 = vmatprep.subr.bf16.mxu0 0
        %7858 = vmatpush1.bf16.msra.mxu0 %v5582
        %7859 = vmatprep.subr.bf16.mxu0 0
        %7860 = vmatpush1.bf16.msra.mxu0 %v5583
        %7861 = vmatprep.subr.bf16.mxu0 0
        %7862 = vmatpush1.bf16.msra.mxu0 %v5584
        %7863 = vmatprep.subr.bf16.mxu0 0
        %7864 = vmatpush1.bf16.msra.mxu0 %v5585
        %7865 = vmatprep.subr.bf16.mxu0 0
        %7866 = vmatpush1.bf16.msra.mxu0 %v5586
        %7867 = vmatprep.subr.bf16.mxu0 0
        %7868 = vmatpush1.bf16.msra.mxu0 %v5587
        %7869 = vmatprep.subr.bf16.mxu0 0
        %7870 = vmatpush1.bf16.msra.mxu0 %v5588
        %7871 = vmatprep.subr.bf16.mxu0 0
        %7872 = vmatpush1.bf16.msra.mxu0 %v5589
        %7873 = vmatprep.subr.bf16.mxu0 0
        %7874 = vmatpush1.bf16.msra.mxu0 %v5590
        %7875 = vmatprep.subr.bf16.mxu0 0
        %7876 = vmatpush1.bf16.msra.mxu0 %v5591
        %7877 = vmatprep.subr.bf16.mxu0 0
        %7878 = vmatpush1.bf16.msra.mxu0 %v5592
        %7879 = vmatprep.subr.bf16.mxu0 0
        %7880 = vmatpush1.bf16.msra.mxu0 %v5593
        %7881 = vmatprep.subr.bf16.mxu0 0
        %7882 = vmatpush1.bf16.msra.mxu0 %v5594
        %7883 = vmatprep.mubr.bf16.mxu0 %v2122
        %7884 = vmatmul.mubr.bf16.gmra.mrb[0].mxu0 %v2108
        %v7885 = vpop.f32.mrb[0].mxu0
        %v7886 = vadd.f32 %v7846, %v7885
        %v7887 = vpop.f32.mrb[0].mxu0
        %v7888 = vpop.f32.mrb[0].mxu0
        %v7889 = vpop.f32.mrb[0].mxu0
        %7890 = vdwg.mxu0
        %7891 = vmatprep.subr.bf16.mxu0 0
        %7892 = vmatpush1.bf16.msra.mxu0 %v5595
        %7893 = vmatprep.subr.bf16.mxu0 0
        %7894 = vmatpush1.bf16.msra.mxu0 %v5596
        %7895 = vmatprep.subr.bf16.mxu0 0
        %7896 = vmatpush1.bf16.msra.mxu0 %v5597
        %7897 = vmatprep.subr.bf16.mxu0 0
        %7898 = vmatpush1.bf16.msra.mxu0 %v5598
        %7899 = vmatprep.subr.bf16.mxu0 0
        %7900 = vmatpush1.bf16.msra.mxu0 %v5599
        %7901 = vmatprep.subr.bf16.mxu0 0
        %7902 = vmatpush1.bf16.msra.mxu0 %v5600
        %7903 = vmatprep.subr.bf16.mxu0 0
        %7904 = vmatpush1.bf16.msra.mxu0 %v5601
        %7905 = vmatprep.subr.bf16.mxu0 0
        %7906 = vmatpush1.bf16.msra.mxu0 %v5602
        %7907 = vmatprep.subr.bf16.mxu0 0
        %7908 = vmatpush1.bf16.msra.mxu0 %v5603
        %7909 = vmatprep.subr.bf16.mxu0 0
        %7910 = vmatpush1.bf16.msra.mxu0 %v5604
        %7911 = vmatprep.subr.bf16.mxu0 0
        %7912 = vmatpush1.bf16.msra.mxu0 %v5605
        %7913 = vmatprep.subr.bf16.mxu0 0
        %7914 = vmatpush1.bf16.msra.mxu0 %v5606
        %7915 = vmatprep.subr.bf16.mxu0 0
        %7916 = vmatpush1.bf16.msra.mxu0 %v5607
        %7917 = vmatprep.subr.bf16.mxu0 0
        %7918 = vmatpush1.bf16.msra.mxu0 %v5608
        %7919 = vmatprep.subr.bf16.mxu0 0
        %7920 = vmatpush1.bf16.msra.mxu0 %v5609
        %7921 = vmatprep.subr.bf16.mxu0 0
        %7922 = vmatpush1.bf16.msra.mxu0 %v5610
        %7923 = vmatprep.mubr.bf16.mxu0 %v2126
        %7924 = vmatmul.mubr.bf16.gmra.mrb[0].mxu0 %v2124
        %v7925 = vpop.f32.mrb[0].mxu0
        %v7926 = vadd.f32 %v7886, %v7925
        %v7927 = vpop.f32.mrb[0].mxu0
        %v7928 = vpop.f32.mrb[0].mxu0
        %v7929 = vpop.f32.mrb[0].mxu0
        %7930 = vdwg.mxu0
        %7931 = vmatprep.subr.bf16.mxu0 0
        %7932 = vmatpush1.bf16.msra.mxu0 %v5611
        %7933 = vmatprep.subr.bf16.mxu0 0
        %7934 = vmatpush1.bf16.msra.mxu0 %v5612
        %7935 = vmatprep.subr.bf16.mxu0 0
        %7936 = vmatpush1.bf16.msra.mxu0 %v5613
        %7937 = vmatprep.subr.bf16.mxu0 0
        %7938 = vmatpush1.bf16.msra.mxu0 %v5614
        %7939 = vmatprep.subr.bf16.mxu0 0
        %7940 = vmatpush1.bf16.msra.mxu0 %v5615
        %7941 = vmatprep.subr.bf16.mxu0 0
        %7942 = vmatpush1.bf16.msra.mxu0 %v5616
        %7943 = vmatprep.subr.bf16.mxu0 0
        %7944 = vmatpush1.bf16.msra.mxu0 %v5617
        %7945 = vmatprep.subr.bf16.mxu0 0
        %7946 = vmatpush1.bf16.msra.mxu0 %v5618
        %7947 = vmatprep.subr.bf16.mxu0 0
        %7948 = vmatpush1.bf16.msra.mxu0 %v5619
        %7949 = vmatprep.subr.bf16.mxu0 0
        %7950 = vmatpush1.bf16.msra.mxu0 %v5620
        %7951 = vmatprep.subr.bf16.mxu0 0
        %7952 = vmatpush1.bf16.msra.mxu0 %v5621
        %7953 = vmatprep.subr.bf16.mxu0 0
        %7954 = vmatpush1.bf16.msra.mxu0 %v5622
        %7955 = vmatprep.subr.bf16.mxu0 0
        %7956 = vmatpush1.bf16.msra.mxu0 %v5623
        %7957 = vmatprep.subr.bf16.mxu0 0
        %7958 = vmatpush1.bf16.msra.mxu0 %v5624
        %7959 = vmatprep.subr.bf16.mxu0 0
        %7960 = vmatpush1.bf16.msra.mxu0 %v5625
        %7961 = vmatprep.subr.bf16.mxu0 0
        %7962 = vmatpush1.bf16.msra.mxu0 %v5626
        %7963 = vmatprep.mubr.bf16.mxu0 %v2163
        %7964 = vmatmul.mubr.bf16.gmra.mrb[0].mxu0 %v2149
        %v7965 = vpop.f32.mrb[0].mxu0
        %v7966 = vadd.f32 %v7926, %v7965
        %v7967 = vpop.f32.mrb[0].mxu0
        %v7968 = vpop.f32.mrb[0].mxu0
        %v7969 = vpop.f32.mrb[0].mxu0
        %7970 = vdwg.mxu0
        %7971 = vmatprep.subr.bf16.mxu0 0
        %7972 = vmatpush1.bf16.msra.mxu0 %v5627
        %7973 = vmatprep.subr.bf16.mxu0 0
        %7974 = vmatpush1.bf16.msra.mxu0 %v5628
        %7975 = vmatprep.subr.bf16.mxu0 0
        %7976 = vmatpush1.bf16.msra.mxu0 %v5629
        %7977 = vmatprep.subr.bf16.mxu0 0
        %7978 = vmatpush1.bf16.msra.mxu0 %v5630
        %7979 = vmatprep.subr.bf16.mxu0 0
        %7980 = vmatpush1.bf16.msra.mxu0 %v5631
        %7981 = vmatprep.subr.bf16.mxu0 0
        %7982 = vmatpush1.bf16.msra.mxu0 %v5632
        %7983 = vmatprep.subr.bf16.mxu0 0
        %7984 = vmatpush1.bf16.msra.mxu0 %v5633
        %7985 = vmatprep.subr.bf16.mxu0 0
        %7986 = vmatpush1.bf16.msra.mxu0 %v5634
        %7987 = vmatprep.subr.bf16.mxu0 0
        %7988 = vmatpush1.bf16.msra.mxu0 %v5635
        %7989 = vmatprep.subr.bf16.mxu0 0
        %7990 = vmatpush1.bf16.msra.mxu0 %v5636
        %7991 = vmatprep.subr.bf16.mxu0 0
        %7992 = vmatpush1.bf16.msra.mxu0 %v5637
        %7993 = vmatprep.subr.bf16.mxu0 0
        %7994 = vmatpush1.bf16.msra.mxu0 %v5638
        %7995 = vmatprep.subr.bf16.mxu0 0
        %7996 = vmatpush1.bf16.msra.mxu0 %v5639
        %7997 = vmatprep.subr.bf16.mxu0 0
        %7998 = vmatpush1.bf16.msra.mxu0 %v5640
        %7999 = vmatprep.subr.bf16.mxu0 0
        %8000 = vmatpush1.bf16.msra.mxu0 %v5641
        %8001 = vmatprep.subr.bf16.mxu0 0
        %8002 = vmatpush1.bf16.msra.mxu0 %v5642
        %8003 = vmatprep.mubr.bf16.mxu0 %v2165
        %8004 = vmatmul.mubr.bf16.gmra.mrb[0].mxu0 %v2164
        %v8005 = vpop.f32.mrb[0].mxu0
        %v8006 = vadd.f32 %v7966, %v8005
        %v8007 = vpop.f32.mrb[0].mxu0
        %v8008 = vpop.f32.mrb[0].mxu0
        %v8009 = vpop.f32.mrb[0].mxu0
        %8010 = vdwg.mxu0
        %8011 = vmatprep.subr.bf16.mxu0 0
        %8012 = vmatpush1.bf16.msra.mxu0 %v5643
        %8013 = vmatprep.subr.bf16.mxu0 0
        %8014 = vmatpush1.bf16.msra.mxu0 %v5644
        %8015 = vmatprep.subr.bf16.mxu0 0
        %8016 = vmatpush1.bf16.msra.mxu0 %v5645
        %8017 = vmatprep.subr.bf16.mxu0 0
        %8018 = vmatpush1.bf16.msra.mxu0 %v5646
        %8019 = vmatprep.subr.bf16.mxu0 0
        %8020 = vmatpush1.bf16.msra.mxu0 %v5647
        %8021 = vmatprep.subr.bf16.mxu0 0
        %8022 = vmatpush1.bf16.msra.mxu0 %v5648
        %8023 = vmatprep.subr.bf16.mxu0 0
        %8024 = vmatpush1.bf16.msra.mxu0 %v5649
        %8025 = vmatprep.subr.bf16.mxu0 0
        %8026 = vmatpush1.bf16.msra.mxu0 %v5650
        %8027 = vmatprep.subr.bf16.mxu0 0
        %8028 = vmatpush1.bf16.msra.mxu0 0
        %8029 = vmatprep.subr.bf16.mxu0 0
        %8030 = vmatpush1.bf16.msra.mxu0 0
        %8031 = vmatprep.subr.bf16.mxu0 0
        %8032 = vmatpush1.bf16.msra.mxu0 0
        %8033 = vmatprep.subr.bf16.mxu0 0
        %8034 = vmatpush1.bf16.msra.mxu0 0
        %8035 = vmatprep.subr.bf16.mxu0 0
        %8036 = vmatpush1.bf16.msra.mxu0 0
        %8037 = vmatprep.subr.bf16.mxu0 0
        %8038 = vmatpush1.bf16.msra.mxu0 0
        %8039 = vmatprep.subr.bf16.mxu0 0
        %8040 = vmatpush1.bf16.msra.mxu0 0
        %8041 = vmatprep.subr.bf16.mxu0 0
        %8042 = vmatpush1.bf16.msra.mxu0 0
        %8043 = vmatprep.mubr.bf16.mxu0 0
        %8044 = vmatmul.mubr.bf16.gmra.mrb[0].mxu0 %v2156
        %v8045 = vpop.f32.mrb[0].mxu0
        %v8046 = vadd.f32 %v8006, %v8045
        %v8047 = vpop.f32.mrb[0].mxu0
        %v8048 = vpop.f32.mrb[0].mxu0
        %v8049 = vpop.f32.mrb[0].mxu0
        %8050 = vdwg.mxu0
        %v8051 = vmax.f32 %v8046, 0.0
        %v8052 = vld [vmem:[%s245] sm:$0xff]
        %v8053 = vld [vmem:[%s245 + $0x8] sm:$0xff]
        %v8054 = vld [vmem:[%s245 + $0x10] sm:$0xff]
        %v8055 = vld [vmem:[%s245 + $0x18] sm:$0xff]
        %v8056 = vld [vmem:[%s245 + $0x20] sm:$0xff]
        %v8057 = vld [vmem:[%s245 + $0x28] sm:$0xff]
        %v8058 = vld [vmem:[%s245 + $0x30] sm:$0xff]
        %v8059 = vld [vmem:[%s245 + $0x38] sm:$0xff]
        %v8060 = vld [vmem:[%s245 + $0x40] sm:$0xff]
        %v8061 = vld [vmem:[%s245 + $0x48] sm:$0xff]
        %v8062 = vld [vmem:[%s245 + $0x50] sm:$0xff]
        %v8063 = vld [vmem:[%s245 + $0x58] sm:$0xff]
        %v8064 = vld [vmem:[%s245 + $0x60] sm:$0xff]
        %v8065 = vld [vmem:[%s245 + $0x68] sm:$0xff]
        %v8066 = vld [vmem:[%s245 + $0x70] sm:$0xff]
        %v8067 = vld [vmem:[%s245 + $0x78] sm:$0xff]
        %8068 = vmatprep.subr.mxu0 0.0
        %8069 = vmatpush1.msra.mxu0 %v8052
        %8070 = vmatprep.subr.mxu0 0.0
        %8071 = vmatpush1.msra.mxu0 %v8053
        %8072 = vmatprep.subr.mxu0 0.0
        %8073 = vmatpush1.msra.mxu0 %v8054
        %8074 = vmatprep.subr.mxu0 0.0
        %8075 = vmatpush1.msra.mxu0 %v8055
        %8076 = vmatprep.subr.mxu0 0.0
        %8077 = vmatpush1.msra.mxu0 %v8056
        %8078 = vmatprep.subr.mxu0 0.0
        %8079 = vmatpush1.msra.mxu0 %v8057
        %8080 = vmatprep.subr.mxu0 0.0
        %8081 = vmatpush1.msra.mxu0 %v8058
        %8082 = vmatprep.subr.mxu0 0.0
        %8083 = vmatpush1.msra.mxu0 %v8059
        %8084 = vmatprep.subr.mxu0 0.0
        %8085 = vmatpush1.msra.mxu0 %v8060
        %8086 = vmatprep.subr.mxu0 0.0
        %8087 = vmatpush1.msra.mxu0 %v8061
        %8088 = vmatprep.subr.mxu0 0.0
        %8089 = vmatpush1.msra.mxu0 %v8062
        %8090 = vmatprep.subr.mxu0 0.0
        %8091 = vmatpush1.msra.mxu0 %v8063
        %8092 = vmatprep.subr.mxu0 0.0
        %8093 = vmatpush1.msra.mxu0 %v8064
        %8094 = vmatprep.subr.mxu0 0.0
        %8095 = vmatpush1.msra.mxu0 %v8065
        %8096 = vmatprep.subr.mxu0 0.0
        %8097 = vmatpush1.msra.mxu0 %v8066
        %8098 = vmatprep.subr.mxu0 0.0
        %8099 = vmatpush1.msra.mxu0 %v8067
        %8100 = vmatprep.subr.mxu0 0.0
        %8101 = vmatpush1.msra.mxu0 0.0
        %8102 = vmatprep.subr.mxu0 0.0
        %8103 = vmatpush1.msra.mxu0 0.0
        %8104 = vmatprep.subr.mxu0 0.0
        %8105 = vmatpush1.msra.mxu0 0.0
        %8106 = vmatprep.subr.mxu0 0.0
        %8107 = vmatpush1.msra.mxu0 0.0
        %8108 = vmatprep.subr.mxu0 0.0
        %8109 = vmatpush1.msra.mxu0 0.0
        %8110 = vmatprep.subr.mxu0 0.0
        %8111 = vmatpush1.msra.mxu0 0.0
        %8112 = vmatprep.subr.mxu0 0.0
        %8113 = vmatpush1.msra.mxu0 0.0
        %8114 = vmatprep.subr.mxu0 0.0
        %8115 = vmatpush1.msra.mxu0 0.0
        %8116 = vmatprep.subr.mxu0 0.0
        %8117 = vmatpush1.msra.mxu0 0.0
        %8118 = vmatprep.subr.mxu0 0.0
        %8119 = vmatpush1.msra.mxu0 0.0
        %8120 = vmatprep.subr.mxu0 0.0
        %8121 = vmatpush1.msra.mxu0 0.0
        %8122 = vmatprep.subr.mxu0 0.0
        %8123 = vmatpush1.msra.mxu0 0.0
        %8124 = vmatprep.subr.mxu0 0.0
        %8125 = vmatpush1.msra.mxu0 0.0
        %8126 = vmatprep.subr.mxu0 0.0
        %8127 = vmatpush1.msra.mxu0 0.0
        %8128 = vmatprep.subr.mxu0 0.0
        %8129 = vmatpush1.msra.mxu0 0.0
        %8130 = vmatprep.subr.mxu0 0.0
        %8131 = vmatpush1.msra.mxu0 0.0
        %8132 = vmatprep.mubr.f32.mxu0 0.0
        %8133 = vmatmul.mubr.f32.gmra.mrb[0].mxu0 %v8051
        %v8134 = vpop.f32.mrb[0].mxu0
        %v8135 = vadd.f32 0.0, %v8134
        %v8136 = vpop.f32.mrb[0].mxu0
        %8137 = vdwg.mxu0
        %p8138 = scmp.eq.s32.totalorder %s17, 0
        // Predicated region
        $region41: #{dqn_forward.5} parent=39 // pred_check
          %p8139 = pneg %p8138
        $region42: #{dqn_forward.5} parent=39 // pred_check_branch
          %8141 = sbr.rel (%p8139) target = $region44
        $region43: #{dqn_forward.5} parent=39 // pred_region
          %v8142 = vld [vmem:[%s4] sm:$0x1]
          %v8144 = vlaneseq
          %v8145 = vshrl.u32 %v8144, 7
          %v8146 = vsub.s32 0, %v8145
          %v8147 = vrot.slane %v8142, %v8146
          %v8149 = vadd.f32 %v8135, %v8147
          %vm8150 = vcmask 25600
          %8151 = vst.msk [vmem:[#allocation2] sm:$0x3] %vm8150, %v8149
        $region44: #{dqn_forward.5} parent=39 // pred_fallthru
          _
        %p8152 = scmp.gt.s32.totalorder %s17, 0
        // Predicated region
        $region45: #{dqn_forward.5} parent=39 // pred_check
          %p8153 = pneg %p8152
        $region46: #{dqn_forward.5} parent=39 // pred_check_branch
          %8155 = sbr.rel (%p8153) target = $region48
        $region47: #{dqn_forward.5} parent=39 // pred_region
          %v8156 = vld [vmem:[#allocation2] sm:$0x3]
          %v8157 = vadd.f32 %v8156, %v8135
          %vm8158 = vcmask 25600
          %8159 = vst.msk [vmem:[#allocation2] sm:$0x3] %vm8158, %v8157
        $region48: #{dqn_forward.5} parent=39 // pred_fallthru
          _
        // Predicated region
        $region49: #{dqn_forward.5} parent=39 // pred_check
          %p8160 = pneg %p150
        $region50: #{dqn_forward.5} parent=39 // pred_check_branch
          %8162 = sbr.rel (%p8160) target = $region52
        $region51: #{dqn_forward.5} parent=39 // pred_region
          %s8164 = ssub.s32 32, 32
          %8165 = vsyncadd [#allocation3], %s8164
          %s8167 = sshll.u32 [#allocation2], 4
          %s8168 = int_to_ptr.vmem [resolvable:$true] %s8167
          %8170 = dma.vmem_to_hbm [thread:$0]  %s8168, 32, %s5, [#allocation3]
        $region52: #{dqn_forward.5} parent=39 // pred_fallthru
          _
        // Predicated region
        $region53: #{dqn_forward.5} parent=39 // pred_check
          %p8171 = pneg %p150
        $region54: #{dqn_forward.5} parent=39 // pred_check_branch
          %8173 = sbr.rel (%p8171) target = $region56
        $region55: #{dqn_forward.5} parent=39 // pred_region
          %8174 = dma.done [#allocation3], 32
        $region56: #{dqn_forward.5} parent=39 // pred_fallthru
          _
      $region40: #{dqn_forward.5} parent=5 // pred_fallthru
        _
      %p8175 = scmp.le.s32.totalorder 2, %s12
      // Predicated region
      $region57: #{dqn_forward.5} parent=5 // pred_check
        %p8176 = pneg %p8175
      $region58: #{dqn_forward.5} parent=5 // pred_check_branch
        %8178 = sbr.rel (%p8176) target = $region60
      $region59: #{dqn_forward.5} parent=5 // pred_region
        %s8179 = ssub.s32 %s12, 2
      $region60: #{dqn_forward.5} parent=5 // pred_fallthru
        _
    $region6: #{dqn_forward.5} parent=1 // loop_footer
      %s16 = sadd.s32 1, %s12
    $region7: #{dqn_forward.5} parent=1 // loop_footer_branch
      %11 = sbr.rel target = $region3
    $region8: #{dqn_forward.5} parent=1 // loop_exit
      _
    %8180 = vsyncpa [#allocation3], 1
    %s8181 = scalar_lea.sflag [#allocation3], 1
    %8182 = vsyncpa %s8181, 1

</llo_original>
